<compile_context>
chip_gen: v5e
topology: v5e:2x2
jax: 0.10.0
libtpu: 0.0.40
codegen_flags: <defaults>
</compile_context>

<pallas_src>
import functools

import jax
import jax.numpy as jnp
import numpy as np
from jax.experimental import pallas as pl
from jax.experimental.pallas import tpu as pltpu


def _attn_body(q_ref, kv_ref, wpt_ref, bp_ref, o_ref, acc_ref, *, H, D, scale):
    # q_ref  : (tq, C)  query rows of this (batch, q-block)
    # kv_ref : (N,  C)  all key/value rows of this batch element
    # wpt_ref: (C,  C)  proj weight, pre-transposed (y = x @ wpt + b)
    # bp_ref : (1,  C)  proj bias
    # o_ref  : (tq, C)  projected output rows (lane-dense, C = H*D = 128)
    # acc_ref: (tq, C)  f32 scratch: per-head attention outputs packed lane-dense
    for h in range(H):
        sl = slice(h * D, (h + 1) * D)
        kh_f32 = kv_ref[:, sl]                                   # (N, D)
        qh_f32 = kh_f32 if q_ref is kv_ref else q_ref[:, sl]     # (tq, D)
        # Pre-scale q (cheaper than scaling the (tq, N) score matrix; exact for the
        # default power-of-two scale), feed the MXU in bf16 with f32 accumulation.
        qh = (qh_f32 * scale).astype(jnp.bfloat16)
        kh = kh_f32.astype(jnp.bfloat16)
        # s = q_h @ k_h^T (contract on D; transposed RHS handled natively by the MXU).
        s = jax.lax.dot_general(qh, kh, (((1,), (1,)), ((), ())),
                                preferred_element_type=jnp.float32)   # (tq, N)
        m = jnp.max(s, axis=-1, keepdims=True)
        p = jnp.exp(s - m)
        l = jnp.sum(p, axis=-1, keepdims=True)
        oh = jnp.dot(p.astype(jnp.bfloat16), kh,
                     preferred_element_type=jnp.float32)              # (tq, D)
        acc_ref[:, sl] = oh * pl.reciprocal(l, approx=True)
    # Fused output projection: a single full-depth matmul on the lane-dense accumulator
    # (kept f32; its cost is negligible next to the attention math).
    y = jnp.dot(acc_ref[...], wpt_ref[...],
                preferred_element_type=jnp.float32) + bp_ref[...]
    o_ref[...] = y.astype(o_ref.dtype)


def _make_kernel(H, D, scale, shared_qkv):
    if shared_qkv:
        def kernel(x_ref, wpt_ref, bp_ref, o_ref, acc_ref):
            _attn_body(x_ref, x_ref, wpt_ref, bp_ref, o_ref, acc_ref,
                       H=H, D=D, scale=scale)
    else:
        def kernel(q_ref, kv_ref, wpt_ref, bp_ref, o_ref, acc_ref):
            _attn_body(q_ref, kv_ref, wpt_ref, bp_ref, o_ref, acc_ref,
                       H=H, D=D, scale=scale)
    return kernel


def attention_forward(x, w_proj, b_proj, *, num_heads=8, qk_scale=None, tq=256):
    """x: [B, N, C] -> [B, N, C], matching the PyTorch Attention.forward."""
    B, N, C = x.shape
    assert C % num_heads == 0, (C, num_heads)
    D = C // num_heads
    scale = qk_scale if qk_scale is not None else D ** (-0.5)

    tq = min(tq, N)
    # Keep >= 2 independent parallel grid units when possible (v7x has 2 TensorCores).
    if (B * (N // tq) < 2 and tq % 2 == 0 and (tq // 2) % 8 == 0
            and N % (tq // 2) == 0):
        tq //= 2
    assert N % tq == 0, (N, tq)

    # Whole-kv-in-VMEM path (exact softmax, no online rescale).
    # TODO(synk): add a kv-blocked flash-attention path for very long sequences.
    assert N * C * x.dtype.itemsize <= 8 * 1024 * 1024, \
        "sequence too long for the single-kv-block path"

    wpt = jnp.transpose(w_proj)          # (C, C); y = x @ wpt + b
    bp = b_proj.reshape(1, C)

    shared_qkv = (tq == N)               # q block == kv block -> DMA x only once
    kernel = _make_kernel(num_heads, D, scale, shared_qkv)

    q_spec = pl.BlockSpec((None, tq, C), lambda b, qi: (b, qi, 0))
    kv_spec = pl.BlockSpec((None, N, C), lambda b, qi: (b, 0, 0))
    w_spec = pl.BlockSpec((C, C), lambda b, qi: (0, 0))
    b_spec = pl.BlockSpec((1, C), lambda b, qi: (0, 0))

    if shared_qkv:
        in_specs = [q_spec, w_spec, b_spec]
        args = (x, wpt, bp)
    else:
        in_specs = [q_spec, kv_spec, w_spec, b_spec]
        args = (x, x, wpt, bp)

    return pl.pallas_call(
        kernel,
        out_shape=jax.ShapeDtypeStruct((B, N, C), x.dtype),
        grid_spec=pltpu.PrefetchScalarGridSpec(
            num_scalar_prefetch=0,
            grid=(B, N // tq),
            in_specs=in_specs,
            out_specs=pl.BlockSpec((None, tq, C), lambda b, qi: (b, qi, 0)),
            scratch_shapes=[pltpu.VMEM((tq, C), jnp.float32)],
        ),
        compiler_params=pltpu.CompilerParams(
            dimension_semantics=("parallel", "parallel")),
    )(*args)


def init_params(key, dim):
    """PyTorch-like uniform init for the proj Linear (the only layer the forward uses)."""
    kw, kb = jax.random.split(key)
    bound = 1.0 / np.sqrt(dim)
    w = jax.random.uniform(kw, (dim, dim), jnp.float32, -bound, bound)
    b = jax.random.uniform(kb, (dim,), jnp.float32, -bound, bound)
    return {'w_proj': w, 'b_proj': b}


# ---------------------------------------------------------------------------
# Pure-JAX reference (for correctness check)
# ---------------------------------------------------------------------------
def ref_forward(x, w_proj, b_proj, *, num_heads=8, qk_scale=None):
    B, N, C = x.shape
    D = C // num_heads
    scale = qk_scale if qk_scale is not None else D ** (-0.5)
    q = jnp.transpose(x.reshape(B, N, num_heads, D), (0, 2, 1, 3))  # [B,H,N,D]
    attn = jnp.einsum('bhqd,bhkd->bhqk', q, q) * scale
    attn = jax.nn.softmax(attn, axis=-1)
    out = jnp.einsum('bhqk,bhkd->bhqd', attn, q)
    out = jnp.transpose(out, (0, 2, 1, 3)).reshape(B, N, C)
    return out @ w_proj.T + b_proj


if __name__ == "__main__":
    key = jax.random.PRNGKey(0)
    kx, kp = jax.random.split(key)

    B, N, C, H = 2, 256, 128, 8      # seq=256, dim=128, 8 heads -> head_dim=16
    x = jax.random.normal(kx, (B, N, C), jnp.float32)
    params = init_params(kp, C)

    fwd = jax.jit(functools.partial(attention_forward, num_heads=H))
    out = fwd(x, params['w_proj'], params['b_proj'])
    jax.block_until_ready(out)
    assert out.shape == (B, N, C), out.shape

    ref = ref_forward(x, params['w_proj'], params['b_proj'], num_heads=H)
    # bf16 MXU operands (f32 accumulation) -> slightly looser tolerance than pure f32.
    np.testing.assert_allclose(np.asarray(out), np.asarray(ref), rtol=2e-2, atol=2e-2)

    print("KERNEL_OK")
</pallas_src>

<mosaic_0001>
module attributes {stable_mosaic.version = 11 : i64} {
  func.func @kernel(%arg0: i32, %arg1: i32, %arg2: memref<1x256x128xf32, #tpu.memory_space<vmem>>, %arg3: memref<128x128xf32, #tpu.memory_space<vmem>>, %arg4: memref<1x128xf32, #tpu.memory_space<vmem>>, %arg5: memref<1x256x128xf32, #tpu.memory_space<vmem>>, %arg6: memref<256x128xf32, #tpu.memory_space<vmem>>) attributes {dimension_semantics = [#tpu.dimension_semantics<parallel>, #tpu.dimension_semantics<parallel>], iteration_bounds = array<i64: 2, 1>, scalar_prefetch = 0 : i64, scratch_operands = 1 : i64, tpu.core_type = #tpu.core_type<tc>, window_params = [{transform_indices = @transform_0, window_bounds = array<i64: 1, 256, 128>}, {pipeline_mode = #tpu.pipeline_mode<synchronous>, transform_indices = @transform_1, window_bounds = array<i64: 128, 128>}, {pipeline_mode = #tpu.pipeline_mode<synchronous>, transform_indices = @transform_2, window_bounds = array<i64: 1, 128>}, {transform_indices = @transform_3, window_bounds = array<i64: 1, 256, 128>}]} {
    %c0 = arith.constant 0 : index
    %c0_0 = arith.constant 0 : index
    %c0_1 = arith.constant 0 : index
    %0 = vector.load %arg2[%c0, %c0_0, %c0_1] : memref<1x256x128xf32, #tpu.memory_space<vmem>>, vector<1x256x16xf32>
    %1 = vector.shape_cast %0 : vector<1x256x16xf32> to vector<256x16xf32>
    %cst = arith.constant 2.500000e-01 : f32
    %2 = vector.broadcast %cst : f32 to vector<256x16xf32>
    %3 = arith.mulf %1, %2 : vector<256x16xf32>
    %4 = arith.truncf %3 : vector<256x16xf32> to vector<256x16xbf16>
    %5 = arith.truncf %1 : vector<256x16xf32> to vector<256x16xbf16>
    %cst_2 = arith.constant dense<0.000000e+00> : vector<256x256xf32>
    %6 = tpu.matmul %4, %5, %cst_2 {dimension_numbers = #tpu.dot_dimension_numbers<[1], [1], [0], [0], [0, 0, 1, 0], [], []>} : vector<256x16xbf16>, vector<256x16xbf16>, vector<256x256xf32> -> vector<256x256xf32>
    %cst_3 = arith.constant dense<0xFF800000> : vector<256xf32>
    %7 = vector.multi_reduction <maximumf>, %6, %cst_3 [1] : vector<256x256xf32> to vector<256xf32>
    %8 = vector.shape_cast %7 : vector<256xf32> to vector<256x1xf32>
    %9 = vector.broadcast %8 : vector<256x1xf32> to vector<256x256xf32>
    %10 = arith.subf %6, %9 : vector<256x256xf32>
    %11 = math.exp %10 : vector<256x256xf32>
    %cst_4 = arith.constant dense<0.000000e+00> : vector<256xf32>
    %12 = vector.multi_reduction <add>, %11, %cst_4 [1] : vector<256x256xf32> to vector<256xf32>
    %13 = vector.shape_cast %12 : vector<256xf32> to vector<256x1xf32>
    %14 = arith.truncf %11 : vector<256x256xf32> to vector<256x256xbf16>
    %cst_5 = arith.constant dense<0.000000e+00> : vector<256x16xf32>
    %15 = tpu.matmul %14, %5, %cst_5 {dimension_numbers = #tpu.dot_dimension_numbers<[1], [0], [0], [1], [0, 0, 1, 1], [], []>} : vector<256x256xbf16>, vector<256x16xbf16>, vector<256x16xf32> -> vector<256x16xf32>
    %16 = tpu.reciprocal %13 {approx = true} : vector<256x1xf32> -> vector<256x1xf32>
    %17 = vector.broadcast %16 : vector<256x1xf32> to vector<256x16xf32>
    %18 = arith.mulf %15, %17 : vector<256x16xf32>
    %c0_6 = arith.constant 0 : index
    %c0_7 = arith.constant 0 : index
    %19 = vector.load %arg6[%c0_6, %c0_7] : memref<256x128xf32, #tpu.memory_space<vmem>>, vector<256x16xf32>
    tpu.vector_store %arg6[%c0_6, %c0_7], %18 {strides = array<i32>} : memref<256x128xf32, #tpu.memory_space<vmem>>, vector<256x16xf32>,
    %c0_8 = arith.constant 0 : index
    %c0_9 = arith.constant 0 : index
    %c16 = arith.constant 16 : index
    %20 = vector.load %arg2[%c0_8, %c0_9, %c16] : memref<1x256x128xf32, #tpu.memory_space<vmem>>, vector<1x256x16xf32>
    %21 = vector.shape_cast %20 : vector<1x256x16xf32> to vector<256x16xf32>
    %cst_10 = arith.constant 2.500000e-01 : f32
    %22 = vector.broadcast %cst_10 : f32 to vector<256x16xf32>
    %23 = arith.mulf %21, %22 : vector<256x16xf32>
    %24 = arith.truncf %23 : vector<256x16xf32> to vector<256x16xbf16>
    %25 = arith.truncf %21 : vector<256x16xf32> to vector<256x16xbf16>
    %cst_11 = arith.constant dense<0.000000e+00> : vector<256x256xf32>
    %26 = tpu.matmul %24, %25, %cst_11 {dimension_numbers = #tpu.dot_dimension_numbers<[1], [1], [0], [0], [0, 0, 1, 0], [], []>} : vector<256x16xbf16>, vector<256x16xbf16>, vector<256x256xf32> -> vector<256x256xf32>
    %cst_12 = arith.constant dense<0xFF800000> : vector<256xf32>
    %27 = vector.multi_reduction <maximumf>, %26, %cst_12 [1] : vector<256x256xf32> to vector<256xf32>
    %28 = vector.shape_cast %27 : vector<256xf32> to vector<256x1xf32>
    %29 = vector.broadcast %28 : vector<256x1xf32> to vector<256x256xf32>
    %30 = arith.subf %26, %29 : vector<256x256xf32>
    %31 = math.exp %30 : vector<256x256xf32>
    %cst_13 = arith.constant dense<0.000000e+00> : vector<256xf32>
    %32 = vector.multi_reduction <add>, %31, %cst_13 [1] : vector<256x256xf32> to vector<256xf32>
    %33 = vector.shape_cast %32 : vector<256xf32> to vector<256x1xf32>
    %34 = arith.truncf %31 : vector<256x256xf32> to vector<256x256xbf16>
    %cst_14 = arith.constant dense<0.000000e+00> : vector<256x16xf32>
    %35 = tpu.matmul %34, %25, %cst_14 {dimension_numbers = #tpu.dot_dimension_numbers<[1], [0], [0], [1], [0, 0, 1, 1], [], []>} : vector<256x256xbf16>, vector<256x16xbf16>, vector<256x16xf32> -> vector<256x16xf32>
    %36 = tpu.reciprocal %33 {approx = true} : vector<256x1xf32> -> vector<256x1xf32>
    %37 = vector.broadcast %36 : vector<256x1xf32> to vector<256x16xf32>
    %38 = arith.mulf %35, %37 : vector<256x16xf32>
    %c0_15 = arith.constant 0 : index
    %c16_16 = arith.constant 16 : index
    %39 = vector.load %arg6[%c0_15, %c16_16] : memref<256x128xf32, #tpu.memory_space<vmem>>, vector<256x16xf32>
    tpu.vector_store %arg6[%c0_15, %c16_16], %38 {strides = array<i32>} : memref<256x128xf32, #tpu.memory_space<vmem>>, vector<256x16xf32>,
    %c0_17 = arith.constant 0 : index
    %c0_18 = arith.constant 0 : index
    %c32 = arith.constant 32 : index
    %40 = vector.load %arg2[%c0_17, %c0_18, %c32] : memref<1x256x128xf32, #tpu.memory_space<vmem>>, vector<1x256x16xf32>
    %41 = vector.shape_cast %40 : vector<1x256x16xf32> to vector<256x16xf32>
    %cst_19 = arith.constant 2.500000e-01 : f32
    %42 = vector.broadcast %cst_19 : f32 to vector<256x16xf32>
    %43 = arith.mulf %41, %42 : vector<256x16xf32>
    %44 = arith.truncf %43 : vector<256x16xf32> to vector<256x16xbf16>
    %45 = arith.truncf %41 : vector<256x16xf32> to vector<256x16xbf16>
    %cst_20 = arith.constant dense<0.000000e+00> : vector<256x256xf32>
    %46 = tpu.matmul %44, %45, %cst_20 {dimension_numbers = #tpu.dot_dimension_numbers<[1], [1], [0], [0], [0, 0, 1, 0], [], []>} : vector<256x16xbf16>, vector<256x16xbf16>, vector<256x256xf32> -> vector<256x256xf32>
    %cst_21 = arith.constant dense<0xFF800000> : vector<256xf32>
    %47 = vector.multi_reduction <maximumf>, %46, %cst_21 [1] : vector<256x256xf32> to vector<256xf32>
    %48 = vector.shape_cast %47 : vector<256xf32> to vector<256x1xf32>
    %49 = vector.broadcast %48 : vector<256x1xf32> to vector<256x256xf32>
    %50 = arith.subf %46, %49 : vector<256x256xf32>
    %51 = math.exp %50 : vector<256x256xf32>
    %cst_22 = arith.constant dense<0.000000e+00> : vector<256xf32>
    %52 = vector.multi_reduction <add>, %51, %cst_22 [1] : vector<256x256xf32> to vector<256xf32>
    %53 = vector.shape_cast %52 : vector<256xf32> to vector<256x1xf32>
    %54 = arith.truncf %51 : vector<256x256xf32> to vector<256x256xbf16>
    %cst_23 = arith.constant dense<0.000000e+00> : vector<256x16xf32>
    %55 = tpu.matmul %54, %45, %cst_23 {dimension_numbers = #tpu.dot_dimension_numbers<[1], [0], [0], [1], [0, 0, 1, 1], [], []>} : vector<256x256xbf16>, vector<256x16xbf16>, vector<256x16xf32> -> vector<256x16xf32>
    %56 = tpu.reciprocal %53 {approx = true} : vector<256x1xf32> -> vector<256x1xf32>
    %57 = vector.broadcast %56 : vector<256x1xf32> to vector<256x16xf32>
    %58 = arith.mulf %55, %57 : vector<256x16xf32>
    %c0_24 = arith.constant 0 : index
    %c32_25 = arith.constant 32 : index
    %59 = vector.load %arg6[%c0_24, %c32_25] : memref<256x128xf32, #tpu.memory_space<vmem>>, vector<256x16xf32>
    tpu.vector_store %arg6[%c0_24, %c32_25], %58 {strides = array<i32>} : memref<256x128xf32, #tpu.memory_space<vmem>>, vector<256x16xf32>,
    %c0_26 = arith.constant 0 : index
    %c0_27 = arith.constant 0 : index
    %c48 = arith.constant 48 : index
    %60 = vector.load %arg2[%c0_26, %c0_27, %c48] : memref<1x256x128xf32, #tpu.memory_space<vmem>>, vector<1x256x16xf32>
    %61 = vector.shape_cast %60 : vector<1x256x16xf32> to vector<256x16xf32>
    %cst_28 = arith.constant 2.500000e-01 : f32
    %62 = vector.broadcast %cst_28 : f32 to vector<256x16xf32>
    %63 = arith.mulf %61, %62 : vector<256x16xf32>
    %64 = arith.truncf %63 : vector<256x16xf32> to vector<256x16xbf16>
    %65 = arith.truncf %61 : vector<256x16xf32> to vector<256x16xbf16>
    %cst_29 = arith.constant dense<0.000000e+00> : vector<256x256xf32>
    %66 = tpu.matmul %64, %65, %cst_29 {dimension_numbers = #tpu.dot_dimension_numbers<[1], [1], [0], [0], [0, 0, 1, 0], [], []>} : vector<256x16xbf16>, vector<256x16xbf16>, vector<256x256xf32> -> vector<256x256xf32>
    %cst_30 = arith.constant dense<0xFF800000> : vector<256xf32>
    %67 = vector.multi_reduction <maximumf>, %66, %cst_30 [1] : vector<256x256xf32> to vector<256xf32>
    %68 = vector.shape_cast %67 : vector<256xf32> to vector<256x1xf32>
    %69 = vector.broadcast %68 : vector<256x1xf32> to vector<256x256xf32>
    %70 = arith.subf %66, %69 : vector<256x256xf32>
    %71 = math.exp %70 : vector<256x256xf32>
    %cst_31 = arith.constant dense<0.000000e+00> : vector<256xf32>
    %72 = vector.multi_reduction <add>, %71, %cst_31 [1] : vector<256x256xf32> to vector<256xf32>
    %73 = vector.shape_cast %72 : vector<256xf32> to vector<256x1xf32>
    %74 = arith.truncf %71 : vector<256x256xf32> to vector<256x256xbf16>
    %cst_32 = arith.constant dense<0.000000e+00> : vector<256x16xf32>
    %75 = tpu.matmul %74, %65, %cst_32 {dimension_numbers = #tpu.dot_dimension_numbers<[1], [0], [0], [1], [0, 0, 1, 1], [], []>} : vector<256x256xbf16>, vector<256x16xbf16>, vector<256x16xf32> -> vector<256x16xf32>
    %76 = tpu.reciprocal %73 {approx = true} : vector<256x1xf32> -> vector<256x1xf32>
    %77 = vector.broadcast %76 : vector<256x1xf32> to vector<256x16xf32>
    %78 = arith.mulf %75, %77 : vector<256x16xf32>
    %c0_33 = arith.constant 0 : index
    %c48_34 = arith.constant 48 : index
    %79 = vector.load %arg6[%c0_33, %c48_34] : memref<256x128xf32, #tpu.memory_space<vmem>>, vector<256x16xf32>
    tpu.vector_store %arg6[%c0_33, %c48_34], %78 {strides = array<i32>} : memref<256x128xf32, #tpu.memory_space<vmem>>, vector<256x16xf32>,
    %c0_35 = arith.constant 0 : index
    %c0_36 = arith.constant 0 : index
    %c64 = arith.constant 64 : index
    %80 = vector.load %arg2[%c0_35, %c0_36, %c64] : memref<1x256x128xf32, #tpu.memory_space<vmem>>, vector<1x256x16xf32>
    %81 = vector.shape_cast %80 : vector<1x256x16xf32> to vector<256x16xf32>
    %cst_37 = arith.constant 2.500000e-01 : f32
    %82 = vector.broadcast %cst_37 : f32 to vector<256x16xf32>
    %83 = arith.mulf %81, %82 : vector<256x16xf32>
    %84 = arith.truncf %83 : vector<256x16xf32> to vector<256x16xbf16>
    %85 = arith.truncf %81 : vector<256x16xf32> to vector<256x16xbf16>
    %cst_38 = arith.constant dense<0.000000e+00> : vector<256x256xf32>
    %86 = tpu.matmul %84, %85, %cst_38 {dimension_numbers = #tpu.dot_dimension_numbers<[1], [1], [0], [0], [0, 0, 1, 0], [], []>} : vector<256x16xbf16>, vector<256x16xbf16>, vector<256x256xf32> -> vector<256x256xf32>
    %cst_39 = arith.constant dense<0xFF800000> : vector<256xf32>
    %87 = vector.multi_reduction <maximumf>, %86, %cst_39 [1] : vector<256x256xf32> to vector<256xf32>
    %88 = vector.shape_cast %87 : vector<256xf32> to vector<256x1xf32>
    %89 = vector.broadcast %88 : vector<256x1xf32> to vector<256x256xf32>
    %90 = arith.subf %86, %89 : vector<256x256xf32>
    %91 = math.exp %90 : vector<256x256xf32>
    %cst_40 = arith.constant dense<0.000000e+00> : vector<256xf32>
    %92 = vector.multi_reduction <add>, %91, %cst_40 [1] : vector<256x256xf32> to vector<256xf32>
    %93 = vector.shape_cast %92 : vector<256xf32> to vector<256x1xf32>
    %94 = arith.truncf %91 : vector<256x256xf32> to vector<256x256xbf16>
    %cst_41 = arith.constant dense<0.000000e+00> : vector<256x16xf32>
    %95 = tpu.matmul %94, %85, %cst_41 {dimension_numbers = #tpu.dot_dimension_numbers<[1], [0], [0], [1], [0, 0, 1, 1], [], []>} : vector<256x256xbf16>, vector<256x16xbf16>, vector<256x16xf32> -> vector<256x16xf32>
    %96 = tpu.reciprocal %93 {approx = true} : vector<256x1xf32> -> vector<256x1xf32>
    %97 = vector.broadcast %96 : vector<256x1xf32> to vector<256x16xf32>
    %98 = arith.mulf %95, %97 : vector<256x16xf32>
    %c0_42 = arith.constant 0 : index
    %c64_43 = arith.constant 64 : index
    %99 = vector.load %arg6[%c0_42, %c64_43] : memref<256x128xf32, #tpu.memory_space<vmem>>, vector<256x16xf32>
    tpu.vector_store %arg6[%c0_42, %c64_43], %98 {strides = array<i32>} : memref<256x128xf32, #tpu.memory_space<vmem>>, vector<256x16xf32>,
    %c0_44 = arith.constant 0 : index
    %c0_45 = arith.constant 0 : index
    %c80 = arith.constant 80 : index
    %100 = vector.load %arg2[%c0_44, %c0_45, %c80] : memref<1x256x128xf32, #tpu.memory_space<vmem>>, vector<1x256x16xf32>
    %101 = vector.shape_cast %100 : vector<1x256x16xf32> to vector<256x16xf32>
    %cst_46 = arith.constant 2.500000e-01 : f32
    %102 = vector.broadcast %cst_46 : f32 to vector<256x16xf32>
    %103 = arith.mulf %101, %102 : vector<256x16xf32>
    %104 = arith.truncf %103 : vector<256x16xf32> to vector<256x16xbf16>
    %105 = arith.truncf %101 : vector<256x16xf32> to vector<256x16xbf16>
    %cst_47 = arith.constant dense<0.000000e+00> : vector<256x256xf32>
    %106 = tpu.matmul %104, %105, %cst_47 {dimension_numbers = #tpu.dot_dimension_numbers<[1], [1], [0], [0], [0, 0, 1, 0], [], []>} : vector<256x16xbf16>, vector<256x16xbf16>, vector<256x256xf32> -> vector<256x256xf32>
    %cst_48 = arith.constant dense<0xFF800000> : vector<256xf32>
    %107 = vector.multi_reduction <maximumf>, %106, %cst_48 [1] : vector<256x256xf32> to vector<256xf32>
    %108 = vector.shape_cast %107 : vector<256xf32> to vector<256x1xf32>
    %109 = vector.broadcast %108 : vector<256x1xf32> to vector<256x256xf32>
    %110 = arith.subf %106, %109 : vector<256x256xf32>
    %111 = math.exp %110 : vector<256x256xf32>
    %cst_49 = arith.constant dense<0.000000e+00> : vector<256xf32>
    %112 = vector.multi_reduction <add>, %111, %cst_49 [1] : vector<256x256xf32> to vector<256xf32>
    %113 = vector.shape_cast %112 : vector<256xf32> to vector<256x1xf32>
    %114 = arith.truncf %111 : vector<256x256xf32> to vector<256x256xbf16>
    %cst_50 = arith.constant dense<0.000000e+00> : vector<256x16xf32>
    %115 = tpu.matmul %114, %105, %cst_50 {dimension_numbers = #tpu.dot_dimension_numbers<[1], [0], [0], [1], [0, 0, 1, 1], [], []>} : vector<256x256xbf16>, vector<256x16xbf16>, vector<256x16xf32> -> vector<256x16xf32>
    %116 = tpu.reciprocal %113 {approx = true} : vector<256x1xf32> -> vector<256x1xf32>
    %117 = vector.broadcast %116 : vector<256x1xf32> to vector<256x16xf32>
    %118 = arith.mulf %115, %117 : vector<256x16xf32>
    %c0_51 = arith.constant 0 : index
    %c80_52 = arith.constant 80 : index
    %119 = vector.load %arg6[%c0_51, %c80_52] : memref<256x128xf32, #tpu.memory_space<vmem>>, vector<256x16xf32>
    tpu.vector_store %arg6[%c0_51, %c80_52], %118 {strides = array<i32>} : memref<256x128xf32, #tpu.memory_space<vmem>>, vector<256x16xf32>,
    %c0_53 = arith.constant 0 : index
    %c0_54 = arith.constant 0 : index
    %c96 = arith.constant 96 : index
    %120 = vector.load %arg2[%c0_53, %c0_54, %c96] : memref<1x256x128xf32, #tpu.memory_space<vmem>>, vector<1x256x16xf32>
    %121 = vector.shape_cast %120 : vector<1x256x16xf32> to vector<256x16xf32>
    %cst_55 = arith.constant 2.500000e-01 : f32
    %122 = vector.broadcast %cst_55 : f32 to vector<256x16xf32>
    %123 = arith.mulf %121, %122 : vector<256x16xf32>
    %124 = arith.truncf %123 : vector<256x16xf32> to vector<256x16xbf16>
    %125 = arith.truncf %121 : vector<256x16xf32> to vector<256x16xbf16>
    %cst_56 = arith.constant dense<0.000000e+00> : vector<256x256xf32>
    %126 = tpu.matmul %124, %125, %cst_56 {dimension_numbers = #tpu.dot_dimension_numbers<[1], [1], [0], [0], [0, 0, 1, 0], [], []>} : vector<256x16xbf16>, vector<256x16xbf16>, vector<256x256xf32> -> vector<256x256xf32>
    %cst_57 = arith.constant dense<0xFF800000> : vector<256xf32>
    %127 = vector.multi_reduction <maximumf>, %126, %cst_57 [1] : vector<256x256xf32> to vector<256xf32>
    %128 = vector.shape_cast %127 : vector<256xf32> to vector<256x1xf32>
    %129 = vector.broadcast %128 : vector<256x1xf32> to vector<256x256xf32>
    %130 = arith.subf %126, %129 : vector<256x256xf32>
    %131 = math.exp %130 : vector<256x256xf32>
    %cst_58 = arith.constant dense<0.000000e+00> : vector<256xf32>
    %132 = vector.multi_reduction <add>, %131, %cst_58 [1] : vector<256x256xf32> to vector<256xf32>
    %133 = vector.shape_cast %132 : vector<256xf32> to vector<256x1xf32>
    %134 = arith.truncf %131 : vector<256x256xf32> to vector<256x256xbf16>
    %cst_59 = arith.constant dense<0.000000e+00> : vector<256x16xf32>
    %135 = tpu.matmul %134, %125, %cst_59 {dimension_numbers = #tpu.dot_dimension_numbers<[1], [0], [0], [1], [0, 0, 1, 1], [], []>} : vector<256x256xbf16>, vector<256x16xbf16>, vector<256x16xf32> -> vector<256x16xf32>
    %136 = tpu.reciprocal %133 {approx = true} : vector<256x1xf32> -> vector<256x1xf32>
    %137 = vector.broadcast %136 : vector<256x1xf32> to vector<256x16xf32>
    %138 = arith.mulf %135, %137 : vector<256x16xf32>
    %c0_60 = arith.constant 0 : index
    %c96_61 = arith.constant 96 : index
    %139 = vector.load %arg6[%c0_60, %c96_61] : memref<256x128xf32, #tpu.memory_space<vmem>>, vector<256x16xf32>
    tpu.vector_store %arg6[%c0_60, %c96_61], %138 {strides = array<i32>} : memref<256x128xf32, #tpu.memory_space<vmem>>, vector<256x16xf32>,
    %c0_62 = arith.constant 0 : index
    %c0_63 = arith.constant 0 : index
    %c112 = arith.constant 112 : index
    %140 = vector.load %arg2[%c0_62, %c0_63, %c112] : memref<1x256x128xf32, #tpu.memory_space<vmem>>, vector<1x256x16xf32>
    %141 = vector.shape_cast %140 : vector<1x256x16xf32> to vector<256x16xf32>
    %cst_64 = arith.constant 2.500000e-01 : f32
    %142 = vector.broadcast %cst_64 : f32 to vector<256x16xf32>
    %143 = arith.mulf %141, %142 : vector<256x16xf32>
    %144 = arith.truncf %143 : vector<256x16xf32> to vector<256x16xbf16>
    %145 = arith.truncf %141 : vector<256x16xf32> to vector<256x16xbf16>
    %cst_65 = arith.constant dense<0.000000e+00> : vector<256x256xf32>
    %146 = tpu.matmul %144, %145, %cst_65 {dimension_numbers = #tpu.dot_dimension_numbers<[1], [1], [0], [0], [0, 0, 1, 0], [], []>} : vector<256x16xbf16>, vector<256x16xbf16>, vector<256x256xf32> -> vector<256x256xf32>
    %cst_66 = arith.constant dense<0xFF800000> : vector<256xf32>
    %147 = vector.multi_reduction <maximumf>, %146, %cst_66 [1] : vector<256x256xf32> to vector<256xf32>
    %148 = vector.shape_cast %147 : vector<256xf32> to vector<256x1xf32>
    %149 = vector.broadcast %148 : vector<256x1xf32> to vector<256x256xf32>
    %150 = arith.subf %146, %149 : vector<256x256xf32>
    %151 = math.exp %150 : vector<256x256xf32>
    %cst_67 = arith.constant dense<0.000000e+00> : vector<256xf32>
    %152 = vector.multi_reduction <add>, %151, %cst_67 [1] : vector<256x256xf32> to vector<256xf32>
    %153 = vector.shape_cast %152 : vector<256xf32> to vector<256x1xf32>
    %154 = arith.truncf %151 : vector<256x256xf32> to vector<256x256xbf16>
    %cst_68 = arith.constant dense<0.000000e+00> : vector<256x16xf32>
    %155 = tpu.matmul %154, %145, %cst_68 {dimension_numbers = #tpu.dot_dimension_numbers<[1], [0], [0], [1], [0, 0, 1, 1], [], []>} : vector<256x256xbf16>, vector<256x16xbf16>, vector<256x16xf32> -> vector<256x16xf32>
    %156 = tpu.reciprocal %153 {approx = true} : vector<256x1xf32> -> vector<256x1xf32>
    %157 = vector.broadcast %156 : vector<256x1xf32> to vector<256x16xf32>
    %158 = arith.mulf %155, %157 : vector<256x16xf32>
    %c0_69 = arith.constant 0 : index
    %c112_70 = arith.constant 112 : index
    %159 = vector.load %arg6[%c0_69, %c112_70] : memref<256x128xf32, #tpu.memory_space<vmem>>, vector<256x16xf32>
    tpu.vector_store %arg6[%c0_69, %c112_70], %158 {strides = array<i32>} : memref<256x128xf32, #tpu.memory_space<vmem>>, vector<256x16xf32>,
    %c0_71 = arith.constant 0 : index
    %c0_72 = arith.constant 0 : index
    %160 = vector.load %arg6[%c0_71, %c0_72] : memref<256x128xf32, #tpu.memory_space<vmem>>, vector<256x128xf32>
    %c0_73 = arith.constant 0 : index
    %c0_74 = arith.constant 0 : index
    %161 = vector.load %arg3[%c0_73, %c0_74] : memref<128x128xf32, #tpu.memory_space<vmem>>, vector<128x128xf32>
    %cst_75 = arith.constant dense<0.000000e+00> : vector<256x128xf32>
    %162 = tpu.matmul %160, %161, %cst_75 {dimension_numbers = #tpu.dot_dimension_numbers<[1], [0], [0], [1], [0, 0, 1, 1], [], []>} : vector<256x128xf32>, vector<128x128xf32>, vector<256x128xf32> -> vector<256x128xf32>
    %c0_76 = arith.constant 0 : index
    %c0_77 = arith.constant 0 : index
    %163 = vector.load %arg4[%c0_76, %c0_77] : memref<1x128xf32, #tpu.memory_space<vmem>>, vector<1x128xf32>
    %164 = vector.broadcast %163 : vector<1x128xf32> to vector<256x128xf32>
    %165 = arith.addf %162, %164 : vector<256x128xf32>
    %c0_78 = arith.constant 0 : index
    %c0_79 = arith.constant 0 : index
    %c0_80 = arith.constant 0 : index
    %166 = vector.load %arg5[%c0_78, %c0_79, %c0_80] : memref<1x256x128xf32, #tpu.memory_space<vmem>>, vector<1x256x128xf32>
    %167 = vector.shape_cast %166 : vector<1x256x128xf32> to vector<256x128xf32>
    %168 = vector.shape_cast %165 : vector<256x128xf32> to vector<1x256x128xf32>
    tpu.vector_store %arg5[%c0_78, %c0_79, %c0_80], %168 {strides = array<i32>} : memref<1x256x128xf32, #tpu.memory_space<vmem>>, vector<1x256x128xf32>,
    return
  }
  func.func @transform_0(%arg0: i32, %arg1: i32) -> (i32, i32, i32) {
    %c0_i32 = arith.constant 0 : i32
    %c0_i32_0 = arith.constant 0 : i32
    return %arg0, %arg1, %c0_i32 : i32, i32, i32
  }
  func.func @transform_1(%arg0: i32, %arg1: i32) -> (i32, i32) {
    %c0_i32 = arith.constant 0 : i32
    %c0_i32_0 = arith.constant 0 : i32
    %c0_i32_1 = arith.constant 0 : i32
    return %c0_i32, %c0_i32_0 : i32, i32
  }
  func.func @transform_2(%arg0: i32, %arg1: i32) -> (i32, i32) {
    %c0_i32 = arith.constant 0 : i32
    %c0_i32_0 = arith.constant 0 : i32
    %c0_i32_1 = arith.constant 0 : i32
    return %c0_i32, %c0_i32_0 : i32, i32
  }
  func.func @transform_3(%arg0: i32, %arg1: i32) -> (i32, i32, i32) {
    %c0_i32 = arith.constant 0 : i32
    %c0_i32_0 = arith.constant 0 : i32
    return %arg0, %arg1, %c0_i32 : i32, i32, i32
  }
}

</mosaic_0001>

<llo_original>
// kernel: attention_forward.1
$region0: #{attention_forward.1}
  #allocation0 [shape = 'u32[]', space=smem, size = 0x4, offset = 0x4, fixed_abs, tag = 'smem constant byte address 0x4 - core index']
  #allocation1 [shape = 'u32[72,128]{1,0:T(1,128)}', space=vmem, size = 0x9000, scoped, tag = 'internal scratch']
  #allocation2 [shape = 'f32[256,128]{1,0:T(8,128)}', space=vmem, size = 0x20000, scoped, tag = 'scratch operand']
  %s0 = inlined_call_operand.hbm [shape: f32[2,256,128], index: 0, kind: input, shape index: {}]
  %s1 = inlined_call_operand.vmem [shape: f32[128,128], index: 1, kind: input, shape index: {}]
  %s2 = inlined_call_operand.vmem [shape: f32[1,128], index: 2, kind: input, shape index: {}]
  %s3 = inlined_call_operand.hbm [shape: f32[2,256,128], index: 3, kind: output, shape index: {}]
  %s4 = sld [smem:[#allocation0]]
  $region49: #{attention_forward.1} parent=0
    _
  %s6 = ssub.s32 1, %s4
  %s7 = scalar_select 0, %s6, %s4
  $region1: #{attention_forward.1} parent=0
    #allocation3 [shape = 'u8[262144]{0}', space=vmem, size = 0x40000, scoped, tag = 'input window, operand 0']
    #allocation4 [shape = 's32[2]{0}', space=sflag, size = 0x8, scoped, tag = 'scoped memory for attention_forward.1']
    #allocation5 [shape = 's32[2]{0}', space=sflag, size = 0x8, scoped, tag = 'scoped memory for attention_forward.1']
    #allocation6 [shape = 'u8[262144]{0}', space=vmem, size = 0x40000, scoped, tag = 'output window, operand 0']
    %8 = vsyncpa [#allocation4], 0
    %s9 = scalar_lea.sflag [#allocation4], 1
    %10 = vsyncpa %s9, 0
    %11 = vsyncpa [#allocation5], 0
    %s12 = scalar_lea.sflag [#allocation5], 1
    %13 = vsyncpa %s12, 0
    loop: start=0, step=1, limit=4
    $region2: #{attention_forward.1} parent=1 // loop_pre_header
      _
    $region3: #{attention_forward.1} parent=1 // loop_header
      %s15 = sphi 0, %s19
      %p16 = scmp.ge.s32.totalorder %s15, 4
      %s22 = sphi 0, %s34
      %s23 = sphi 0, %s30
      %s24 = sphi 0, %s22
      %s25 = sphi 0, %s23
      %s26 = sphi 0, %s24
      %s27 = sphi 0, %s25
      %s39 = sphi 0, %s41
      %s42 = sphi 0, %s39
      %s43 = sphi 0, %s42
      %s59 = sphi 0, %s43
      %s63 = sphi 0, %s63
      %s65 = sphi 0, %s63
      %s66 = sphi 0, %s65
      %s80 = sphi 0, %s66
      %s84 = sphi 0, %s84
      %s86 = sphi 0, %s84
      %s87 = sphi 0, %s86
      %s101 = sphi 0, %s87
      %s109 = sphi 0, %s111
      %s112 = sphi 0, %s109
      %s113 = sphi 0, %s112
      %s129 = sphi 0, %s113
    $region4: #{attention_forward.1} parent=1 // loop_header_branch
      %18 = sbr.rel (%p16) target = $region8
    $region5: #{attention_forward.1} parent=1 // loop_body
      %s20 = ssub.s32 %s15, 1
      %s21 = ssub.s32 %s15, 2
      %s28 = sadd.s32 1, %s23
      %p29 = scmp.ge.s32.totalorder %s28, 1
      %s30 = scalar_select %p29, 0, %s28
      %s31 = sadd.s32 1, %s22
      %s32 = scalar_select %p29, %s31, %s22
      %p33 = scmp.ge.s32.totalorder %s32, 2
      %s34 = scalar_select %p33, 0, %s32
      %s35 = ssub.s32 %s22, %s34
      %s36 = ssub.s32 %s23, %s30
      %s37 = sor.u32 %s35, %s36
      %p38 = scmp.eq.s32.totalorder %s37, 0
      %s40 = sadd.s32 %s39, 1
      %s41 = scalar_select %p38, %s39, %s40
      %p44 = pneg %p38
      %p45 = scmp.eq.s32.totalorder %s15, 1
      %p46 = por %p44, %p45
      %p47 = scmp.ne.s32.totalorder %s39, %s42
      %p48 = scmp.eq.s32.totalorder %s15, 0
      %p49 = por %p47, %p48
      %p50 = scmp.ne.s32.totalorder %s39, %s42
      %p51 = scmp.eq.s32.totalorder %s20, 1
      %p52 = por %p50, %p51
      %p53 = scmp.ne.s32.totalorder %s42, %s43
      %p54 = scmp.eq.s32.totalorder %s20, 0
      %p55 = por %p53, %p54
      %p56 = scmp.ne.s32.totalorder %s42, %s43
      %p57 = scmp.eq.s32.totalorder %s21, 1
      %p58 = por %p56, %p57
      %p60 = scmp.ne.s32.totalorder %s43, %s59
      %p61 = scmp.eq.s32.totalorder %s21, 0
      %p62 = por %p60, %p61
      %s64 = sadd.s32 %s63, 1
      %p67 = scmp.eq.s32.totalorder %s15, 1
      %p68 = scmp.ne.s32.totalorder %s63, %s65
      %p69 = scmp.eq.s32.totalorder %s15, 0
      %p70 = por %p68, %p69
      %p71 = scmp.ne.s32.totalorder %s63, %s65
      %p72 = scmp.eq.s32.totalorder %s20, 1
      %p73 = por %p71, %p72
      %p74 = scmp.ne.s32.totalorder %s65, %s66
      %p75 = scmp.eq.s32.totalorder %s20, 0
      %p76 = por %p74, %p75
      %p77 = scmp.ne.s32.totalorder %s65, %s66
      %p78 = scmp.eq.s32.totalorder %s21, 1
      %p79 = por %p77, %p78
      %p81 = scmp.ne.s32.totalorder %s66, %s80
      %p82 = scmp.eq.s32.totalorder %s21, 0
      %p83 = por %p81, %p82
      %s85 = sadd.s32 %s84, 1
      %p88 = scmp.eq.s32.totalorder %s15, 1
      %p89 = scmp.ne.s32.totalorder %s84, %s86
      %p90 = scmp.eq.s32.totalorder %s15, 0
      %p91 = por %p89, %p90
      %p92 = scmp.ne.s32.totalorder %s84, %s86
      %p93 = scmp.eq.s32.totalorder %s20, 1
      %p94 = por %p92, %p93
      %p95 = scmp.ne.s32.totalorder %s86, %s87
      %p96 = scmp.eq.s32.totalorder %s20, 0
      %p97 = por %p95, %p96
      %p98 = scmp.ne.s32.totalorder %s86, %s87
      %p99 = scmp.eq.s32.totalorder %s21, 1
      %p100 = por %p98, %p99
      %p102 = scmp.ne.s32.totalorder %s87, %s101
      %p103 = scmp.eq.s32.totalorder %s21, 0
      %p104 = por %p102, %p103
      %s105 = ssub.s32 %s22, %s34
      %s106 = ssub.s32 %s23, %s30
      %s107 = sor.u32 %s105, %s106
      %p108 = scmp.eq.s32.totalorder %s107, 0
      %s110 = sadd.s32 %s109, 1
      %s111 = scalar_select %p108, %s109, %s110
      %p114 = pneg %p108
      %p115 = scmp.eq.s32.totalorder %s15, 1
      %p116 = por %p114, %p115
      %p117 = scmp.ne.s32.totalorder %s109, %s112
      %p118 = scmp.eq.s32.totalorder %s15, 0
      %p119 = por %p117, %p118
      %p120 = scmp.ne.s32.totalorder %s109, %s112
      %p121 = scmp.eq.s32.totalorder %s20, 1
      %p122 = por %p120, %p121
      %p123 = scmp.ne.s32.totalorder %s112, %s113
      %p124 = scmp.eq.s32.totalorder %s20, 0
      %p125 = por %p123, %p124
      %p126 = scmp.ne.s32.totalorder %s112, %s113
      %p127 = scmp.eq.s32.totalorder %s21, 1
      %p128 = por %p126, %p127
      %p130 = scmp.ne.s32.totalorder %s113, %s129
      %p131 = scmp.eq.s32.totalorder %s21, 0
      %p132 = por %p130, %p131
      %p133 = scmp.le.s32.totalorder 1, %s15
      %p134 = scmp.lt.s32.totalorder %s15, 3
      %p135 = pnand %p133, %p134
      %p136 = pneg %p135
      // Predicated region
      $region9: #{attention_forward.1} parent=5 // pred_check
        _
      $region10: #{attention_forward.1} parent=5 // pred_check_branch
        %138 = sbr.rel (%p135) target = $region12
      $region11: #{attention_forward.1} parent=5 // pred_region
        %s139 = ssub.s32 %s15, 1
        // Predicated region
        $region13: #{attention_forward.1} parent=11 // pred_check
          %p140 = pneg %p76
        $region14: #{attention_forward.1} parent=11 // pred_check_branch
          %142 = sbr.rel (%p140) target = $region16
        $region15: #{attention_forward.1} parent=11 // pred_region
          _
        $region16: #{attention_forward.1} parent=11 // pred_fallthru
          _
        // Predicated region
        $region17: #{attention_forward.1} parent=11 // pred_check
          %p143 = pneg %p97
        $region18: #{attention_forward.1} parent=11 // pred_check_branch
          %145 = sbr.rel (%p143) target = $region20
        $region19: #{attention_forward.1} parent=11 // pred_region
          _
        $region20: #{attention_forward.1} parent=11 // pred_fallthru
          _
      $region12: #{attention_forward.1} parent=5 // pred_fallthru
        _
      %p146 = scmp.lt.s32.totalorder %s15, 2
      // Predicated region
      $region21: #{attention_forward.1} parent=5 // pred_check
        %p147 = pneg %p146
      $region22: #{attention_forward.1} parent=5 // pred_check_branch
        %149 = sbr.rel (%p147) target = $region24
      $region23: #{attention_forward.1} parent=5 // pred_region
        // Predicated region
        $region25: #{attention_forward.1} parent=23 // pred_check
          %p150 = pneg %p49
        $region26: #{attention_forward.1} parent=23 // pred_check_branch
          %152 = sbr.rel (%p150) target = $region28
        $region27: #{attention_forward.1} parent=23 // pred_region
          %s153 = sand.u32 %s39, 1
          %s154 = scalar_lea.sflag [#allocation4], %s153
          %s155 = sand.u32 %s39, 1
          %s156 = smul.addr %s155, 256
          %s157 = scalar_lea.vmem [#allocation3], %s156
          %s158 = smul.u32 32, %s23
          %160 = vsyncadd %s154, 0
          %s161 = smul.addr %s22, 32
          %s162 = sadd.s32 %s158, %s161
          %s163 = smul.addr %s162, 8
          %s164 = scalar_lea.hbm %s0, %s163
          %s165 = sshll.u32 %s164, 4
          %s166 = int_to_ptr.hbm [resolvable:$true] %s165
          %s167 = sshll.u32 %s157, 4
          %s168 = int_to_ptr.vmem [resolvable:$true] %s167
          %173 = dma.hbm_to_vmem [thread:$0]  %s166, 4096, %s168, %s154, 128, 128, 8
        $region28: #{attention_forward.1} parent=23 // pred_fallthru
          _
      $region24: #{attention_forward.1} parent=5 // pred_fallthru
        _
      %p174 = scmp.le.s32.totalorder 1, %s15
      %p175 = scmp.lt.s32.totalorder %s15, 3
      %p176 = pnand %p174, %p175
      %p177 = pneg %p176
      // Predicated region
      $region29: #{attention_forward.1} parent=5 // pred_check
        _
      $region30: #{attention_forward.1} parent=5 // pred_check_branch
        %179 = sbr.rel (%p176) target = $region32
      $region31: #{attention_forward.1} parent=5 // pred_region
        %s180 = ssub.s32 %s15, 1
        %s181 = sand.u32 %s42, 1
        %s182 = scalar_lea.sflag [#allocation4], %s181
        %s183 = sand.u32 %s42, 1
        %s184 = smul.addr %s183, 256
        %s185 = scalar_lea.vmem [#allocation3], %s184
        // Predicated region
        $region33: #{attention_forward.1} parent=31 // pred_check
          %p186 = pneg %p55
        $region34: #{attention_forward.1} parent=31 // pred_check_branch
          %188 = sbr.rel (%p186) target = $region36
        $region35: #{attention_forward.1} parent=31 // pred_region
          %190 = dma.done %s182, 4096
        $region36: #{attention_forward.1} parent=31 // pred_fallthru
          _
        %s191 = sand.u32 %s42, 1
        %s192 = scalar_lea.sflag [#allocation4], %s191
        %s193 = sand.u32 %s42, 1
        %s194 = smul.addr %s193, 256
        %s195 = scalar_lea.vmem [#allocation3], %s194
        %p196 = pneg %p55
        %p197 = pneg %p52
        %p198 = pneg %p76
        %p199 = pneg %p73
        %p200 = pneg %p97
        %p201 = pneg %p94
        %p202 = pneg %p125
        %p203 = pneg %p122
        %s204 = sand.u32 %s112, 1
        %s205 = scalar_lea.sflag [#allocation5], %s204
        %s206 = sand.u32 %s112, 1
        %s207 = smul.addr %s206, 256
        %s208 = scalar_lea.vmem [#allocation6], %s207
        %s209 = smul.u32 32, %s25
        %s210 = smul.u32 32, %s25
        %v211 = vld [vmem:[%s185] sm:$0xff]
        %v212 = vld [vmem:[%s185 + $0x8] sm:$0xff]
        %v213 = vld [vmem:[%s185 + $0x10] sm:$0xff]
        %v214 = vld [vmem:[%s185 + $0x18] sm:$0xff]
        %v215 = vld [vmem:[%s185 + $0x20] sm:$0xff]
        %v216 = vld [vmem:[%s185 + $0x28] sm:$0xff]
        %v217 = vld [vmem:[%s185 + $0x30] sm:$0xff]
        %v218 = vld [vmem:[%s185 + $0x38] sm:$0xff]
        %v219 = vld [vmem:[%s185 + $0x40] sm:$0xff]
        %v220 = vld [vmem:[%s185 + $0x48] sm:$0xff]
        %v221 = vld [vmem:[%s185 + $0x50] sm:$0xff]
        %v222 = vld [vmem:[%s185 + $0x58] sm:$0xff]
        %v223 = vld [vmem:[%s185 + $0x60] sm:$0xff]
        %v224 = vld [vmem:[%s185 + $0x68] sm:$0xff]
        %v225 = vld [vmem:[%s185 + $0x70] sm:$0xff]
        %v226 = vld [vmem:[%s185 + $0x78] sm:$0xff]
        %v227 = vld [vmem:[%s185 + $0x80] sm:$0xff]
        %v228 = vld [vmem:[%s185 + $0x88] sm:$0xff]
        %v229 = vld [vmem:[%s185 + $0x90] sm:$0xff]
        %v230 = vld [vmem:[%s185 + $0x98] sm:$0xff]
        %v231 = vld [vmem:[%s185 + $0xa0] sm:$0xff]
        %v232 = vld [vmem:[%s185 + $0xa8] sm:$0xff]
        %v233 = vld [vmem:[%s185 + $0xb0] sm:$0xff]
        %v234 = vld [vmem:[%s185 + $0xb8] sm:$0xff]
        %v235 = vld [vmem:[%s185 + $0xc0] sm:$0xff]
        %v236 = vld [vmem:[%s185 + $0xc8] sm:$0xff]
        %v237 = vld [vmem:[%s185 + $0xd0] sm:$0xff]
        %v238 = vld [vmem:[%s185 + $0xd8] sm:$0xff]
        %v239 = vld [vmem:[%s185 + $0xe0] sm:$0xff]
        %v240 = vld [vmem:[%s185 + $0xe8] sm:$0xff]
        %v241 = vld [vmem:[%s185 + $0xf0] sm:$0xff]
        %v242 = vld [vmem:[%s185 + $0xf8] sm:$0xff]
        %v243 = vmul.f32 %v211, 0.25
        %v244 = vmul.f32 %v212, 0.25
        %v245 = vmul.f32 %v213, 0.25
        %v246 = vmul.f32 %v214, 0.25
        %v247 = vmul.f32 %v215, 0.25
        %v248 = vmul.f32 %v216, 0.25
        %v249 = vmul.f32 %v217, 0.25
        %v250 = vmul.f32 %v218, 0.25
        %v251 = vmul.f32 %v219, 0.25
        %v252 = vmul.f32 %v220, 0.25
        %v253 = vmul.f32 %v221, 0.25
        %v254 = vmul.f32 %v222, 0.25
        %v255 = vmul.f32 %v223, 0.25
        %v256 = vmul.f32 %v224, 0.25
        %v257 = vmul.f32 %v225, 0.25
        %v258 = vmul.f32 %v226, 0.25
        %v259 = vmul.f32 %v227, 0.25
        %v260 = vmul.f32 %v228, 0.25
        %v261 = vmul.f32 %v229, 0.25
        %v262 = vmul.f32 %v230, 0.25
        %v263 = vmul.f32 %v231, 0.25
        %v264 = vmul.f32 %v232, 0.25
        %v265 = vmul.f32 %v233, 0.25
        %v266 = vmul.f32 %v234, 0.25
        %v267 = vmul.f32 %v235, 0.25
        %v268 = vmul.f32 %v236, 0.25
        %v269 = vmul.f32 %v237, 0.25
        %v270 = vmul.f32 %v238, 0.25
        %v271 = vmul.f32 %v239, 0.25
        %v272 = vmul.f32 %v240, 0.25
        %v273 = vmul.f32 %v241, 0.25
        %v274 = vmul.f32 %v242, 0.25
        %v275 = vpack.c.bf16 %v244, %v243
        %v276 = vpack.c.bf16 %v246, %v245
        %v277 = vpack.c.bf16 %v248, %v247
        %v278 = vpack.c.bf16 %v250, %v249
        %v279 = vpack.c.bf16 %v252, %v251
        %v280 = vpack.c.bf16 %v254, %v253
        %v281 = vpack.c.bf16 %v256, %v255
        %v282 = vpack.c.bf16 %v258, %v257
        %v283 = vpack.c.bf16 %v260, %v259
        %v284 = vpack.c.bf16 %v262, %v261
        %v285 = vpack.c.bf16 %v264, %v263
        %v286 = vpack.c.bf16 %v266, %v265
        %v287 = vpack.c.bf16 %v268, %v267
        %v288 = vpack.c.bf16 %v270, %v269
        %v289 = vpack.c.bf16 %v272, %v271
        %v290 = vpack.c.bf16 %v274, %v273
        %v291 = vpack.c.bf16 %v212, %v211
        %v292 = vpack.c.bf16 %v214, %v213
        %v293 = vpack.c.bf16 %v216, %v215
        %v294 = vpack.c.bf16 %v218, %v217
        %v295 = vpack.c.bf16 %v220, %v219
        %v296 = vpack.c.bf16 %v222, %v221
        %v297 = vpack.c.bf16 %v224, %v223
        %v298 = vpack.c.bf16 %v226, %v225
        %v299 = vpack.c.bf16 %v228, %v227
        %v300 = vpack.c.bf16 %v230, %v229
        %v301 = vpack.c.bf16 %v232, %v231
        %v302 = vpack.c.bf16 %v234, %v233
        %v303 = vpack.c.bf16 %v236, %v235
        %v304 = vpack.c.bf16 %v238, %v237
        %v305 = vpack.c.bf16 %v240, %v239
        %v306 = vpack.c.bf16 %v242, %v241
        %vm307 = vcmask 130048
        %v309 = vsel %vm307, %v275, 0
        %v312 = vsel %vm307, %v276, 0
        %v315 = vsel %vm307, %v277, 0
        %v318 = vsel %vm307, %v278, 0
        %v321 = vsel %vm307, %v279, 0
        %v324 = vsel %vm307, %v280, 0
        %v327 = vsel %vm307, %v281, 0
        %v330 = vsel %vm307, %v282, 0
        %v333 = vsel %vm307, %v283, 0
        %v336 = vsel %vm307, %v284, 0
        %v339 = vsel %vm307, %v285, 0
        %v342 = vsel %vm307, %v286, 0
        %v345 = vsel %vm307, %v287, 0
        %v348 = vsel %vm307, %v288, 0
        %v351 = vsel %vm307, %v289, 0
        %v354 = vsel %vm307, %v290, 0
        %v357 = vsel %vm307, %v291, 0
        %v360 = vsel %vm307, %v292, 0
        %v363 = vsel %vm307, %v293, 0
        %v366 = vsel %vm307, %v294, 0
        %v369 = vsel %vm307, %v295, 0
        %v372 = vsel %vm307, %v296, 0
        %v375 = vsel %vm307, %v297, 0
        %v378 = vsel %vm307, %v298, 0
        %v381 = vsel %vm307, %v299, 0
        %v384 = vsel %vm307, %v300, 0
        %v387 = vsel %vm307, %v301, 0
        %v390 = vsel %vm307, %v302, 0
        %v393 = vsel %vm307, %v303, 0
        %v396 = vsel %vm307, %v304, 0
        %v399 = vsel %vm307, %v305, 0
        %v402 = vsel %vm307, %v306, 0
        %404 = vmatpush.bf16.xpose.msra.mxu0 %v378
        %405 = vmatpush.bf16.xpose.msra.mxu0 %v375
        %406 = vmatpush.bf16.xpose.msra.mxu0 %v372
        %407 = vmatpush.bf16.xpose.msra.mxu0 %v369
        %408 = vmatpush.bf16.xpose.msra.mxu0 %v366
        %409 = vmatpush.bf16.xpose.msra.mxu0 %v363
        %410 = vmatpush.bf16.xpose.msra.mxu0 %v360
        %411 = vmatpush.bf16.xpose.msra.mxu0 %v357
        %412 = vmatmul.bf16.gmra.mxu0 %v309
        %v413 = vpop.f32.mrf.mxu0
        %v414 = vadd.f32 0.0, %v413
        %v415 = vpop.f32.mrf.mxu0
        %v416 = vadd.f32 0.0, %v415
        %417 = vmatmul.bf16.gmra.mxu0 %v312
        %v418 = vpop.f32.mrf.mxu0
        %v419 = vadd.f32 0.0, %v418
        %v420 = vpop.f32.mrf.mxu0
        %v421 = vadd.f32 0.0, %v420
        %422 = vmatmul.bf16.gmra.mxu0 %v315
        %v423 = vpop.f32.mrf.mxu0
        %v424 = vadd.f32 0.0, %v423
        %v425 = vpop.f32.mrf.mxu0
        %v426 = vadd.f32 0.0, %v425
        %427 = vmatmul.bf16.gmra.mxu0 %v318
        %v428 = vpop.f32.mrf.mxu0
        %v429 = vadd.f32 0.0, %v428
        %v430 = vpop.f32.mrf.mxu0
        %v431 = vadd.f32 0.0, %v430
        %432 = vmatmul.bf16.gmra.mxu0 %v321
        %v433 = vpop.f32.mrf.mxu0
        %v434 = vadd.f32 0.0, %v433
        %v435 = vpop.f32.mrf.mxu0
        %v436 = vadd.f32 0.0, %v435
        %437 = vmatmul.bf16.gmra.mxu0 %v324
        %v438 = vpop.f32.mrf.mxu0
        %v439 = vadd.f32 0.0, %v438
        %v440 = vpop.f32.mrf.mxu0
        %v441 = vadd.f32 0.0, %v440
        %442 = vmatmul.bf16.gmra.mxu0 %v327
        %v443 = vpop.f32.mrf.mxu0
        %v444 = vadd.f32 0.0, %v443
        %v445 = vpop.f32.mrf.mxu0
        %v446 = vadd.f32 0.0, %v445
        %447 = vmatmul.bf16.gmra.mxu0 %v330
        %v448 = vpop.f32.mrf.mxu0
        %v449 = vadd.f32 0.0, %v448
        %v450 = vpop.f32.mrf.mxu0
        %v451 = vadd.f32 0.0, %v450
        %452 = vmatmul.bf16.gmra.mxu0 %v333
        %v453 = vpop.f32.mrf.mxu0
        %v454 = vadd.f32 0.0, %v453
        %v455 = vpop.f32.mrf.mxu0
        %v456 = vadd.f32 0.0, %v455
        %457 = vmatmul.bf16.gmra.mxu0 %v336
        %v458 = vpop.f32.mrf.mxu0
        %v459 = vadd.f32 0.0, %v458
        %v460 = vpop.f32.mrf.mxu0
        %v461 = vadd.f32 0.0, %v460
        %462 = vmatmul.bf16.gmra.mxu0 %v339
        %v463 = vpop.f32.mrf.mxu0
        %v464 = vadd.f32 0.0, %v463
        %v465 = vpop.f32.mrf.mxu0
        %v466 = vadd.f32 0.0, %v465
        %467 = vmatmul.bf16.gmra.mxu0 %v342
        %v468 = vpop.f32.mrf.mxu0
        %v469 = vadd.f32 0.0, %v468
        %v470 = vpop.f32.mrf.mxu0
        %v471 = vadd.f32 0.0, %v470
        %472 = vmatmul.bf16.gmra.mxu0 %v345
        %v473 = vpop.f32.mrf.mxu0
        %v474 = vadd.f32 0.0, %v473
        %v475 = vpop.f32.mrf.mxu0
        %v476 = vadd.f32 0.0, %v475
        %477 = vmatmul.bf16.gmra.mxu0 %v348
        %v478 = vpop.f32.mrf.mxu0
        %v479 = vadd.f32 0.0, %v478
        %v480 = vpop.f32.mrf.mxu0
        %v481 = vadd.f32 0.0, %v480
        %482 = vmatmul.bf16.gmra.mxu0 %v351
        %v483 = vpop.f32.mrf.mxu0
        %v484 = vadd.f32 0.0, %v483
        %v485 = vpop.f32.mrf.mxu0
        %v486 = vadd.f32 0.0, %v485
        %487 = vmatmul.bf16.gmra.mxu0 %v354
        %v488 = vpop.f32.mrf.mxu0
        %v489 = vadd.f32 0.0, %v488
        %v490 = vpop.f32.mrf.mxu0
        %v491 = vadd.f32 0.0, %v490
        %492 = vdwg.mxu0
        %493 = vmatpush.bf16.xpose.msra.mxu0 %v402
        %494 = vmatpush.bf16.xpose.msra.mxu0 %v399
        %495 = vmatpush.bf16.xpose.msra.mxu0 %v396
        %496 = vmatpush.bf16.xpose.msra.mxu0 %v393
        %497 = vmatpush.bf16.xpose.msra.mxu0 %v390
        %498 = vmatpush.bf16.xpose.msra.mxu0 %v387
        %499 = vmatpush.bf16.xpose.msra.mxu0 %v384
        %500 = vmatpush.bf16.xpose.msra.mxu0 %v381
        %501 = vmatmul.bf16.gmra.mxu0 %v309
        %v502 = vpop.f32.mrf.mxu0
        %v503 = vadd.f32 0.0, %v502
        %v504 = vpop.f32.mrf.mxu0
        %v505 = vadd.f32 0.0, %v504
        %506 = vmatmul.bf16.gmra.mxu0 %v312
        %v507 = vpop.f32.mrf.mxu0
        %v508 = vadd.f32 0.0, %v507
        %v509 = vpop.f32.mrf.mxu0
        %v510 = vadd.f32 0.0, %v509
        %511 = vmatmul.bf16.gmra.mxu0 %v315
        %v512 = vpop.f32.mrf.mxu0
        %v513 = vadd.f32 0.0, %v512
        %v514 = vpop.f32.mrf.mxu0
        %v515 = vadd.f32 0.0, %v514
        %516 = vmatmul.bf16.gmra.mxu0 %v318
        %v517 = vpop.f32.mrf.mxu0
        %v518 = vadd.f32 0.0, %v517
        %v519 = vpop.f32.mrf.mxu0
        %v520 = vadd.f32 0.0, %v519
        %521 = vmatmul.bf16.gmra.mxu0 %v321
        %v522 = vpop.f32.mrf.mxu0
        %v523 = vadd.f32 0.0, %v522
        %v524 = vpop.f32.mrf.mxu0
        %v525 = vadd.f32 0.0, %v524
        %526 = vmatmul.bf16.gmra.mxu0 %v324
        %v527 = vpop.f32.mrf.mxu0
        %v528 = vadd.f32 0.0, %v527
        %v529 = vpop.f32.mrf.mxu0
        %v530 = vadd.f32 0.0, %v529
        %531 = vmatmul.bf16.gmra.mxu0 %v327
        %v532 = vpop.f32.mrf.mxu0
        %v533 = vadd.f32 0.0, %v532
        %v534 = vpop.f32.mrf.mxu0
        %v535 = vadd.f32 0.0, %v534
        %536 = vmatmul.bf16.gmra.mxu0 %v330
        %v537 = vpop.f32.mrf.mxu0
        %v538 = vadd.f32 0.0, %v537
        %v539 = vpop.f32.mrf.mxu0
        %v540 = vadd.f32 0.0, %v539
        %541 = vmatmul.bf16.gmra.mxu0 %v333
        %v542 = vpop.f32.mrf.mxu0
        %v543 = vadd.f32 0.0, %v542
        %v544 = vpop.f32.mrf.mxu0
        %v545 = vadd.f32 0.0, %v544
        %546 = vmatmul.bf16.gmra.mxu0 %v336
        %v547 = vpop.f32.mrf.mxu0
        %v548 = vadd.f32 0.0, %v547
        %v549 = vpop.f32.mrf.mxu0
        %v550 = vadd.f32 0.0, %v549
        %551 = vmatmul.bf16.gmra.mxu0 %v339
        %v552 = vpop.f32.mrf.mxu0
        %v553 = vadd.f32 0.0, %v552
        %v554 = vpop.f32.mrf.mxu0
        %v555 = vadd.f32 0.0, %v554
        %556 = vmatmul.bf16.gmra.mxu0 %v342
        %v557 = vpop.f32.mrf.mxu0
        %v558 = vadd.f32 0.0, %v557
        %v559 = vpop.f32.mrf.mxu0
        %v560 = vadd.f32 0.0, %v559
        %561 = vmatmul.bf16.gmra.mxu0 %v345
        %v562 = vpop.f32.mrf.mxu0
        %v563 = vadd.f32 0.0, %v562
        %v564 = vpop.f32.mrf.mxu0
        %v565 = vadd.f32 0.0, %v564
        %566 = vmatmul.bf16.gmra.mxu0 %v348
        %v567 = vpop.f32.mrf.mxu0
        %v568 = vadd.f32 0.0, %v567
        %v569 = vpop.f32.mrf.mxu0
        %v570 = vadd.f32 0.0, %v569
        %571 = vmatmul.bf16.gmra.mxu0 %v351
        %v572 = vpop.f32.mrf.mxu0
        %v573 = vadd.f32 0.0, %v572
        %v574 = vpop.f32.mrf.mxu0
        %v575 = vadd.f32 0.0, %v574
        %576 = vmatmul.bf16.gmra.mxu0 %v354
        %v577 = vpop.f32.mrf.mxu0
        %v578 = vadd.f32 0.0, %v577
        %v579 = vpop.f32.mrf.mxu0
        %v580 = vadd.f32 0.0, %v579
        %581 = vdwg.mxu0
        %v582 = vmax.f32 %v414, %v503
        %583 = vmax.xlane.f32.xlu0 %v582
        %v584 = vpop.xlane.xlu0 %583
        %v585 = vmax.f32 %v416, %v505
        %586 = vmax.xlane.f32.xlu0 %v585
        %v587 = vpop.xlane.xlu0 %586
        %v588 = vmax.f32 %v419, %v508
        %589 = vmax.xlane.f32.xlu0 %v588
        %v590 = vpop.xlane.xlu0 %589
        %v591 = vmax.f32 %v421, %v510
        %592 = vmax.xlane.f32.xlu0 %v591
        %v593 = vpop.xlane.xlu0 %592
        %v594 = vmax.f32 %v424, %v513
        %595 = vmax.xlane.f32.xlu0 %v594
        %v596 = vpop.xlane.xlu0 %595
        %v597 = vmax.f32 %v426, %v515
        %598 = vmax.xlane.f32.xlu0 %v597
        %v599 = vpop.xlane.xlu0 %598
        %v600 = vmax.f32 %v429, %v518
        %601 = vmax.xlane.f32.xlu0 %v600
        %v602 = vpop.xlane.xlu0 %601
        %v603 = vmax.f32 %v431, %v520
        %604 = vmax.xlane.f32.xlu0 %v603
        %v605 = vpop.xlane.xlu0 %604
        %v606 = vmax.f32 %v434, %v523
        %607 = vmax.xlane.f32.xlu0 %v606
        %v608 = vpop.xlane.xlu0 %607
        %v609 = vmax.f32 %v436, %v525
        %610 = vmax.xlane.f32.xlu0 %v609
        %v611 = vpop.xlane.xlu0 %610
        %v612 = vmax.f32 %v439, %v528
        %613 = vmax.xlane.f32.xlu0 %v612
        %v614 = vpop.xlane.xlu0 %613
        %v615 = vmax.f32 %v441, %v530
        %616 = vmax.xlane.f32.xlu0 %v615
        %v617 = vpop.xlane.xlu0 %616
        %v618 = vmax.f32 %v444, %v533
        %619 = vmax.xlane.f32.xlu0 %v618
        %v620 = vpop.xlane.xlu0 %619
        %v621 = vmax.f32 %v446, %v535
        %622 = vmax.xlane.f32.xlu0 %v621
        %v623 = vpop.xlane.xlu0 %622
        %v624 = vmax.f32 %v449, %v538
        %625 = vmax.xlane.f32.xlu0 %v624
        %v626 = vpop.xlane.xlu0 %625
        %v627 = vmax.f32 %v451, %v540
        %628 = vmax.xlane.f32.xlu0 %v627
        %v629 = vpop.xlane.xlu0 %628
        %v630 = vmax.f32 %v454, %v543
        %631 = vmax.xlane.f32.xlu0 %v630
        %v632 = vpop.xlane.xlu0 %631
        %v633 = vmax.f32 %v456, %v545
        %634 = vmax.xlane.f32.xlu0 %v633
        %v635 = vpop.xlane.xlu0 %634
        %v636 = vmax.f32 %v459, %v548
        %637 = vmax.xlane.f32.xlu0 %v636
        %v638 = vpop.xlane.xlu0 %637
        %v639 = vmax.f32 %v461, %v550
        %640 = vmax.xlane.f32.xlu0 %v639
        %v641 = vpop.xlane.xlu0 %640
        %v642 = vmax.f32 %v464, %v553
        %643 = vmax.xlane.f32.xlu0 %v642
        %v644 = vpop.xlane.xlu0 %643
        %v645 = vmax.f32 %v466, %v555
        %646 = vmax.xlane.f32.xlu0 %v645
        %v647 = vpop.xlane.xlu0 %646
        %v648 = vmax.f32 %v469, %v558
        %649 = vmax.xlane.f32.xlu0 %v648
        %v650 = vpop.xlane.xlu0 %649
        %v651 = vmax.f32 %v471, %v560
        %652 = vmax.xlane.f32.xlu0 %v651
        %v653 = vpop.xlane.xlu0 %652
        %v654 = vmax.f32 %v474, %v563
        %655 = vmax.xlane.f32.xlu0 %v654
        %v656 = vpop.xlane.xlu0 %655
        %v657 = vmax.f32 %v476, %v565
        %658 = vmax.xlane.f32.xlu0 %v657
        %v659 = vpop.xlane.xlu0 %658
        %v660 = vmax.f32 %v479, %v568
        %661 = vmax.xlane.f32.xlu0 %v660
        %v662 = vpop.xlane.xlu0 %661
        %v663 = vmax.f32 %v481, %v570
        %664 = vmax.xlane.f32.xlu0 %v663
        %v665 = vpop.xlane.xlu0 %664
        %v666 = vmax.f32 %v484, %v573
        %667 = vmax.xlane.f32.xlu0 %v666
        %v668 = vpop.xlane.xlu0 %667
        %v669 = vmax.f32 %v486, %v575
        %670 = vmax.xlane.f32.xlu0 %v669
        %v671 = vpop.xlane.xlu0 %670
        %v672 = vmax.f32 %v489, %v578
        %673 = vmax.xlane.f32.xlu0 %v672
        %v674 = vpop.xlane.xlu0 %673
        %v675 = vmax.f32 %v491, %v580
        %676 = vmax.xlane.f32.xlu0 %v675
        %v677 = vpop.xlane.xlu0 %676
        %v678 = vsub.f32 %v414, %v584
        %v679 = vsub.f32 %v503, %v584
        %v680 = vsub.f32 %v416, %v587
        %v681 = vsub.f32 %v505, %v587
        %v682 = vsub.f32 %v419, %v590
        %v683 = vsub.f32 %v508, %v590
        %v684 = vsub.f32 %v421, %v593
        %v685 = vsub.f32 %v510, %v593
        %v686 = vsub.f32 %v424, %v596
        %v687 = vsub.f32 %v513, %v596
        %v688 = vsub.f32 %v426, %v599
        %v689 = vsub.f32 %v515, %v599
        %v690 = vsub.f32 %v429, %v602
        %v691 = vsub.f32 %v518, %v602
        %v692 = vsub.f32 %v431, %v605
        %v693 = vsub.f32 %v520, %v605
        %v694 = vsub.f32 %v434, %v608
        %v695 = vsub.f32 %v523, %v608
        %v696 = vsub.f32 %v436, %v611
        %v697 = vsub.f32 %v525, %v611
        %v698 = vsub.f32 %v439, %v614
        %v699 = vsub.f32 %v528, %v614
        %v700 = vsub.f32 %v441, %v617
        %v701 = vsub.f32 %v530, %v617
        %v702 = vsub.f32 %v444, %v620
        %v703 = vsub.f32 %v533, %v620
        %v704 = vsub.f32 %v446, %v623
        %v705 = vsub.f32 %v535, %v623
        %v706 = vsub.f32 %v449, %v626
        %v707 = vsub.f32 %v538, %v626
        %v708 = vsub.f32 %v451, %v629
        %v709 = vsub.f32 %v540, %v629
        %v710 = vsub.f32 %v454, %v632
        %v711 = vsub.f32 %v543, %v632
        %v712 = vsub.f32 %v456, %v635
        %v713 = vsub.f32 %v545, %v635
        %v714 = vsub.f32 %v459, %v638
        %v715 = vsub.f32 %v548, %v638
        %v716 = vsub.f32 %v461, %v641
        %v717 = vsub.f32 %v550, %v641
        %v718 = vsub.f32 %v464, %v644
        %v719 = vsub.f32 %v553, %v644
        %v720 = vsub.f32 %v466, %v647
        %v721 = vsub.f32 %v555, %v647
        %v722 = vsub.f32 %v469, %v650
        %v723 = vsub.f32 %v558, %v650
        %v724 = vsub.f32 %v471, %v653
        %v725 = vsub.f32 %v560, %v653
        %v726 = vsub.f32 %v474, %v656
        %v727 = vsub.f32 %v563, %v656
        %v728 = vsub.f32 %v476, %v659
        %v729 = vsub.f32 %v565, %v659
        %v730 = vsub.f32 %v479, %v662
        %v731 = vsub.f32 %v568, %v662
        %v732 = vsub.f32 %v481, %v665
        %v733 = vsub.f32 %v570, %v665
        %v734 = vsub.f32 %v484, %v668
        %v735 = vsub.f32 %v573, %v668
        %v736 = vsub.f32 %v486, %v671
        %v737 = vsub.f32 %v575, %v671
        %v738 = vsub.f32 %v489, %v674
        %v739 = vsub.f32 %v578, %v674
        %v740 = vsub.f32 %v491, %v677
        %v741 = vsub.f32 %v580, %v677
        %v742 = vmul.f32 %v678, 1.442695
        %v743 = vpow.pop %v742
        %v744 = vmul.f32 %v679, 1.442695
        %v745 = vpow.pop %v744
        %v746 = vmul.f32 %v680, 1.442695
        %v747 = vpow.pop %v746
        %v748 = vmul.f32 %v681, 1.442695
        %v749 = vpow.pop %v748
        %v750 = vmul.f32 %v682, 1.442695
        %v751 = vpow.pop %v750
        %v752 = vmul.f32 %v683, 1.442695
        %v753 = vpow.pop %v752
        %v754 = vmul.f32 %v684, 1.442695
        %v755 = vpow.pop %v754
        %v756 = vmul.f32 %v685, 1.442695
        %v757 = vpow.pop %v756
        %v758 = vmul.f32 %v686, 1.442695
        %v759 = vpow.pop %v758
        %v760 = vmul.f32 %v687, 1.442695
        %v761 = vpow.pop %v760
        %v762 = vmul.f32 %v688, 1.442695
        %v763 = vpow.pop %v762
        %v764 = vmul.f32 %v689, 1.442695
        %v765 = vpow.pop %v764
        %v766 = vmul.f32 %v690, 1.442695
        %v767 = vpow.pop %v766
        %v768 = vmul.f32 %v691, 1.442695
        %v769 = vpow.pop %v768
        %v770 = vmul.f32 %v692, 1.442695
        %v771 = vpow.pop %v770
        %v772 = vmul.f32 %v693, 1.442695
        %v773 = vpow.pop %v772
        %v774 = vmul.f32 %v694, 1.442695
        %v775 = vpow.pop %v774
        %v776 = vmul.f32 %v695, 1.442695
        %v777 = vpow.pop %v776
        %v778 = vmul.f32 %v696, 1.442695
        %v779 = vpow.pop %v778
        %v780 = vmul.f32 %v697, 1.442695
        %v781 = vpow.pop %v780
        %v782 = vmul.f32 %v698, 1.442695
        %v783 = vpow.pop %v782
        %v784 = vmul.f32 %v699, 1.442695
        %v785 = vpow.pop %v784
        %v786 = vmul.f32 %v700, 1.442695
        %v787 = vpow.pop %v786
        %v788 = vmul.f32 %v701, 1.442695
        %v789 = vpow.pop %v788
        %v790 = vmul.f32 %v702, 1.442695
        %v791 = vpow.pop %v790
        %v792 = vmul.f32 %v703, 1.442695
        %v793 = vpow.pop %v792
        %v794 = vmul.f32 %v704, 1.442695
        %v795 = vpow.pop %v794
        %v796 = vmul.f32 %v705, 1.442695
        %v797 = vpow.pop %v796
        %v798 = vmul.f32 %v706, 1.442695
        %v799 = vpow.pop %v798
        %v800 = vmul.f32 %v707, 1.442695
        %v801 = vpow.pop %v800
        %v802 = vmul.f32 %v708, 1.442695
        %v803 = vpow.pop %v802
        %v804 = vmul.f32 %v709, 1.442695
        %v805 = vpow.pop %v804
        %v806 = vmul.f32 %v710, 1.442695
        %v807 = vpow.pop %v806
        %v808 = vmul.f32 %v711, 1.442695
        %v809 = vpow.pop %v808
        %v810 = vmul.f32 %v712, 1.442695
        %v811 = vpow.pop %v810
        %v812 = vmul.f32 %v713, 1.442695
        %v813 = vpow.pop %v812
        %v814 = vmul.f32 %v714, 1.442695
        %v815 = vpow.pop %v814
        %v816 = vmul.f32 %v715, 1.442695
        %v817 = vpow.pop %v816
        %v818 = vmul.f32 %v716, 1.442695
        %v819 = vpow.pop %v818
        %v820 = vmul.f32 %v717, 1.442695
        %v821 = vpow.pop %v820
        %v822 = vmul.f32 %v718, 1.442695
        %v823 = vpow.pop %v822
        %v824 = vmul.f32 %v719, 1.442695
        %v825 = vpow.pop %v824
        %v826 = vmul.f32 %v720, 1.442695
        %v827 = vpow.pop %v826
        %v828 = vmul.f32 %v721, 1.442695
        %v829 = vpow.pop %v828
        %v830 = vmul.f32 %v722, 1.442695
        %v831 = vpow.pop %v830
        %v832 = vmul.f32 %v723, 1.442695
        %v833 = vpow.pop %v832
        %v834 = vmul.f32 %v724, 1.442695
        %v835 = vpow.pop %v834
        %v836 = vmul.f32 %v725, 1.442695
        %v837 = vpow.pop %v836
        %v838 = vmul.f32 %v726, 1.442695
        %v839 = vpow.pop %v838
        %v840 = vmul.f32 %v727, 1.442695
        %v841 = vpow.pop %v840
        %v842 = vmul.f32 %v728, 1.442695
        %v843 = vpow.pop %v842
        %v844 = vmul.f32 %v729, 1.442695
        %v845 = vpow.pop %v844
        %v846 = vmul.f32 %v730, 1.442695
        %v847 = vpow.pop %v846
        %v848 = vmul.f32 %v731, 1.442695
        %v849 = vpow.pop %v848
        %v850 = vmul.f32 %v732, 1.442695
        %v851 = vpow.pop %v850
        %v852 = vmul.f32 %v733, 1.442695
        %v853 = vpow.pop %v852
        %v854 = vmul.f32 %v734, 1.442695
        %v855 = vpow.pop %v854
        %v856 = vmul.f32 %v735, 1.442695
        %v857 = vpow.pop %v856
        %v858 = vmul.f32 %v736, 1.442695
        %v859 = vpow.pop %v858
        %v860 = vmul.f32 %v737, 1.442695
        %v861 = vpow.pop %v860
        %v862 = vmul.f32 %v738, 1.442695
        %v863 = vpow.pop %v862
        %v864 = vmul.f32 %v739, 1.442695
        %v865 = vpow.pop %v864
        %v866 = vmul.f32 %v740, 1.442695
        %v867 = vpow.pop %v866
        %v868 = vmul.f32 %v741, 1.442695
        %v869 = vpow.pop %v868
        %v870 = vadd.f32 %v743, %v745
        %871 = vadd.xlane.f32.xlu0 %v870
        %v872 = vpop.xlane.xlu0 %871
        %v873 = vadd.f32 %v747, %v749
        %874 = vadd.xlane.f32.xlu0 %v873
        %v875 = vpop.xlane.xlu0 %874
        %v876 = vadd.f32 %v751, %v753
        %877 = vadd.xlane.f32.xlu0 %v876
        %v878 = vpop.xlane.xlu0 %877
        %v879 = vadd.f32 %v755, %v757
        %880 = vadd.xlane.f32.xlu0 %v879
        %v881 = vpop.xlane.xlu0 %880
        %v882 = vadd.f32 %v759, %v761
        %883 = vadd.xlane.f32.xlu0 %v882
        %v884 = vpop.xlane.xlu0 %883
        %v885 = vadd.f32 %v763, %v765
        %886 = vadd.xlane.f32.xlu0 %v885
        %v887 = vpop.xlane.xlu0 %886
        %v888 = vadd.f32 %v767, %v769
        %889 = vadd.xlane.f32.xlu0 %v888
        %v890 = vpop.xlane.xlu0 %889
        %v891 = vadd.f32 %v771, %v773
        %892 = vadd.xlane.f32.xlu0 %v891
        %v893 = vpop.xlane.xlu0 %892
        %v894 = vadd.f32 %v775, %v777
        %895 = vadd.xlane.f32.xlu0 %v894
        %v896 = vpop.xlane.xlu0 %895
        %v897 = vadd.f32 %v779, %v781
        %898 = vadd.xlane.f32.xlu0 %v897
        %v899 = vpop.xlane.xlu0 %898
        %v900 = vadd.f32 %v783, %v785
        %901 = vadd.xlane.f32.xlu0 %v900
        %v902 = vpop.xlane.xlu0 %901
        %v903 = vadd.f32 %v787, %v789
        %904 = vadd.xlane.f32.xlu0 %v903
        %v905 = vpop.xlane.xlu0 %904
        %v906 = vadd.f32 %v791, %v793
        %907 = vadd.xlane.f32.xlu0 %v906
        %v908 = vpop.xlane.xlu0 %907
        %v909 = vadd.f32 %v795, %v797
        %910 = vadd.xlane.f32.xlu0 %v909
        %v911 = vpop.xlane.xlu0 %910
        %v912 = vadd.f32 %v799, %v801
        %913 = vadd.xlane.f32.xlu0 %v912
        %v914 = vpop.xlane.xlu0 %913
        %v915 = vadd.f32 %v803, %v805
        %916 = vadd.xlane.f32.xlu0 %v915
        %v917 = vpop.xlane.xlu0 %916
        %v918 = vadd.f32 %v807, %v809
        %919 = vadd.xlane.f32.xlu0 %v918
        %v920 = vpop.xlane.xlu0 %919
        %v921 = vadd.f32 %v811, %v813
        %922 = vadd.xlane.f32.xlu0 %v921
        %v923 = vpop.xlane.xlu0 %922
        %v924 = vadd.f32 %v815, %v817
        %925 = vadd.xlane.f32.xlu0 %v924
        %v926 = vpop.xlane.xlu0 %925
        %v927 = vadd.f32 %v819, %v821
        %928 = vadd.xlane.f32.xlu0 %v927
        %v929 = vpop.xlane.xlu0 %928
        %v930 = vadd.f32 %v823, %v825
        %931 = vadd.xlane.f32.xlu0 %v930
        %v932 = vpop.xlane.xlu0 %931
        %v933 = vadd.f32 %v827, %v829
        %934 = vadd.xlane.f32.xlu0 %v933
        %v935 = vpop.xlane.xlu0 %934
        %v936 = vadd.f32 %v831, %v833
        %937 = vadd.xlane.f32.xlu0 %v936
        %v938 = vpop.xlane.xlu0 %937
        %v939 = vadd.f32 %v835, %v837
        %940 = vadd.xlane.f32.xlu0 %v939
        %v941 = vpop.xlane.xlu0 %940
        %v942 = vadd.f32 %v839, %v841
        %943 = vadd.xlane.f32.xlu0 %v942
        %v944 = vpop.xlane.xlu0 %943
        %v945 = vadd.f32 %v843, %v845
        %946 = vadd.xlane.f32.xlu0 %v945
        %v947 = vpop.xlane.xlu0 %946
        %v948 = vadd.f32 %v847, %v849
        %949 = vadd.xlane.f32.xlu0 %v948
        %v950 = vpop.xlane.xlu0 %949
        %v951 = vadd.f32 %v851, %v853
        %952 = vadd.xlane.f32.xlu0 %v951
        %v953 = vpop.xlane.xlu0 %952
        %v954 = vadd.f32 %v855, %v857
        %955 = vadd.xlane.f32.xlu0 %v954
        %v956 = vpop.xlane.xlu0 %955
        %v957 = vadd.f32 %v859, %v861
        %958 = vadd.xlane.f32.xlu0 %v957
        %v959 = vpop.xlane.xlu0 %958
        %v960 = vadd.f32 %v863, %v865
        %961 = vadd.xlane.f32.xlu0 %v960
        %v962 = vpop.xlane.xlu0 %961
        %v963 = vadd.f32 %v867, %v869
        %964 = vadd.xlane.f32.xlu0 %v963
        %v965 = vpop.xlane.xlu0 %964
        %v966 = vpack.c.bf16 %v747, %v743
        %v967 = vpack.c.bf16 %v749, %v745
        %v968 = vpack.c.bf16 %v755, %v751
        %v969 = vpack.c.bf16 %v757, %v753
        %v970 = vpack.c.bf16 %v763, %v759
        %v971 = vpack.c.bf16 %v765, %v761
        %v972 = vpack.c.bf16 %v771, %v767
        %v973 = vpack.c.bf16 %v773, %v769
        %v974 = vpack.c.bf16 %v779, %v775
        %v975 = vpack.c.bf16 %v781, %v777
        %v976 = vpack.c.bf16 %v787, %v783
        %v977 = vpack.c.bf16 %v789, %v785
        %v978 = vpack.c.bf16 %v795, %v791
        %v979 = vpack.c.bf16 %v797, %v793
        %v980 = vpack.c.bf16 %v803, %v799
        %v981 = vpack.c.bf16 %v805, %v801
        %v982 = vpack.c.bf16 %v811, %v807
        %v983 = vpack.c.bf16 %v813, %v809
        %v984 = vpack.c.bf16 %v819, %v815
        %v985 = vpack.c.bf16 %v821, %v817
        %v986 = vpack.c.bf16 %v827, %v823
        %v987 = vpack.c.bf16 %v829, %v825
        %v988 = vpack.c.bf16 %v835, %v831
        %v989 = vpack.c.bf16 %v837, %v833
        %v990 = vpack.c.bf16 %v843, %v839
        %v991 = vpack.c.bf16 %v845, %v841
        %v992 = vpack.c.bf16 %v851, %v847
        %v993 = vpack.c.bf16 %v853, %v849
        %v994 = vpack.c.bf16 %v859, %v855
        %v995 = vpack.c.bf16 %v861, %v857
        %v996 = vpack.c.bf16 %v867, %v863
        %v997 = vpack.c.bf16 %v869, %v865
        %998 = vmatpush.bf16.msra.mxu0 %v298
        %999 = vmatpush.bf16.msra.mxu0 %v297
        %1000 = vmatpush.bf16.msra.mxu0 %v296
        %1001 = vmatpush.bf16.msra.mxu0 %v295
        %1002 = vmatpush.bf16.msra.mxu0 %v294
        %1003 = vmatpush.bf16.msra.mxu0 %v293
        %1004 = vmatpush.bf16.msra.mxu0 %v292
        %1005 = vmatpush.bf16.msra.mxu0 %v291
        %1006 = vmatmul.bf16.gmra.mxu0 %v966
        %v1007 = vpop.f32.mrf.mxu0
        %v1008 = vadd.f32 0.0, %v1007
        %v1009 = vpop.f32.mrf.mxu0
        %v1010 = vadd.f32 0.0, %v1009
        %1011 = vmatmul.bf16.gmra.mxu0 %v968
        %v1012 = vpop.f32.mrf.mxu0
        %v1013 = vadd.f32 0.0, %v1012
        %v1014 = vpop.f32.mrf.mxu0
        %v1015 = vadd.f32 0.0, %v1014
        %1016 = vmatmul.bf16.gmra.mxu0 %v970
        %v1017 = vpop.f32.mrf.mxu0
        %v1018 = vadd.f32 0.0, %v1017
        %v1019 = vpop.f32.mrf.mxu0
        %v1020 = vadd.f32 0.0, %v1019
        %1021 = vmatmul.bf16.gmra.mxu0 %v972
        %v1022 = vpop.f32.mrf.mxu0
        %v1023 = vadd.f32 0.0, %v1022
        %v1024 = vpop.f32.mrf.mxu0
        %v1025 = vadd.f32 0.0, %v1024
        %1026 = vmatmul.bf16.gmra.mxu0 %v974
        %v1027 = vpop.f32.mrf.mxu0
        %v1028 = vadd.f32 0.0, %v1027
        %v1029 = vpop.f32.mrf.mxu0
        %v1030 = vadd.f32 0.0, %v1029
        %1031 = vmatmul.bf16.gmra.mxu0 %v976
        %v1032 = vpop.f32.mrf.mxu0
        %v1033 = vadd.f32 0.0, %v1032
        %v1034 = vpop.f32.mrf.mxu0
        %v1035 = vadd.f32 0.0, %v1034
        %1036 = vmatmul.bf16.gmra.mxu0 %v978
        %v1037 = vpop.f32.mrf.mxu0
        %v1038 = vadd.f32 0.0, %v1037
        %v1039 = vpop.f32.mrf.mxu0
        %v1040 = vadd.f32 0.0, %v1039
        %1041 = vmatmul.bf16.gmra.mxu0 %v980
        %v1042 = vpop.f32.mrf.mxu0
        %v1043 = vadd.f32 0.0, %v1042
        %v1044 = vpop.f32.mrf.mxu0
        %v1045 = vadd.f32 0.0, %v1044
        %1046 = vmatmul.bf16.gmra.mxu0 %v982
        %v1047 = vpop.f32.mrf.mxu0
        %v1048 = vadd.f32 0.0, %v1047
        %v1049 = vpop.f32.mrf.mxu0
        %v1050 = vadd.f32 0.0, %v1049
        %1051 = vmatmul.bf16.gmra.mxu0 %v984
        %v1052 = vpop.f32.mrf.mxu0
        %v1053 = vadd.f32 0.0, %v1052
        %v1054 = vpop.f32.mrf.mxu0
        %v1055 = vadd.f32 0.0, %v1054
        %1056 = vmatmul.bf16.gmra.mxu0 %v986
        %v1057 = vpop.f32.mrf.mxu0
        %v1058 = vadd.f32 0.0, %v1057
        %v1059 = vpop.f32.mrf.mxu0
        %v1060 = vadd.f32 0.0, %v1059
        %1061 = vmatmul.bf16.gmra.mxu0 %v988
        %v1062 = vpop.f32.mrf.mxu0
        %v1063 = vadd.f32 0.0, %v1062
        %v1064 = vpop.f32.mrf.mxu0
        %v1065 = vadd.f32 0.0, %v1064
        %1066 = vmatmul.bf16.gmra.mxu0 %v990
        %v1067 = vpop.f32.mrf.mxu0
        %v1068 = vadd.f32 0.0, %v1067
        %v1069 = vpop.f32.mrf.mxu0
        %v1070 = vadd.f32 0.0, %v1069
        %1071 = vmatmul.bf16.gmra.mxu0 %v992
        %v1072 = vpop.f32.mrf.mxu0
        %v1073 = vadd.f32 0.0, %v1072
        %v1074 = vpop.f32.mrf.mxu0
        %v1075 = vadd.f32 0.0, %v1074
        %1076 = vmatmul.bf16.gmra.mxu0 %v994
        %v1077 = vpop.f32.mrf.mxu0
        %v1078 = vadd.f32 0.0, %v1077
        %v1079 = vpop.f32.mrf.mxu0
        %v1080 = vadd.f32 0.0, %v1079
        %1081 = vmatmul.bf16.gmra.mxu0 %v996
        %v1082 = vpop.f32.mrf.mxu0
        %v1083 = vadd.f32 0.0, %v1082
        %v1084 = vpop.f32.mrf.mxu0
        %v1085 = vadd.f32 0.0, %v1084
        %1086 = vdwg.mxu0
        %1087 = vmatpush.bf16.msra.mxu0 %v306
        %1088 = vmatpush.bf16.msra.mxu0 %v305
        %1089 = vmatpush.bf16.msra.mxu0 %v304
        %1090 = vmatpush.bf16.msra.mxu0 %v303
        %1091 = vmatpush.bf16.msra.mxu0 %v302
        %1092 = vmatpush.bf16.msra.mxu0 %v301
        %1093 = vmatpush.bf16.msra.mxu0 %v300
        %1094 = vmatpush.bf16.msra.mxu0 %v299
        %1095 = vmatmul.bf16.gmra.mxu0 %v967
        %v1096 = vpop.f32.mrf.mxu0
        %v1097 = vadd.f32 %v1008, %v1096
        %v1098 = vpop.f32.mrf.mxu0
        %v1099 = vadd.f32 %v1010, %v1098
        %1100 = vmatmul.bf16.gmra.mxu0 %v969
        %v1101 = vpop.f32.mrf.mxu0
        %v1102 = vadd.f32 %v1013, %v1101
        %v1103 = vpop.f32.mrf.mxu0
        %v1104 = vadd.f32 %v1015, %v1103
        %1105 = vmatmul.bf16.gmra.mxu0 %v971
        %v1106 = vpop.f32.mrf.mxu0
        %v1107 = vadd.f32 %v1018, %v1106
        %v1108 = vpop.f32.mrf.mxu0
        %v1109 = vadd.f32 %v1020, %v1108
        %1110 = vmatmul.bf16.gmra.mxu0 %v973
        %v1111 = vpop.f32.mrf.mxu0
        %v1112 = vadd.f32 %v1023, %v1111
        %v1113 = vpop.f32.mrf.mxu0
        %v1114 = vadd.f32 %v1025, %v1113
        %1115 = vmatmul.bf16.gmra.mxu0 %v975
        %v1116 = vpop.f32.mrf.mxu0
        %v1117 = vadd.f32 %v1028, %v1116
        %v1118 = vpop.f32.mrf.mxu0
        %v1119 = vadd.f32 %v1030, %v1118
        %1120 = vmatmul.bf16.gmra.mxu0 %v977
        %v1121 = vpop.f32.mrf.mxu0
        %v1122 = vadd.f32 %v1033, %v1121
        %v1123 = vpop.f32.mrf.mxu0
        %v1124 = vadd.f32 %v1035, %v1123
        %1125 = vmatmul.bf16.gmra.mxu0 %v979
        %v1126 = vpop.f32.mrf.mxu0
        %v1127 = vadd.f32 %v1038, %v1126
        %v1128 = vpop.f32.mrf.mxu0
        %v1129 = vadd.f32 %v1040, %v1128
        %1130 = vmatmul.bf16.gmra.mxu0 %v981
        %v1131 = vpop.f32.mrf.mxu0
        %v1132 = vadd.f32 %v1043, %v1131
        %v1133 = vpop.f32.mrf.mxu0
        %v1134 = vadd.f32 %v1045, %v1133
        %1135 = vmatmul.bf16.gmra.mxu0 %v983
        %v1136 = vpop.f32.mrf.mxu0
        %v1137 = vadd.f32 %v1048, %v1136
        %v1138 = vpop.f32.mrf.mxu0
        %v1139 = vadd.f32 %v1050, %v1138
        %1140 = vmatmul.bf16.gmra.mxu0 %v985
        %v1141 = vpop.f32.mrf.mxu0
        %v1142 = vadd.f32 %v1053, %v1141
        %v1143 = vpop.f32.mrf.mxu0
        %v1144 = vadd.f32 %v1055, %v1143
        %1145 = vmatmul.bf16.gmra.mxu0 %v987
        %v1146 = vpop.f32.mrf.mxu0
        %v1147 = vadd.f32 %v1058, %v1146
        %v1148 = vpop.f32.mrf.mxu0
        %v1149 = vadd.f32 %v1060, %v1148
        %1150 = vmatmul.bf16.gmra.mxu0 %v989
        %v1151 = vpop.f32.mrf.mxu0
        %v1152 = vadd.f32 %v1063, %v1151
        %v1153 = vpop.f32.mrf.mxu0
        %v1154 = vadd.f32 %v1065, %v1153
        %1155 = vmatmul.bf16.gmra.mxu0 %v991
        %v1156 = vpop.f32.mrf.mxu0
        %v1157 = vadd.f32 %v1068, %v1156
        %v1158 = vpop.f32.mrf.mxu0
        %v1159 = vadd.f32 %v1070, %v1158
        %1160 = vmatmul.bf16.gmra.mxu0 %v993
        %v1161 = vpop.f32.mrf.mxu0
        %v1162 = vadd.f32 %v1073, %v1161
        %v1163 = vpop.f32.mrf.mxu0
        %v1164 = vadd.f32 %v1075, %v1163
        %1165 = vmatmul.bf16.gmra.mxu0 %v995
        %v1166 = vpop.f32.mrf.mxu0
        %v1167 = vadd.f32 %v1078, %v1166
        %v1168 = vpop.f32.mrf.mxu0
        %v1169 = vadd.f32 %v1080, %v1168
        %1170 = vmatmul.bf16.gmra.mxu0 %v997
        %v1171 = vpop.f32.mrf.mxu0
        %v1172 = vadd.f32 %v1083, %v1171
        %v1173 = vpop.f32.mrf.mxu0
        %v1174 = vadd.f32 %v1085, %v1173
        %1175 = vdwg.mxu0
        %v1176 = vrcp.pop %v872
        %v1177 = vrcp.pop %v875
        %v1178 = vrcp.pop %v878
        %v1179 = vrcp.pop %v881
        %v1180 = vrcp.pop %v884
        %v1181 = vrcp.pop %v887
        %v1182 = vrcp.pop %v890
        %v1183 = vrcp.pop %v893
        %v1184 = vrcp.pop %v896
        %v1185 = vrcp.pop %v899
        %v1186 = vrcp.pop %v902
        %v1187 = vrcp.pop %v905
        %v1188 = vrcp.pop %v908
        %v1189 = vrcp.pop %v911
        %v1190 = vrcp.pop %v914
        %v1191 = vrcp.pop %v917
        %v1192 = vrcp.pop %v920
        %v1193 = vrcp.pop %v923
        %v1194 = vrcp.pop %v926
        %v1195 = vrcp.pop %v929
        %v1196 = vrcp.pop %v932
        %v1197 = vrcp.pop %v935
        %v1198 = vrcp.pop %v938
        %v1199 = vrcp.pop %v941
        %v1200 = vrcp.pop %v944
        %v1201 = vrcp.pop %v947
        %v1202 = vrcp.pop %v950
        %v1203 = vrcp.pop %v953
        %v1204 = vrcp.pop %v956
        %v1205 = vrcp.pop %v959
        %v1206 = vrcp.pop %v962
        %v1207 = vrcp.pop %v965
        %v1208 = vmul.f32 %v1097, %v1176
        %v1209 = vmul.f32 %v1099, %v1177
        %v1210 = vmul.f32 %v1102, %v1178
        %v1211 = vmul.f32 %v1104, %v1179
        %v1212 = vmul.f32 %v1107, %v1180
        %v1213 = vmul.f32 %v1109, %v1181
        %v1214 = vmul.f32 %v1112, %v1182
        %v1215 = vmul.f32 %v1114, %v1183
        %v1216 = vmul.f32 %v1117, %v1184
        %v1217 = vmul.f32 %v1119, %v1185
        %v1218 = vmul.f32 %v1122, %v1186
        %v1219 = vmul.f32 %v1124, %v1187
        %v1220 = vmul.f32 %v1127, %v1188
        %v1221 = vmul.f32 %v1129, %v1189
        %v1222 = vmul.f32 %v1132, %v1190
        %v1223 = vmul.f32 %v1134, %v1191
        %v1224 = vmul.f32 %v1137, %v1192
        %v1225 = vmul.f32 %v1139, %v1193
        %v1226 = vmul.f32 %v1142, %v1194
        %v1227 = vmul.f32 %v1144, %v1195
        %v1228 = vmul.f32 %v1147, %v1196
        %v1229 = vmul.f32 %v1149, %v1197
        %v1230 = vmul.f32 %v1152, %v1198
        %v1231 = vmul.f32 %v1154, %v1199
        %v1232 = vmul.f32 %v1157, %v1200
        %v1233 = vmul.f32 %v1159, %v1201
        %v1234 = vmul.f32 %v1162, %v1202
        %v1235 = vmul.f32 %v1164, %v1203
        %v1236 = vmul.f32 %v1167, %v1204
        %v1237 = vmul.f32 %v1169, %v1205
        %v1238 = vmul.f32 %v1172, %v1206
        %v1239 = vmul.f32 %v1174, %v1207
        %1240 = vst.msk [vmem:[#allocation2] sm:$0xff] %vm307, %v1208
        %1241 = vst.msk [vmem:[#allocation2 + $0x8] sm:$0xff] %vm307, %v1209
        %1242 = vst.msk [vmem:[#allocation2 + $0x10] sm:$0xff] %vm307, %v1210
        %1243 = vst.msk [vmem:[#allocation2 + $0x18] sm:$0xff] %vm307, %v1211
        %1244 = vst.msk [vmem:[#allocation2 + $0x20] sm:$0xff] %vm307, %v1212
        %1245 = vst.msk [vmem:[#allocation2 + $0x28] sm:$0xff] %vm307, %v1213
        %1246 = vst.msk [vmem:[#allocation2 + $0x30] sm:$0xff] %vm307, %v1214
        %1247 = vst.msk [vmem:[#allocation2 + $0x38] sm:$0xff] %vm307, %v1215
        %1248 = vst.msk [vmem:[#allocation2 + $0x40] sm:$0xff] %vm307, %v1216
        %1249 = vst.msk [vmem:[#allocation2 + $0x48] sm:$0xff] %vm307, %v1217
        %1250 = vst.msk [vmem:[#allocation2 + $0x50] sm:$0xff] %vm307, %v1218
        %1251 = vst.msk [vmem:[#allocation2 + $0x58] sm:$0xff] %vm307, %v1219
        %1252 = vst.msk [vmem:[#allocation2 + $0x60] sm:$0xff] %vm307, %v1220
        %1253 = vst.msk [vmem:[#allocation2 + $0x68] sm:$0xff] %vm307, %v1221
        %1254 = vst.msk [vmem:[#allocation2 + $0x70] sm:$0xff] %vm307, %v1222
        %1255 = vst.msk [vmem:[#allocation2 + $0x78] sm:$0xff] %vm307, %v1223
        %1256 = vst.msk [vmem:[#allocation2 + $0x80] sm:$0xff] %vm307, %v1224
        %1257 = vst.msk [vmem:[#allocation2 + $0x88] sm:$0xff] %vm307, %v1225
        %1258 = vst.msk [vmem:[#allocation2 + $0x90] sm:$0xff] %vm307, %v1226
        %1259 = vst.msk [vmem:[#allocation2 + $0x98] sm:$0xff] %vm307, %v1227
        %1260 = vst.msk [vmem:[#allocation2 + $0xa0] sm:$0xff] %vm307, %v1228
        %1261 = vst.msk [vmem:[#allocation2 + $0xa8] sm:$0xff] %vm307, %v1229
        %1262 = vst.msk [vmem:[#allocation2 + $0xb0] sm:$0xff] %vm307, %v1230
        %1263 = vst.msk [vmem:[#allocation2 + $0xb8] sm:$0xff] %vm307, %v1231
        %1264 = vst.msk [vmem:[#allocation2 + $0xc0] sm:$0xff] %vm307, %v1232
        %1265 = vst.msk [vmem:[#allocation2 + $0xc8] sm:$0xff] %vm307, %v1233
        %1266 = vst.msk [vmem:[#allocation2 + $0xd0] sm:$0xff] %vm307, %v1234
        %1267 = vst.msk [vmem:[#allocation2 + $0xd8] sm:$0xff] %vm307, %v1235
        %1268 = vst.msk [vmem:[#allocation2 + $0xe0] sm:$0xff] %vm307, %v1236
        %1269 = vst.msk [vmem:[#allocation2 + $0xe8] sm:$0xff] %vm307, %v1237
        %1270 = vst.msk [vmem:[#allocation2 + $0xf0] sm:$0xff] %vm307, %v1238
        %1271 = vst.msk [vmem:[#allocation2 + $0xf8] sm:$0xff] %vm307, %v1239
        %v1272 = vld [vmem:[%s185] sm:$0xff]
        %v1273 = vld [vmem:[%s185 + $0x8] sm:$0xff]
        %v1274 = vld [vmem:[%s185 + $0x10] sm:$0xff]
        %v1275 = vld [vmem:[%s185 + $0x18] sm:$0xff]
        %v1276 = vld [vmem:[%s185 + $0x20] sm:$0xff]
        %v1277 = vld [vmem:[%s185 + $0x28] sm:$0xff]
        %v1278 = vld [vmem:[%s185 + $0x30] sm:$0xff]
        %v1279 = vld [vmem:[%s185 + $0x38] sm:$0xff]
        %v1280 = vld [vmem:[%s185 + $0x40] sm:$0xff]
        %v1281 = vld [vmem:[%s185 + $0x48] sm:$0xff]
        %v1282 = vld [vmem:[%s185 + $0x50] sm:$0xff]
        %v1283 = vld [vmem:[%s185 + $0x58] sm:$0xff]
        %v1284 = vld [vmem:[%s185 + $0x60] sm:$0xff]
        %v1285 = vld [vmem:[%s185 + $0x68] sm:$0xff]
        %v1286 = vld [vmem:[%s185 + $0x70] sm:$0xff]
        %v1287 = vld [vmem:[%s185 + $0x78] sm:$0xff]
        %v1288 = vld [vmem:[%s185 + $0x80] sm:$0xff]
        %v1289 = vld [vmem:[%s185 + $0x88] sm:$0xff]
        %v1290 = vld [vmem:[%s185 + $0x90] sm:$0xff]
        %v1291 = vld [vmem:[%s185 + $0x98] sm:$0xff]
        %v1292 = vld [vmem:[%s185 + $0xa0] sm:$0xff]
        %v1293 = vld [vmem:[%s185 + $0xa8] sm:$0xff]
        %v1294 = vld [vmem:[%s185 + $0xb0] sm:$0xff]
        %v1295 = vld [vmem:[%s185 + $0xb8] sm:$0xff]
        %v1296 = vld [vmem:[%s185 + $0xc0] sm:$0xff]
        %v1297 = vld [vmem:[%s185 + $0xc8] sm:$0xff]
        %v1298 = vld [vmem:[%s185 + $0xd0] sm:$0xff]
        %v1299 = vld [vmem:[%s185 + $0xd8] sm:$0xff]
        %v1300 = vld [vmem:[%s185 + $0xe0] sm:$0xff]
        %v1301 = vld [vmem:[%s185 + $0xe8] sm:$0xff]
        %v1302 = vld [vmem:[%s185 + $0xf0] sm:$0xff]
        %v1303 = vld [vmem:[%s185 + $0xf8] sm:$0xff]
        %v1304 = vmul.f32 %v1272, 0.25
        %v1305 = vmul.f32 %v1273, 0.25
        %v1306 = vmul.f32 %v1274, 0.25
        %v1307 = vmul.f32 %v1275, 0.25
        %v1308 = vmul.f32 %v1276, 0.25
        %v1309 = vmul.f32 %v1277, 0.25
        %v1310 = vmul.f32 %v1278, 0.25
        %v1311 = vmul.f32 %v1279, 0.25
        %v1312 = vmul.f32 %v1280, 0.25
        %v1313 = vmul.f32 %v1281, 0.25
        %v1314 = vmul.f32 %v1282, 0.25
        %v1315 = vmul.f32 %v1283, 0.25
        %v1316 = vmul.f32 %v1284, 0.25
        %v1317 = vmul.f32 %v1285, 0.25
        %v1318 = vmul.f32 %v1286, 0.25
        %v1319 = vmul.f32 %v1287, 0.25
        %v1320 = vmul.f32 %v1288, 0.25
        %v1321 = vmul.f32 %v1289, 0.25
        %v1322 = vmul.f32 %v1290, 0.25
        %v1323 = vmul.f32 %v1291, 0.25
        %v1324 = vmul.f32 %v1292, 0.25
        %v1325 = vmul.f32 %v1293, 0.25
        %v1326 = vmul.f32 %v1294, 0.25
        %v1327 = vmul.f32 %v1295, 0.25
        %v1328 = vmul.f32 %v1296, 0.25
        %v1329 = vmul.f32 %v1297, 0.25
        %v1330 = vmul.f32 %v1298, 0.25
        %v1331 = vmul.f32 %v1299, 0.25
        %v1332 = vmul.f32 %v1300, 0.25
        %v1333 = vmul.f32 %v1301, 0.25
        %v1334 = vmul.f32 %v1302, 0.25
        %v1335 = vmul.f32 %v1303, 0.25
        %v1336 = vpack.c.bf16 %v1305, %v1304
        %v1337 = vpack.c.bf16 %v1307, %v1306
        %v1338 = vpack.c.bf16 %v1309, %v1308
        %v1339 = vpack.c.bf16 %v1311, %v1310
        %v1340 = vpack.c.bf16 %v1313, %v1312
        %v1341 = vpack.c.bf16 %v1315, %v1314
        %v1342 = vpack.c.bf16 %v1317, %v1316
        %v1343 = vpack.c.bf16 %v1319, %v1318
        %v1344 = vpack.c.bf16 %v1321, %v1320
        %v1345 = vpack.c.bf16 %v1323, %v1322
        %v1346 = vpack.c.bf16 %v1325, %v1324
        %v1347 = vpack.c.bf16 %v1327, %v1326
        %v1348 = vpack.c.bf16 %v1329, %v1328
        %v1349 = vpack.c.bf16 %v1331, %v1330
        %v1350 = vpack.c.bf16 %v1333, %v1332
        %v1351 = vpack.c.bf16 %v1335, %v1334
        %v1352 = vpack.c.bf16 %v1273, %v1272
        %v1353 = vpack.c.bf16 %v1275, %v1274
        %v1354 = vpack.c.bf16 %v1277, %v1276
        %v1355 = vpack.c.bf16 %v1279, %v1278
        %v1356 = vpack.c.bf16 %v1281, %v1280
        %v1357 = vpack.c.bf16 %v1283, %v1282
        %v1358 = vpack.c.bf16 %v1285, %v1284
        %v1359 = vpack.c.bf16 %v1287, %v1286
        %v1360 = vpack.c.bf16 %v1289, %v1288
        %v1361 = vpack.c.bf16 %v1291, %v1290
        %v1362 = vpack.c.bf16 %v1293, %v1292
        %v1363 = vpack.c.bf16 %v1295, %v1294
        %v1364 = vpack.c.bf16 %v1297, %v1296
        %v1365 = vpack.c.bf16 %v1299, %v1298
        %v1366 = vpack.c.bf16 %v1301, %v1300
        %v1367 = vpack.c.bf16 %v1303, %v1302
        %1384 = vrot.lane.b32.xlu0 %v1336, 112
        %v1385 = vpop.permute.xlu0 %1384
        %1386 = vrot.lane.b32.xlu0 %v1337, 112
        %v1387 = vpop.permute.xlu0 %1386
        %1388 = vrot.lane.b32.xlu0 %v1338, 112
        %v1389 = vpop.permute.xlu0 %1388
        %1390 = vrot.lane.b32.xlu0 %v1339, 112
        %v1391 = vpop.permute.xlu0 %1390
        %1392 = vrot.lane.b32.xlu0 %v1340, 112
        %v1393 = vpop.permute.xlu0 %1392
        %1394 = vrot.lane.b32.xlu0 %v1341, 112
        %v1395 = vpop.permute.xlu0 %1394
        %1396 = vrot.lane.b32.xlu0 %v1342, 112
        %v1397 = vpop.permute.xlu0 %1396
        %1398 = vrot.lane.b32.xlu0 %v1343, 112
        %v1399 = vpop.permute.xlu0 %1398
        %1400 = vrot.lane.b32.xlu0 %v1344, 112
        %v1401 = vpop.permute.xlu0 %1400
        %1402 = vrot.lane.b32.xlu0 %v1345, 112
        %v1403 = vpop.permute.xlu0 %1402
        %1404 = vrot.lane.b32.xlu0 %v1346, 112
        %v1405 = vpop.permute.xlu0 %1404
        %1406 = vrot.lane.b32.xlu0 %v1347, 112
        %v1407 = vpop.permute.xlu0 %1406
        %1408 = vrot.lane.b32.xlu0 %v1348, 112
        %v1409 = vpop.permute.xlu0 %1408
        %1410 = vrot.lane.b32.xlu0 %v1349, 112
        %v1411 = vpop.permute.xlu0 %1410
        %1412 = vrot.lane.b32.xlu0 %v1350, 112
        %v1413 = vpop.permute.xlu0 %1412
        %1414 = vrot.lane.b32.xlu0 %v1351, 112
        %v1415 = vpop.permute.xlu0 %1414
        %1432 = vrot.lane.b32.xlu0 %v1352, 112
        %v1433 = vpop.permute.xlu0 %1432
        %1434 = vrot.lane.b32.xlu0 %v1353, 112
        %v1435 = vpop.permute.xlu0 %1434
        %1436 = vrot.lane.b32.xlu0 %v1354, 112
        %v1437 = vpop.permute.xlu0 %1436
        %1438 = vrot.lane.b32.xlu0 %v1355, 112
        %v1439 = vpop.permute.xlu0 %1438
        %1440 = vrot.lane.b32.xlu0 %v1356, 112
        %v1441 = vpop.permute.xlu0 %1440
        %1442 = vrot.lane.b32.xlu0 %v1357, 112
        %v1443 = vpop.permute.xlu0 %1442
        %1444 = vrot.lane.b32.xlu0 %v1358, 112
        %v1445 = vpop.permute.xlu0 %1444
        %1446 = vrot.lane.b32.xlu0 %v1359, 112
        %v1447 = vpop.permute.xlu0 %1446
        %1448 = vrot.lane.b32.xlu0 %v1360, 112
        %v1449 = vpop.permute.xlu0 %1448
        %1450 = vrot.lane.b32.xlu0 %v1361, 112
        %v1451 = vpop.permute.xlu0 %1450
        %1452 = vrot.lane.b32.xlu0 %v1362, 112
        %v1453 = vpop.permute.xlu0 %1452
        %1454 = vrot.lane.b32.xlu0 %v1363, 112
        %v1455 = vpop.permute.xlu0 %1454
        %1456 = vrot.lane.b32.xlu0 %v1364, 112
        %v1457 = vpop.permute.xlu0 %1456
        %1458 = vrot.lane.b32.xlu0 %v1365, 112
        %v1459 = vpop.permute.xlu0 %1458
        %1460 = vrot.lane.b32.xlu0 %v1366, 112
        %v1461 = vpop.permute.xlu0 %1460
        %1462 = vrot.lane.b32.xlu0 %v1367, 112
        %v1463 = vpop.permute.xlu0 %1462
        %v1465 = vsel %vm307, %v1385, 0
        %v1468 = vsel %vm307, %v1387, 0
        %v1471 = vsel %vm307, %v1389, 0
        %v1474 = vsel %vm307, %v1391, 0
        %v1477 = vsel %vm307, %v1393, 0
        %v1480 = vsel %vm307, %v1395, 0
        %v1483 = vsel %vm307, %v1397, 0
        %v1486 = vsel %vm307, %v1399, 0
        %v1489 = vsel %vm307, %v1401, 0
        %v1492 = vsel %vm307, %v1403, 0
        %v1495 = vsel %vm307, %v1405, 0
        %v1498 = vsel %vm307, %v1407, 0
        %v1501 = vsel %vm307, %v1409, 0
        %v1504 = vsel %vm307, %v1411, 0
        %v1507 = vsel %vm307, %v1413, 0
        %v1510 = vsel %vm307, %v1415, 0
        %v1513 = vsel %vm307, %v1433, 0
        %v1516 = vsel %vm307, %v1435, 0
        %v1519 = vsel %vm307, %v1437, 0
        %v1522 = vsel %vm307, %v1439, 0
        %v1525 = vsel %vm307, %v1441, 0
        %v1528 = vsel %vm307, %v1443, 0
        %v1531 = vsel %vm307, %v1445, 0
        %v1534 = vsel %vm307, %v1447, 0
        %v1537 = vsel %vm307, %v1449, 0
        %v1540 = vsel %vm307, %v1451, 0
        %v1543 = vsel %vm307, %v1453, 0
        %v1546 = vsel %vm307, %v1455, 0
        %v1549 = vsel %vm307, %v1457, 0
        %v1552 = vsel %vm307, %v1459, 0
        %v1555 = vsel %vm307, %v1461, 0
        %v1558 = vsel %vm307, %v1463, 0
        %1560 = vmatpush.bf16.xpose.msra.mxu0 %v1534
        %1561 = vmatpush.bf16.xpose.msra.mxu0 %v1531
        %1562 = vmatpush.bf16.xpose.msra.mxu0 %v1528
        %1563 = vmatpush.bf16.xpose.msra.mxu0 %v1525
        %1564 = vmatpush.bf16.xpose.msra.mxu0 %v1522
        %1565 = vmatpush.bf16.xpose.msra.mxu0 %v1519
        %1566 = vmatpush.bf16.xpose.msra.mxu0 %v1516
        %1567 = vmatpush.bf16.xpose.msra.mxu0 %v1513
        %1568 = vmatmul.bf16.gmra.mxu0 %v1465
        %v1569 = vpop.f32.mrf.mxu0
        %v1570 = vadd.f32 0.0, %v1569
        %v1571 = vpop.f32.mrf.mxu0
        %v1572 = vadd.f32 0.0, %v1571
        %1573 = vmatmul.bf16.gmra.mxu0 %v1468
        %v1574 = vpop.f32.mrf.mxu0
        %v1575 = vadd.f32 0.0, %v1574
        %v1576 = vpop.f32.mrf.mxu0
        %v1577 = vadd.f32 0.0, %v1576
        %1578 = vmatmul.bf16.gmra.mxu0 %v1471
        %v1579 = vpop.f32.mrf.mxu0
        %v1580 = vadd.f32 0.0, %v1579
        %v1581 = vpop.f32.mrf.mxu0
        %v1582 = vadd.f32 0.0, %v1581
        %1583 = vmatmul.bf16.gmra.mxu0 %v1474
        %v1584 = vpop.f32.mrf.mxu0
        %v1585 = vadd.f32 0.0, %v1584
        %v1586 = vpop.f32.mrf.mxu0
        %v1587 = vadd.f32 0.0, %v1586
        %1588 = vmatmul.bf16.gmra.mxu0 %v1477
        %v1589 = vpop.f32.mrf.mxu0
        %v1590 = vadd.f32 0.0, %v1589
        %v1591 = vpop.f32.mrf.mxu0
        %v1592 = vadd.f32 0.0, %v1591
        %1593 = vmatmul.bf16.gmra.mxu0 %v1480
        %v1594 = vpop.f32.mrf.mxu0
        %v1595 = vadd.f32 0.0, %v1594
        %v1596 = vpop.f32.mrf.mxu0
        %v1597 = vadd.f32 0.0, %v1596
        %1598 = vmatmul.bf16.gmra.mxu0 %v1483
        %v1599 = vpop.f32.mrf.mxu0
        %v1600 = vadd.f32 0.0, %v1599
        %v1601 = vpop.f32.mrf.mxu0
        %v1602 = vadd.f32 0.0, %v1601
        %1603 = vmatmul.bf16.gmra.mxu0 %v1486
        %v1604 = vpop.f32.mrf.mxu0
        %v1605 = vadd.f32 0.0, %v1604
        %v1606 = vpop.f32.mrf.mxu0
        %v1607 = vadd.f32 0.0, %v1606
        %1608 = vmatmul.bf16.gmra.mxu0 %v1489
        %v1609 = vpop.f32.mrf.mxu0
        %v1610 = vadd.f32 0.0, %v1609
        %v1611 = vpop.f32.mrf.mxu0
        %v1612 = vadd.f32 0.0, %v1611
        %1613 = vmatmul.bf16.gmra.mxu0 %v1492
        %v1614 = vpop.f32.mrf.mxu0
        %v1615 = vadd.f32 0.0, %v1614
        %v1616 = vpop.f32.mrf.mxu0
        %v1617 = vadd.f32 0.0, %v1616
        %1618 = vmatmul.bf16.gmra.mxu0 %v1495
        %v1619 = vpop.f32.mrf.mxu0
        %v1620 = vadd.f32 0.0, %v1619
        %v1621 = vpop.f32.mrf.mxu0
        %v1622 = vadd.f32 0.0, %v1621
        %1623 = vmatmul.bf16.gmra.mxu0 %v1498
        %v1624 = vpop.f32.mrf.mxu0
        %v1625 = vadd.f32 0.0, %v1624
        %v1626 = vpop.f32.mrf.mxu0
        %v1627 = vadd.f32 0.0, %v1626
        %1628 = vmatmul.bf16.gmra.mxu0 %v1501
        %v1629 = vpop.f32.mrf.mxu0
        %v1630 = vadd.f32 0.0, %v1629
        %v1631 = vpop.f32.mrf.mxu0
        %v1632 = vadd.f32 0.0, %v1631
        %1633 = vmatmul.bf16.gmra.mxu0 %v1504
        %v1634 = vpop.f32.mrf.mxu0
        %v1635 = vadd.f32 0.0, %v1634
        %v1636 = vpop.f32.mrf.mxu0
        %v1637 = vadd.f32 0.0, %v1636
        %1638 = vmatmul.bf16.gmra.mxu0 %v1507
        %v1639 = vpop.f32.mrf.mxu0
        %v1640 = vadd.f32 0.0, %v1639
        %v1641 = vpop.f32.mrf.mxu0
        %v1642 = vadd.f32 0.0, %v1641
        %1643 = vmatmul.bf16.gmra.mxu0 %v1510
        %v1644 = vpop.f32.mrf.mxu0
        %v1645 = vadd.f32 0.0, %v1644
        %v1646 = vpop.f32.mrf.mxu0
        %v1647 = vadd.f32 0.0, %v1646
        %1648 = vdwg.mxu0
        %1649 = vmatpush.bf16.xpose.msra.mxu0 %v1558
        %1650 = vmatpush.bf16.xpose.msra.mxu0 %v1555
        %1651 = vmatpush.bf16.xpose.msra.mxu0 %v1552
        %1652 = vmatpush.bf16.xpose.msra.mxu0 %v1549
        %1653 = vmatpush.bf16.xpose.msra.mxu0 %v1546
        %1654 = vmatpush.bf16.xpose.msra.mxu0 %v1543
        %1655 = vmatpush.bf16.xpose.msra.mxu0 %v1540
        %1656 = vmatpush.bf16.xpose.msra.mxu0 %v1537
        %1657 = vmatmul.bf16.gmra.mxu0 %v1465
        %v1658 = vpop.f32.mrf.mxu0
        %v1659 = vadd.f32 0.0, %v1658
        %v1660 = vpop.f32.mrf.mxu0
        %v1661 = vadd.f32 0.0, %v1660
        %1662 = vmatmul.bf16.gmra.mxu0 %v1468
        %v1663 = vpop.f32.mrf.mxu0
        %v1664 = vadd.f32 0.0, %v1663
        %v1665 = vpop.f32.mrf.mxu0
        %v1666 = vadd.f32 0.0, %v1665
        %1667 = vmatmul.bf16.gmra.mxu0 %v1471
        %v1668 = vpop.f32.mrf.mxu0
        %v1669 = vadd.f32 0.0, %v1668
        %v1670 = vpop.f32.mrf.mxu0
        %v1671 = vadd.f32 0.0, %v1670
        %1672 = vmatmul.bf16.gmra.mxu0 %v1474
        %v1673 = vpop.f32.mrf.mxu0
        %v1674 = vadd.f32 0.0, %v1673
        %v1675 = vpop.f32.mrf.mxu0
        %v1676 = vadd.f32 0.0, %v1675
        %1677 = vmatmul.bf16.gmra.mxu0 %v1477
        %v1678 = vpop.f32.mrf.mxu0
        %v1679 = vadd.f32 0.0, %v1678
        %v1680 = vpop.f32.mrf.mxu0
        %v1681 = vadd.f32 0.0, %v1680
        %1682 = vmatmul.bf16.gmra.mxu0 %v1480
        %v1683 = vpop.f32.mrf.mxu0
        %v1684 = vadd.f32 0.0, %v1683
        %v1685 = vpop.f32.mrf.mxu0
        %v1686 = vadd.f32 0.0, %v1685
        %1687 = vmatmul.bf16.gmra.mxu0 %v1483
        %v1688 = vpop.f32.mrf.mxu0
        %v1689 = vadd.f32 0.0, %v1688
        %v1690 = vpop.f32.mrf.mxu0
        %v1691 = vadd.f32 0.0, %v1690
        %1692 = vmatmul.bf16.gmra.mxu0 %v1486
        %v1693 = vpop.f32.mrf.mxu0
        %v1694 = vadd.f32 0.0, %v1693
        %v1695 = vpop.f32.mrf.mxu0
        %v1696 = vadd.f32 0.0, %v1695
        %1697 = vmatmul.bf16.gmra.mxu0 %v1489
        %v1698 = vpop.f32.mrf.mxu0
        %v1699 = vadd.f32 0.0, %v1698
        %v1700 = vpop.f32.mrf.mxu0
        %v1701 = vadd.f32 0.0, %v1700
        %1702 = vmatmul.bf16.gmra.mxu0 %v1492
        %v1703 = vpop.f32.mrf.mxu0
        %v1704 = vadd.f32 0.0, %v1703
        %v1705 = vpop.f32.mrf.mxu0
        %v1706 = vadd.f32 0.0, %v1705
        %1707 = vmatmul.bf16.gmra.mxu0 %v1495
        %v1708 = vpop.f32.mrf.mxu0
        %v1709 = vadd.f32 0.0, %v1708
        %v1710 = vpop.f32.mrf.mxu0
        %v1711 = vadd.f32 0.0, %v1710
        %1712 = vmatmul.bf16.gmra.mxu0 %v1498
        %v1713 = vpop.f32.mrf.mxu0
        %v1714 = vadd.f32 0.0, %v1713
        %v1715 = vpop.f32.mrf.mxu0
        %v1716 = vadd.f32 0.0, %v1715
        %1717 = vmatmul.bf16.gmra.mxu0 %v1501
        %v1718 = vpop.f32.mrf.mxu0
        %v1719 = vadd.f32 0.0, %v1718
        %v1720 = vpop.f32.mrf.mxu0
        %v1721 = vadd.f32 0.0, %v1720
        %1722 = vmatmul.bf16.gmra.mxu0 %v1504
        %v1723 = vpop.f32.mrf.mxu0
        %v1724 = vadd.f32 0.0, %v1723
        %v1725 = vpop.f32.mrf.mxu0
        %v1726 = vadd.f32 0.0, %v1725
        %1727 = vmatmul.bf16.gmra.mxu0 %v1507
        %v1728 = vpop.f32.mrf.mxu0
        %v1729 = vadd.f32 0.0, %v1728
        %v1730 = vpop.f32.mrf.mxu0
        %v1731 = vadd.f32 0.0, %v1730
        %1732 = vmatmul.bf16.gmra.mxu0 %v1510
        %v1733 = vpop.f32.mrf.mxu0
        %v1734 = vadd.f32 0.0, %v1733
        %v1735 = vpop.f32.mrf.mxu0
        %v1736 = vadd.f32 0.0, %v1735
        %1737 = vdwg.mxu0
        %v1738 = vmax.f32 %v1570, %v1659
        %1739 = vmax.xlane.f32.xlu0 %v1738
        %v1740 = vpop.xlane.xlu0 %1739
        %v1741 = vmax.f32 %v1572, %v1661
        %1742 = vmax.xlane.f32.xlu0 %v1741
        %v1743 = vpop.xlane.xlu0 %1742
        %v1744 = vmax.f32 %v1575, %v1664
        %1745 = vmax.xlane.f32.xlu0 %v1744
        %v1746 = vpop.xlane.xlu0 %1745
        %v1747 = vmax.f32 %v1577, %v1666
        %1748 = vmax.xlane.f32.xlu0 %v1747
        %v1749 = vpop.xlane.xlu0 %1748
        %v1750 = vmax.f32 %v1580, %v1669
        %1751 = vmax.xlane.f32.xlu0 %v1750
        %v1752 = vpop.xlane.xlu0 %1751
        %v1753 = vmax.f32 %v1582, %v1671
        %1754 = vmax.xlane.f32.xlu0 %v1753
        %v1755 = vpop.xlane.xlu0 %1754
        %v1756 = vmax.f32 %v1585, %v1674
        %1757 = vmax.xlane.f32.xlu0 %v1756
        %v1758 = vpop.xlane.xlu0 %1757
        %v1759 = vmax.f32 %v1587, %v1676
        %1760 = vmax.xlane.f32.xlu0 %v1759
        %v1761 = vpop.xlane.xlu0 %1760
        %v1762 = vmax.f32 %v1590, %v1679
        %1763 = vmax.xlane.f32.xlu0 %v1762
        %v1764 = vpop.xlane.xlu0 %1763
        %v1765 = vmax.f32 %v1592, %v1681
        %1766 = vmax.xlane.f32.xlu0 %v1765
        %v1767 = vpop.xlane.xlu0 %1766
        %v1768 = vmax.f32 %v1595, %v1684
        %1769 = vmax.xlane.f32.xlu0 %v1768
        %v1770 = vpop.xlane.xlu0 %1769
        %v1771 = vmax.f32 %v1597, %v1686
        %1772 = vmax.xlane.f32.xlu0 %v1771
        %v1773 = vpop.xlane.xlu0 %1772
        %v1774 = vmax.f32 %v1600, %v1689
        %1775 = vmax.xlane.f32.xlu0 %v1774
        %v1776 = vpop.xlane.xlu0 %1775
        %v1777 = vmax.f32 %v1602, %v1691
        %1778 = vmax.xlane.f32.xlu0 %v1777
        %v1779 = vpop.xlane.xlu0 %1778
        %v1780 = vmax.f32 %v1605, %v1694
        %1781 = vmax.xlane.f32.xlu0 %v1780
        %v1782 = vpop.xlane.xlu0 %1781
        %v1783 = vmax.f32 %v1607, %v1696
        %1784 = vmax.xlane.f32.xlu0 %v1783
        %v1785 = vpop.xlane.xlu0 %1784
        %v1786 = vmax.f32 %v1610, %v1699
        %1787 = vmax.xlane.f32.xlu0 %v1786
        %v1788 = vpop.xlane.xlu0 %1787
        %v1789 = vmax.f32 %v1612, %v1701
        %1790 = vmax.xlane.f32.xlu0 %v1789
        %v1791 = vpop.xlane.xlu0 %1790
        %v1792 = vmax.f32 %v1615, %v1704
        %1793 = vmax.xlane.f32.xlu0 %v1792
        %v1794 = vpop.xlane.xlu0 %1793
        %v1795 = vmax.f32 %v1617, %v1706
        %1796 = vmax.xlane.f32.xlu0 %v1795
        %v1797 = vpop.xlane.xlu0 %1796
        %v1798 = vmax.f32 %v1620, %v1709
        %1799 = vmax.xlane.f32.xlu0 %v1798
        %v1800 = vpop.xlane.xlu0 %1799
        %v1801 = vmax.f32 %v1622, %v1711
        %1802 = vmax.xlane.f32.xlu0 %v1801
        %v1803 = vpop.xlane.xlu0 %1802
        %v1804 = vmax.f32 %v1625, %v1714
        %1805 = vmax.xlane.f32.xlu0 %v1804
        %v1806 = vpop.xlane.xlu0 %1805
        %v1807 = vmax.f32 %v1627, %v1716
        %1808 = vmax.xlane.f32.xlu0 %v1807
        %v1809 = vpop.xlane.xlu0 %1808
        %v1810 = vmax.f32 %v1630, %v1719
        %1811 = vmax.xlane.f32.xlu0 %v1810
        %v1812 = vpop.xlane.xlu0 %1811
        %v1813 = vmax.f32 %v1632, %v1721
        %1814 = vmax.xlane.f32.xlu0 %v1813
        %v1815 = vpop.xlane.xlu0 %1814
        %v1816 = vmax.f32 %v1635, %v1724
        %1817 = vmax.xlane.f32.xlu0 %v1816
        %v1818 = vpop.xlane.xlu0 %1817
        %v1819 = vmax.f32 %v1637, %v1726
        %1820 = vmax.xlane.f32.xlu0 %v1819
        %v1821 = vpop.xlane.xlu0 %1820
        %v1822 = vmax.f32 %v1640, %v1729
        %1823 = vmax.xlane.f32.xlu0 %v1822
        %v1824 = vpop.xlane.xlu0 %1823
        %v1825 = vmax.f32 %v1642, %v1731
        %1826 = vmax.xlane.f32.xlu0 %v1825
        %v1827 = vpop.xlane.xlu0 %1826
        %v1828 = vmax.f32 %v1645, %v1734
        %1829 = vmax.xlane.f32.xlu0 %v1828
        %v1830 = vpop.xlane.xlu0 %1829
        %v1831 = vmax.f32 %v1647, %v1736
        %1832 = vmax.xlane.f32.xlu0 %v1831
        %v1833 = vpop.xlane.xlu0 %1832
        %v1834 = vsub.f32 %v1570, %v1740
        %v1835 = vsub.f32 %v1659, %v1740
        %v1836 = vsub.f32 %v1572, %v1743
        %v1837 = vsub.f32 %v1661, %v1743
        %v1838 = vsub.f32 %v1575, %v1746
        %v1839 = vsub.f32 %v1664, %v1746
        %v1840 = vsub.f32 %v1577, %v1749
        %v1841 = vsub.f32 %v1666, %v1749
        %v1842 = vsub.f32 %v1580, %v1752
        %v1843 = vsub.f32 %v1669, %v1752
        %v1844 = vsub.f32 %v1582, %v1755
        %v1845 = vsub.f32 %v1671, %v1755
        %v1846 = vsub.f32 %v1585, %v1758
        %v1847 = vsub.f32 %v1674, %v1758
        %v1848 = vsub.f32 %v1587, %v1761
        %v1849 = vsub.f32 %v1676, %v1761
        %v1850 = vsub.f32 %v1590, %v1764
        %v1851 = vsub.f32 %v1679, %v1764
        %v1852 = vsub.f32 %v1592, %v1767
        %v1853 = vsub.f32 %v1681, %v1767
        %v1854 = vsub.f32 %v1595, %v1770
        %v1855 = vsub.f32 %v1684, %v1770
        %v1856 = vsub.f32 %v1597, %v1773
        %v1857 = vsub.f32 %v1686, %v1773
        %v1858 = vsub.f32 %v1600, %v1776
        %v1859 = vsub.f32 %v1689, %v1776
        %v1860 = vsub.f32 %v1602, %v1779
        %v1861 = vsub.f32 %v1691, %v1779
        %v1862 = vsub.f32 %v1605, %v1782
        %v1863 = vsub.f32 %v1694, %v1782
        %v1864 = vsub.f32 %v1607, %v1785
        %v1865 = vsub.f32 %v1696, %v1785
        %v1866 = vsub.f32 %v1610, %v1788
        %v1867 = vsub.f32 %v1699, %v1788
        %v1868 = vsub.f32 %v1612, %v1791
        %v1869 = vsub.f32 %v1701, %v1791
        %v1870 = vsub.f32 %v1615, %v1794
        %v1871 = vsub.f32 %v1704, %v1794
        %v1872 = vsub.f32 %v1617, %v1797
        %v1873 = vsub.f32 %v1706, %v1797
        %v1874 = vsub.f32 %v1620, %v1800
        %v1875 = vsub.f32 %v1709, %v1800
        %v1876 = vsub.f32 %v1622, %v1803
        %v1877 = vsub.f32 %v1711, %v1803
        %v1878 = vsub.f32 %v1625, %v1806
        %v1879 = vsub.f32 %v1714, %v1806
        %v1880 = vsub.f32 %v1627, %v1809
        %v1881 = vsub.f32 %v1716, %v1809
        %v1882 = vsub.f32 %v1630, %v1812
        %v1883 = vsub.f32 %v1719, %v1812
        %v1884 = vsub.f32 %v1632, %v1815
        %v1885 = vsub.f32 %v1721, %v1815
        %v1886 = vsub.f32 %v1635, %v1818
        %v1887 = vsub.f32 %v1724, %v1818
        %v1888 = vsub.f32 %v1637, %v1821
        %v1889 = vsub.f32 %v1726, %v1821
        %v1890 = vsub.f32 %v1640, %v1824
        %v1891 = vsub.f32 %v1729, %v1824
        %v1892 = vsub.f32 %v1642, %v1827
        %v1893 = vsub.f32 %v1731, %v1827
        %v1894 = vsub.f32 %v1645, %v1830
        %v1895 = vsub.f32 %v1734, %v1830
        %v1896 = vsub.f32 %v1647, %v1833
        %v1897 = vsub.f32 %v1736, %v1833
        %v1898 = vmul.f32 %v1834, 1.442695
        %v1899 = vpow.pop %v1898
        %v1900 = vmul.f32 %v1835, 1.442695
        %v1901 = vpow.pop %v1900
        %v1902 = vmul.f32 %v1836, 1.442695
        %v1903 = vpow.pop %v1902
        %v1904 = vmul.f32 %v1837, 1.442695
        %v1905 = vpow.pop %v1904
        %v1906 = vmul.f32 %v1838, 1.442695
        %v1907 = vpow.pop %v1906
        %v1908 = vmul.f32 %v1839, 1.442695
        %v1909 = vpow.pop %v1908
        %v1910 = vmul.f32 %v1840, 1.442695
        %v1911 = vpow.pop %v1910
        %v1912 = vmul.f32 %v1841, 1.442695
        %v1913 = vpow.pop %v1912
        %v1914 = vmul.f32 %v1842, 1.442695
        %v1915 = vpow.pop %v1914
        %v1916 = vmul.f32 %v1843, 1.442695
        %v1917 = vpow.pop %v1916
        %v1918 = vmul.f32 %v1844, 1.442695
        %v1919 = vpow.pop %v1918
        %v1920 = vmul.f32 %v1845, 1.442695
        %v1921 = vpow.pop %v1920
        %v1922 = vmul.f32 %v1846, 1.442695
        %v1923 = vpow.pop %v1922
        %v1924 = vmul.f32 %v1847, 1.442695
        %v1925 = vpow.pop %v1924
        %v1926 = vmul.f32 %v1848, 1.442695
        %v1927 = vpow.pop %v1926
        %v1928 = vmul.f32 %v1849, 1.442695
        %v1929 = vpow.pop %v1928
        %v1930 = vmul.f32 %v1850, 1.442695
        %v1931 = vpow.pop %v1930
        %v1932 = vmul.f32 %v1851, 1.442695
        %v1933 = vpow.pop %v1932
        %v1934 = vmul.f32 %v1852, 1.442695
        %v1935 = vpow.pop %v1934
        %v1936 = vmul.f32 %v1853, 1.442695
        %v1937 = vpow.pop %v1936
        %v1938 = vmul.f32 %v1854, 1.442695
        %v1939 = vpow.pop %v1938
        %v1940 = vmul.f32 %v1855, 1.442695
        %v1941 = vpow.pop %v1940
        %v1942 = vmul.f32 %v1856, 1.442695
        %v1943 = vpow.pop %v1942
        %v1944 = vmul.f32 %v1857, 1.442695
        %v1945 = vpow.pop %v1944
        %v1946 = vmul.f32 %v1858, 1.442695
        %v1947 = vpow.pop %v1946
        %v1948 = vmul.f32 %v1859, 1.442695
        %v1949 = vpow.pop %v1948
        %v1950 = vmul.f32 %v1860, 1.442695
        %v1951 = vpow.pop %v1950
        %v1952 = vmul.f32 %v1861, 1.442695
        %v1953 = vpow.pop %v1952
        %v1954 = vmul.f32 %v1862, 1.442695
        %v1955 = vpow.pop %v1954
        %v1956 = vmul.f32 %v1863, 1.442695
        %v1957 = vpow.pop %v1956
        %v1958 = vmul.f32 %v1864, 1.442695
        %v1959 = vpow.pop %v1958
        %v1960 = vmul.f32 %v1865, 1.442695
        %v1961 = vpow.pop %v1960
        %v1962 = vmul.f32 %v1866, 1.442695
        %v1963 = vpow.pop %v1962
        %v1964 = vmul.f32 %v1867, 1.442695
        %v1965 = vpow.pop %v1964
        %v1966 = vmul.f32 %v1868, 1.442695
        %v1967 = vpow.pop %v1966
        %v1968 = vmul.f32 %v1869, 1.442695
        %v1969 = vpow.pop %v1968
        %v1970 = vmul.f32 %v1870, 1.442695
        %v1971 = vpow.pop %v1970
        %v1972 = vmul.f32 %v1871, 1.442695
        %v1973 = vpow.pop %v1972
        %v1974 = vmul.f32 %v1872, 1.442695
        %v1975 = vpow.pop %v1974
        %v1976 = vmul.f32 %v1873, 1.442695
        %v1977 = vpow.pop %v1976
        %v1978 = vmul.f32 %v1874, 1.442695
        %v1979 = vpow.pop %v1978
        %v1980 = vmul.f32 %v1875, 1.442695
        %v1981 = vpow.pop %v1980
        %v1982 = vmul.f32 %v1876, 1.442695
        %v1983 = vpow.pop %v1982
        %v1984 = vmul.f32 %v1877, 1.442695
        %v1985 = vpow.pop %v1984
        %v1986 = vmul.f32 %v1878, 1.442695
        %v1987 = vpow.pop %v1986
        %v1988 = vmul.f32 %v1879, 1.442695
        %v1989 = vpow.pop %v1988
        %v1990 = vmul.f32 %v1880, 1.442695
        %v1991 = vpow.pop %v1990
        %v1992 = vmul.f32 %v1881, 1.442695
        %v1993 = vpow.pop %v1992
        %v1994 = vmul.f32 %v1882, 1.442695
        %v1995 = vpow.pop %v1994
        %v1996 = vmul.f32 %v1883, 1.442695
        %v1997 = vpow.pop %v1996
        %v1998 = vmul.f32 %v1884, 1.442695
        %v1999 = vpow.pop %v1998
        %v2000 = vmul.f32 %v1885, 1.442695
        %v2001 = vpow.pop %v2000
        %v2002 = vmul.f32 %v1886, 1.442695
        %v2003 = vpow.pop %v2002
        %v2004 = vmul.f32 %v1887, 1.442695
        %v2005 = vpow.pop %v2004
        %v2006 = vmul.f32 %v1888, 1.442695
        %v2007 = vpow.pop %v2006
        %v2008 = vmul.f32 %v1889, 1.442695
        %v2009 = vpow.pop %v2008
        %v2010 = vmul.f32 %v1890, 1.442695
        %v2011 = vpow.pop %v2010
        %v2012 = vmul.f32 %v1891, 1.442695
        %v2013 = vpow.pop %v2012
        %v2014 = vmul.f32 %v1892, 1.442695
        %v2015 = vpow.pop %v2014
        %v2016 = vmul.f32 %v1893, 1.442695
        %v2017 = vpow.pop %v2016
        %v2018 = vmul.f32 %v1894, 1.442695
        %v2019 = vpow.pop %v2018
        %v2020 = vmul.f32 %v1895, 1.442695
        %v2021 = vpow.pop %v2020
        %v2022 = vmul.f32 %v1896, 1.442695
        %v2023 = vpow.pop %v2022
        %v2024 = vmul.f32 %v1897, 1.442695
        %v2025 = vpow.pop %v2024
        %v2026 = vadd.f32 %v1899, %v1901
        %2027 = vadd.xlane.f32.xlu0 %v2026
        %v2028 = vpop.xlane.xlu0 %2027
        %v2029 = vadd.f32 %v1903, %v1905
        %2030 = vadd.xlane.f32.xlu0 %v2029
        %v2031 = vpop.xlane.xlu0 %2030
        %v2032 = vadd.f32 %v1907, %v1909
        %2033 = vadd.xlane.f32.xlu0 %v2032
        %v2034 = vpop.xlane.xlu0 %2033
        %v2035 = vadd.f32 %v1911, %v1913
        %2036 = vadd.xlane.f32.xlu0 %v2035
        %v2037 = vpop.xlane.xlu0 %2036
        %v2038 = vadd.f32 %v1915, %v1917
        %2039 = vadd.xlane.f32.xlu0 %v2038
        %v2040 = vpop.xlane.xlu0 %2039
        %v2041 = vadd.f32 %v1919, %v1921
        %2042 = vadd.xlane.f32.xlu0 %v2041
        %v2043 = vpop.xlane.xlu0 %2042
        %v2044 = vadd.f32 %v1923, %v1925
        %2045 = vadd.xlane.f32.xlu0 %v2044
        %v2046 = vpop.xlane.xlu0 %2045
        %v2047 = vadd.f32 %v1927, %v1929
        %2048 = vadd.xlane.f32.xlu0 %v2047
        %v2049 = vpop.xlane.xlu0 %2048
        %v2050 = vadd.f32 %v1931, %v1933
        %2051 = vadd.xlane.f32.xlu0 %v2050
        %v2052 = vpop.xlane.xlu0 %2051
        %v2053 = vadd.f32 %v1935, %v1937
        %2054 = vadd.xlane.f32.xlu0 %v2053
        %v2055 = vpop.xlane.xlu0 %2054
        %v2056 = vadd.f32 %v1939, %v1941
        %2057 = vadd.xlane.f32.xlu0 %v2056
        %v2058 = vpop.xlane.xlu0 %2057
        %v2059 = vadd.f32 %v1943, %v1945
        %2060 = vadd.xlane.f32.xlu0 %v2059
        %v2061 = vpop.xlane.xlu0 %2060
        %v2062 = vadd.f32 %v1947, %v1949
        %2063 = vadd.xlane.f32.xlu0 %v2062
        %v2064 = vpop.xlane.xlu0 %2063
        %v2065 = vadd.f32 %v1951, %v1953
        %2066 = vadd.xlane.f32.xlu0 %v2065
        %v2067 = vpop.xlane.xlu0 %2066
        %v2068 = vadd.f32 %v1955, %v1957
        %2069 = vadd.xlane.f32.xlu0 %v2068
        %v2070 = vpop.xlane.xlu0 %2069
        %v2071 = vadd.f32 %v1959, %v1961
        %2072 = vadd.xlane.f32.xlu0 %v2071
        %v2073 = vpop.xlane.xlu0 %2072
        %v2074 = vadd.f32 %v1963, %v1965
        %2075 = vadd.xlane.f32.xlu0 %v2074
        %v2076 = vpop.xlane.xlu0 %2075
        %v2077 = vadd.f32 %v1967, %v1969
        %2078 = vadd.xlane.f32.xlu0 %v2077
        %v2079 = vpop.xlane.xlu0 %2078
        %v2080 = vadd.f32 %v1971, %v1973
        %2081 = vadd.xlane.f32.xlu0 %v2080
        %v2082 = vpop.xlane.xlu0 %2081
        %v2083 = vadd.f32 %v1975, %v1977
        %2084 = vadd.xlane.f32.xlu0 %v2083
        %v2085 = vpop.xlane.xlu0 %2084
        %v2086 = vadd.f32 %v1979, %v1981
        %2087 = vadd.xlane.f32.xlu0 %v2086
        %v2088 = vpop.xlane.xlu0 %2087
        %v2089 = vadd.f32 %v1983, %v1985
        %2090 = vadd.xlane.f32.xlu0 %v2089
        %v2091 = vpop.xlane.xlu0 %2090
        %v2092 = vadd.f32 %v1987, %v1989
        %2093 = vadd.xlane.f32.xlu0 %v2092
        %v2094 = vpop.xlane.xlu0 %2093
        %v2095 = vadd.f32 %v1991, %v1993
        %2096 = vadd.xlane.f32.xlu0 %v2095
        %v2097 = vpop.xlane.xlu0 %2096
        %v2098 = vadd.f32 %v1995, %v1997
        %2099 = vadd.xlane.f32.xlu0 %v2098
        %v2100 = vpop.xlane.xlu0 %2099
        %v2101 = vadd.f32 %v1999, %v2001
        %2102 = vadd.xlane.f32.xlu0 %v2101
        %v2103 = vpop.xlane.xlu0 %2102
        %v2104 = vadd.f32 %v2003, %v2005
        %2105 = vadd.xlane.f32.xlu0 %v2104
        %v2106 = vpop.xlane.xlu0 %2105
        %v2107 = vadd.f32 %v2007, %v2009
        %2108 = vadd.xlane.f32.xlu0 %v2107
        %v2109 = vpop.xlane.xlu0 %2108
        %v2110 = vadd.f32 %v2011, %v2013
        %2111 = vadd.xlane.f32.xlu0 %v2110
        %v2112 = vpop.xlane.xlu0 %2111
        %v2113 = vadd.f32 %v2015, %v2017
        %2114 = vadd.xlane.f32.xlu0 %v2113
        %v2115 = vpop.xlane.xlu0 %2114
        %v2116 = vadd.f32 %v2019, %v2021
        %2117 = vadd.xlane.f32.xlu0 %v2116
        %v2118 = vpop.xlane.xlu0 %2117
        %v2119 = vadd.f32 %v2023, %v2025
        %2120 = vadd.xlane.f32.xlu0 %v2119
        %v2121 = vpop.xlane.xlu0 %2120
        %v2122 = vpack.c.bf16 %v1903, %v1899
        %v2123 = vpack.c.bf16 %v1905, %v1901
        %v2124 = vpack.c.bf16 %v1911, %v1907
        %v2125 = vpack.c.bf16 %v1913, %v1909
        %v2126 = vpack.c.bf16 %v1919, %v1915
        %v2127 = vpack.c.bf16 %v1921, %v1917
        %v2128 = vpack.c.bf16 %v1927, %v1923
        %v2129 = vpack.c.bf16 %v1929, %v1925
        %v2130 = vpack.c.bf16 %v1935, %v1931
        %v2131 = vpack.c.bf16 %v1937, %v1933
        %v2132 = vpack.c.bf16 %v1943, %v1939
        %v2133 = vpack.c.bf16 %v1945, %v1941
        %v2134 = vpack.c.bf16 %v1951, %v1947
        %v2135 = vpack.c.bf16 %v1953, %v1949
        %v2136 = vpack.c.bf16 %v1959, %v1955
        %v2137 = vpack.c.bf16 %v1961, %v1957
        %v2138 = vpack.c.bf16 %v1967, %v1963
        %v2139 = vpack.c.bf16 %v1969, %v1965
        %v2140 = vpack.c.bf16 %v1975, %v1971
        %v2141 = vpack.c.bf16 %v1977, %v1973
        %v2142 = vpack.c.bf16 %v1983, %v1979
        %v2143 = vpack.c.bf16 %v1985, %v1981
        %v2144 = vpack.c.bf16 %v1991, %v1987
        %v2145 = vpack.c.bf16 %v1993, %v1989
        %v2146 = vpack.c.bf16 %v1999, %v1995
        %v2147 = vpack.c.bf16 %v2001, %v1997
        %v2148 = vpack.c.bf16 %v2007, %v2003
        %v2149 = vpack.c.bf16 %v2009, %v2005
        %v2150 = vpack.c.bf16 %v2015, %v2011
        %v2151 = vpack.c.bf16 %v2017, %v2013
        %v2152 = vpack.c.bf16 %v2023, %v2019
        %v2153 = vpack.c.bf16 %v2025, %v2021
        %2170 = vmatpush.bf16.msra.mxu0 %v1447
        %2171 = vmatpush.bf16.msra.mxu0 %v1445
        %2172 = vmatpush.bf16.msra.mxu0 %v1443
        %2173 = vmatpush.bf16.msra.mxu0 %v1441
        %2174 = vmatpush.bf16.msra.mxu0 %v1439
        %2175 = vmatpush.bf16.msra.mxu0 %v1437
        %2176 = vmatpush.bf16.msra.mxu0 %v1435
        %2177 = vmatpush.bf16.msra.mxu0 %v1433
        %2178 = vmatmul.bf16.gmra.mxu0 %v2122
        %v2179 = vpop.f32.mrf.mxu0
        %v2180 = vadd.f32 0.0, %v2179
        %v2181 = vpop.f32.mrf.mxu0
        %v2182 = vadd.f32 0.0, %v2181
        %2183 = vmatmul.bf16.gmra.mxu0 %v2124
        %v2184 = vpop.f32.mrf.mxu0
        %v2185 = vadd.f32 0.0, %v2184
        %v2186 = vpop.f32.mrf.mxu0
        %v2187 = vadd.f32 0.0, %v2186
        %2188 = vmatmul.bf16.gmra.mxu0 %v2126
        %v2189 = vpop.f32.mrf.mxu0
        %v2190 = vadd.f32 0.0, %v2189
        %v2191 = vpop.f32.mrf.mxu0
        %v2192 = vadd.f32 0.0, %v2191
        %2193 = vmatmul.bf16.gmra.mxu0 %v2128
        %v2194 = vpop.f32.mrf.mxu0
        %v2195 = vadd.f32 0.0, %v2194
        %v2196 = vpop.f32.mrf.mxu0
        %v2197 = vadd.f32 0.0, %v2196
        %2198 = vmatmul.bf16.gmra.mxu0 %v2130
        %v2199 = vpop.f32.mrf.mxu0
        %v2200 = vadd.f32 0.0, %v2199
        %v2201 = vpop.f32.mrf.mxu0
        %v2202 = vadd.f32 0.0, %v2201
        %2203 = vmatmul.bf16.gmra.mxu0 %v2132
        %v2204 = vpop.f32.mrf.mxu0
        %v2205 = vadd.f32 0.0, %v2204
        %v2206 = vpop.f32.mrf.mxu0
        %v2207 = vadd.f32 0.0, %v2206
        %2208 = vmatmul.bf16.gmra.mxu0 %v2134
        %v2209 = vpop.f32.mrf.mxu0
        %v2210 = vadd.f32 0.0, %v2209
        %v2211 = vpop.f32.mrf.mxu0
        %v2212 = vadd.f32 0.0, %v2211
        %2213 = vmatmul.bf16.gmra.mxu0 %v2136
        %v2214 = vpop.f32.mrf.mxu0
        %v2215 = vadd.f32 0.0, %v2214
        %v2216 = vpop.f32.mrf.mxu0
        %v2217 = vadd.f32 0.0, %v2216
        %2218 = vmatmul.bf16.gmra.mxu0 %v2138
        %v2219 = vpop.f32.mrf.mxu0
        %v2220 = vadd.f32 0.0, %v2219
        %v2221 = vpop.f32.mrf.mxu0
        %v2222 = vadd.f32 0.0, %v2221
        %2223 = vmatmul.bf16.gmra.mxu0 %v2140
        %v2224 = vpop.f32.mrf.mxu0
        %v2225 = vadd.f32 0.0, %v2224
        %v2226 = vpop.f32.mrf.mxu0
        %v2227 = vadd.f32 0.0, %v2226
        %2228 = vmatmul.bf16.gmra.mxu0 %v2142
        %v2229 = vpop.f32.mrf.mxu0
        %v2230 = vadd.f32 0.0, %v2229
        %v2231 = vpop.f32.mrf.mxu0
        %v2232 = vadd.f32 0.0, %v2231
        %2233 = vmatmul.bf16.gmra.mxu0 %v2144
        %v2234 = vpop.f32.mrf.mxu0
        %v2235 = vadd.f32 0.0, %v2234
        %v2236 = vpop.f32.mrf.mxu0
        %v2237 = vadd.f32 0.0, %v2236
        %2238 = vmatmul.bf16.gmra.mxu0 %v2146
        %v2239 = vpop.f32.mrf.mxu0
        %v2240 = vadd.f32 0.0, %v2239
        %v2241 = vpop.f32.mrf.mxu0
        %v2242 = vadd.f32 0.0, %v2241
        %2243 = vmatmul.bf16.gmra.mxu0 %v2148
        %v2244 = vpop.f32.mrf.mxu0
        %v2245 = vadd.f32 0.0, %v2244
        %v2246 = vpop.f32.mrf.mxu0
        %v2247 = vadd.f32 0.0, %v2246
        %2248 = vmatmul.bf16.gmra.mxu0 %v2150
        %v2249 = vpop.f32.mrf.mxu0
        %v2250 = vadd.f32 0.0, %v2249
        %v2251 = vpop.f32.mrf.mxu0
        %v2252 = vadd.f32 0.0, %v2251
        %2253 = vmatmul.bf16.gmra.mxu0 %v2152
        %v2254 = vpop.f32.mrf.mxu0
        %v2255 = vadd.f32 0.0, %v2254
        %v2256 = vpop.f32.mrf.mxu0
        %v2257 = vadd.f32 0.0, %v2256
        %2258 = vdwg.mxu0
        %2259 = vmatpush.bf16.msra.mxu0 %v1463
        %2260 = vmatpush.bf16.msra.mxu0 %v1461
        %2261 = vmatpush.bf16.msra.mxu0 %v1459
        %2262 = vmatpush.bf16.msra.mxu0 %v1457
        %2263 = vmatpush.bf16.msra.mxu0 %v1455
        %2264 = vmatpush.bf16.msra.mxu0 %v1453
        %2265 = vmatpush.bf16.msra.mxu0 %v1451
        %2266 = vmatpush.bf16.msra.mxu0 %v1449
        %2267 = vmatmul.bf16.gmra.mxu0 %v2123
        %v2268 = vpop.f32.mrf.mxu0
        %v2269 = vadd.f32 %v2180, %v2268
        %v2270 = vpop.f32.mrf.mxu0
        %v2271 = vadd.f32 %v2182, %v2270
        %2272 = vmatmul.bf16.gmra.mxu0 %v2125
        %v2273 = vpop.f32.mrf.mxu0
        %v2274 = vadd.f32 %v2185, %v2273
        %v2275 = vpop.f32.mrf.mxu0
        %v2276 = vadd.f32 %v2187, %v2275
        %2277 = vmatmul.bf16.gmra.mxu0 %v2127
        %v2278 = vpop.f32.mrf.mxu0
        %v2279 = vadd.f32 %v2190, %v2278
        %v2280 = vpop.f32.mrf.mxu0
        %v2281 = vadd.f32 %v2192, %v2280
        %2282 = vmatmul.bf16.gmra.mxu0 %v2129
        %v2283 = vpop.f32.mrf.mxu0
        %v2284 = vadd.f32 %v2195, %v2283
        %v2285 = vpop.f32.mrf.mxu0
        %v2286 = vadd.f32 %v2197, %v2285
        %2287 = vmatmul.bf16.gmra.mxu0 %v2131
        %v2288 = vpop.f32.mrf.mxu0
        %v2289 = vadd.f32 %v2200, %v2288
        %v2290 = vpop.f32.mrf.mxu0
        %v2291 = vadd.f32 %v2202, %v2290
        %2292 = vmatmul.bf16.gmra.mxu0 %v2133
        %v2293 = vpop.f32.mrf.mxu0
        %v2294 = vadd.f32 %v2205, %v2293
        %v2295 = vpop.f32.mrf.mxu0
        %v2296 = vadd.f32 %v2207, %v2295
        %2297 = vmatmul.bf16.gmra.mxu0 %v2135
        %v2298 = vpop.f32.mrf.mxu0
        %v2299 = vadd.f32 %v2210, %v2298
        %v2300 = vpop.f32.mrf.mxu0
        %v2301 = vadd.f32 %v2212, %v2300
        %2302 = vmatmul.bf16.gmra.mxu0 %v2137
        %v2303 = vpop.f32.mrf.mxu0
        %v2304 = vadd.f32 %v2215, %v2303
        %v2305 = vpop.f32.mrf.mxu0
        %v2306 = vadd.f32 %v2217, %v2305
        %2307 = vmatmul.bf16.gmra.mxu0 %v2139
        %v2308 = vpop.f32.mrf.mxu0
        %v2309 = vadd.f32 %v2220, %v2308
        %v2310 = vpop.f32.mrf.mxu0
        %v2311 = vadd.f32 %v2222, %v2310
        %2312 = vmatmul.bf16.gmra.mxu0 %v2141
        %v2313 = vpop.f32.mrf.mxu0
        %v2314 = vadd.f32 %v2225, %v2313
        %v2315 = vpop.f32.mrf.mxu0
        %v2316 = vadd.f32 %v2227, %v2315
        %2317 = vmatmul.bf16.gmra.mxu0 %v2143
        %v2318 = vpop.f32.mrf.mxu0
        %v2319 = vadd.f32 %v2230, %v2318
        %v2320 = vpop.f32.mrf.mxu0
        %v2321 = vadd.f32 %v2232, %v2320
        %2322 = vmatmul.bf16.gmra.mxu0 %v2145
        %v2323 = vpop.f32.mrf.mxu0
        %v2324 = vadd.f32 %v2235, %v2323
        %v2325 = vpop.f32.mrf.mxu0
        %v2326 = vadd.f32 %v2237, %v2325
        %2327 = vmatmul.bf16.gmra.mxu0 %v2147
        %v2328 = vpop.f32.mrf.mxu0
        %v2329 = vadd.f32 %v2240, %v2328
        %v2330 = vpop.f32.mrf.mxu0
        %v2331 = vadd.f32 %v2242, %v2330
        %2332 = vmatmul.bf16.gmra.mxu0 %v2149
        %v2333 = vpop.f32.mrf.mxu0
        %v2334 = vadd.f32 %v2245, %v2333
        %v2335 = vpop.f32.mrf.mxu0
        %v2336 = vadd.f32 %v2247, %v2335
        %2337 = vmatmul.bf16.gmra.mxu0 %v2151
        %v2338 = vpop.f32.mrf.mxu0
        %v2339 = vadd.f32 %v2250, %v2338
        %v2340 = vpop.f32.mrf.mxu0
        %v2341 = vadd.f32 %v2252, %v2340
        %2342 = vmatmul.bf16.gmra.mxu0 %v2153
        %v2343 = vpop.f32.mrf.mxu0
        %v2344 = vadd.f32 %v2255, %v2343
        %v2345 = vpop.f32.mrf.mxu0
        %v2346 = vadd.f32 %v2257, %v2345
        %2347 = vdwg.mxu0
        %v2348 = vrcp.pop %v2028
        %v2349 = vrcp.pop %v2031
        %v2350 = vrcp.pop %v2034
        %v2351 = vrcp.pop %v2037
        %v2352 = vrcp.pop %v2040
        %v2353 = vrcp.pop %v2043
        %v2354 = vrcp.pop %v2046
        %v2355 = vrcp.pop %v2049
        %v2356 = vrcp.pop %v2052
        %v2357 = vrcp.pop %v2055
        %v2358 = vrcp.pop %v2058
        %v2359 = vrcp.pop %v2061
        %v2360 = vrcp.pop %v2064
        %v2361 = vrcp.pop %v2067
        %v2362 = vrcp.pop %v2070
        %v2363 = vrcp.pop %v2073
        %v2364 = vrcp.pop %v2076
        %v2365 = vrcp.pop %v2079
        %v2366 = vrcp.pop %v2082
        %v2367 = vrcp.pop %v2085
        %v2368 = vrcp.pop %v2088
        %v2369 = vrcp.pop %v2091
        %v2370 = vrcp.pop %v2094
        %v2371 = vrcp.pop %v2097
        %v2372 = vrcp.pop %v2100
        %v2373 = vrcp.pop %v2103
        %v2374 = vrcp.pop %v2106
        %v2375 = vrcp.pop %v2109
        %v2376 = vrcp.pop %v2112
        %v2377 = vrcp.pop %v2115
        %v2378 = vrcp.pop %v2118
        %v2379 = vrcp.pop %v2121
        %v2380 = vmul.f32 %v2269, %v2348
        %v2381 = vmul.f32 %v2271, %v2349
        %v2382 = vmul.f32 %v2274, %v2350
        %v2383 = vmul.f32 %v2276, %v2351
        %v2384 = vmul.f32 %v2279, %v2352
        %v2385 = vmul.f32 %v2281, %v2353
        %v2386 = vmul.f32 %v2284, %v2354
        %v2387 = vmul.f32 %v2286, %v2355
        %v2388 = vmul.f32 %v2289, %v2356
        %v2389 = vmul.f32 %v2291, %v2357
        %v2390 = vmul.f32 %v2294, %v2358
        %v2391 = vmul.f32 %v2296, %v2359
        %v2392 = vmul.f32 %v2299, %v2360
        %v2393 = vmul.f32 %v2301, %v2361
        %v2394 = vmul.f32 %v2304, %v2362
        %v2395 = vmul.f32 %v2306, %v2363
        %v2396 = vmul.f32 %v2309, %v2364
        %v2397 = vmul.f32 %v2311, %v2365
        %v2398 = vmul.f32 %v2314, %v2366
        %v2399 = vmul.f32 %v2316, %v2367
        %v2400 = vmul.f32 %v2319, %v2368
        %v2401 = vmul.f32 %v2321, %v2369
        %v2402 = vmul.f32 %v2324, %v2370
        %v2403 = vmul.f32 %v2326, %v2371
        %v2404 = vmul.f32 %v2329, %v2372
        %v2405 = vmul.f32 %v2331, %v2373
        %v2406 = vmul.f32 %v2334, %v2374
        %v2407 = vmul.f32 %v2336, %v2375
        %v2408 = vmul.f32 %v2339, %v2376
        %v2409 = vmul.f32 %v2341, %v2377
        %v2410 = vmul.f32 %v2344, %v2378
        %v2411 = vmul.f32 %v2346, %v2379
        %2444 = vrot.lane.b32.xlu0 %v2380, 16
        %v2445 = vpop.permute.xlu0 %2444
        %2446 = vrot.lane.b32.xlu0 %v2381, 16
        %v2447 = vpop.permute.xlu0 %2446
        %2448 = vrot.lane.b32.xlu0 %v2382, 16
        %v2449 = vpop.permute.xlu0 %2448
        %2450 = vrot.lane.b32.xlu0 %v2383, 16
        %v2451 = vpop.permute.xlu0 %2450
        %2452 = vrot.lane.b32.xlu0 %v2384, 16
        %v2453 = vpop.permute.xlu0 %2452
        %2454 = vrot.lane.b32.xlu0 %v2385, 16
        %v2455 = vpop.permute.xlu0 %2454
        %2456 = vrot.lane.b32.xlu0 %v2386, 16
        %v2457 = vpop.permute.xlu0 %2456
        %2458 = vrot.lane.b32.xlu0 %v2387, 16
        %v2459 = vpop.permute.xlu0 %2458
        %2460 = vrot.lane.b32.xlu0 %v2388, 16
        %v2461 = vpop.permute.xlu0 %2460
        %2462 = vrot.lane.b32.xlu0 %v2389, 16
        %v2463 = vpop.permute.xlu0 %2462
        %2464 = vrot.lane.b32.xlu0 %v2390, 16
        %v2465 = vpop.permute.xlu0 %2464
        %2466 = vrot.lane.b32.xlu0 %v2391, 16
        %v2467 = vpop.permute.xlu0 %2466
        %2468 = vrot.lane.b32.xlu0 %v2392, 16
        %v2469 = vpop.permute.xlu0 %2468
        %2470 = vrot.lane.b32.xlu0 %v2393, 16
        %v2471 = vpop.permute.xlu0 %2470
        %2472 = vrot.lane.b32.xlu0 %v2394, 16
        %v2473 = vpop.permute.xlu0 %2472
        %2474 = vrot.lane.b32.xlu0 %v2395, 16
        %v2475 = vpop.permute.xlu0 %2474
        %2476 = vrot.lane.b32.xlu0 %v2396, 16
        %v2477 = vpop.permute.xlu0 %2476
        %2478 = vrot.lane.b32.xlu0 %v2397, 16
        %v2479 = vpop.permute.xlu0 %2478
        %2480 = vrot.lane.b32.xlu0 %v2398, 16
        %v2481 = vpop.permute.xlu0 %2480
        %2482 = vrot.lane.b32.xlu0 %v2399, 16
        %v2483 = vpop.permute.xlu0 %2482
        %2484 = vrot.lane.b32.xlu0 %v2400, 16
        %v2485 = vpop.permute.xlu0 %2484
        %2486 = vrot.lane.b32.xlu0 %v2401, 16
        %v2487 = vpop.permute.xlu0 %2486
        %2488 = vrot.lane.b32.xlu0 %v2402, 16
        %v2489 = vpop.permute.xlu0 %2488
        %2490 = vrot.lane.b32.xlu0 %v2403, 16
        %v2491 = vpop.permute.xlu0 %2490
        %2492 = vrot.lane.b32.xlu0 %v2404, 16
        %v2493 = vpop.permute.xlu0 %2492
        %2494 = vrot.lane.b32.xlu0 %v2405, 16
        %v2495 = vpop.permute.xlu0 %2494
        %2496 = vrot.lane.b32.xlu0 %v2406, 16
        %v2497 = vpop.permute.xlu0 %2496
        %2498 = vrot.lane.b32.xlu0 %v2407, 16
        %v2499 = vpop.permute.xlu0 %2498
        %2500 = vrot.lane.b32.xlu0 %v2408, 16
        %v2501 = vpop.permute.xlu0 %2500
        %2502 = vrot.lane.b32.xlu0 %v2409, 16
        %v2503 = vpop.permute.xlu0 %2502
        %2504 = vrot.lane.b32.xlu0 %v2410, 16
        %v2505 = vpop.permute.xlu0 %2504
        %2506 = vrot.lane.b32.xlu0 %v2411, 16
        %v2507 = vpop.permute.xlu0 %2506
        %vm2540 = vcmask 261248
        %2541 = vst.msk [vmem:[#allocation2] sm:$0xff] %vm2540, %v2445
        %2542 = vst.msk [vmem:[#allocation2 + $0x8] sm:$0xff] %vm2540, %v2447
        %2543 = vst.msk [vmem:[#allocation2 + $0x10] sm:$0xff] %vm2540, %v2449
        %2544 = vst.msk [vmem:[#allocation2 + $0x18] sm:$0xff] %vm2540, %v2451
        %2545 = vst.msk [vmem:[#allocation2 + $0x20] sm:$0xff] %vm2540, %v2453
        %2546 = vst.msk [vmem:[#allocation2 + $0x28] sm:$0xff] %vm2540, %v2455
        %2547 = vst.msk [vmem:[#allocation2 + $0x30] sm:$0xff] %vm2540, %v2457
        %2548 = vst.msk [vmem:[#allocation2 + $0x38] sm:$0xff] %vm2540, %v2459
        %2549 = vst.msk [vmem:[#allocation2 + $0x40] sm:$0xff] %vm2540, %v2461
        %2550 = vst.msk [vmem:[#allocation2 + $0x48] sm:$0xff] %vm2540, %v2463
        %2551 = vst.msk [vmem:[#allocation2 + $0x50] sm:$0xff] %vm2540, %v2465
        %2552 = vst.msk [vmem:[#allocation2 + $0x58] sm:$0xff] %vm2540, %v2467
        %2553 = vst.msk [vmem:[#allocation2 + $0x60] sm:$0xff] %vm2540, %v2469
        %2554 = vst.msk [vmem:[#allocation2 + $0x68] sm:$0xff] %vm2540, %v2471
        %2555 = vst.msk [vmem:[#allocation2 + $0x70] sm:$0xff] %vm2540, %v2473
        %2556 = vst.msk [vmem:[#allocation2 + $0x78] sm:$0xff] %vm2540, %v2475
        %2557 = vst.msk [vmem:[#allocation2 + $0x80] sm:$0xff] %vm2540, %v2477
        %2558 = vst.msk [vmem:[#allocation2 + $0x88] sm:$0xff] %vm2540, %v2479
        %2559 = vst.msk [vmem:[#allocation2 + $0x90] sm:$0xff] %vm2540, %v2481
        %2560 = vst.msk [vmem:[#allocation2 + $0x98] sm:$0xff] %vm2540, %v2483
        %2561 = vst.msk [vmem:[#allocation2 + $0xa0] sm:$0xff] %vm2540, %v2485
        %2562 = vst.msk [vmem:[#allocation2 + $0xa8] sm:$0xff] %vm2540, %v2487
        %2563 = vst.msk [vmem:[#allocation2 + $0xb0] sm:$0xff] %vm2540, %v2489
        %2564 = vst.msk [vmem:[#allocation2 + $0xb8] sm:$0xff] %vm2540, %v2491
        %2565 = vst.msk [vmem:[#allocation2 + $0xc0] sm:$0xff] %vm2540, %v2493
        %2566 = vst.msk [vmem:[#allocation2 + $0xc8] sm:$0xff] %vm2540, %v2495
        %2567 = vst.msk [vmem:[#allocation2 + $0xd0] sm:$0xff] %vm2540, %v2497
        %2568 = vst.msk [vmem:[#allocation2 + $0xd8] sm:$0xff] %vm2540, %v2499
        %2569 = vst.msk [vmem:[#allocation2 + $0xe0] sm:$0xff] %vm2540, %v2501
        %2570 = vst.msk [vmem:[#allocation2 + $0xe8] sm:$0xff] %vm2540, %v2503
        %2571 = vst.msk [vmem:[#allocation2 + $0xf0] sm:$0xff] %vm2540, %v2505
        %2572 = vst.msk [vmem:[#allocation2 + $0xf8] sm:$0xff] %vm2540, %v2507
        %v2573 = vld [vmem:[%s185] sm:$0xff]
        %v2574 = vld [vmem:[%s185 + $0x8] sm:$0xff]
        %v2575 = vld [vmem:[%s185 + $0x10] sm:$0xff]
        %v2576 = vld [vmem:[%s185 + $0x18] sm:$0xff]
        %v2577 = vld [vmem:[%s185 + $0x20] sm:$0xff]
        %v2578 = vld [vmem:[%s185 + $0x28] sm:$0xff]
        %v2579 = vld [vmem:[%s185 + $0x30] sm:$0xff]
        %v2580 = vld [vmem:[%s185 + $0x38] sm:$0xff]
        %v2581 = vld [vmem:[%s185 + $0x40] sm:$0xff]
        %v2582 = vld [vmem:[%s185 + $0x48] sm:$0xff]
        %v2583 = vld [vmem:[%s185 + $0x50] sm:$0xff]
        %v2584 = vld [vmem:[%s185 + $0x58] sm:$0xff]
        %v2585 = vld [vmem:[%s185 + $0x60] sm:$0xff]
        %v2586 = vld [vmem:[%s185 + $0x68] sm:$0xff]
        %v2587 = vld [vmem:[%s185 + $0x70] sm:$0xff]
        %v2588 = vld [vmem:[%s185 + $0x78] sm:$0xff]
        %v2589 = vld [vmem:[%s185 + $0x80] sm:$0xff]
        %v2590 = vld [vmem:[%s185 + $0x88] sm:$0xff]
        %v2591 = vld [vmem:[%s185 + $0x90] sm:$0xff]
        %v2592 = vld [vmem:[%s185 + $0x98] sm:$0xff]
        %v2593 = vld [vmem:[%s185 + $0xa0] sm:$0xff]
        %v2594 = vld [vmem:[%s185 + $0xa8] sm:$0xff]
        %v2595 = vld [vmem:[%s185 + $0xb0] sm:$0xff]
        %v2596 = vld [vmem:[%s185 + $0xb8] sm:$0xff]
        %v2597 = vld [vmem:[%s185 + $0xc0] sm:$0xff]
        %v2598 = vld [vmem:[%s185 + $0xc8] sm:$0xff]
        %v2599 = vld [vmem:[%s185 + $0xd0] sm:$0xff]
        %v2600 = vld [vmem:[%s185 + $0xd8] sm:$0xff]
        %v2601 = vld [vmem:[%s185 + $0xe0] sm:$0xff]
        %v2602 = vld [vmem:[%s185 + $0xe8] sm:$0xff]
        %v2603 = vld [vmem:[%s185 + $0xf0] sm:$0xff]
        %v2604 = vld [vmem:[%s185 + $0xf8] sm:$0xff]
        %v2605 = vmul.f32 %v2573, 0.25
        %v2606 = vmul.f32 %v2574, 0.25
        %v2607 = vmul.f32 %v2575, 0.25
        %v2608 = vmul.f32 %v2576, 0.25
        %v2609 = vmul.f32 %v2577, 0.25
        %v2610 = vmul.f32 %v2578, 0.25
        %v2611 = vmul.f32 %v2579, 0.25
        %v2612 = vmul.f32 %v2580, 0.25
        %v2613 = vmul.f32 %v2581, 0.25
        %v2614 = vmul.f32 %v2582, 0.25
        %v2615 = vmul.f32 %v2583, 0.25
        %v2616 = vmul.f32 %v2584, 0.25
        %v2617 = vmul.f32 %v2585, 0.25
        %v2618 = vmul.f32 %v2586, 0.25
        %v2619 = vmul.f32 %v2587, 0.25
        %v2620 = vmul.f32 %v2588, 0.25
        %v2621 = vmul.f32 %v2589, 0.25
        %v2622 = vmul.f32 %v2590, 0.25
        %v2623 = vmul.f32 %v2591, 0.25
        %v2624 = vmul.f32 %v2592, 0.25
        %v2625 = vmul.f32 %v2593, 0.25
        %v2626 = vmul.f32 %v2594, 0.25
        %v2627 = vmul.f32 %v2595, 0.25
        %v2628 = vmul.f32 %v2596, 0.25
        %v2629 = vmul.f32 %v2597, 0.25
        %v2630 = vmul.f32 %v2598, 0.25
        %v2631 = vmul.f32 %v2599, 0.25
        %v2632 = vmul.f32 %v2600, 0.25
        %v2633 = vmul.f32 %v2601, 0.25
        %v2634 = vmul.f32 %v2602, 0.25
        %v2635 = vmul.f32 %v2603, 0.25
        %v2636 = vmul.f32 %v2604, 0.25
        %v2637 = vpack.c.bf16 %v2606, %v2605
        %v2638 = vpack.c.bf16 %v2608, %v2607
        %v2639 = vpack.c.bf16 %v2610, %v2609
        %v2640 = vpack.c.bf16 %v2612, %v2611
        %v2641 = vpack.c.bf16 %v2614, %v2613
        %v2642 = vpack.c.bf16 %v2616, %v2615
        %v2643 = vpack.c.bf16 %v2618, %v2617
        %v2644 = vpack.c.bf16 %v2620, %v2619
        %v2645 = vpack.c.bf16 %v2622, %v2621
        %v2646 = vpack.c.bf16 %v2624, %v2623
        %v2647 = vpack.c.bf16 %v2626, %v2625
        %v2648 = vpack.c.bf16 %v2628, %v2627
        %v2649 = vpack.c.bf16 %v2630, %v2629
        %v2650 = vpack.c.bf16 %v2632, %v2631
        %v2651 = vpack.c.bf16 %v2634, %v2633
        %v2652 = vpack.c.bf16 %v2636, %v2635
        %v2653 = vpack.c.bf16 %v2574, %v2573
        %v2654 = vpack.c.bf16 %v2576, %v2575
        %v2655 = vpack.c.bf16 %v2578, %v2577
        %v2656 = vpack.c.bf16 %v2580, %v2579
        %v2657 = vpack.c.bf16 %v2582, %v2581
        %v2658 = vpack.c.bf16 %v2584, %v2583
        %v2659 = vpack.c.bf16 %v2586, %v2585
        %v2660 = vpack.c.bf16 %v2588, %v2587
        %v2661 = vpack.c.bf16 %v2590, %v2589
        %v2662 = vpack.c.bf16 %v2592, %v2591
        %v2663 = vpack.c.bf16 %v2594, %v2593
        %v2664 = vpack.c.bf16 %v2596, %v2595
        %v2665 = vpack.c.bf16 %v2598, %v2597
        %v2666 = vpack.c.bf16 %v2600, %v2599
        %v2667 = vpack.c.bf16 %v2602, %v2601
        %v2668 = vpack.c.bf16 %v2604, %v2603
        %2685 = vrot.lane.b32.xlu0 %v2637, 96
        %v2686 = vpop.permute.xlu0 %2685
        %2687 = vrot.lane.b32.xlu0 %v2638, 96
        %v2688 = vpop.permute.xlu0 %2687
        %2689 = vrot.lane.b32.xlu0 %v2639, 96
        %v2690 = vpop.permute.xlu0 %2689
        %2691 = vrot.lane.b32.xlu0 %v2640, 96
        %v2692 = vpop.permute.xlu0 %2691
        %2693 = vrot.lane.b32.xlu0 %v2641, 96
        %v2694 = vpop.permute.xlu0 %2693
        %2695 = vrot.lane.b32.xlu0 %v2642, 96
        %v2696 = vpop.permute.xlu0 %2695
        %2697 = vrot.lane.b32.xlu0 %v2643, 96
        %v2698 = vpop.permute.xlu0 %2697
        %2699 = vrot.lane.b32.xlu0 %v2644, 96
        %v2700 = vpop.permute.xlu0 %2699
        %2701 = vrot.lane.b32.xlu0 %v2645, 96
        %v2702 = vpop.permute.xlu0 %2701
        %2703 = vrot.lane.b32.xlu0 %v2646, 96
        %v2704 = vpop.permute.xlu0 %2703
        %2705 = vrot.lane.b32.xlu0 %v2647, 96
        %v2706 = vpop.permute.xlu0 %2705
        %2707 = vrot.lane.b32.xlu0 %v2648, 96
        %v2708 = vpop.permute.xlu0 %2707
        %2709 = vrot.lane.b32.xlu0 %v2649, 96
        %v2710 = vpop.permute.xlu0 %2709
        %2711 = vrot.lane.b32.xlu0 %v2650, 96
        %v2712 = vpop.permute.xlu0 %2711
        %2713 = vrot.lane.b32.xlu0 %v2651, 96
        %v2714 = vpop.permute.xlu0 %2713
        %2715 = vrot.lane.b32.xlu0 %v2652, 96
        %v2716 = vpop.permute.xlu0 %2715
        %2733 = vrot.lane.b32.xlu0 %v2653, 96
        %v2734 = vpop.permute.xlu0 %2733
        %2735 = vrot.lane.b32.xlu0 %v2654, 96
        %v2736 = vpop.permute.xlu0 %2735
        %2737 = vrot.lane.b32.xlu0 %v2655, 96
        %v2738 = vpop.permute.xlu0 %2737
        %2739 = vrot.lane.b32.xlu0 %v2656, 96
        %v2740 = vpop.permute.xlu0 %2739
        %2741 = vrot.lane.b32.xlu0 %v2657, 96
        %v2742 = vpop.permute.xlu0 %2741
        %2743 = vrot.lane.b32.xlu0 %v2658, 96
        %v2744 = vpop.permute.xlu0 %2743
        %2745 = vrot.lane.b32.xlu0 %v2659, 96
        %v2746 = vpop.permute.xlu0 %2745
        %2747 = vrot.lane.b32.xlu0 %v2660, 96
        %v2748 = vpop.permute.xlu0 %2747
        %2749 = vrot.lane.b32.xlu0 %v2661, 96
        %v2750 = vpop.permute.xlu0 %2749
        %2751 = vrot.lane.b32.xlu0 %v2662, 96
        %v2752 = vpop.permute.xlu0 %2751
        %2753 = vrot.lane.b32.xlu0 %v2663, 96
        %v2754 = vpop.permute.xlu0 %2753
        %2755 = vrot.lane.b32.xlu0 %v2664, 96
        %v2756 = vpop.permute.xlu0 %2755
        %2757 = vrot.lane.b32.xlu0 %v2665, 96
        %v2758 = vpop.permute.xlu0 %2757
        %2759 = vrot.lane.b32.xlu0 %v2666, 96
        %v2760 = vpop.permute.xlu0 %2759
        %2761 = vrot.lane.b32.xlu0 %v2667, 96
        %v2762 = vpop.permute.xlu0 %2761
        %2763 = vrot.lane.b32.xlu0 %v2668, 96
        %v2764 = vpop.permute.xlu0 %2763
        %v2766 = vsel %vm307, %v2686, 0
        %v2769 = vsel %vm307, %v2688, 0
        %v2772 = vsel %vm307, %v2690, 0
        %v2775 = vsel %vm307, %v2692, 0
        %v2778 = vsel %vm307, %v2694, 0
        %v2781 = vsel %vm307, %v2696, 0
        %v2784 = vsel %vm307, %v2698, 0
        %v2787 = vsel %vm307, %v2700, 0
        %v2790 = vsel %vm307, %v2702, 0
        %v2793 = vsel %vm307, %v2704, 0
        %v2796 = vsel %vm307, %v2706, 0
        %v2799 = vsel %vm307, %v2708, 0
        %v2802 = vsel %vm307, %v2710, 0
        %v2805 = vsel %vm307, %v2712, 0
        %v2808 = vsel %vm307, %v2714, 0
        %v2811 = vsel %vm307, %v2716, 0
        %v2814 = vsel %vm307, %v2734, 0
        %v2817 = vsel %vm307, %v2736, 0
        %v2820 = vsel %vm307, %v2738, 0
        %v2823 = vsel %vm307, %v2740, 0
        %v2826 = vsel %vm307, %v2742, 0
        %v2829 = vsel %vm307, %v2744, 0
        %v2832 = vsel %vm307, %v2746, 0
        %v2835 = vsel %vm307, %v2748, 0
        %v2838 = vsel %vm307, %v2750, 0
        %v2841 = vsel %vm307, %v2752, 0
        %v2844 = vsel %vm307, %v2754, 0
        %v2847 = vsel %vm307, %v2756, 0
        %v2850 = vsel %vm307, %v2758, 0
        %v2853 = vsel %vm307, %v2760, 0
        %v2856 = vsel %vm307, %v2762, 0
        %v2859 = vsel %vm307, %v2764, 0
        %2861 = vmatpush.bf16.xpose.msra.mxu0 %v2835
        %2862 = vmatpush.bf16.xpose.msra.mxu0 %v2832
        %2863 = vmatpush.bf16.xpose.msra.mxu0 %v2829
        %2864 = vmatpush.bf16.xpose.msra.mxu0 %v2826
        %2865 = vmatpush.bf16.xpose.msra.mxu0 %v2823
        %2866 = vmatpush.bf16.xpose.msra.mxu0 %v2820
        %2867 = vmatpush.bf16.xpose.msra.mxu0 %v2817
        %2868 = vmatpush.bf16.xpose.msra.mxu0 %v2814
        %2869 = vmatmul.bf16.gmra.mxu0 %v2766
        %v2870 = vpop.f32.mrf.mxu0
        %v2871 = vadd.f32 0.0, %v2870
        %v2872 = vpop.f32.mrf.mxu0
        %v2873 = vadd.f32 0.0, %v2872
        %2874 = vmatmul.bf16.gmra.mxu0 %v2769
        %v2875 = vpop.f32.mrf.mxu0
        %v2876 = vadd.f32 0.0, %v2875
        %v2877 = vpop.f32.mrf.mxu0
        %v2878 = vadd.f32 0.0, %v2877
        %2879 = vmatmul.bf16.gmra.mxu0 %v2772
        %v2880 = vpop.f32.mrf.mxu0
        %v2881 = vadd.f32 0.0, %v2880
        %v2882 = vpop.f32.mrf.mxu0
        %v2883 = vadd.f32 0.0, %v2882
        %2884 = vmatmul.bf16.gmra.mxu0 %v2775
        %v2885 = vpop.f32.mrf.mxu0
        %v2886 = vadd.f32 0.0, %v2885
        %v2887 = vpop.f32.mrf.mxu0
        %v2888 = vadd.f32 0.0, %v2887
        %2889 = vmatmul.bf16.gmra.mxu0 %v2778
        %v2890 = vpop.f32.mrf.mxu0
        %v2891 = vadd.f32 0.0, %v2890
        %v2892 = vpop.f32.mrf.mxu0
        %v2893 = vadd.f32 0.0, %v2892
        %2894 = vmatmul.bf16.gmra.mxu0 %v2781
        %v2895 = vpop.f32.mrf.mxu0
        %v2896 = vadd.f32 0.0, %v2895
        %v2897 = vpop.f32.mrf.mxu0
        %v2898 = vadd.f32 0.0, %v2897
        %2899 = vmatmul.bf16.gmra.mxu0 %v2784
        %v2900 = vpop.f32.mrf.mxu0
        %v2901 = vadd.f32 0.0, %v2900
        %v2902 = vpop.f32.mrf.mxu0
        %v2903 = vadd.f32 0.0, %v2902
        %2904 = vmatmul.bf16.gmra.mxu0 %v2787
        %v2905 = vpop.f32.mrf.mxu0
        %v2906 = vadd.f32 0.0, %v2905
        %v2907 = vpop.f32.mrf.mxu0
        %v2908 = vadd.f32 0.0, %v2907
        %2909 = vmatmul.bf16.gmra.mxu0 %v2790
        %v2910 = vpop.f32.mrf.mxu0
        %v2911 = vadd.f32 0.0, %v2910
        %v2912 = vpop.f32.mrf.mxu0
        %v2913 = vadd.f32 0.0, %v2912
        %2914 = vmatmul.bf16.gmra.mxu0 %v2793
        %v2915 = vpop.f32.mrf.mxu0
        %v2916 = vadd.f32 0.0, %v2915
        %v2917 = vpop.f32.mrf.mxu0
        %v2918 = vadd.f32 0.0, %v2917
        %2919 = vmatmul.bf16.gmra.mxu0 %v2796
        %v2920 = vpop.f32.mrf.mxu0
        %v2921 = vadd.f32 0.0, %v2920
        %v2922 = vpop.f32.mrf.mxu0
        %v2923 = vadd.f32 0.0, %v2922
        %2924 = vmatmul.bf16.gmra.mxu0 %v2799
        %v2925 = vpop.f32.mrf.mxu0
        %v2926 = vadd.f32 0.0, %v2925
        %v2927 = vpop.f32.mrf.mxu0
        %v2928 = vadd.f32 0.0, %v2927
        %2929 = vmatmul.bf16.gmra.mxu0 %v2802
        %v2930 = vpop.f32.mrf.mxu0
        %v2931 = vadd.f32 0.0, %v2930
        %v2932 = vpop.f32.mrf.mxu0
        %v2933 = vadd.f32 0.0, %v2932
        %2934 = vmatmul.bf16.gmra.mxu0 %v2805
        %v2935 = vpop.f32.mrf.mxu0
        %v2936 = vadd.f32 0.0, %v2935
        %v2937 = vpop.f32.mrf.mxu0
        %v2938 = vadd.f32 0.0, %v2937
        %2939 = vmatmul.bf16.gmra.mxu0 %v2808
        %v2940 = vpop.f32.mrf.mxu0
        %v2941 = vadd.f32 0.0, %v2940
        %v2942 = vpop.f32.mrf.mxu0
        %v2943 = vadd.f32 0.0, %v2942
        %2944 = vmatmul.bf16.gmra.mxu0 %v2811
        %v2945 = vpop.f32.mrf.mxu0
        %v2946 = vadd.f32 0.0, %v2945
        %v2947 = vpop.f32.mrf.mxu0
        %v2948 = vadd.f32 0.0, %v2947
        %2949 = vdwg.mxu0
        %2950 = vmatpush.bf16.xpose.msra.mxu0 %v2859
        %2951 = vmatpush.bf16.xpose.msra.mxu0 %v2856
        %2952 = vmatpush.bf16.xpose.msra.mxu0 %v2853
        %2953 = vmatpush.bf16.xpose.msra.mxu0 %v2850
        %2954 = vmatpush.bf16.xpose.msra.mxu0 %v2847
        %2955 = vmatpush.bf16.xpose.msra.mxu0 %v2844
        %2956 = vmatpush.bf16.xpose.msra.mxu0 %v2841
        %2957 = vmatpush.bf16.xpose.msra.mxu0 %v2838
        %2958 = vmatmul.bf16.gmra.mxu0 %v2766
        %v2959 = vpop.f32.mrf.mxu0
        %v2960 = vadd.f32 0.0, %v2959
        %v2961 = vpop.f32.mrf.mxu0
        %v2962 = vadd.f32 0.0, %v2961
        %2963 = vmatmul.bf16.gmra.mxu0 %v2769
        %v2964 = vpop.f32.mrf.mxu0
        %v2965 = vadd.f32 0.0, %v2964
        %v2966 = vpop.f32.mrf.mxu0
        %v2967 = vadd.f32 0.0, %v2966
        %2968 = vmatmul.bf16.gmra.mxu0 %v2772
        %v2969 = vpop.f32.mrf.mxu0
        %v2970 = vadd.f32 0.0, %v2969
        %v2971 = vpop.f32.mrf.mxu0
        %v2972 = vadd.f32 0.0, %v2971
        %2973 = vmatmul.bf16.gmra.mxu0 %v2775
        %v2974 = vpop.f32.mrf.mxu0
        %v2975 = vadd.f32 0.0, %v2974
        %v2976 = vpop.f32.mrf.mxu0
        %v2977 = vadd.f32 0.0, %v2976
        %2978 = vmatmul.bf16.gmra.mxu0 %v2778
        %v2979 = vpop.f32.mrf.mxu0
        %v2980 = vadd.f32 0.0, %v2979
        %v2981 = vpop.f32.mrf.mxu0
        %v2982 = vadd.f32 0.0, %v2981
        %2983 = vmatmul.bf16.gmra.mxu0 %v2781
        %v2984 = vpop.f32.mrf.mxu0
        %v2985 = vadd.f32 0.0, %v2984
        %v2986 = vpop.f32.mrf.mxu0
        %v2987 = vadd.f32 0.0, %v2986
        %2988 = vmatmul.bf16.gmra.mxu0 %v2784
        %v2989 = vpop.f32.mrf.mxu0
        %v2990 = vadd.f32 0.0, %v2989
        %v2991 = vpop.f32.mrf.mxu0
        %v2992 = vadd.f32 0.0, %v2991
        %2993 = vmatmul.bf16.gmra.mxu0 %v2787
        %v2994 = vpop.f32.mrf.mxu0
        %v2995 = vadd.f32 0.0, %v2994
        %v2996 = vpop.f32.mrf.mxu0
        %v2997 = vadd.f32 0.0, %v2996
        %2998 = vmatmul.bf16.gmra.mxu0 %v2790
        %v2999 = vpop.f32.mrf.mxu0
        %v3000 = vadd.f32 0.0, %v2999
        %v3001 = vpop.f32.mrf.mxu0
        %v3002 = vadd.f32 0.0, %v3001
        %3003 = vmatmul.bf16.gmra.mxu0 %v2793
        %v3004 = vpop.f32.mrf.mxu0
        %v3005 = vadd.f32 0.0, %v3004
        %v3006 = vpop.f32.mrf.mxu0
        %v3007 = vadd.f32 0.0, %v3006
        %3008 = vmatmul.bf16.gmra.mxu0 %v2796
        %v3009 = vpop.f32.mrf.mxu0
        %v3010 = vadd.f32 0.0, %v3009
        %v3011 = vpop.f32.mrf.mxu0
        %v3012 = vadd.f32 0.0, %v3011
        %3013 = vmatmul.bf16.gmra.mxu0 %v2799
        %v3014 = vpop.f32.mrf.mxu0
        %v3015 = vadd.f32 0.0, %v3014
        %v3016 = vpop.f32.mrf.mxu0
        %v3017 = vadd.f32 0.0, %v3016
        %3018 = vmatmul.bf16.gmra.mxu0 %v2802
        %v3019 = vpop.f32.mrf.mxu0
        %v3020 = vadd.f32 0.0, %v3019
        %v3021 = vpop.f32.mrf.mxu0
        %v3022 = vadd.f32 0.0, %v3021
        %3023 = vmatmul.bf16.gmra.mxu0 %v2805
        %v3024 = vpop.f32.mrf.mxu0
        %v3025 = vadd.f32 0.0, %v3024
        %v3026 = vpop.f32.mrf.mxu0
        %v3027 = vadd.f32 0.0, %v3026
        %3028 = vmatmul.bf16.gmra.mxu0 %v2808
        %v3029 = vpop.f32.mrf.mxu0
        %v3030 = vadd.f32 0.0, %v3029
        %v3031 = vpop.f32.mrf.mxu0
        %v3032 = vadd.f32 0.0, %v3031
        %3033 = vmatmul.bf16.gmra.mxu0 %v2811
        %v3034 = vpop.f32.mrf.mxu0
        %v3035 = vadd.f32 0.0, %v3034
        %v3036 = vpop.f32.mrf.mxu0
        %v3037 = vadd.f32 0.0, %v3036
        %3038 = vdwg.mxu0
        %v3039 = vmax.f32 %v2871, %v2960
        %3040 = vmax.xlane.f32.xlu0 %v3039
        %v3041 = vpop.xlane.xlu0 %3040
        %v3042 = vmax.f32 %v2873, %v2962
        %3043 = vmax.xlane.f32.xlu0 %v3042
        %v3044 = vpop.xlane.xlu0 %3043
        %v3045 = vmax.f32 %v2876, %v2965
        %3046 = vmax.xlane.f32.xlu0 %v3045
        %v3047 = vpop.xlane.xlu0 %3046
        %v3048 = vmax.f32 %v2878, %v2967
        %3049 = vmax.xlane.f32.xlu0 %v3048
        %v3050 = vpop.xlane.xlu0 %3049
        %v3051 = vmax.f32 %v2881, %v2970
        %3052 = vmax.xlane.f32.xlu0 %v3051
        %v3053 = vpop.xlane.xlu0 %3052
        %v3054 = vmax.f32 %v2883, %v2972
        %3055 = vmax.xlane.f32.xlu0 %v3054
        %v3056 = vpop.xlane.xlu0 %3055
        %v3057 = vmax.f32 %v2886, %v2975
        %3058 = vmax.xlane.f32.xlu0 %v3057
        %v3059 = vpop.xlane.xlu0 %3058
        %v3060 = vmax.f32 %v2888, %v2977
        %3061 = vmax.xlane.f32.xlu0 %v3060
        %v3062 = vpop.xlane.xlu0 %3061
        %v3063 = vmax.f32 %v2891, %v2980
        %3064 = vmax.xlane.f32.xlu0 %v3063
        %v3065 = vpop.xlane.xlu0 %3064
        %v3066 = vmax.f32 %v2893, %v2982
        %3067 = vmax.xlane.f32.xlu0 %v3066
        %v3068 = vpop.xlane.xlu0 %3067
        %v3069 = vmax.f32 %v2896, %v2985
        %3070 = vmax.xlane.f32.xlu0 %v3069
        %v3071 = vpop.xlane.xlu0 %3070
        %v3072 = vmax.f32 %v2898, %v2987
        %3073 = vmax.xlane.f32.xlu0 %v3072
        %v3074 = vpop.xlane.xlu0 %3073
        %v3075 = vmax.f32 %v2901, %v2990
        %3076 = vmax.xlane.f32.xlu0 %v3075
        %v3077 = vpop.xlane.xlu0 %3076
        %v3078 = vmax.f32 %v2903, %v2992
        %3079 = vmax.xlane.f32.xlu0 %v3078
        %v3080 = vpop.xlane.xlu0 %3079
        %v3081 = vmax.f32 %v2906, %v2995
        %3082 = vmax.xlane.f32.xlu0 %v3081
        %v3083 = vpop.xlane.xlu0 %3082
        %v3084 = vmax.f32 %v2908, %v2997
        %3085 = vmax.xlane.f32.xlu0 %v3084
        %v3086 = vpop.xlane.xlu0 %3085
        %v3087 = vmax.f32 %v2911, %v3000
        %3088 = vmax.xlane.f32.xlu0 %v3087
        %v3089 = vpop.xlane.xlu0 %3088
        %v3090 = vmax.f32 %v2913, %v3002
        %3091 = vmax.xlane.f32.xlu0 %v3090
        %v3092 = vpop.xlane.xlu0 %3091
        %v3093 = vmax.f32 %v2916, %v3005
        %3094 = vmax.xlane.f32.xlu0 %v3093
        %v3095 = vpop.xlane.xlu0 %3094
        %v3096 = vmax.f32 %v2918, %v3007
        %3097 = vmax.xlane.f32.xlu0 %v3096
        %v3098 = vpop.xlane.xlu0 %3097
        %v3099 = vmax.f32 %v2921, %v3010
        %3100 = vmax.xlane.f32.xlu0 %v3099
        %v3101 = vpop.xlane.xlu0 %3100
        %v3102 = vmax.f32 %v2923, %v3012
        %3103 = vmax.xlane.f32.xlu0 %v3102
        %v3104 = vpop.xlane.xlu0 %3103
        %v3105 = vmax.f32 %v2926, %v3015
        %3106 = vmax.xlane.f32.xlu0 %v3105
        %v3107 = vpop.xlane.xlu0 %3106
        %v3108 = vmax.f32 %v2928, %v3017
        %3109 = vmax.xlane.f32.xlu0 %v3108
        %v3110 = vpop.xlane.xlu0 %3109
        %v3111 = vmax.f32 %v2931, %v3020
        %3112 = vmax.xlane.f32.xlu0 %v3111
        %v3113 = vpop.xlane.xlu0 %3112
        %v3114 = vmax.f32 %v2933, %v3022
        %3115 = vmax.xlane.f32.xlu0 %v3114
        %v3116 = vpop.xlane.xlu0 %3115
        %v3117 = vmax.f32 %v2936, %v3025
        %3118 = vmax.xlane.f32.xlu0 %v3117
        %v3119 = vpop.xlane.xlu0 %3118
        %v3120 = vmax.f32 %v2938, %v3027
        %3121 = vmax.xlane.f32.xlu0 %v3120
        %v3122 = vpop.xlane.xlu0 %3121
        %v3123 = vmax.f32 %v2941, %v3030
        %3124 = vmax.xlane.f32.xlu0 %v3123
        %v3125 = vpop.xlane.xlu0 %3124
        %v3126 = vmax.f32 %v2943, %v3032
        %3127 = vmax.xlane.f32.xlu0 %v3126
        %v3128 = vpop.xlane.xlu0 %3127
        %v3129 = vmax.f32 %v2946, %v3035
        %3130 = vmax.xlane.f32.xlu0 %v3129
        %v3131 = vpop.xlane.xlu0 %3130
        %v3132 = vmax.f32 %v2948, %v3037
        %3133 = vmax.xlane.f32.xlu0 %v3132
        %v3134 = vpop.xlane.xlu0 %3133
        %v3135 = vsub.f32 %v2871, %v3041
        %v3136 = vsub.f32 %v2960, %v3041
        %v3137 = vsub.f32 %v2873, %v3044
        %v3138 = vsub.f32 %v2962, %v3044
        %v3139 = vsub.f32 %v2876, %v3047
        %v3140 = vsub.f32 %v2965, %v3047
        %v3141 = vsub.f32 %v2878, %v3050
        %v3142 = vsub.f32 %v2967, %v3050
        %v3143 = vsub.f32 %v2881, %v3053
        %v3144 = vsub.f32 %v2970, %v3053
        %v3145 = vsub.f32 %v2883, %v3056
        %v3146 = vsub.f32 %v2972, %v3056
        %v3147 = vsub.f32 %v2886, %v3059
        %v3148 = vsub.f32 %v2975, %v3059
        %v3149 = vsub.f32 %v2888, %v3062
        %v3150 = vsub.f32 %v2977, %v3062
        %v3151 = vsub.f32 %v2891, %v3065
        %v3152 = vsub.f32 %v2980, %v3065
        %v3153 = vsub.f32 %v2893, %v3068
        %v3154 = vsub.f32 %v2982, %v3068
        %v3155 = vsub.f32 %v2896, %v3071
        %v3156 = vsub.f32 %v2985, %v3071
        %v3157 = vsub.f32 %v2898, %v3074
        %v3158 = vsub.f32 %v2987, %v3074
        %v3159 = vsub.f32 %v2901, %v3077
        %v3160 = vsub.f32 %v2990, %v3077
        %v3161 = vsub.f32 %v2903, %v3080
        %v3162 = vsub.f32 %v2992, %v3080
        %v3163 = vsub.f32 %v2906, %v3083
        %v3164 = vsub.f32 %v2995, %v3083
        %v3165 = vsub.f32 %v2908, %v3086
        %v3166 = vsub.f32 %v2997, %v3086
        %v3167 = vsub.f32 %v2911, %v3089
        %v3168 = vsub.f32 %v3000, %v3089
        %v3169 = vsub.f32 %v2913, %v3092
        %v3170 = vsub.f32 %v3002, %v3092
        %v3171 = vsub.f32 %v2916, %v3095
        %v3172 = vsub.f32 %v3005, %v3095
        %v3173 = vsub.f32 %v2918, %v3098
        %v3174 = vsub.f32 %v3007, %v3098
        %v3175 = vsub.f32 %v2921, %v3101
        %v3176 = vsub.f32 %v3010, %v3101
        %v3177 = vsub.f32 %v2923, %v3104
        %v3178 = vsub.f32 %v3012, %v3104
        %v3179 = vsub.f32 %v2926, %v3107
        %v3180 = vsub.f32 %v3015, %v3107
        %v3181 = vsub.f32 %v2928, %v3110
        %v3182 = vsub.f32 %v3017, %v3110
        %v3183 = vsub.f32 %v2931, %v3113
        %v3184 = vsub.f32 %v3020, %v3113
        %v3185 = vsub.f32 %v2933, %v3116
        %v3186 = vsub.f32 %v3022, %v3116
        %v3187 = vsub.f32 %v2936, %v3119
        %v3188 = vsub.f32 %v3025, %v3119
        %v3189 = vsub.f32 %v2938, %v3122
        %v3190 = vsub.f32 %v3027, %v3122
        %v3191 = vsub.f32 %v2941, %v3125
        %v3192 = vsub.f32 %v3030, %v3125
        %v3193 = vsub.f32 %v2943, %v3128
        %v3194 = vsub.f32 %v3032, %v3128
        %v3195 = vsub.f32 %v2946, %v3131
        %v3196 = vsub.f32 %v3035, %v3131
        %v3197 = vsub.f32 %v2948, %v3134
        %v3198 = vsub.f32 %v3037, %v3134
        %v3199 = vmul.f32 %v3135, 1.442695
        %v3200 = vpow.pop %v3199
        %v3201 = vmul.f32 %v3136, 1.442695
        %v3202 = vpow.pop %v3201
        %v3203 = vmul.f32 %v3137, 1.442695
        %v3204 = vpow.pop %v3203
        %v3205 = vmul.f32 %v3138, 1.442695
        %v3206 = vpow.pop %v3205
        %v3207 = vmul.f32 %v3139, 1.442695
        %v3208 = vpow.pop %v3207
        %v3209 = vmul.f32 %v3140, 1.442695
        %v3210 = vpow.pop %v3209
        %v3211 = vmul.f32 %v3141, 1.442695
        %v3212 = vpow.pop %v3211
        %v3213 = vmul.f32 %v3142, 1.442695
        %v3214 = vpow.pop %v3213
        %v3215 = vmul.f32 %v3143, 1.442695
        %v3216 = vpow.pop %v3215
        %v3217 = vmul.f32 %v3144, 1.442695
        %v3218 = vpow.pop %v3217
        %v3219 = vmul.f32 %v3145, 1.442695
        %v3220 = vpow.pop %v3219
        %v3221 = vmul.f32 %v3146, 1.442695
        %v3222 = vpow.pop %v3221
        %v3223 = vmul.f32 %v3147, 1.442695
        %v3224 = vpow.pop %v3223
        %v3225 = vmul.f32 %v3148, 1.442695
        %v3226 = vpow.pop %v3225
        %v3227 = vmul.f32 %v3149, 1.442695
        %v3228 = vpow.pop %v3227
        %v3229 = vmul.f32 %v3150, 1.442695
        %v3230 = vpow.pop %v3229
        %v3231 = vmul.f32 %v3151, 1.442695
        %v3232 = vpow.pop %v3231
        %v3233 = vmul.f32 %v3152, 1.442695
        %v3234 = vpow.pop %v3233
        %v3235 = vmul.f32 %v3153, 1.442695
        %v3236 = vpow.pop %v3235
        %v3237 = vmul.f32 %v3154, 1.442695
        %v3238 = vpow.pop %v3237
        %v3239 = vmul.f32 %v3155, 1.442695
        %v3240 = vpow.pop %v3239
        %v3241 = vmul.f32 %v3156, 1.442695
        %v3242 = vpow.pop %v3241
        %v3243 = vmul.f32 %v3157, 1.442695
        %v3244 = vpow.pop %v3243
        %v3245 = vmul.f32 %v3158, 1.442695
        %v3246 = vpow.pop %v3245
        %v3247 = vmul.f32 %v3159, 1.442695
        %v3248 = vpow.pop %v3247
        %v3249 = vmul.f32 %v3160, 1.442695
        %v3250 = vpow.pop %v3249
        %v3251 = vmul.f32 %v3161, 1.442695
        %v3252 = vpow.pop %v3251
        %v3253 = vmul.f32 %v3162, 1.442695
        %v3254 = vpow.pop %v3253
        %v3255 = vmul.f32 %v3163, 1.442695
        %v3256 = vpow.pop %v3255
        %v3257 = vmul.f32 %v3164, 1.442695
        %v3258 = vpow.pop %v3257
        %v3259 = vmul.f32 %v3165, 1.442695
        %v3260 = vpow.pop %v3259
        %v3261 = vmul.f32 %v3166, 1.442695
        %v3262 = vpow.pop %v3261
        %v3263 = vmul.f32 %v3167, 1.442695
        %v3264 = vpow.pop %v3263
        %v3265 = vmul.f32 %v3168, 1.442695
        %v3266 = vpow.pop %v3265
        %v3267 = vmul.f32 %v3169, 1.442695
        %v3268 = vpow.pop %v3267
        %v3269 = vmul.f32 %v3170, 1.442695
        %v3270 = vpow.pop %v3269
        %v3271 = vmul.f32 %v3171, 1.442695
        %v3272 = vpow.pop %v3271
        %v3273 = vmul.f32 %v3172, 1.442695
        %v3274 = vpow.pop %v3273
        %v3275 = vmul.f32 %v3173, 1.442695
        %v3276 = vpow.pop %v3275
        %v3277 = vmul.f32 %v3174, 1.442695
        %v3278 = vpow.pop %v3277
        %v3279 = vmul.f32 %v3175, 1.442695
        %v3280 = vpow.pop %v3279
        %v3281 = vmul.f32 %v3176, 1.442695
        %v3282 = vpow.pop %v3281
        %v3283 = vmul.f32 %v3177, 1.442695
        %v3284 = vpow.pop %v3283
        %v3285 = vmul.f32 %v3178, 1.442695
        %v3286 = vpow.pop %v3285
        %v3287 = vmul.f32 %v3179, 1.442695
        %v3288 = vpow.pop %v3287
        %v3289 = vmul.f32 %v3180, 1.442695
        %v3290 = vpow.pop %v3289
        %v3291 = vmul.f32 %v3181, 1.442695
        %v3292 = vpow.pop %v3291
        %v3293 = vmul.f32 %v3182, 1.442695
        %v3294 = vpow.pop %v3293
        %v3295 = vmul.f32 %v3183, 1.442695
        %v3296 = vpow.pop %v3295
        %v3297 = vmul.f32 %v3184, 1.442695
        %v3298 = vpow.pop %v3297
        %v3299 = vmul.f32 %v3185, 1.442695
        %v3300 = vpow.pop %v3299
        %v3301 = vmul.f32 %v3186, 1.442695
        %v3302 = vpow.pop %v3301
        %v3303 = vmul.f32 %v3187, 1.442695
        %v3304 = vpow.pop %v3303
        %v3305 = vmul.f32 %v3188, 1.442695
        %v3306 = vpow.pop %v3305
        %v3307 = vmul.f32 %v3189, 1.442695
        %v3308 = vpow.pop %v3307
        %v3309 = vmul.f32 %v3190, 1.442695
        %v3310 = vpow.pop %v3309
        %v3311 = vmul.f32 %v3191, 1.442695
        %v3312 = vpow.pop %v3311
        %v3313 = vmul.f32 %v3192, 1.442695
        %v3314 = vpow.pop %v3313
        %v3315 = vmul.f32 %v3193, 1.442695
        %v3316 = vpow.pop %v3315
        %v3317 = vmul.f32 %v3194, 1.442695
        %v3318 = vpow.pop %v3317
        %v3319 = vmul.f32 %v3195, 1.442695
        %v3320 = vpow.pop %v3319
        %v3321 = vmul.f32 %v3196, 1.442695
        %v3322 = vpow.pop %v3321
        %v3323 = vmul.f32 %v3197, 1.442695
        %v3324 = vpow.pop %v3323
        %v3325 = vmul.f32 %v3198, 1.442695
        %v3326 = vpow.pop %v3325
        %v3327 = vadd.f32 %v3200, %v3202
        %3328 = vadd.xlane.f32.xlu0 %v3327
        %v3329 = vpop.xlane.xlu0 %3328
        %v3330 = vadd.f32 %v3204, %v3206
        %3331 = vadd.xlane.f32.xlu0 %v3330
        %v3332 = vpop.xlane.xlu0 %3331
        %v3333 = vadd.f32 %v3208, %v3210
        %3334 = vadd.xlane.f32.xlu0 %v3333
        %v3335 = vpop.xlane.xlu0 %3334
        %v3336 = vadd.f32 %v3212, %v3214
        %3337 = vadd.xlane.f32.xlu0 %v3336
        %v3338 = vpop.xlane.xlu0 %3337
        %v3339 = vadd.f32 %v3216, %v3218
        %3340 = vadd.xlane.f32.xlu0 %v3339
        %v3341 = vpop.xlane.xlu0 %3340
        %v3342 = vadd.f32 %v3220, %v3222
        %3343 = vadd.xlane.f32.xlu0 %v3342
        %v3344 = vpop.xlane.xlu0 %3343
        %v3345 = vadd.f32 %v3224, %v3226
        %3346 = vadd.xlane.f32.xlu0 %v3345
        %v3347 = vpop.xlane.xlu0 %3346
        %v3348 = vadd.f32 %v3228, %v3230
        %3349 = vadd.xlane.f32.xlu0 %v3348
        %v3350 = vpop.xlane.xlu0 %3349
        %v3351 = vadd.f32 %v3232, %v3234
        %3352 = vadd.xlane.f32.xlu0 %v3351
        %v3353 = vpop.xlane.xlu0 %3352
        %v3354 = vadd.f32 %v3236, %v3238
        %3355 = vadd.xlane.f32.xlu0 %v3354
        %v3356 = vpop.xlane.xlu0 %3355
        %v3357 = vadd.f32 %v3240, %v3242
        %3358 = vadd.xlane.f32.xlu0 %v3357
        %v3359 = vpop.xlane.xlu0 %3358
        %v3360 = vadd.f32 %v3244, %v3246
        %3361 = vadd.xlane.f32.xlu0 %v3360
        %v3362 = vpop.xlane.xlu0 %3361
        %v3363 = vadd.f32 %v3248, %v3250
        %3364 = vadd.xlane.f32.xlu0 %v3363
        %v3365 = vpop.xlane.xlu0 %3364
        %v3366 = vadd.f32 %v3252, %v3254
        %3367 = vadd.xlane.f32.xlu0 %v3366
        %v3368 = vpop.xlane.xlu0 %3367
        %v3369 = vadd.f32 %v3256, %v3258
        %3370 = vadd.xlane.f32.xlu0 %v3369
        %v3371 = vpop.xlane.xlu0 %3370
        %v3372 = vadd.f32 %v3260, %v3262
        %3373 = vadd.xlane.f32.xlu0 %v3372
        %v3374 = vpop.xlane.xlu0 %3373
        %v3375 = vadd.f32 %v3264, %v3266
        %3376 = vadd.xlane.f32.xlu0 %v3375
        %v3377 = vpop.xlane.xlu0 %3376
        %v3378 = vadd.f32 %v3268, %v3270
        %3379 = vadd.xlane.f32.xlu0 %v3378
        %v3380 = vpop.xlane.xlu0 %3379
        %v3381 = vadd.f32 %v3272, %v3274
        %3382 = vadd.xlane.f32.xlu0 %v3381
        %v3383 = vpop.xlane.xlu0 %3382
        %v3384 = vadd.f32 %v3276, %v3278
        %3385 = vadd.xlane.f32.xlu0 %v3384
        %v3386 = vpop.xlane.xlu0 %3385
        %v3387 = vadd.f32 %v3280, %v3282
        %3388 = vadd.xlane.f32.xlu0 %v3387
        %v3389 = vpop.xlane.xlu0 %3388
        %v3390 = vadd.f32 %v3284, %v3286
        %3391 = vadd.xlane.f32.xlu0 %v3390
        %v3392 = vpop.xlane.xlu0 %3391
        %v3393 = vadd.f32 %v3288, %v3290
        %3394 = vadd.xlane.f32.xlu0 %v3393
        %v3395 = vpop.xlane.xlu0 %3394
        %v3396 = vadd.f32 %v3292, %v3294
        %3397 = vadd.xlane.f32.xlu0 %v3396
        %v3398 = vpop.xlane.xlu0 %3397
        %v3399 = vadd.f32 %v3296, %v3298
        %3400 = vadd.xlane.f32.xlu0 %v3399
        %v3401 = vpop.xlane.xlu0 %3400
        %v3402 = vadd.f32 %v3300, %v3302
        %3403 = vadd.xlane.f32.xlu0 %v3402
        %v3404 = vpop.xlane.xlu0 %3403
        %v3405 = vadd.f32 %v3304, %v3306
        %3406 = vadd.xlane.f32.xlu0 %v3405
        %v3407 = vpop.xlane.xlu0 %3406
        %v3408 = vadd.f32 %v3308, %v3310
        %3409 = vadd.xlane.f32.xlu0 %v3408
        %v3410 = vpop.xlane.xlu0 %3409
        %v3411 = vadd.f32 %v3312, %v3314
        %3412 = vadd.xlane.f32.xlu0 %v3411
        %v3413 = vpop.xlane.xlu0 %3412
        %v3414 = vadd.f32 %v3316, %v3318
        %3415 = vadd.xlane.f32.xlu0 %v3414
        %v3416 = vpop.xlane.xlu0 %3415
        %v3417 = vadd.f32 %v3320, %v3322
        %3418 = vadd.xlane.f32.xlu0 %v3417
        %v3419 = vpop.xlane.xlu0 %3418
        %v3420 = vadd.f32 %v3324, %v3326
        %3421 = vadd.xlane.f32.xlu0 %v3420
        %v3422 = vpop.xlane.xlu0 %3421
        %v3423 = vpack.c.bf16 %v3204, %v3200
        %v3424 = vpack.c.bf16 %v3206, %v3202
        %v3425 = vpack.c.bf16 %v3212, %v3208
        %v3426 = vpack.c.bf16 %v3214, %v3210
        %v3427 = vpack.c.bf16 %v3220, %v3216
        %v3428 = vpack.c.bf16 %v3222, %v3218
        %v3429 = vpack.c.bf16 %v3228, %v3224
        %v3430 = vpack.c.bf16 %v3230, %v3226
        %v3431 = vpack.c.bf16 %v3236, %v3232
        %v3432 = vpack.c.bf16 %v3238, %v3234
        %v3433 = vpack.c.bf16 %v3244, %v3240
        %v3434 = vpack.c.bf16 %v3246, %v3242
        %v3435 = vpack.c.bf16 %v3252, %v3248
        %v3436 = vpack.c.bf16 %v3254, %v3250
        %v3437 = vpack.c.bf16 %v3260, %v3256
        %v3438 = vpack.c.bf16 %v3262, %v3258
        %v3439 = vpack.c.bf16 %v3268, %v3264
        %v3440 = vpack.c.bf16 %v3270, %v3266
        %v3441 = vpack.c.bf16 %v3276, %v3272
        %v3442 = vpack.c.bf16 %v3278, %v3274
        %v3443 = vpack.c.bf16 %v3284, %v3280
        %v3444 = vpack.c.bf16 %v3286, %v3282
        %v3445 = vpack.c.bf16 %v3292, %v3288
        %v3446 = vpack.c.bf16 %v3294, %v3290
        %v3447 = vpack.c.bf16 %v3300, %v3296
        %v3448 = vpack.c.bf16 %v3302, %v3298
        %v3449 = vpack.c.bf16 %v3308, %v3304
        %v3450 = vpack.c.bf16 %v3310, %v3306
        %v3451 = vpack.c.bf16 %v3316, %v3312
        %v3452 = vpack.c.bf16 %v3318, %v3314
        %v3453 = vpack.c.bf16 %v3324, %v3320
        %v3454 = vpack.c.bf16 %v3326, %v3322
        %3471 = vmatpush.bf16.msra.mxu0 %v2748
        %3472 = vmatpush.bf16.msra.mxu0 %v2746
        %3473 = vmatpush.bf16.msra.mxu0 %v2744
        %3474 = vmatpush.bf16.msra.mxu0 %v2742
        %3475 = vmatpush.bf16.msra.mxu0 %v2740
        %3476 = vmatpush.bf16.msra.mxu0 %v2738
        %3477 = vmatpush.bf16.msra.mxu0 %v2736
        %3478 = vmatpush.bf16.msra.mxu0 %v2734
        %3479 = vmatmul.bf16.gmra.mxu0 %v3423
        %v3480 = vpop.f32.mrf.mxu0
        %v3481 = vadd.f32 0.0, %v3480
        %v3482 = vpop.f32.mrf.mxu0
        %v3483 = vadd.f32 0.0, %v3482
        %3484 = vmatmul.bf16.gmra.mxu0 %v3425
        %v3485 = vpop.f32.mrf.mxu0
        %v3486 = vadd.f32 0.0, %v3485
        %v3487 = vpop.f32.mrf.mxu0
        %v3488 = vadd.f32 0.0, %v3487
        %3489 = vmatmul.bf16.gmra.mxu0 %v3427
        %v3490 = vpop.f32.mrf.mxu0
        %v3491 = vadd.f32 0.0, %v3490
        %v3492 = vpop.f32.mrf.mxu0
        %v3493 = vadd.f32 0.0, %v3492
        %3494 = vmatmul.bf16.gmra.mxu0 %v3429
        %v3495 = vpop.f32.mrf.mxu0
        %v3496 = vadd.f32 0.0, %v3495
        %v3497 = vpop.f32.mrf.mxu0
        %v3498 = vadd.f32 0.0, %v3497
        %3499 = vmatmul.bf16.gmra.mxu0 %v3431
        %v3500 = vpop.f32.mrf.mxu0
        %v3501 = vadd.f32 0.0, %v3500
        %v3502 = vpop.f32.mrf.mxu0
        %v3503 = vadd.f32 0.0, %v3502
        %3504 = vmatmul.bf16.gmra.mxu0 %v3433
        %v3505 = vpop.f32.mrf.mxu0
        %v3506 = vadd.f32 0.0, %v3505
        %v3507 = vpop.f32.mrf.mxu0
        %v3508 = vadd.f32 0.0, %v3507
        %3509 = vmatmul.bf16.gmra.mxu0 %v3435
        %v3510 = vpop.f32.mrf.mxu0
        %v3511 = vadd.f32 0.0, %v3510
        %v3512 = vpop.f32.mrf.mxu0
        %v3513 = vadd.f32 0.0, %v3512
        %3514 = vmatmul.bf16.gmra.mxu0 %v3437
        %v3515 = vpop.f32.mrf.mxu0
        %v3516 = vadd.f32 0.0, %v3515
        %v3517 = vpop.f32.mrf.mxu0
        %v3518 = vadd.f32 0.0, %v3517
        %3519 = vmatmul.bf16.gmra.mxu0 %v3439
        %v3520 = vpop.f32.mrf.mxu0
        %v3521 = vadd.f32 0.0, %v3520
        %v3522 = vpop.f32.mrf.mxu0
        %v3523 = vadd.f32 0.0, %v3522
        %3524 = vmatmul.bf16.gmra.mxu0 %v3441
        %v3525 = vpop.f32.mrf.mxu0
        %v3526 = vadd.f32 0.0, %v3525
        %v3527 = vpop.f32.mrf.mxu0
        %v3528 = vadd.f32 0.0, %v3527
        %3529 = vmatmul.bf16.gmra.mxu0 %v3443
        %v3530 = vpop.f32.mrf.mxu0
        %v3531 = vadd.f32 0.0, %v3530
        %v3532 = vpop.f32.mrf.mxu0
        %v3533 = vadd.f32 0.0, %v3532
        %3534 = vmatmul.bf16.gmra.mxu0 %v3445
        %v3535 = vpop.f32.mrf.mxu0
        %v3536 = vadd.f32 0.0, %v3535
        %v3537 = vpop.f32.mrf.mxu0
        %v3538 = vadd.f32 0.0, %v3537
        %3539 = vmatmul.bf16.gmra.mxu0 %v3447
        %v3540 = vpop.f32.mrf.mxu0
        %v3541 = vadd.f32 0.0, %v3540
        %v3542 = vpop.f32.mrf.mxu0
        %v3543 = vadd.f32 0.0, %v3542
        %3544 = vmatmul.bf16.gmra.mxu0 %v3449
        %v3545 = vpop.f32.mrf.mxu0
        %v3546 = vadd.f32 0.0, %v3545
        %v3547 = vpop.f32.mrf.mxu0
        %v3548 = vadd.f32 0.0, %v3547
        %3549 = vmatmul.bf16.gmra.mxu0 %v3451
        %v3550 = vpop.f32.mrf.mxu0
        %v3551 = vadd.f32 0.0, %v3550
        %v3552 = vpop.f32.mrf.mxu0
        %v3553 = vadd.f32 0.0, %v3552
        %3554 = vmatmul.bf16.gmra.mxu0 %v3453
        %v3555 = vpop.f32.mrf.mxu0
        %v3556 = vadd.f32 0.0, %v3555
        %v3557 = vpop.f32.mrf.mxu0
        %v3558 = vadd.f32 0.0, %v3557
        %3559 = vdwg.mxu0
        %3560 = vmatpush.bf16.msra.mxu0 %v2764
        %3561 = vmatpush.bf16.msra.mxu0 %v2762
        %3562 = vmatpush.bf16.msra.mxu0 %v2760
        %3563 = vmatpush.bf16.msra.mxu0 %v2758
        %3564 = vmatpush.bf16.msra.mxu0 %v2756
        %3565 = vmatpush.bf16.msra.mxu0 %v2754
        %3566 = vmatpush.bf16.msra.mxu0 %v2752
        %3567 = vmatpush.bf16.msra.mxu0 %v2750
        %3568 = vmatmul.bf16.gmra.mxu0 %v3424
        %v3569 = vpop.f32.mrf.mxu0
        %v3570 = vadd.f32 %v3481, %v3569
        %v3571 = vpop.f32.mrf.mxu0
        %v3572 = vadd.f32 %v3483, %v3571
        %3573 = vmatmul.bf16.gmra.mxu0 %v3426
        %v3574 = vpop.f32.mrf.mxu0
        %v3575 = vadd.f32 %v3486, %v3574
        %v3576 = vpop.f32.mrf.mxu0
        %v3577 = vadd.f32 %v3488, %v3576
        %3578 = vmatmul.bf16.gmra.mxu0 %v3428
        %v3579 = vpop.f32.mrf.mxu0
        %v3580 = vadd.f32 %v3491, %v3579
        %v3581 = vpop.f32.mrf.mxu0
        %v3582 = vadd.f32 %v3493, %v3581
        %3583 = vmatmul.bf16.gmra.mxu0 %v3430
        %v3584 = vpop.f32.mrf.mxu0
        %v3585 = vadd.f32 %v3496, %v3584
        %v3586 = vpop.f32.mrf.mxu0
        %v3587 = vadd.f32 %v3498, %v3586
        %3588 = vmatmul.bf16.gmra.mxu0 %v3432
        %v3589 = vpop.f32.mrf.mxu0
        %v3590 = vadd.f32 %v3501, %v3589
        %v3591 = vpop.f32.mrf.mxu0
        %v3592 = vadd.f32 %v3503, %v3591
        %3593 = vmatmul.bf16.gmra.mxu0 %v3434
        %v3594 = vpop.f32.mrf.mxu0
        %v3595 = vadd.f32 %v3506, %v3594
        %v3596 = vpop.f32.mrf.mxu0
        %v3597 = vadd.f32 %v3508, %v3596
        %3598 = vmatmul.bf16.gmra.mxu0 %v3436
        %v3599 = vpop.f32.mrf.mxu0
        %v3600 = vadd.f32 %v3511, %v3599
        %v3601 = vpop.f32.mrf.mxu0
        %v3602 = vadd.f32 %v3513, %v3601
        %3603 = vmatmul.bf16.gmra.mxu0 %v3438
        %v3604 = vpop.f32.mrf.mxu0
        %v3605 = vadd.f32 %v3516, %v3604
        %v3606 = vpop.f32.mrf.mxu0
        %v3607 = vadd.f32 %v3518, %v3606
        %3608 = vmatmul.bf16.gmra.mxu0 %v3440
        %v3609 = vpop.f32.mrf.mxu0
        %v3610 = vadd.f32 %v3521, %v3609
        %v3611 = vpop.f32.mrf.mxu0
        %v3612 = vadd.f32 %v3523, %v3611
        %3613 = vmatmul.bf16.gmra.mxu0 %v3442
        %v3614 = vpop.f32.mrf.mxu0
        %v3615 = vadd.f32 %v3526, %v3614
        %v3616 = vpop.f32.mrf.mxu0
        %v3617 = vadd.f32 %v3528, %v3616
        %3618 = vmatmul.bf16.gmra.mxu0 %v3444
        %v3619 = vpop.f32.mrf.mxu0
        %v3620 = vadd.f32 %v3531, %v3619
        %v3621 = vpop.f32.mrf.mxu0
        %v3622 = vadd.f32 %v3533, %v3621
        %3623 = vmatmul.bf16.gmra.mxu0 %v3446
        %v3624 = vpop.f32.mrf.mxu0
        %v3625 = vadd.f32 %v3536, %v3624
        %v3626 = vpop.f32.mrf.mxu0
        %v3627 = vadd.f32 %v3538, %v3626
        %3628 = vmatmul.bf16.gmra.mxu0 %v3448
        %v3629 = vpop.f32.mrf.mxu0
        %v3630 = vadd.f32 %v3541, %v3629
        %v3631 = vpop.f32.mrf.mxu0
        %v3632 = vadd.f32 %v3543, %v3631
        %3633 = vmatmul.bf16.gmra.mxu0 %v3450
        %v3634 = vpop.f32.mrf.mxu0
        %v3635 = vadd.f32 %v3546, %v3634
        %v3636 = vpop.f32.mrf.mxu0
        %v3637 = vadd.f32 %v3548, %v3636
        %3638 = vmatmul.bf16.gmra.mxu0 %v3452
        %v3639 = vpop.f32.mrf.mxu0
        %v3640 = vadd.f32 %v3551, %v3639
        %v3641 = vpop.f32.mrf.mxu0
        %v3642 = vadd.f32 %v3553, %v3641
        %3643 = vmatmul.bf16.gmra.mxu0 %v3454
        %v3644 = vpop.f32.mrf.mxu0
        %v3645 = vadd.f32 %v3556, %v3644
        %v3646 = vpop.f32.mrf.mxu0
        %v3647 = vadd.f32 %v3558, %v3646
        %3648 = vdwg.mxu0
        %v3649 = vrcp.pop %v3329
        %v3650 = vrcp.pop %v3332
        %v3651 = vrcp.pop %v3335
        %v3652 = vrcp.pop %v3338
        %v3653 = vrcp.pop %v3341
        %v3654 = vrcp.pop %v3344
        %v3655 = vrcp.pop %v3347
        %v3656 = vrcp.pop %v3350
        %v3657 = vrcp.pop %v3353
        %v3658 = vrcp.pop %v3356
        %v3659 = vrcp.pop %v3359
        %v3660 = vrcp.pop %v3362
        %v3661 = vrcp.pop %v3365
        %v3662 = vrcp.pop %v3368
        %v3663 = vrcp.pop %v3371
        %v3664 = vrcp.pop %v3374
        %v3665 = vrcp.pop %v3377
        %v3666 = vrcp.pop %v3380
        %v3667 = vrcp.pop %v3383
        %v3668 = vrcp.pop %v3386
        %v3669 = vrcp.pop %v3389
        %v3670 = vrcp.pop %v3392
        %v3671 = vrcp.pop %v3395
        %v3672 = vrcp.pop %v3398
        %v3673 = vrcp.pop %v3401
        %v3674 = vrcp.pop %v3404
        %v3675 = vrcp.pop %v3407
        %v3676 = vrcp.pop %v3410
        %v3677 = vrcp.pop %v3413
        %v3678 = vrcp.pop %v3416
        %v3679 = vrcp.pop %v3419
        %v3680 = vrcp.pop %v3422
        %v3681 = vmul.f32 %v3570, %v3649
        %v3682 = vmul.f32 %v3572, %v3650
        %v3683 = vmul.f32 %v3575, %v3651
        %v3684 = vmul.f32 %v3577, %v3652
        %v3685 = vmul.f32 %v3580, %v3653
        %v3686 = vmul.f32 %v3582, %v3654
        %v3687 = vmul.f32 %v3585, %v3655
        %v3688 = vmul.f32 %v3587, %v3656
        %v3689 = vmul.f32 %v3590, %v3657
        %v3690 = vmul.f32 %v3592, %v3658
        %v3691 = vmul.f32 %v3595, %v3659
        %v3692 = vmul.f32 %v3597, %v3660
        %v3693 = vmul.f32 %v3600, %v3661
        %v3694 = vmul.f32 %v3602, %v3662
        %v3695 = vmul.f32 %v3605, %v3663
        %v3696 = vmul.f32 %v3607, %v3664
        %v3697 = vmul.f32 %v3610, %v3665
        %v3698 = vmul.f32 %v3612, %v3666
        %v3699 = vmul.f32 %v3615, %v3667
        %v3700 = vmul.f32 %v3617, %v3668
        %v3701 = vmul.f32 %v3620, %v3669
        %v3702 = vmul.f32 %v3622, %v3670
        %v3703 = vmul.f32 %v3625, %v3671
        %v3704 = vmul.f32 %v3627, %v3672
        %v3705 = vmul.f32 %v3630, %v3673
        %v3706 = vmul.f32 %v3632, %v3674
        %v3707 = vmul.f32 %v3635, %v3675
        %v3708 = vmul.f32 %v3637, %v3676
        %v3709 = vmul.f32 %v3640, %v3677
        %v3710 = vmul.f32 %v3642, %v3678
        %v3711 = vmul.f32 %v3645, %v3679
        %v3712 = vmul.f32 %v3647, %v3680
        %3745 = vrot.lane.b32.xlu0 %v3681, 32
        %v3746 = vpop.permute.xlu0 %3745
        %3747 = vrot.lane.b32.xlu0 %v3682, 32
        %v3748 = vpop.permute.xlu0 %3747
        %3749 = vrot.lane.b32.xlu0 %v3683, 32
        %v3750 = vpop.permute.xlu0 %3749
        %3751 = vrot.lane.b32.xlu0 %v3684, 32
        %v3752 = vpop.permute.xlu0 %3751
        %3753 = vrot.lane.b32.xlu0 %v3685, 32
        %v3754 = vpop.permute.xlu0 %3753
        %3755 = vrot.lane.b32.xlu0 %v3686, 32
        %v3756 = vpop.permute.xlu0 %3755
        %3757 = vrot.lane.b32.xlu0 %v3687, 32
        %v3758 = vpop.permute.xlu0 %3757
        %3759 = vrot.lane.b32.xlu0 %v3688, 32
        %v3760 = vpop.permute.xlu0 %3759
        %3761 = vrot.lane.b32.xlu0 %v3689, 32
        %v3762 = vpop.permute.xlu0 %3761
        %3763 = vrot.lane.b32.xlu0 %v3690, 32
        %v3764 = vpop.permute.xlu0 %3763
        %3765 = vrot.lane.b32.xlu0 %v3691, 32
        %v3766 = vpop.permute.xlu0 %3765
        %3767 = vrot.lane.b32.xlu0 %v3692, 32
        %v3768 = vpop.permute.xlu0 %3767
        %3769 = vrot.lane.b32.xlu0 %v3693, 32
        %v3770 = vpop.permute.xlu0 %3769
        %3771 = vrot.lane.b32.xlu0 %v3694, 32
        %v3772 = vpop.permute.xlu0 %3771
        %3773 = vrot.lane.b32.xlu0 %v3695, 32
        %v3774 = vpop.permute.xlu0 %3773
        %3775 = vrot.lane.b32.xlu0 %v3696, 32
        %v3776 = vpop.permute.xlu0 %3775
        %3777 = vrot.lane.b32.xlu0 %v3697, 32
        %v3778 = vpop.permute.xlu0 %3777
        %3779 = vrot.lane.b32.xlu0 %v3698, 32
        %v3780 = vpop.permute.xlu0 %3779
        %3781 = vrot.lane.b32.xlu0 %v3699, 32
        %v3782 = vpop.permute.xlu0 %3781
        %3783 = vrot.lane.b32.xlu0 %v3700, 32
        %v3784 = vpop.permute.xlu0 %3783
        %3785 = vrot.lane.b32.xlu0 %v3701, 32
        %v3786 = vpop.permute.xlu0 %3785
        %3787 = vrot.lane.b32.xlu0 %v3702, 32
        %v3788 = vpop.permute.xlu0 %3787
        %3789 = vrot.lane.b32.xlu0 %v3703, 32
        %v3790 = vpop.permute.xlu0 %3789
        %3791 = vrot.lane.b32.xlu0 %v3704, 32
        %v3792 = vpop.permute.xlu0 %3791
        %3793 = vrot.lane.b32.xlu0 %v3705, 32
        %v3794 = vpop.permute.xlu0 %3793
        %3795 = vrot.lane.b32.xlu0 %v3706, 32
        %v3796 = vpop.permute.xlu0 %3795
        %3797 = vrot.lane.b32.xlu0 %v3707, 32
        %v3798 = vpop.permute.xlu0 %3797
        %3799 = vrot.lane.b32.xlu0 %v3708, 32
        %v3800 = vpop.permute.xlu0 %3799
        %3801 = vrot.lane.b32.xlu0 %v3709, 32
        %v3802 = vpop.permute.xlu0 %3801
        %3803 = vrot.lane.b32.xlu0 %v3710, 32
        %v3804 = vpop.permute.xlu0 %3803
        %3805 = vrot.lane.b32.xlu0 %v3711, 32
        %v3806 = vpop.permute.xlu0 %3805
        %3807 = vrot.lane.b32.xlu0 %v3712, 32
        %v3808 = vpop.permute.xlu0 %3807
        %vm3841 = vcmask 392448
        %3842 = vst.msk [vmem:[#allocation2] sm:$0xff] %vm3841, %v3746
        %3843 = vst.msk [vmem:[#allocation2 + $0x8] sm:$0xff] %vm3841, %v3748
        %3844 = vst.msk [vmem:[#allocation2 + $0x10] sm:$0xff] %vm3841, %v3750
        %3845 = vst.msk [vmem:[#allocation2 + $0x18] sm:$0xff] %vm3841, %v3752
        %3846 = vst.msk [vmem:[#allocation2 + $0x20] sm:$0xff] %vm3841, %v3754
        %3847 = vst.msk [vmem:[#allocation2 + $0x28] sm:$0xff] %vm3841, %v3756
        %3848 = vst.msk [vmem:[#allocation2 + $0x30] sm:$0xff] %vm3841, %v3758
        %3849 = vst.msk [vmem:[#allocation2 + $0x38] sm:$0xff] %vm3841, %v3760
        %3850 = vst.msk [vmem:[#allocation2 + $0x40] sm:$0xff] %vm3841, %v3762
        %3851 = vst.msk [vmem:[#allocation2 + $0x48] sm:$0xff] %vm3841, %v3764
        %3852 = vst.msk [vmem:[#allocation2 + $0x50] sm:$0xff] %vm3841, %v3766
        %3853 = vst.msk [vmem:[#allocation2 + $0x58] sm:$0xff] %vm3841, %v3768
        %3854 = vst.msk [vmem:[#allocation2 + $0x60] sm:$0xff] %vm3841, %v3770
        %3855 = vst.msk [vmem:[#allocation2 + $0x68] sm:$0xff] %vm3841, %v3772
        %3856 = vst.msk [vmem:[#allocation2 + $0x70] sm:$0xff] %vm3841, %v3774
        %3857 = vst.msk [vmem:[#allocation2 + $0x78] sm:$0xff] %vm3841, %v3776
        %3858 = vst.msk [vmem:[#allocation2 + $0x80] sm:$0xff] %vm3841, %v3778
        %3859 = vst.msk [vmem:[#allocation2 + $0x88] sm:$0xff] %vm3841, %v3780
        %3860 = vst.msk [vmem:[#allocation2 + $0x90] sm:$0xff] %vm3841, %v3782
        %3861 = vst.msk [vmem:[#allocation2 + $0x98] sm:$0xff] %vm3841, %v3784
        %3862 = vst.msk [vmem:[#allocation2 + $0xa0] sm:$0xff] %vm3841, %v3786
        %3863 = vst.msk [vmem:[#allocation2 + $0xa8] sm:$0xff] %vm3841, %v3788
        %3864 = vst.msk [vmem:[#allocation2 + $0xb0] sm:$0xff] %vm3841, %v3790
        %3865 = vst.msk [vmem:[#allocation2 + $0xb8] sm:$0xff] %vm3841, %v3792
        %3866 = vst.msk [vmem:[#allocation2 + $0xc0] sm:$0xff] %vm3841, %v3794
        %3867 = vst.msk [vmem:[#allocation2 + $0xc8] sm:$0xff] %vm3841, %v3796
        %3868 = vst.msk [vmem:[#allocation2 + $0xd0] sm:$0xff] %vm3841, %v3798
        %3869 = vst.msk [vmem:[#allocation2 + $0xd8] sm:$0xff] %vm3841, %v3800
        %3870 = vst.msk [vmem:[#allocation2 + $0xe0] sm:$0xff] %vm3841, %v3802
        %3871 = vst.msk [vmem:[#allocation2 + $0xe8] sm:$0xff] %vm3841, %v3804
        %3872 = vst.msk [vmem:[#allocation2 + $0xf0] sm:$0xff] %vm3841, %v3806
        %3873 = vst.msk [vmem:[#allocation2 + $0xf8] sm:$0xff] %vm3841, %v3808
        %v3874 = vld [vmem:[%s185] sm:$0xff]
        %v3875 = vld [vmem:[%s185 + $0x8] sm:$0xff]
        %v3876 = vld [vmem:[%s185 + $0x10] sm:$0xff]
        %v3877 = vld [vmem:[%s185 + $0x18] sm:$0xff]
        %v3878 = vld [vmem:[%s185 + $0x20] sm:$0xff]
        %v3879 = vld [vmem:[%s185 + $0x28] sm:$0xff]
        %v3880 = vld [vmem:[%s185 + $0x30] sm:$0xff]
        %v3881 = vld [vmem:[%s185 + $0x38] sm:$0xff]
        %v3882 = vld [vmem:[%s185 + $0x40] sm:$0xff]
        %v3883 = vld [vmem:[%s185 + $0x48] sm:$0xff]
        %v3884 = vld [vmem:[%s185 + $0x50] sm:$0xff]
        %v3885 = vld [vmem:[%s185 + $0x58] sm:$0xff]
        %v3886 = vld [vmem:[%s185 + $0x60] sm:$0xff]
        %v3887 = vld [vmem:[%s185 + $0x68] sm:$0xff]
        %v3888 = vld [vmem:[%s185 + $0x70] sm:$0xff]
        %v3889 = vld [vmem:[%s185 + $0x78] sm:$0xff]
        %v3890 = vld [vmem:[%s185 + $0x80] sm:$0xff]
        %v3891 = vld [vmem:[%s185 + $0x88] sm:$0xff]
        %v3892 = vld [vmem:[%s185 + $0x90] sm:$0xff]
        %v3893 = vld [vmem:[%s185 + $0x98] sm:$0xff]
        %v3894 = vld [vmem:[%s185 + $0xa0] sm:$0xff]
        %v3895 = vld [vmem:[%s185 + $0xa8] sm:$0xff]
        %v3896 = vld [vmem:[%s185 + $0xb0] sm:$0xff]
        %v3897 = vld [vmem:[%s185 + $0xb8] sm:$0xff]
        %v3898 = vld [vmem:[%s185 + $0xc0] sm:$0xff]
        %v3899 = vld [vmem:[%s185 + $0xc8] sm:$0xff]
        %v3900 = vld [vmem:[%s185 + $0xd0] sm:$0xff]
        %v3901 = vld [vmem:[%s185 + $0xd8] sm:$0xff]
        %v3902 = vld [vmem:[%s185 + $0xe0] sm:$0xff]
        %v3903 = vld [vmem:[%s185 + $0xe8] sm:$0xff]
        %v3904 = vld [vmem:[%s185 + $0xf0] sm:$0xff]
        %v3905 = vld [vmem:[%s185 + $0xf8] sm:$0xff]
        %v3906 = vmul.f32 %v3874, 0.25
        %v3907 = vmul.f32 %v3875, 0.25
        %v3908 = vmul.f32 %v3876, 0.25
        %v3909 = vmul.f32 %v3877, 0.25
        %v3910 = vmul.f32 %v3878, 0.25
        %v3911 = vmul.f32 %v3879, 0.25
        %v3912 = vmul.f32 %v3880, 0.25
        %v3913 = vmul.f32 %v3881, 0.25
        %v3914 = vmul.f32 %v3882, 0.25
        %v3915 = vmul.f32 %v3883, 0.25
        %v3916 = vmul.f32 %v3884, 0.25
        %v3917 = vmul.f32 %v3885, 0.25
        %v3918 = vmul.f32 %v3886, 0.25
        %v3919 = vmul.f32 %v3887, 0.25
        %v3920 = vmul.f32 %v3888, 0.25
        %v3921 = vmul.f32 %v3889, 0.25
        %v3922 = vmul.f32 %v3890, 0.25
        %v3923 = vmul.f32 %v3891, 0.25
        %v3924 = vmul.f32 %v3892, 0.25
        %v3925 = vmul.f32 %v3893, 0.25
        %v3926 = vmul.f32 %v3894, 0.25
        %v3927 = vmul.f32 %v3895, 0.25
        %v3928 = vmul.f32 %v3896, 0.25
        %v3929 = vmul.f32 %v3897, 0.25
        %v3930 = vmul.f32 %v3898, 0.25
        %v3931 = vmul.f32 %v3899, 0.25
        %v3932 = vmul.f32 %v3900, 0.25
        %v3933 = vmul.f32 %v3901, 0.25
        %v3934 = vmul.f32 %v3902, 0.25
        %v3935 = vmul.f32 %v3903, 0.25
        %v3936 = vmul.f32 %v3904, 0.25
        %v3937 = vmul.f32 %v3905, 0.25
        %v3938 = vpack.c.bf16 %v3907, %v3906
        %v3939 = vpack.c.bf16 %v3909, %v3908
        %v3940 = vpack.c.bf16 %v3911, %v3910
        %v3941 = vpack.c.bf16 %v3913, %v3912
        %v3942 = vpack.c.bf16 %v3915, %v3914
        %v3943 = vpack.c.bf16 %v3917, %v3916
        %v3944 = vpack.c.bf16 %v3919, %v3918
        %v3945 = vpack.c.bf16 %v3921, %v3920
        %v3946 = vpack.c.bf16 %v3923, %v3922
        %v3947 = vpack.c.bf16 %v3925, %v3924
        %v3948 = vpack.c.bf16 %v3927, %v3926
        %v3949 = vpack.c.bf16 %v3929, %v3928
        %v3950 = vpack.c.bf16 %v3931, %v3930
        %v3951 = vpack.c.bf16 %v3933, %v3932
        %v3952 = vpack.c.bf16 %v3935, %v3934
        %v3953 = vpack.c.bf16 %v3937, %v3936
        %v3954 = vpack.c.bf16 %v3875, %v3874
        %v3955 = vpack.c.bf16 %v3877, %v3876
        %v3956 = vpack.c.bf16 %v3879, %v3878
        %v3957 = vpack.c.bf16 %v3881, %v3880
        %v3958 = vpack.c.bf16 %v3883, %v3882
        %v3959 = vpack.c.bf16 %v3885, %v3884
        %v3960 = vpack.c.bf16 %v3887, %v3886
        %v3961 = vpack.c.bf16 %v3889, %v3888
        %v3962 = vpack.c.bf16 %v3891, %v3890
        %v3963 = vpack.c.bf16 %v3893, %v3892
        %v3964 = vpack.c.bf16 %v3895, %v3894
        %v3965 = vpack.c.bf16 %v3897, %v3896
        %v3966 = vpack.c.bf16 %v3899, %v3898
        %v3967 = vpack.c.bf16 %v3901, %v3900
        %v3968 = vpack.c.bf16 %v3903, %v3902
        %v3969 = vpack.c.bf16 %v3905, %v3904
        %3986 = vrot.lane.b32.xlu0 %v3938, 80
        %v3987 = vpop.permute.xlu0 %3986
        %3988 = vrot.lane.b32.xlu0 %v3939, 80
        %v3989 = vpop.permute.xlu0 %3988
        %3990 = vrot.lane.b32.xlu0 %v3940, 80
        %v3991 = vpop.permute.xlu0 %3990
        %3992 = vrot.lane.b32.xlu0 %v3941, 80
        %v3993 = vpop.permute.xlu0 %3992
        %3994 = vrot.lane.b32.xlu0 %v3942, 80
        %v3995 = vpop.permute.xlu0 %3994
        %3996 = vrot.lane.b32.xlu0 %v3943, 80
        %v3997 = vpop.permute.xlu0 %3996
        %3998 = vrot.lane.b32.xlu0 %v3944, 80
        %v3999 = vpop.permute.xlu0 %3998
        %4000 = vrot.lane.b32.xlu0 %v3945, 80
        %v4001 = vpop.permute.xlu0 %4000
        %4002 = vrot.lane.b32.xlu0 %v3946, 80
        %v4003 = vpop.permute.xlu0 %4002
        %4004 = vrot.lane.b32.xlu0 %v3947, 80
        %v4005 = vpop.permute.xlu0 %4004
        %4006 = vrot.lane.b32.xlu0 %v3948, 80
        %v4007 = vpop.permute.xlu0 %4006
        %4008 = vrot.lane.b32.xlu0 %v3949, 80
        %v4009 = vpop.permute.xlu0 %4008
        %4010 = vrot.lane.b32.xlu0 %v3950, 80
        %v4011 = vpop.permute.xlu0 %4010
        %4012 = vrot.lane.b32.xlu0 %v3951, 80
        %v4013 = vpop.permute.xlu0 %4012
        %4014 = vrot.lane.b32.xlu0 %v3952, 80
        %v4015 = vpop.permute.xlu0 %4014
        %4016 = vrot.lane.b32.xlu0 %v3953, 80
        %v4017 = vpop.permute.xlu0 %4016
        %4034 = vrot.lane.b32.xlu0 %v3954, 80
        %v4035 = vpop.permute.xlu0 %4034
        %4036 = vrot.lane.b32.xlu0 %v3955, 80
        %v4037 = vpop.permute.xlu0 %4036
        %4038 = vrot.lane.b32.xlu0 %v3956, 80
        %v4039 = vpop.permute.xlu0 %4038
        %4040 = vrot.lane.b32.xlu0 %v3957, 80
        %v4041 = vpop.permute.xlu0 %4040
        %4042 = vrot.lane.b32.xlu0 %v3958, 80
        %v4043 = vpop.permute.xlu0 %4042
        %4044 = vrot.lane.b32.xlu0 %v3959, 80
        %v4045 = vpop.permute.xlu0 %4044
        %4046 = vrot.lane.b32.xlu0 %v3960, 80
        %v4047 = vpop.permute.xlu0 %4046
        %4048 = vrot.lane.b32.xlu0 %v3961, 80
        %v4049 = vpop.permute.xlu0 %4048
        %4050 = vrot.lane.b32.xlu0 %v3962, 80
        %v4051 = vpop.permute.xlu0 %4050
        %4052 = vrot.lane.b32.xlu0 %v3963, 80
        %v4053 = vpop.permute.xlu0 %4052
        %4054 = vrot.lane.b32.xlu0 %v3964, 80
        %v4055 = vpop.permute.xlu0 %4054
        %4056 = vrot.lane.b32.xlu0 %v3965, 80
        %v4057 = vpop.permute.xlu0 %4056
        %4058 = vrot.lane.b32.xlu0 %v3966, 80
        %v4059 = vpop.permute.xlu0 %4058
        %4060 = vrot.lane.b32.xlu0 %v3967, 80
        %v4061 = vpop.permute.xlu0 %4060
        %4062 = vrot.lane.b32.xlu0 %v3968, 80
        %v4063 = vpop.permute.xlu0 %4062
        %4064 = vrot.lane.b32.xlu0 %v3969, 80
        %v4065 = vpop.permute.xlu0 %4064
        %v4067 = vsel %vm307, %v3987, 0
        %v4070 = vsel %vm307, %v3989, 0
        %v4073 = vsel %vm307, %v3991, 0
        %v4076 = vsel %vm307, %v3993, 0
        %v4079 = vsel %vm307, %v3995, 0
        %v4082 = vsel %vm307, %v3997, 0
        %v4085 = vsel %vm307, %v3999, 0
        %v4088 = vsel %vm307, %v4001, 0
        %v4091 = vsel %vm307, %v4003, 0
        %v4094 = vsel %vm307, %v4005, 0
        %v4097 = vsel %vm307, %v4007, 0
        %v4100 = vsel %vm307, %v4009, 0
        %v4103 = vsel %vm307, %v4011, 0
        %v4106 = vsel %vm307, %v4013, 0
        %v4109 = vsel %vm307, %v4015, 0
        %v4112 = vsel %vm307, %v4017, 0
        %v4115 = vsel %vm307, %v4035, 0
        %v4118 = vsel %vm307, %v4037, 0
        %v4121 = vsel %vm307, %v4039, 0
        %v4124 = vsel %vm307, %v4041, 0
        %v4127 = vsel %vm307, %v4043, 0
        %v4130 = vsel %vm307, %v4045, 0
        %v4133 = vsel %vm307, %v4047, 0
        %v4136 = vsel %vm307, %v4049, 0
        %v4139 = vsel %vm307, %v4051, 0
        %v4142 = vsel %vm307, %v4053, 0
        %v4145 = vsel %vm307, %v4055, 0
        %v4148 = vsel %vm307, %v4057, 0
        %v4151 = vsel %vm307, %v4059, 0
        %v4154 = vsel %vm307, %v4061, 0
        %v4157 = vsel %vm307, %v4063, 0
        %v4160 = vsel %vm307, %v4065, 0
        %4162 = vmatpush.bf16.xpose.msra.mxu0 %v4136
        %4163 = vmatpush.bf16.xpose.msra.mxu0 %v4133
        %4164 = vmatpush.bf16.xpose.msra.mxu0 %v4130
        %4165 = vmatpush.bf16.xpose.msra.mxu0 %v4127
        %4166 = vmatpush.bf16.xpose.msra.mxu0 %v4124
        %4167 = vmatpush.bf16.xpose.msra.mxu0 %v4121
        %4168 = vmatpush.bf16.xpose.msra.mxu0 %v4118
        %4169 = vmatpush.bf16.xpose.msra.mxu0 %v4115
        %4170 = vmatmul.bf16.gmra.mxu0 %v4067
        %v4171 = vpop.f32.mrf.mxu0
        %v4172 = vadd.f32 0.0, %v4171
        %v4173 = vpop.f32.mrf.mxu0
        %v4174 = vadd.f32 0.0, %v4173
        %4175 = vmatmul.bf16.gmra.mxu0 %v4070
        %v4176 = vpop.f32.mrf.mxu0
        %v4177 = vadd.f32 0.0, %v4176
        %v4178 = vpop.f32.mrf.mxu0
        %v4179 = vadd.f32 0.0, %v4178
        %4180 = vmatmul.bf16.gmra.mxu0 %v4073
        %v4181 = vpop.f32.mrf.mxu0
        %v4182 = vadd.f32 0.0, %v4181
        %v4183 = vpop.f32.mrf.mxu0
        %v4184 = vadd.f32 0.0, %v4183
        %4185 = vmatmul.bf16.gmra.mxu0 %v4076
        %v4186 = vpop.f32.mrf.mxu0
        %v4187 = vadd.f32 0.0, %v4186
        %v4188 = vpop.f32.mrf.mxu0
        %v4189 = vadd.f32 0.0, %v4188
        %4190 = vmatmul.bf16.gmra.mxu0 %v4079
        %v4191 = vpop.f32.mrf.mxu0
        %v4192 = vadd.f32 0.0, %v4191
        %v4193 = vpop.f32.mrf.mxu0
        %v4194 = vadd.f32 0.0, %v4193
        %4195 = vmatmul.bf16.gmra.mxu0 %v4082
        %v4196 = vpop.f32.mrf.mxu0
        %v4197 = vadd.f32 0.0, %v4196
        %v4198 = vpop.f32.mrf.mxu0
        %v4199 = vadd.f32 0.0, %v4198
        %4200 = vmatmul.bf16.gmra.mxu0 %v4085
        %v4201 = vpop.f32.mrf.mxu0
        %v4202 = vadd.f32 0.0, %v4201
        %v4203 = vpop.f32.mrf.mxu0
        %v4204 = vadd.f32 0.0, %v4203
        %4205 = vmatmul.bf16.gmra.mxu0 %v4088
        %v4206 = vpop.f32.mrf.mxu0
        %v4207 = vadd.f32 0.0, %v4206
        %v4208 = vpop.f32.mrf.mxu0
        %v4209 = vadd.f32 0.0, %v4208
        %4210 = vmatmul.bf16.gmra.mxu0 %v4091
        %v4211 = vpop.f32.mrf.mxu0
        %v4212 = vadd.f32 0.0, %v4211
        %v4213 = vpop.f32.mrf.mxu0
        %v4214 = vadd.f32 0.0, %v4213
        %4215 = vmatmul.bf16.gmra.mxu0 %v4094
        %v4216 = vpop.f32.mrf.mxu0
        %v4217 = vadd.f32 0.0, %v4216
        %v4218 = vpop.f32.mrf.mxu0
        %v4219 = vadd.f32 0.0, %v4218
        %4220 = vmatmul.bf16.gmra.mxu0 %v4097
        %v4221 = vpop.f32.mrf.mxu0
        %v4222 = vadd.f32 0.0, %v4221
        %v4223 = vpop.f32.mrf.mxu0
        %v4224 = vadd.f32 0.0, %v4223
        %4225 = vmatmul.bf16.gmra.mxu0 %v4100
        %v4226 = vpop.f32.mrf.mxu0
        %v4227 = vadd.f32 0.0, %v4226
        %v4228 = vpop.f32.mrf.mxu0
        %v4229 = vadd.f32 0.0, %v4228
        %4230 = vmatmul.bf16.gmra.mxu0 %v4103
        %v4231 = vpop.f32.mrf.mxu0
        %v4232 = vadd.f32 0.0, %v4231
        %v4233 = vpop.f32.mrf.mxu0
        %v4234 = vadd.f32 0.0, %v4233
        %4235 = vmatmul.bf16.gmra.mxu0 %v4106
        %v4236 = vpop.f32.mrf.mxu0
        %v4237 = vadd.f32 0.0, %v4236
        %v4238 = vpop.f32.mrf.mxu0
        %v4239 = vadd.f32 0.0, %v4238
        %4240 = vmatmul.bf16.gmra.mxu0 %v4109
        %v4241 = vpop.f32.mrf.mxu0
        %v4242 = vadd.f32 0.0, %v4241
        %v4243 = vpop.f32.mrf.mxu0
        %v4244 = vadd.f32 0.0, %v4243
        %4245 = vmatmul.bf16.gmra.mxu0 %v4112
        %v4246 = vpop.f32.mrf.mxu0
        %v4247 = vadd.f32 0.0, %v4246
        %v4248 = vpop.f32.mrf.mxu0
        %v4249 = vadd.f32 0.0, %v4248
        %4250 = vdwg.mxu0
        %4251 = vmatpush.bf16.xpose.msra.mxu0 %v4160
        %4252 = vmatpush.bf16.xpose.msra.mxu0 %v4157
        %4253 = vmatpush.bf16.xpose.msra.mxu0 %v4154
        %4254 = vmatpush.bf16.xpose.msra.mxu0 %v4151
        %4255 = vmatpush.bf16.xpose.msra.mxu0 %v4148
        %4256 = vmatpush.bf16.xpose.msra.mxu0 %v4145
        %4257 = vmatpush.bf16.xpose.msra.mxu0 %v4142
        %4258 = vmatpush.bf16.xpose.msra.mxu0 %v4139
        %4259 = vmatmul.bf16.gmra.mxu0 %v4067
        %v4260 = vpop.f32.mrf.mxu0
        %v4261 = vadd.f32 0.0, %v4260
        %v4262 = vpop.f32.mrf.mxu0
        %v4263 = vadd.f32 0.0, %v4262
        %4264 = vmatmul.bf16.gmra.mxu0 %v4070
        %v4265 = vpop.f32.mrf.mxu0
        %v4266 = vadd.f32 0.0, %v4265
        %v4267 = vpop.f32.mrf.mxu0
        %v4268 = vadd.f32 0.0, %v4267
        %4269 = vmatmul.bf16.gmra.mxu0 %v4073
        %v4270 = vpop.f32.mrf.mxu0
        %v4271 = vadd.f32 0.0, %v4270
        %v4272 = vpop.f32.mrf.mxu0
        %v4273 = vadd.f32 0.0, %v4272
        %4274 = vmatmul.bf16.gmra.mxu0 %v4076
        %v4275 = vpop.f32.mrf.mxu0
        %v4276 = vadd.f32 0.0, %v4275
        %v4277 = vpop.f32.mrf.mxu0
        %v4278 = vadd.f32 0.0, %v4277
        %4279 = vmatmul.bf16.gmra.mxu0 %v4079
        %v4280 = vpop.f32.mrf.mxu0
        %v4281 = vadd.f32 0.0, %v4280
        %v4282 = vpop.f32.mrf.mxu0
        %v4283 = vadd.f32 0.0, %v4282
        %4284 = vmatmul.bf16.gmra.mxu0 %v4082
        %v4285 = vpop.f32.mrf.mxu0
        %v4286 = vadd.f32 0.0, %v4285
        %v4287 = vpop.f32.mrf.mxu0
        %v4288 = vadd.f32 0.0, %v4287
        %4289 = vmatmul.bf16.gmra.mxu0 %v4085
        %v4290 = vpop.f32.mrf.mxu0
        %v4291 = vadd.f32 0.0, %v4290
        %v4292 = vpop.f32.mrf.mxu0
        %v4293 = vadd.f32 0.0, %v4292
        %4294 = vmatmul.bf16.gmra.mxu0 %v4088
        %v4295 = vpop.f32.mrf.mxu0
        %v4296 = vadd.f32 0.0, %v4295
        %v4297 = vpop.f32.mrf.mxu0
        %v4298 = vadd.f32 0.0, %v4297
        %4299 = vmatmul.bf16.gmra.mxu0 %v4091
        %v4300 = vpop.f32.mrf.mxu0
        %v4301 = vadd.f32 0.0, %v4300
        %v4302 = vpop.f32.mrf.mxu0
        %v4303 = vadd.f32 0.0, %v4302
        %4304 = vmatmul.bf16.gmra.mxu0 %v4094
        %v4305 = vpop.f32.mrf.mxu0
        %v4306 = vadd.f32 0.0, %v4305
        %v4307 = vpop.f32.mrf.mxu0
        %v4308 = vadd.f32 0.0, %v4307
        %4309 = vmatmul.bf16.gmra.mxu0 %v4097
        %v4310 = vpop.f32.mrf.mxu0
        %v4311 = vadd.f32 0.0, %v4310
        %v4312 = vpop.f32.mrf.mxu0
        %v4313 = vadd.f32 0.0, %v4312
        %4314 = vmatmul.bf16.gmra.mxu0 %v4100
        %v4315 = vpop.f32.mrf.mxu0
        %v4316 = vadd.f32 0.0, %v4315
        %v4317 = vpop.f32.mrf.mxu0
        %v4318 = vadd.f32 0.0, %v4317
        %4319 = vmatmul.bf16.gmra.mxu0 %v4103
        %v4320 = vpop.f32.mrf.mxu0
        %v4321 = vadd.f32 0.0, %v4320
        %v4322 = vpop.f32.mrf.mxu0
        %v4323 = vadd.f32 0.0, %v4322
        %4324 = vmatmul.bf16.gmra.mxu0 %v4106
        %v4325 = vpop.f32.mrf.mxu0
        %v4326 = vadd.f32 0.0, %v4325
        %v4327 = vpop.f32.mrf.mxu0
        %v4328 = vadd.f32 0.0, %v4327
        %4329 = vmatmul.bf16.gmra.mxu0 %v4109
        %v4330 = vpop.f32.mrf.mxu0
        %v4331 = vadd.f32 0.0, %v4330
        %v4332 = vpop.f32.mrf.mxu0
        %v4333 = vadd.f32 0.0, %v4332
        %4334 = vmatmul.bf16.gmra.mxu0 %v4112
        %v4335 = vpop.f32.mrf.mxu0
        %v4336 = vadd.f32 0.0, %v4335
        %v4337 = vpop.f32.mrf.mxu0
        %v4338 = vadd.f32 0.0, %v4337
        %4339 = vdwg.mxu0
        %v4340 = vmax.f32 %v4172, %v4261
        %4341 = vmax.xlane.f32.xlu0 %v4340
        %v4342 = vpop.xlane.xlu0 %4341
        %v4343 = vmax.f32 %v4174, %v4263
        %4344 = vmax.xlane.f32.xlu0 %v4343
        %v4345 = vpop.xlane.xlu0 %4344
        %v4346 = vmax.f32 %v4177, %v4266
        %4347 = vmax.xlane.f32.xlu0 %v4346
        %v4348 = vpop.xlane.xlu0 %4347
        %v4349 = vmax.f32 %v4179, %v4268
        %4350 = vmax.xlane.f32.xlu0 %v4349
        %v4351 = vpop.xlane.xlu0 %4350
        %v4352 = vmax.f32 %v4182, %v4271
        %4353 = vmax.xlane.f32.xlu0 %v4352
        %v4354 = vpop.xlane.xlu0 %4353
        %v4355 = vmax.f32 %v4184, %v4273
        %4356 = vmax.xlane.f32.xlu0 %v4355
        %v4357 = vpop.xlane.xlu0 %4356
        %v4358 = vmax.f32 %v4187, %v4276
        %4359 = vmax.xlane.f32.xlu0 %v4358
        %v4360 = vpop.xlane.xlu0 %4359
        %v4361 = vmax.f32 %v4189, %v4278
        %4362 = vmax.xlane.f32.xlu0 %v4361
        %v4363 = vpop.xlane.xlu0 %4362
        %v4364 = vmax.f32 %v4192, %v4281
        %4365 = vmax.xlane.f32.xlu0 %v4364
        %v4366 = vpop.xlane.xlu0 %4365
        %v4367 = vmax.f32 %v4194, %v4283
        %4368 = vmax.xlane.f32.xlu0 %v4367
        %v4369 = vpop.xlane.xlu0 %4368
        %v4370 = vmax.f32 %v4197, %v4286
        %4371 = vmax.xlane.f32.xlu0 %v4370
        %v4372 = vpop.xlane.xlu0 %4371
        %v4373 = vmax.f32 %v4199, %v4288
        %4374 = vmax.xlane.f32.xlu0 %v4373
        %v4375 = vpop.xlane.xlu0 %4374
        %v4376 = vmax.f32 %v4202, %v4291
        %4377 = vmax.xlane.f32.xlu0 %v4376
        %v4378 = vpop.xlane.xlu0 %4377
        %v4379 = vmax.f32 %v4204, %v4293
        %4380 = vmax.xlane.f32.xlu0 %v4379
        %v4381 = vpop.xlane.xlu0 %4380
        %v4382 = vmax.f32 %v4207, %v4296
        %4383 = vmax.xlane.f32.xlu0 %v4382
        %v4384 = vpop.xlane.xlu0 %4383
        %v4385 = vmax.f32 %v4209, %v4298
        %4386 = vmax.xlane.f32.xlu0 %v4385
        %v4387 = vpop.xlane.xlu0 %4386
        %v4388 = vmax.f32 %v4212, %v4301
        %4389 = vmax.xlane.f32.xlu0 %v4388
        %v4390 = vpop.xlane.xlu0 %4389
        %v4391 = vmax.f32 %v4214, %v4303
        %4392 = vmax.xlane.f32.xlu0 %v4391
        %v4393 = vpop.xlane.xlu0 %4392
        %v4394 = vmax.f32 %v4217, %v4306
        %4395 = vmax.xlane.f32.xlu0 %v4394
        %v4396 = vpop.xlane.xlu0 %4395
        %v4397 = vmax.f32 %v4219, %v4308
        %4398 = vmax.xlane.f32.xlu0 %v4397
        %v4399 = vpop.xlane.xlu0 %4398
        %v4400 = vmax.f32 %v4222, %v4311
        %4401 = vmax.xlane.f32.xlu0 %v4400
        %v4402 = vpop.xlane.xlu0 %4401
        %v4403 = vmax.f32 %v4224, %v4313
        %4404 = vmax.xlane.f32.xlu0 %v4403
        %v4405 = vpop.xlane.xlu0 %4404
        %v4406 = vmax.f32 %v4227, %v4316
        %4407 = vmax.xlane.f32.xlu0 %v4406
        %v4408 = vpop.xlane.xlu0 %4407
        %v4409 = vmax.f32 %v4229, %v4318
        %4410 = vmax.xlane.f32.xlu0 %v4409
        %v4411 = vpop.xlane.xlu0 %4410
        %v4412 = vmax.f32 %v4232, %v4321
        %4413 = vmax.xlane.f32.xlu0 %v4412
        %v4414 = vpop.xlane.xlu0 %4413
        %v4415 = vmax.f32 %v4234, %v4323
        %4416 = vmax.xlane.f32.xlu0 %v4415
        %v4417 = vpop.xlane.xlu0 %4416
        %v4418 = vmax.f32 %v4237, %v4326
        %4419 = vmax.xlane.f32.xlu0 %v4418
        %v4420 = vpop.xlane.xlu0 %4419
        %v4421 = vmax.f32 %v4239, %v4328
        %4422 = vmax.xlane.f32.xlu0 %v4421
        %v4423 = vpop.xlane.xlu0 %4422
        %v4424 = vmax.f32 %v4242, %v4331
        %4425 = vmax.xlane.f32.xlu0 %v4424
        %v4426 = vpop.xlane.xlu0 %4425
        %v4427 = vmax.f32 %v4244, %v4333
        %4428 = vmax.xlane.f32.xlu0 %v4427
        %v4429 = vpop.xlane.xlu0 %4428
        %v4430 = vmax.f32 %v4247, %v4336
        %4431 = vmax.xlane.f32.xlu0 %v4430
        %v4432 = vpop.xlane.xlu0 %4431
        %v4433 = vmax.f32 %v4249, %v4338
        %4434 = vmax.xlane.f32.xlu0 %v4433
        %v4435 = vpop.xlane.xlu0 %4434
        %v4436 = vsub.f32 %v4172, %v4342
        %v4437 = vsub.f32 %v4261, %v4342
        %v4438 = vsub.f32 %v4174, %v4345
        %v4439 = vsub.f32 %v4263, %v4345
        %v4440 = vsub.f32 %v4177, %v4348
        %v4441 = vsub.f32 %v4266, %v4348
        %v4442 = vsub.f32 %v4179, %v4351
        %v4443 = vsub.f32 %v4268, %v4351
        %v4444 = vsub.f32 %v4182, %v4354
        %v4445 = vsub.f32 %v4271, %v4354
        %v4446 = vsub.f32 %v4184, %v4357
        %v4447 = vsub.f32 %v4273, %v4357
        %v4448 = vsub.f32 %v4187, %v4360
        %v4449 = vsub.f32 %v4276, %v4360
        %v4450 = vsub.f32 %v4189, %v4363
        %v4451 = vsub.f32 %v4278, %v4363
        %v4452 = vsub.f32 %v4192, %v4366
        %v4453 = vsub.f32 %v4281, %v4366
        %v4454 = vsub.f32 %v4194, %v4369
        %v4455 = vsub.f32 %v4283, %v4369
        %v4456 = vsub.f32 %v4197, %v4372
        %v4457 = vsub.f32 %v4286, %v4372
        %v4458 = vsub.f32 %v4199, %v4375
        %v4459 = vsub.f32 %v4288, %v4375
        %v4460 = vsub.f32 %v4202, %v4378
        %v4461 = vsub.f32 %v4291, %v4378
        %v4462 = vsub.f32 %v4204, %v4381
        %v4463 = vsub.f32 %v4293, %v4381
        %v4464 = vsub.f32 %v4207, %v4384
        %v4465 = vsub.f32 %v4296, %v4384
        %v4466 = vsub.f32 %v4209, %v4387
        %v4467 = vsub.f32 %v4298, %v4387
        %v4468 = vsub.f32 %v4212, %v4390
        %v4469 = vsub.f32 %v4301, %v4390
        %v4470 = vsub.f32 %v4214, %v4393
        %v4471 = vsub.f32 %v4303, %v4393
        %v4472 = vsub.f32 %v4217, %v4396
        %v4473 = vsub.f32 %v4306, %v4396
        %v4474 = vsub.f32 %v4219, %v4399
        %v4475 = vsub.f32 %v4308, %v4399
        %v4476 = vsub.f32 %v4222, %v4402
        %v4477 = vsub.f32 %v4311, %v4402
        %v4478 = vsub.f32 %v4224, %v4405
        %v4479 = vsub.f32 %v4313, %v4405
        %v4480 = vsub.f32 %v4227, %v4408
        %v4481 = vsub.f32 %v4316, %v4408
        %v4482 = vsub.f32 %v4229, %v4411
        %v4483 = vsub.f32 %v4318, %v4411
        %v4484 = vsub.f32 %v4232, %v4414
        %v4485 = vsub.f32 %v4321, %v4414
        %v4486 = vsub.f32 %v4234, %v4417
        %v4487 = vsub.f32 %v4323, %v4417
        %v4488 = vsub.f32 %v4237, %v4420
        %v4489 = vsub.f32 %v4326, %v4420
        %v4490 = vsub.f32 %v4239, %v4423
        %v4491 = vsub.f32 %v4328, %v4423
        %v4492 = vsub.f32 %v4242, %v4426
        %v4493 = vsub.f32 %v4331, %v4426
        %v4494 = vsub.f32 %v4244, %v4429
        %v4495 = vsub.f32 %v4333, %v4429
        %v4496 = vsub.f32 %v4247, %v4432
        %v4497 = vsub.f32 %v4336, %v4432
        %v4498 = vsub.f32 %v4249, %v4435
        %v4499 = vsub.f32 %v4338, %v4435
        %v4500 = vmul.f32 %v4436, 1.442695
        %v4501 = vpow.pop %v4500
        %v4502 = vmul.f32 %v4437, 1.442695
        %v4503 = vpow.pop %v4502
        %v4504 = vmul.f32 %v4438, 1.442695
        %v4505 = vpow.pop %v4504
        %v4506 = vmul.f32 %v4439, 1.442695
        %v4507 = vpow.pop %v4506
        %v4508 = vmul.f32 %v4440, 1.442695
        %v4509 = vpow.pop %v4508
        %v4510 = vmul.f32 %v4441, 1.442695
        %v4511 = vpow.pop %v4510
        %v4512 = vmul.f32 %v4442, 1.442695
        %v4513 = vpow.pop %v4512
        %v4514 = vmul.f32 %v4443, 1.442695
        %v4515 = vpow.pop %v4514
        %v4516 = vmul.f32 %v4444, 1.442695
        %v4517 = vpow.pop %v4516
        %v4518 = vmul.f32 %v4445, 1.442695
        %v4519 = vpow.pop %v4518
        %v4520 = vmul.f32 %v4446, 1.442695
        %v4521 = vpow.pop %v4520
        %v4522 = vmul.f32 %v4447, 1.442695
        %v4523 = vpow.pop %v4522
        %v4524 = vmul.f32 %v4448, 1.442695
        %v4525 = vpow.pop %v4524
        %v4526 = vmul.f32 %v4449, 1.442695
        %v4527 = vpow.pop %v4526
        %v4528 = vmul.f32 %v4450, 1.442695
        %v4529 = vpow.pop %v4528
        %v4530 = vmul.f32 %v4451, 1.442695
        %v4531 = vpow.pop %v4530
        %v4532 = vmul.f32 %v4452, 1.442695
        %v4533 = vpow.pop %v4532
        %v4534 = vmul.f32 %v4453, 1.442695
        %v4535 = vpow.pop %v4534
        %v4536 = vmul.f32 %v4454, 1.442695
        %v4537 = vpow.pop %v4536
        %v4538 = vmul.f32 %v4455, 1.442695
        %v4539 = vpow.pop %v4538
        %v4540 = vmul.f32 %v4456, 1.442695
        %v4541 = vpow.pop %v4540
        %v4542 = vmul.f32 %v4457, 1.442695
        %v4543 = vpow.pop %v4542
        %v4544 = vmul.f32 %v4458, 1.442695
        %v4545 = vpow.pop %v4544
        %v4546 = vmul.f32 %v4459, 1.442695
        %v4547 = vpow.pop %v4546
        %v4548 = vmul.f32 %v4460, 1.442695
        %v4549 = vpow.pop %v4548
        %v4550 = vmul.f32 %v4461, 1.442695
        %v4551 = vpow.pop %v4550
        %v4552 = vmul.f32 %v4462, 1.442695
        %v4553 = vpow.pop %v4552
        %v4554 = vmul.f32 %v4463, 1.442695
        %v4555 = vpow.pop %v4554
        %v4556 = vmul.f32 %v4464, 1.442695
        %v4557 = vpow.pop %v4556
        %v4558 = vmul.f32 %v4465, 1.442695
        %v4559 = vpow.pop %v4558
        %v4560 = vmul.f32 %v4466, 1.442695
        %v4561 = vpow.pop %v4560
        %v4562 = vmul.f32 %v4467, 1.442695
        %v4563 = vpow.pop %v4562
        %v4564 = vmul.f32 %v4468, 1.442695
        %v4565 = vpow.pop %v4564
        %v4566 = vmul.f32 %v4469, 1.442695
        %v4567 = vpow.pop %v4566
        %v4568 = vmul.f32 %v4470, 1.442695
        %v4569 = vpow.pop %v4568
        %v4570 = vmul.f32 %v4471, 1.442695
        %v4571 = vpow.pop %v4570
        %v4572 = vmul.f32 %v4472, 1.442695
        %v4573 = vpow.pop %v4572
        %v4574 = vmul.f32 %v4473, 1.442695
        %v4575 = vpow.pop %v4574
        %v4576 = vmul.f32 %v4474, 1.442695
        %v4577 = vpow.pop %v4576
        %v4578 = vmul.f32 %v4475, 1.442695
        %v4579 = vpow.pop %v4578
        %v4580 = vmul.f32 %v4476, 1.442695
        %v4581 = vpow.pop %v4580
        %v4582 = vmul.f32 %v4477, 1.442695
        %v4583 = vpow.pop %v4582
        %v4584 = vmul.f32 %v4478, 1.442695
        %v4585 = vpow.pop %v4584
        %v4586 = vmul.f32 %v4479, 1.442695
        %v4587 = vpow.pop %v4586
        %v4588 = vmul.f32 %v4480, 1.442695
        %v4589 = vpow.pop %v4588
        %v4590 = vmul.f32 %v4481, 1.442695
        %v4591 = vpow.pop %v4590
        %v4592 = vmul.f32 %v4482, 1.442695
        %v4593 = vpow.pop %v4592
        %v4594 = vmul.f32 %v4483, 1.442695
        %v4595 = vpow.pop %v4594
        %v4596 = vmul.f32 %v4484, 1.442695
        %v4597 = vpow.pop %v4596
        %v4598 = vmul.f32 %v4485, 1.442695
        %v4599 = vpow.pop %v4598
        %v4600 = vmul.f32 %v4486, 1.442695
        %v4601 = vpow.pop %v4600
        %v4602 = vmul.f32 %v4487, 1.442695
        %v4603 = vpow.pop %v4602
        %v4604 = vmul.f32 %v4488, 1.442695
        %v4605 = vpow.pop %v4604
        %v4606 = vmul.f32 %v4489, 1.442695
        %v4607 = vpow.pop %v4606
        %v4608 = vmul.f32 %v4490, 1.442695
        %v4609 = vpow.pop %v4608
        %v4610 = vmul.f32 %v4491, 1.442695
        %v4611 = vpow.pop %v4610
        %v4612 = vmul.f32 %v4492, 1.442695
        %v4613 = vpow.pop %v4612
        %v4614 = vmul.f32 %v4493, 1.442695
        %v4615 = vpow.pop %v4614
        %v4616 = vmul.f32 %v4494, 1.442695
        %v4617 = vpow.pop %v4616
        %v4618 = vmul.f32 %v4495, 1.442695
        %v4619 = vpow.pop %v4618
        %v4620 = vmul.f32 %v4496, 1.442695
        %v4621 = vpow.pop %v4620
        %v4622 = vmul.f32 %v4497, 1.442695
        %v4623 = vpow.pop %v4622
        %v4624 = vmul.f32 %v4498, 1.442695
        %v4625 = vpow.pop %v4624
        %v4626 = vmul.f32 %v4499, 1.442695
        %v4627 = vpow.pop %v4626
        %v4628 = vadd.f32 %v4501, %v4503
        %4629 = vadd.xlane.f32.xlu0 %v4628
        %v4630 = vpop.xlane.xlu0 %4629
        %v4631 = vadd.f32 %v4505, %v4507
        %4632 = vadd.xlane.f32.xlu0 %v4631
        %v4633 = vpop.xlane.xlu0 %4632
        %v4634 = vadd.f32 %v4509, %v4511
        %4635 = vadd.xlane.f32.xlu0 %v4634
        %v4636 = vpop.xlane.xlu0 %4635
        %v4637 = vadd.f32 %v4513, %v4515
        %4638 = vadd.xlane.f32.xlu0 %v4637
        %v4639 = vpop.xlane.xlu0 %4638
        %v4640 = vadd.f32 %v4517, %v4519
        %4641 = vadd.xlane.f32.xlu0 %v4640
        %v4642 = vpop.xlane.xlu0 %4641
        %v4643 = vadd.f32 %v4521, %v4523
        %4644 = vadd.xlane.f32.xlu0 %v4643
        %v4645 = vpop.xlane.xlu0 %4644
        %v4646 = vadd.f32 %v4525, %v4527
        %4647 = vadd.xlane.f32.xlu0 %v4646
        %v4648 = vpop.xlane.xlu0 %4647
        %v4649 = vadd.f32 %v4529, %v4531
        %4650 = vadd.xlane.f32.xlu0 %v4649
        %v4651 = vpop.xlane.xlu0 %4650
        %v4652 = vadd.f32 %v4533, %v4535
        %4653 = vadd.xlane.f32.xlu0 %v4652
        %v4654 = vpop.xlane.xlu0 %4653
        %v4655 = vadd.f32 %v4537, %v4539
        %4656 = vadd.xlane.f32.xlu0 %v4655
        %v4657 = vpop.xlane.xlu0 %4656
        %v4658 = vadd.f32 %v4541, %v4543
        %4659 = vadd.xlane.f32.xlu0 %v4658
        %v4660 = vpop.xlane.xlu0 %4659
        %v4661 = vadd.f32 %v4545, %v4547
        %4662 = vadd.xlane.f32.xlu0 %v4661
        %v4663 = vpop.xlane.xlu0 %4662
        %v4664 = vadd.f32 %v4549, %v4551
        %4665 = vadd.xlane.f32.xlu0 %v4664
        %v4666 = vpop.xlane.xlu0 %4665
        %v4667 = vadd.f32 %v4553, %v4555
        %4668 = vadd.xlane.f32.xlu0 %v4667
        %v4669 = vpop.xlane.xlu0 %4668
        %v4670 = vadd.f32 %v4557, %v4559
        %4671 = vadd.xlane.f32.xlu0 %v4670
        %v4672 = vpop.xlane.xlu0 %4671
        %v4673 = vadd.f32 %v4561, %v4563
        %4674 = vadd.xlane.f32.xlu0 %v4673
        %v4675 = vpop.xlane.xlu0 %4674
        %v4676 = vadd.f32 %v4565, %v4567
        %4677 = vadd.xlane.f32.xlu0 %v4676
        %v4678 = vpop.xlane.xlu0 %4677
        %v4679 = vadd.f32 %v4569, %v4571
        %4680 = vadd.xlane.f32.xlu0 %v4679
        %v4681 = vpop.xlane.xlu0 %4680
        %v4682 = vadd.f32 %v4573, %v4575
        %4683 = vadd.xlane.f32.xlu0 %v4682
        %v4684 = vpop.xlane.xlu0 %4683
        %v4685 = vadd.f32 %v4577, %v4579
        %4686 = vadd.xlane.f32.xlu0 %v4685
        %v4687 = vpop.xlane.xlu0 %4686
        %v4688 = vadd.f32 %v4581, %v4583
        %4689 = vadd.xlane.f32.xlu0 %v4688
        %v4690 = vpop.xlane.xlu0 %4689
        %v4691 = vadd.f32 %v4585, %v4587
        %4692 = vadd.xlane.f32.xlu0 %v4691
        %v4693 = vpop.xlane.xlu0 %4692
        %v4694 = vadd.f32 %v4589, %v4591
        %4695 = vadd.xlane.f32.xlu0 %v4694
        %v4696 = vpop.xlane.xlu0 %4695
        %v4697 = vadd.f32 %v4593, %v4595
        %4698 = vadd.xlane.f32.xlu0 %v4697
        %v4699 = vpop.xlane.xlu0 %4698
        %v4700 = vadd.f32 %v4597, %v4599
        %4701 = vadd.xlane.f32.xlu0 %v4700
        %v4702 = vpop.xlane.xlu0 %4701
        %v4703 = vadd.f32 %v4601, %v4603
        %4704 = vadd.xlane.f32.xlu0 %v4703
        %v4705 = vpop.xlane.xlu0 %4704
        %v4706 = vadd.f32 %v4605, %v4607
        %4707 = vadd.xlane.f32.xlu0 %v4706
        %v4708 = vpop.xlane.xlu0 %4707
        %v4709 = vadd.f32 %v4609, %v4611
        %4710 = vadd.xlane.f32.xlu0 %v4709
        %v4711 = vpop.xlane.xlu0 %4710
        %v4712 = vadd.f32 %v4613, %v4615
        %4713 = vadd.xlane.f32.xlu0 %v4712
        %v4714 = vpop.xlane.xlu0 %4713
        %v4715 = vadd.f32 %v4617, %v4619
        %4716 = vadd.xlane.f32.xlu0 %v4715
        %v4717 = vpop.xlane.xlu0 %4716
        %v4718 = vadd.f32 %v4621, %v4623
        %4719 = vadd.xlane.f32.xlu0 %v4718
        %v4720 = vpop.xlane.xlu0 %4719
        %v4721 = vadd.f32 %v4625, %v4627
        %4722 = vadd.xlane.f32.xlu0 %v4721
        %v4723 = vpop.xlane.xlu0 %4722
        %v4724 = vpack.c.bf16 %v4505, %v4501
        %v4725 = vpack.c.bf16 %v4507, %v4503
        %v4726 = vpack.c.bf16 %v4513, %v4509
        %v4727 = vpack.c.bf16 %v4515, %v4511
        %v4728 = vpack.c.bf16 %v4521, %v4517
        %v4729 = vpack.c.bf16 %v4523, %v4519
        %v4730 = vpack.c.bf16 %v4529, %v4525
        %v4731 = vpack.c.bf16 %v4531, %v4527
        %v4732 = vpack.c.bf16 %v4537, %v4533
        %v4733 = vpack.c.bf16 %v4539, %v4535
        %v4734 = vpack.c.bf16 %v4545, %v4541
        %v4735 = vpack.c.bf16 %v4547, %v4543
        %v4736 = vpack.c.bf16 %v4553, %v4549
        %v4737 = vpack.c.bf16 %v4555, %v4551
        %v4738 = vpack.c.bf16 %v4561, %v4557
        %v4739 = vpack.c.bf16 %v4563, %v4559
        %v4740 = vpack.c.bf16 %v4569, %v4565
        %v4741 = vpack.c.bf16 %v4571, %v4567
        %v4742 = vpack.c.bf16 %v4577, %v4573
        %v4743 = vpack.c.bf16 %v4579, %v4575
        %v4744 = vpack.c.bf16 %v4585, %v4581
        %v4745 = vpack.c.bf16 %v4587, %v4583
        %v4746 = vpack.c.bf16 %v4593, %v4589
        %v4747 = vpack.c.bf16 %v4595, %v4591
        %v4748 = vpack.c.bf16 %v4601, %v4597
        %v4749 = vpack.c.bf16 %v4603, %v4599
        %v4750 = vpack.c.bf16 %v4609, %v4605
        %v4751 = vpack.c.bf16 %v4611, %v4607
        %v4752 = vpack.c.bf16 %v4617, %v4613
        %v4753 = vpack.c.bf16 %v4619, %v4615
        %v4754 = vpack.c.bf16 %v4625, %v4621
        %v4755 = vpack.c.bf16 %v4627, %v4623
        %4772 = vmatpush.bf16.msra.mxu0 %v4049
        %4773 = vmatpush.bf16.msra.mxu0 %v4047
        %4774 = vmatpush.bf16.msra.mxu0 %v4045
        %4775 = vmatpush.bf16.msra.mxu0 %v4043
        %4776 = vmatpush.bf16.msra.mxu0 %v4041
        %4777 = vmatpush.bf16.msra.mxu0 %v4039
        %4778 = vmatpush.bf16.msra.mxu0 %v4037
        %4779 = vmatpush.bf16.msra.mxu0 %v4035
        %4780 = vmatmul.bf16.gmra.mxu0 %v4724
        %v4781 = vpop.f32.mrf.mxu0
        %v4782 = vadd.f32 0.0, %v4781
        %v4783 = vpop.f32.mrf.mxu0
        %v4784 = vadd.f32 0.0, %v4783
        %4785 = vmatmul.bf16.gmra.mxu0 %v4726
        %v4786 = vpop.f32.mrf.mxu0
        %v4787 = vadd.f32 0.0, %v4786
        %v4788 = vpop.f32.mrf.mxu0
        %v4789 = vadd.f32 0.0, %v4788
        %4790 = vmatmul.bf16.gmra.mxu0 %v4728
        %v4791 = vpop.f32.mrf.mxu0
        %v4792 = vadd.f32 0.0, %v4791
        %v4793 = vpop.f32.mrf.mxu0
        %v4794 = vadd.f32 0.0, %v4793
        %4795 = vmatmul.bf16.gmra.mxu0 %v4730
        %v4796 = vpop.f32.mrf.mxu0
        %v4797 = vadd.f32 0.0, %v4796
        %v4798 = vpop.f32.mrf.mxu0
        %v4799 = vadd.f32 0.0, %v4798
        %4800 = vmatmul.bf16.gmra.mxu0 %v4732
        %v4801 = vpop.f32.mrf.mxu0
        %v4802 = vadd.f32 0.0, %v4801
        %v4803 = vpop.f32.mrf.mxu0
        %v4804 = vadd.f32 0.0, %v4803
        %4805 = vmatmul.bf16.gmra.mxu0 %v4734
        %v4806 = vpop.f32.mrf.mxu0
        %v4807 = vadd.f32 0.0, %v4806
        %v4808 = vpop.f32.mrf.mxu0
        %v4809 = vadd.f32 0.0, %v4808
        %4810 = vmatmul.bf16.gmra.mxu0 %v4736
        %v4811 = vpop.f32.mrf.mxu0
        %v4812 = vadd.f32 0.0, %v4811
        %v4813 = vpop.f32.mrf.mxu0
        %v4814 = vadd.f32 0.0, %v4813
        %4815 = vmatmul.bf16.gmra.mxu0 %v4738
        %v4816 = vpop.f32.mrf.mxu0
        %v4817 = vadd.f32 0.0, %v4816
        %v4818 = vpop.f32.mrf.mxu0
        %v4819 = vadd.f32 0.0, %v4818
        %4820 = vmatmul.bf16.gmra.mxu0 %v4740
        %v4821 = vpop.f32.mrf.mxu0
        %v4822 = vadd.f32 0.0, %v4821
        %v4823 = vpop.f32.mrf.mxu0
        %v4824 = vadd.f32 0.0, %v4823
        %4825 = vmatmul.bf16.gmra.mxu0 %v4742
        %v4826 = vpop.f32.mrf.mxu0
        %v4827 = vadd.f32 0.0, %v4826
        %v4828 = vpop.f32.mrf.mxu0
        %v4829 = vadd.f32 0.0, %v4828
        %4830 = vmatmul.bf16.gmra.mxu0 %v4744
        %v4831 = vpop.f32.mrf.mxu0
        %v4832 = vadd.f32 0.0, %v4831
        %v4833 = vpop.f32.mrf.mxu0
        %v4834 = vadd.f32 0.0, %v4833
        %4835 = vmatmul.bf16.gmra.mxu0 %v4746
        %v4836 = vpop.f32.mrf.mxu0
        %v4837 = vadd.f32 0.0, %v4836
        %v4838 = vpop.f32.mrf.mxu0
        %v4839 = vadd.f32 0.0, %v4838
        %4840 = vmatmul.bf16.gmra.mxu0 %v4748
        %v4841 = vpop.f32.mrf.mxu0
        %v4842 = vadd.f32 0.0, %v4841
        %v4843 = vpop.f32.mrf.mxu0
        %v4844 = vadd.f32 0.0, %v4843
        %4845 = vmatmul.bf16.gmra.mxu0 %v4750
        %v4846 = vpop.f32.mrf.mxu0
        %v4847 = vadd.f32 0.0, %v4846
        %v4848 = vpop.f32.mrf.mxu0
        %v4849 = vadd.f32 0.0, %v4848
        %4850 = vmatmul.bf16.gmra.mxu0 %v4752
        %v4851 = vpop.f32.mrf.mxu0
        %v4852 = vadd.f32 0.0, %v4851
        %v4853 = vpop.f32.mrf.mxu0
        %v4854 = vadd.f32 0.0, %v4853
        %4855 = vmatmul.bf16.gmra.mxu0 %v4754
        %v4856 = vpop.f32.mrf.mxu0
        %v4857 = vadd.f32 0.0, %v4856
        %v4858 = vpop.f32.mrf.mxu0
        %v4859 = vadd.f32 0.0, %v4858
        %4860 = vdwg.mxu0
        %4861 = vmatpush.bf16.msra.mxu0 %v4065
        %4862 = vmatpush.bf16.msra.mxu0 %v4063
        %4863 = vmatpush.bf16.msra.mxu0 %v4061
        %4864 = vmatpush.bf16.msra.mxu0 %v4059
        %4865 = vmatpush.bf16.msra.mxu0 %v4057
        %4866 = vmatpush.bf16.msra.mxu0 %v4055
        %4867 = vmatpush.bf16.msra.mxu0 %v4053
        %4868 = vmatpush.bf16.msra.mxu0 %v4051
        %4869 = vmatmul.bf16.gmra.mxu0 %v4725
        %v4870 = vpop.f32.mrf.mxu0
        %v4871 = vadd.f32 %v4782, %v4870
        %v4872 = vpop.f32.mrf.mxu0
        %v4873 = vadd.f32 %v4784, %v4872
        %4874 = vmatmul.bf16.gmra.mxu0 %v4727
        %v4875 = vpop.f32.mrf.mxu0
        %v4876 = vadd.f32 %v4787, %v4875
        %v4877 = vpop.f32.mrf.mxu0
        %v4878 = vadd.f32 %v4789, %v4877
        %4879 = vmatmul.bf16.gmra.mxu0 %v4729
        %v4880 = vpop.f32.mrf.mxu0
        %v4881 = vadd.f32 %v4792, %v4880
        %v4882 = vpop.f32.mrf.mxu0
        %v4883 = vadd.f32 %v4794, %v4882
        %4884 = vmatmul.bf16.gmra.mxu0 %v4731
        %v4885 = vpop.f32.mrf.mxu0
        %v4886 = vadd.f32 %v4797, %v4885
        %v4887 = vpop.f32.mrf.mxu0
        %v4888 = vadd.f32 %v4799, %v4887
        %4889 = vmatmul.bf16.gmra.mxu0 %v4733
        %v4890 = vpop.f32.mrf.mxu0
        %v4891 = vadd.f32 %v4802, %v4890
        %v4892 = vpop.f32.mrf.mxu0
        %v4893 = vadd.f32 %v4804, %v4892
        %4894 = vmatmul.bf16.gmra.mxu0 %v4735
        %v4895 = vpop.f32.mrf.mxu0
        %v4896 = vadd.f32 %v4807, %v4895
        %v4897 = vpop.f32.mrf.mxu0
        %v4898 = vadd.f32 %v4809, %v4897
        %4899 = vmatmul.bf16.gmra.mxu0 %v4737
        %v4900 = vpop.f32.mrf.mxu0
        %v4901 = vadd.f32 %v4812, %v4900
        %v4902 = vpop.f32.mrf.mxu0
        %v4903 = vadd.f32 %v4814, %v4902
        %4904 = vmatmul.bf16.gmra.mxu0 %v4739
        %v4905 = vpop.f32.mrf.mxu0
        %v4906 = vadd.f32 %v4817, %v4905
        %v4907 = vpop.f32.mrf.mxu0
        %v4908 = vadd.f32 %v4819, %v4907
        %4909 = vmatmul.bf16.gmra.mxu0 %v4741
        %v4910 = vpop.f32.mrf.mxu0
        %v4911 = vadd.f32 %v4822, %v4910
        %v4912 = vpop.f32.mrf.mxu0
        %v4913 = vadd.f32 %v4824, %v4912
        %4914 = vmatmul.bf16.gmra.mxu0 %v4743
        %v4915 = vpop.f32.mrf.mxu0
        %v4916 = vadd.f32 %v4827, %v4915
        %v4917 = vpop.f32.mrf.mxu0
        %v4918 = vadd.f32 %v4829, %v4917
        %4919 = vmatmul.bf16.gmra.mxu0 %v4745
        %v4920 = vpop.f32.mrf.mxu0
        %v4921 = vadd.f32 %v4832, %v4920
        %v4922 = vpop.f32.mrf.mxu0
        %v4923 = vadd.f32 %v4834, %v4922
        %4924 = vmatmul.bf16.gmra.mxu0 %v4747
        %v4925 = vpop.f32.mrf.mxu0
        %v4926 = vadd.f32 %v4837, %v4925
        %v4927 = vpop.f32.mrf.mxu0
        %v4928 = vadd.f32 %v4839, %v4927
        %4929 = vmatmul.bf16.gmra.mxu0 %v4749
        %v4930 = vpop.f32.mrf.mxu0
        %v4931 = vadd.f32 %v4842, %v4930
        %v4932 = vpop.f32.mrf.mxu0
        %v4933 = vadd.f32 %v4844, %v4932
        %4934 = vmatmul.bf16.gmra.mxu0 %v4751
        %v4935 = vpop.f32.mrf.mxu0
        %v4936 = vadd.f32 %v4847, %v4935
        %v4937 = vpop.f32.mrf.mxu0
        %v4938 = vadd.f32 %v4849, %v4937
        %4939 = vmatmul.bf16.gmra.mxu0 %v4753
        %v4940 = vpop.f32.mrf.mxu0
        %v4941 = vadd.f32 %v4852, %v4940
        %v4942 = vpop.f32.mrf.mxu0
        %v4943 = vadd.f32 %v4854, %v4942
        %4944 = vmatmul.bf16.gmra.mxu0 %v4755
        %v4945 = vpop.f32.mrf.mxu0
        %v4946 = vadd.f32 %v4857, %v4945
        %v4947 = vpop.f32.mrf.mxu0
        %v4948 = vadd.f32 %v4859, %v4947
        %4949 = vdwg.mxu0
        %v4950 = vrcp.pop %v4630
        %v4951 = vrcp.pop %v4633
        %v4952 = vrcp.pop %v4636
        %v4953 = vrcp.pop %v4639
        %v4954 = vrcp.pop %v4642
        %v4955 = vrcp.pop %v4645
        %v4956 = vrcp.pop %v4648
        %v4957 = vrcp.pop %v4651
        %v4958 = vrcp.pop %v4654
        %v4959 = vrcp.pop %v4657
        %v4960 = vrcp.pop %v4660
        %v4961 = vrcp.pop %v4663
        %v4962 = vrcp.pop %v4666
        %v4963 = vrcp.pop %v4669
        %v4964 = vrcp.pop %v4672
        %v4965 = vrcp.pop %v4675
        %v4966 = vrcp.pop %v4678
        %v4967 = vrcp.pop %v4681
        %v4968 = vrcp.pop %v4684
        %v4969 = vrcp.pop %v4687
        %v4970 = vrcp.pop %v4690
        %v4971 = vrcp.pop %v4693
        %v4972 = vrcp.pop %v4696
        %v4973 = vrcp.pop %v4699
        %v4974 = vrcp.pop %v4702
        %v4975 = vrcp.pop %v4705
        %v4976 = vrcp.pop %v4708
        %v4977 = vrcp.pop %v4711
        %v4978 = vrcp.pop %v4714
        %v4979 = vrcp.pop %v4717
        %v4980 = vrcp.pop %v4720
        %v4981 = vrcp.pop %v4723
        %v4982 = vmul.f32 %v4871, %v4950
        %v4983 = vmul.f32 %v4873, %v4951
        %v4984 = vmul.f32 %v4876, %v4952
        %v4985 = vmul.f32 %v4878, %v4953
        %v4986 = vmul.f32 %v4881, %v4954
        %v4987 = vmul.f32 %v4883, %v4955
        %v4988 = vmul.f32 %v4886, %v4956
        %v4989 = vmul.f32 %v4888, %v4957
        %v4990 = vmul.f32 %v4891, %v4958
        %v4991 = vmul.f32 %v4893, %v4959
        %v4992 = vmul.f32 %v4896, %v4960
        %v4993 = vmul.f32 %v4898, %v4961
        %v4994 = vmul.f32 %v4901, %v4962
        %v4995 = vmul.f32 %v4903, %v4963
        %v4996 = vmul.f32 %v4906, %v4964
        %v4997 = vmul.f32 %v4908, %v4965
        %v4998 = vmul.f32 %v4911, %v4966
        %v4999 = vmul.f32 %v4913, %v4967
        %v5000 = vmul.f32 %v4916, %v4968
        %v5001 = vmul.f32 %v4918, %v4969
        %v5002 = vmul.f32 %v4921, %v4970
        %v5003 = vmul.f32 %v4923, %v4971
        %v5004 = vmul.f32 %v4926, %v4972
        %v5005 = vmul.f32 %v4928, %v4973
        %v5006 = vmul.f32 %v4931, %v4974
        %v5007 = vmul.f32 %v4933, %v4975
        %v5008 = vmul.f32 %v4936, %v4976
        %v5009 = vmul.f32 %v4938, %v4977
        %v5010 = vmul.f32 %v4941, %v4978
        %v5011 = vmul.f32 %v4943, %v4979
        %v5012 = vmul.f32 %v4946, %v4980
        %v5013 = vmul.f32 %v4948, %v4981
        %5046 = vrot.lane.b32.xlu0 %v4982, 48
        %v5047 = vpop.permute.xlu0 %5046
        %5048 = vrot.lane.b32.xlu0 %v4983, 48
        %v5049 = vpop.permute.xlu0 %5048
        %5050 = vrot.lane.b32.xlu0 %v4984, 48
        %v5051 = vpop.permute.xlu0 %5050
        %5052 = vrot.lane.b32.xlu0 %v4985, 48
        %v5053 = vpop.permute.xlu0 %5052
        %5054 = vrot.lane.b32.xlu0 %v4986, 48
        %v5055 = vpop.permute.xlu0 %5054
        %5056 = vrot.lane.b32.xlu0 %v4987, 48
        %v5057 = vpop.permute.xlu0 %5056
        %5058 = vrot.lane.b32.xlu0 %v4988, 48
        %v5059 = vpop.permute.xlu0 %5058
        %5060 = vrot.lane.b32.xlu0 %v4989, 48
        %v5061 = vpop.permute.xlu0 %5060
        %5062 = vrot.lane.b32.xlu0 %v4990, 48
        %v5063 = vpop.permute.xlu0 %5062
        %5064 = vrot.lane.b32.xlu0 %v4991, 48
        %v5065 = vpop.permute.xlu0 %5064
        %5066 = vrot.lane.b32.xlu0 %v4992, 48
        %v5067 = vpop.permute.xlu0 %5066
        %5068 = vrot.lane.b32.xlu0 %v4993, 48
        %v5069 = vpop.permute.xlu0 %5068
        %5070 = vrot.lane.b32.xlu0 %v4994, 48
        %v5071 = vpop.permute.xlu0 %5070
        %5072 = vrot.lane.b32.xlu0 %v4995, 48
        %v5073 = vpop.permute.xlu0 %5072
        %5074 = vrot.lane.b32.xlu0 %v4996, 48
        %v5075 = vpop.permute.xlu0 %5074
        %5076 = vrot.lane.b32.xlu0 %v4997, 48
        %v5077 = vpop.permute.xlu0 %5076
        %5078 = vrot.lane.b32.xlu0 %v4998, 48
        %v5079 = vpop.permute.xlu0 %5078
        %5080 = vrot.lane.b32.xlu0 %v4999, 48
        %v5081 = vpop.permute.xlu0 %5080
        %5082 = vrot.lane.b32.xlu0 %v5000, 48
        %v5083 = vpop.permute.xlu0 %5082
        %5084 = vrot.lane.b32.xlu0 %v5001, 48
        %v5085 = vpop.permute.xlu0 %5084
        %5086 = vrot.lane.b32.xlu0 %v5002, 48
        %v5087 = vpop.permute.xlu0 %5086
        %5088 = vrot.lane.b32.xlu0 %v5003, 48
        %v5089 = vpop.permute.xlu0 %5088
        %5090 = vrot.lane.b32.xlu0 %v5004, 48
        %v5091 = vpop.permute.xlu0 %5090
        %5092 = vrot.lane.b32.xlu0 %v5005, 48
        %v5093 = vpop.permute.xlu0 %5092
        %5094 = vrot.lane.b32.xlu0 %v5006, 48
        %v5095 = vpop.permute.xlu0 %5094
        %5096 = vrot.lane.b32.xlu0 %v5007, 48
        %v5097 = vpop.permute.xlu0 %5096
        %5098 = vrot.lane.b32.xlu0 %v5008, 48
        %v5099 = vpop.permute.xlu0 %5098
        %5100 = vrot.lane.b32.xlu0 %v5009, 48
        %v5101 = vpop.permute.xlu0 %5100
        %5102 = vrot.lane.b32.xlu0 %v5010, 48
        %v5103 = vpop.permute.xlu0 %5102
        %5104 = vrot.lane.b32.xlu0 %v5011, 48
        %v5105 = vpop.permute.xlu0 %5104
        %5106 = vrot.lane.b32.xlu0 %v5012, 48
        %v5107 = vpop.permute.xlu0 %5106
        %5108 = vrot.lane.b32.xlu0 %v5013, 48
        %v5109 = vpop.permute.xlu0 %5108
        %vm5142 = vcmask 523648
        %5143 = vst.msk [vmem:[#allocation2] sm:$0xff] %vm5142, %v5047
        %5144 = vst.msk [vmem:[#allocation2 + $0x8] sm:$0xff] %vm5142, %v5049
        %5145 = vst.msk [vmem:[#allocation2 + $0x10] sm:$0xff] %vm5142, %v5051
        %5146 = vst.msk [vmem:[#allocation2 + $0x18] sm:$0xff] %vm5142, %v5053
        %5147 = vst.msk [vmem:[#allocation2 + $0x20] sm:$0xff] %vm5142, %v5055
        %5148 = vst.msk [vmem:[#allocation2 + $0x28] sm:$0xff] %vm5142, %v5057
        %5149 = vst.msk [vmem:[#allocation2 + $0x30] sm:$0xff] %vm5142, %v5059
        %5150 = vst.msk [vmem:[#allocation2 + $0x38] sm:$0xff] %vm5142, %v5061
        %5151 = vst.msk [vmem:[#allocation2 + $0x40] sm:$0xff] %vm5142, %v5063
        %5152 = vst.msk [vmem:[#allocation2 + $0x48] sm:$0xff] %vm5142, %v5065
        %5153 = vst.msk [vmem:[#allocation2 + $0x50] sm:$0xff] %vm5142, %v5067
        %5154 = vst.msk [vmem:[#allocation2 + $0x58] sm:$0xff] %vm5142, %v5069
        %5155 = vst.msk [vmem:[#allocation2 + $0x60] sm:$0xff] %vm5142, %v5071
        %5156 = vst.msk [vmem:[#allocation2 + $0x68] sm:$0xff] %vm5142, %v5073
        %5157 = vst.msk [vmem:[#allocation2 + $0x70] sm:$0xff] %vm5142, %v5075
        %5158 = vst.msk [vmem:[#allocation2 + $0x78] sm:$0xff] %vm5142, %v5077
        %5159 = vst.msk [vmem:[#allocation2 + $0x80] sm:$0xff] %vm5142, %v5079
        %5160 = vst.msk [vmem:[#allocation2 + $0x88] sm:$0xff] %vm5142, %v5081
        %5161 = vst.msk [vmem:[#allocation2 + $0x90] sm:$0xff] %vm5142, %v5083
        %5162 = vst.msk [vmem:[#allocation2 + $0x98] sm:$0xff] %vm5142, %v5085
        %5163 = vst.msk [vmem:[#allocation2 + $0xa0] sm:$0xff] %vm5142, %v5087
        %5164 = vst.msk [vmem:[#allocation2 + $0xa8] sm:$0xff] %vm5142, %v5089
        %5165 = vst.msk [vmem:[#allocation2 + $0xb0] sm:$0xff] %vm5142, %v5091
        %5166 = vst.msk [vmem:[#allocation2 + $0xb8] sm:$0xff] %vm5142, %v5093
        %5167 = vst.msk [vmem:[#allocation2 + $0xc0] sm:$0xff] %vm5142, %v5095
        %5168 = vst.msk [vmem:[#allocation2 + $0xc8] sm:$0xff] %vm5142, %v5097
        %5169 = vst.msk [vmem:[#allocation2 + $0xd0] sm:$0xff] %vm5142, %v5099
        %5170 = vst.msk [vmem:[#allocation2 + $0xd8] sm:$0xff] %vm5142, %v5101
        %5171 = vst.msk [vmem:[#allocation2 + $0xe0] sm:$0xff] %vm5142, %v5103
        %5172 = vst.msk [vmem:[#allocation2 + $0xe8] sm:$0xff] %vm5142, %v5105
        %5173 = vst.msk [vmem:[#allocation2 + $0xf0] sm:$0xff] %vm5142, %v5107
        %5174 = vst.msk [vmem:[#allocation2 + $0xf8] sm:$0xff] %vm5142, %v5109
        %v5175 = vld [vmem:[%s185] sm:$0xff]
        %v5176 = vld [vmem:[%s185 + $0x8] sm:$0xff]
        %v5177 = vld [vmem:[%s185 + $0x10] sm:$0xff]
        %v5178 = vld [vmem:[%s185 + $0x18] sm:$0xff]
        %v5179 = vld [vmem:[%s185 + $0x20] sm:$0xff]
        %v5180 = vld [vmem:[%s185 + $0x28] sm:$0xff]
        %v5181 = vld [vmem:[%s185 + $0x30] sm:$0xff]
        %v5182 = vld [vmem:[%s185 + $0x38] sm:$0xff]
        %v5183 = vld [vmem:[%s185 + $0x40] sm:$0xff]
        %v5184 = vld [vmem:[%s185 + $0x48] sm:$0xff]
        %v5185 = vld [vmem:[%s185 + $0x50] sm:$0xff]
        %v5186 = vld [vmem:[%s185 + $0x58] sm:$0xff]
        %v5187 = vld [vmem:[%s185 + $0x60] sm:$0xff]
        %v5188 = vld [vmem:[%s185 + $0x68] sm:$0xff]
        %v5189 = vld [vmem:[%s185 + $0x70] sm:$0xff]
        %v5190 = vld [vmem:[%s185 + $0x78] sm:$0xff]
        %v5191 = vld [vmem:[%s185 + $0x80] sm:$0xff]
        %v5192 = vld [vmem:[%s185 + $0x88] sm:$0xff]
        %v5193 = vld [vmem:[%s185 + $0x90] sm:$0xff]
        %v5194 = vld [vmem:[%s185 + $0x98] sm:$0xff]
        %v5195 = vld [vmem:[%s185 + $0xa0] sm:$0xff]
        %v5196 = vld [vmem:[%s185 + $0xa8] sm:$0xff]
        %v5197 = vld [vmem:[%s185 + $0xb0] sm:$0xff]
        %v5198 = vld [vmem:[%s185 + $0xb8] sm:$0xff]
        %v5199 = vld [vmem:[%s185 + $0xc0] sm:$0xff]
        %v5200 = vld [vmem:[%s185 + $0xc8] sm:$0xff]
        %v5201 = vld [vmem:[%s185 + $0xd0] sm:$0xff]
        %v5202 = vld [vmem:[%s185 + $0xd8] sm:$0xff]
        %v5203 = vld [vmem:[%s185 + $0xe0] sm:$0xff]
        %v5204 = vld [vmem:[%s185 + $0xe8] sm:$0xff]
        %v5205 = vld [vmem:[%s185 + $0xf0] sm:$0xff]
        %v5206 = vld [vmem:[%s185 + $0xf8] sm:$0xff]
        %v5207 = vmul.f32 %v5175, 0.25
        %v5208 = vmul.f32 %v5176, 0.25
        %v5209 = vmul.f32 %v5177, 0.25
        %v5210 = vmul.f32 %v5178, 0.25
        %v5211 = vmul.f32 %v5179, 0.25
        %v5212 = vmul.f32 %v5180, 0.25
        %v5213 = vmul.f32 %v5181, 0.25
        %v5214 = vmul.f32 %v5182, 0.25
        %v5215 = vmul.f32 %v5183, 0.25
        %v5216 = vmul.f32 %v5184, 0.25
        %v5217 = vmul.f32 %v5185, 0.25
        %v5218 = vmul.f32 %v5186, 0.25
        %v5219 = vmul.f32 %v5187, 0.25
        %v5220 = vmul.f32 %v5188, 0.25
        %v5221 = vmul.f32 %v5189, 0.25
        %v5222 = vmul.f32 %v5190, 0.25
        %v5223 = vmul.f32 %v5191, 0.25
        %v5224 = vmul.f32 %v5192, 0.25
        %v5225 = vmul.f32 %v5193, 0.25
        %v5226 = vmul.f32 %v5194, 0.25
        %v5227 = vmul.f32 %v5195, 0.25
        %v5228 = vmul.f32 %v5196, 0.25
        %v5229 = vmul.f32 %v5197, 0.25
        %v5230 = vmul.f32 %v5198, 0.25
        %v5231 = vmul.f32 %v5199, 0.25
        %v5232 = vmul.f32 %v5200, 0.25
        %v5233 = vmul.f32 %v5201, 0.25
        %v5234 = vmul.f32 %v5202, 0.25
        %v5235 = vmul.f32 %v5203, 0.25
        %v5236 = vmul.f32 %v5204, 0.25
        %v5237 = vmul.f32 %v5205, 0.25
        %v5238 = vmul.f32 %v5206, 0.25
        %v5239 = vpack.c.bf16 %v5208, %v5207
        %v5240 = vpack.c.bf16 %v5210, %v5209
        %v5241 = vpack.c.bf16 %v5212, %v5211
        %v5242 = vpack.c.bf16 %v5214, %v5213
        %v5243 = vpack.c.bf16 %v5216, %v5215
        %v5244 = vpack.c.bf16 %v5218, %v5217
        %v5245 = vpack.c.bf16 %v5220, %v5219
        %v5246 = vpack.c.bf16 %v5222, %v5221
        %v5247 = vpack.c.bf16 %v5224, %v5223
        %v5248 = vpack.c.bf16 %v5226, %v5225
        %v5249 = vpack.c.bf16 %v5228, %v5227
        %v5250 = vpack.c.bf16 %v5230, %v5229
        %v5251 = vpack.c.bf16 %v5232, %v5231
        %v5252 = vpack.c.bf16 %v5234, %v5233
        %v5253 = vpack.c.bf16 %v5236, %v5235
        %v5254 = vpack.c.bf16 %v5238, %v5237
        %v5255 = vpack.c.bf16 %v5176, %v5175
        %v5256 = vpack.c.bf16 %v5178, %v5177
        %v5257 = vpack.c.bf16 %v5180, %v5179
        %v5258 = vpack.c.bf16 %v5182, %v5181
        %v5259 = vpack.c.bf16 %v5184, %v5183
        %v5260 = vpack.c.bf16 %v5186, %v5185
        %v5261 = vpack.c.bf16 %v5188, %v5187
        %v5262 = vpack.c.bf16 %v5190, %v5189
        %v5263 = vpack.c.bf16 %v5192, %v5191
        %v5264 = vpack.c.bf16 %v5194, %v5193
        %v5265 = vpack.c.bf16 %v5196, %v5195
        %v5266 = vpack.c.bf16 %v5198, %v5197
        %v5267 = vpack.c.bf16 %v5200, %v5199
        %v5268 = vpack.c.bf16 %v5202, %v5201
        %v5269 = vpack.c.bf16 %v5204, %v5203
        %v5270 = vpack.c.bf16 %v5206, %v5205
        %5287 = vrot.lane.b32.xlu0 %v5239, 64
        %v5288 = vpop.permute.xlu0 %5287
        %5289 = vrot.lane.b32.xlu0 %v5240, 64
        %v5290 = vpop.permute.xlu0 %5289
        %5291 = vrot.lane.b32.xlu0 %v5241, 64
        %v5292 = vpop.permute.xlu0 %5291
        %5293 = vrot.lane.b32.xlu0 %v5242, 64
        %v5294 = vpop.permute.xlu0 %5293
        %5295 = vrot.lane.b32.xlu0 %v5243, 64
        %v5296 = vpop.permute.xlu0 %5295
        %5297 = vrot.lane.b32.xlu0 %v5244, 64
        %v5298 = vpop.permute.xlu0 %5297
        %5299 = vrot.lane.b32.xlu0 %v5245, 64
        %v5300 = vpop.permute.xlu0 %5299
        %5301 = vrot.lane.b32.xlu0 %v5246, 64
        %v5302 = vpop.permute.xlu0 %5301
        %5303 = vrot.lane.b32.xlu0 %v5247, 64
        %v5304 = vpop.permute.xlu0 %5303
        %5305 = vrot.lane.b32.xlu0 %v5248, 64
        %v5306 = vpop.permute.xlu0 %5305
        %5307 = vrot.lane.b32.xlu0 %v5249, 64
        %v5308 = vpop.permute.xlu0 %5307
        %5309 = vrot.lane.b32.xlu0 %v5250, 64
        %v5310 = vpop.permute.xlu0 %5309
        %5311 = vrot.lane.b32.xlu0 %v5251, 64
        %v5312 = vpop.permute.xlu0 %5311
        %5313 = vrot.lane.b32.xlu0 %v5252, 64
        %v5314 = vpop.permute.xlu0 %5313
        %5315 = vrot.lane.b32.xlu0 %v5253, 64
        %v5316 = vpop.permute.xlu0 %5315
        %5317 = vrot.lane.b32.xlu0 %v5254, 64
        %v5318 = vpop.permute.xlu0 %5317
        %5335 = vrot.lane.b32.xlu0 %v5255, 64
        %v5336 = vpop.permute.xlu0 %5335
        %5337 = vrot.lane.b32.xlu0 %v5256, 64
        %v5338 = vpop.permute.xlu0 %5337
        %5339 = vrot.lane.b32.xlu0 %v5257, 64
        %v5340 = vpop.permute.xlu0 %5339
        %5341 = vrot.lane.b32.xlu0 %v5258, 64
        %v5342 = vpop.permute.xlu0 %5341
        %5343 = vrot.lane.b32.xlu0 %v5259, 64
        %v5344 = vpop.permute.xlu0 %5343
        %5345 = vrot.lane.b32.xlu0 %v5260, 64
        %v5346 = vpop.permute.xlu0 %5345
        %5347 = vrot.lane.b32.xlu0 %v5261, 64
        %v5348 = vpop.permute.xlu0 %5347
        %5349 = vrot.lane.b32.xlu0 %v5262, 64
        %v5350 = vpop.permute.xlu0 %5349
        %5351 = vrot.lane.b32.xlu0 %v5263, 64
        %v5352 = vpop.permute.xlu0 %5351
        %5353 = vrot.lane.b32.xlu0 %v5264, 64
        %v5354 = vpop.permute.xlu0 %5353
        %5355 = vrot.lane.b32.xlu0 %v5265, 64
        %v5356 = vpop.permute.xlu0 %5355
        %5357 = vrot.lane.b32.xlu0 %v5266, 64
        %v5358 = vpop.permute.xlu0 %5357
        %5359 = vrot.lane.b32.xlu0 %v5267, 64
        %v5360 = vpop.permute.xlu0 %5359
        %5361 = vrot.lane.b32.xlu0 %v5268, 64
        %v5362 = vpop.permute.xlu0 %5361
        %5363 = vrot.lane.b32.xlu0 %v5269, 64
        %v5364 = vpop.permute.xlu0 %5363
        %5365 = vrot.lane.b32.xlu0 %v5270, 64
        %v5366 = vpop.permute.xlu0 %5365
        %v5368 = vsel %vm307, %v5288, 0
        %v5371 = vsel %vm307, %v5290, 0
        %v5374 = vsel %vm307, %v5292, 0
        %v5377 = vsel %vm307, %v5294, 0
        %v5380 = vsel %vm307, %v5296, 0
        %v5383 = vsel %vm307, %v5298, 0
        %v5386 = vsel %vm307, %v5300, 0
        %v5389 = vsel %vm307, %v5302, 0
        %v5392 = vsel %vm307, %v5304, 0
        %v5395 = vsel %vm307, %v5306, 0
        %v5398 = vsel %vm307, %v5308, 0
        %v5401 = vsel %vm307, %v5310, 0
        %v5404 = vsel %vm307, %v5312, 0
        %v5407 = vsel %vm307, %v5314, 0
        %v5410 = vsel %vm307, %v5316, 0
        %v5413 = vsel %vm307, %v5318, 0
        %v5416 = vsel %vm307, %v5336, 0
        %v5419 = vsel %vm307, %v5338, 0
        %v5422 = vsel %vm307, %v5340, 0
        %v5425 = vsel %vm307, %v5342, 0
        %v5428 = vsel %vm307, %v5344, 0
        %v5431 = vsel %vm307, %v5346, 0
        %v5434 = vsel %vm307, %v5348, 0
        %v5437 = vsel %vm307, %v5350, 0
        %v5440 = vsel %vm307, %v5352, 0
        %v5443 = vsel %vm307, %v5354, 0
        %v5446 = vsel %vm307, %v5356, 0
        %v5449 = vsel %vm307, %v5358, 0
        %v5452 = vsel %vm307, %v5360, 0
        %v5455 = vsel %vm307, %v5362, 0
        %v5458 = vsel %vm307, %v5364, 0
        %v5461 = vsel %vm307, %v5366, 0
        %5463 = vmatpush.bf16.xpose.msra.mxu0 %v5437
        %5464 = vmatpush.bf16.xpose.msra.mxu0 %v5434
        %5465 = vmatpush.bf16.xpose.msra.mxu0 %v5431
        %5466 = vmatpush.bf16.xpose.msra.mxu0 %v5428
        %5467 = vmatpush.bf16.xpose.msra.mxu0 %v5425
        %5468 = vmatpush.bf16.xpose.msra.mxu0 %v5422
        %5469 = vmatpush.bf16.xpose.msra.mxu0 %v5419
        %5470 = vmatpush.bf16.xpose.msra.mxu0 %v5416
        %5471 = vmatmul.bf16.gmra.mxu0 %v5368
        %v5472 = vpop.f32.mrf.mxu0
        %v5473 = vadd.f32 0.0, %v5472
        %v5474 = vpop.f32.mrf.mxu0
        %v5475 = vadd.f32 0.0, %v5474
        %5476 = vmatmul.bf16.gmra.mxu0 %v5371
        %v5477 = vpop.f32.mrf.mxu0
        %v5478 = vadd.f32 0.0, %v5477
        %v5479 = vpop.f32.mrf.mxu0
        %v5480 = vadd.f32 0.0, %v5479
        %5481 = vmatmul.bf16.gmra.mxu0 %v5374
        %v5482 = vpop.f32.mrf.mxu0
        %v5483 = vadd.f32 0.0, %v5482
        %v5484 = vpop.f32.mrf.mxu0
        %v5485 = vadd.f32 0.0, %v5484
        %5486 = vmatmul.bf16.gmra.mxu0 %v5377
        %v5487 = vpop.f32.mrf.mxu0
        %v5488 = vadd.f32 0.0, %v5487
        %v5489 = vpop.f32.mrf.mxu0
        %v5490 = vadd.f32 0.0, %v5489
        %5491 = vmatmul.bf16.gmra.mxu0 %v5380
        %v5492 = vpop.f32.mrf.mxu0
        %v5493 = vadd.f32 0.0, %v5492
        %v5494 = vpop.f32.mrf.mxu0
        %v5495 = vadd.f32 0.0, %v5494
        %5496 = vmatmul.bf16.gmra.mxu0 %v5383
        %v5497 = vpop.f32.mrf.mxu0
        %v5498 = vadd.f32 0.0, %v5497
        %v5499 = vpop.f32.mrf.mxu0
        %v5500 = vadd.f32 0.0, %v5499
        %5501 = vmatmul.bf16.gmra.mxu0 %v5386
        %v5502 = vpop.f32.mrf.mxu0
        %v5503 = vadd.f32 0.0, %v5502
        %v5504 = vpop.f32.mrf.mxu0
        %v5505 = vadd.f32 0.0, %v5504
        %5506 = vmatmul.bf16.gmra.mxu0 %v5389
        %v5507 = vpop.f32.mrf.mxu0
        %v5508 = vadd.f32 0.0, %v5507
        %v5509 = vpop.f32.mrf.mxu0
        %v5510 = vadd.f32 0.0, %v5509
        %5511 = vmatmul.bf16.gmra.mxu0 %v5392
        %v5512 = vpop.f32.mrf.mxu0
        %v5513 = vadd.f32 0.0, %v5512
        %v5514 = vpop.f32.mrf.mxu0
        %v5515 = vadd.f32 0.0, %v5514
        %5516 = vmatmul.bf16.gmra.mxu0 %v5395
        %v5517 = vpop.f32.mrf.mxu0
        %v5518 = vadd.f32 0.0, %v5517
        %v5519 = vpop.f32.mrf.mxu0
        %v5520 = vadd.f32 0.0, %v5519
        %5521 = vmatmul.bf16.gmra.mxu0 %v5398
        %v5522 = vpop.f32.mrf.mxu0
        %v5523 = vadd.f32 0.0, %v5522
        %v5524 = vpop.f32.mrf.mxu0
        %v5525 = vadd.f32 0.0, %v5524
        %5526 = vmatmul.bf16.gmra.mxu0 %v5401
        %v5527 = vpop.f32.mrf.mxu0
        %v5528 = vadd.f32 0.0, %v5527
        %v5529 = vpop.f32.mrf.mxu0
        %v5530 = vadd.f32 0.0, %v5529
        %5531 = vmatmul.bf16.gmra.mxu0 %v5404
        %v5532 = vpop.f32.mrf.mxu0
        %v5533 = vadd.f32 0.0, %v5532
        %v5534 = vpop.f32.mrf.mxu0
        %v5535 = vadd.f32 0.0, %v5534
        %5536 = vmatmul.bf16.gmra.mxu0 %v5407
        %v5537 = vpop.f32.mrf.mxu0
        %v5538 = vadd.f32 0.0, %v5537
        %v5539 = vpop.f32.mrf.mxu0
        %v5540 = vadd.f32 0.0, %v5539
        %5541 = vmatmul.bf16.gmra.mxu0 %v5410
        %v5542 = vpop.f32.mrf.mxu0
        %v5543 = vadd.f32 0.0, %v5542
        %v5544 = vpop.f32.mrf.mxu0
        %v5545 = vadd.f32 0.0, %v5544
        %5546 = vmatmul.bf16.gmra.mxu0 %v5413
        %v5547 = vpop.f32.mrf.mxu0
        %v5548 = vadd.f32 0.0, %v5547
        %v5549 = vpop.f32.mrf.mxu0
        %v5550 = vadd.f32 0.0, %v5549
        %5551 = vdwg.mxu0
        %5552 = vmatpush.bf16.xpose.msra.mxu0 %v5461
        %5553 = vmatpush.bf16.xpose.msra.mxu0 %v5458
        %5554 = vmatpush.bf16.xpose.msra.mxu0 %v5455
        %5555 = vmatpush.bf16.xpose.msra.mxu0 %v5452
        %5556 = vmatpush.bf16.xpose.msra.mxu0 %v5449
        %5557 = vmatpush.bf16.xpose.msra.mxu0 %v5446
        %5558 = vmatpush.bf16.xpose.msra.mxu0 %v5443
        %5559 = vmatpush.bf16.xpose.msra.mxu0 %v5440
        %5560 = vmatmul.bf16.gmra.mxu0 %v5368
        %v5561 = vpop.f32.mrf.mxu0
        %v5562 = vadd.f32 0.0, %v5561
        %v5563 = vpop.f32.mrf.mxu0
        %v5564 = vadd.f32 0.0, %v5563
        %5565 = vmatmul.bf16.gmra.mxu0 %v5371
        %v5566 = vpop.f32.mrf.mxu0
        %v5567 = vadd.f32 0.0, %v5566
        %v5568 = vpop.f32.mrf.mxu0
        %v5569 = vadd.f32 0.0, %v5568
        %5570 = vmatmul.bf16.gmra.mxu0 %v5374
        %v5571 = vpop.f32.mrf.mxu0
        %v5572 = vadd.f32 0.0, %v5571
        %v5573 = vpop.f32.mrf.mxu0
        %v5574 = vadd.f32 0.0, %v5573
        %5575 = vmatmul.bf16.gmra.mxu0 %v5377
        %v5576 = vpop.f32.mrf.mxu0
        %v5577 = vadd.f32 0.0, %v5576
        %v5578 = vpop.f32.mrf.mxu0
        %v5579 = vadd.f32 0.0, %v5578
        %5580 = vmatmul.bf16.gmra.mxu0 %v5380
        %v5581 = vpop.f32.mrf.mxu0
        %v5582 = vadd.f32 0.0, %v5581
        %v5583 = vpop.f32.mrf.mxu0
        %v5584 = vadd.f32 0.0, %v5583
        %5585 = vmatmul.bf16.gmra.mxu0 %v5383
        %v5586 = vpop.f32.mrf.mxu0
        %v5587 = vadd.f32 0.0, %v5586
        %v5588 = vpop.f32.mrf.mxu0
        %v5589 = vadd.f32 0.0, %v5588
        %5590 = vmatmul.bf16.gmra.mxu0 %v5386
        %v5591 = vpop.f32.mrf.mxu0
        %v5592 = vadd.f32 0.0, %v5591
        %v5593 = vpop.f32.mrf.mxu0
        %v5594 = vadd.f32 0.0, %v5593
        %5595 = vmatmul.bf16.gmra.mxu0 %v5389
        %v5596 = vpop.f32.mrf.mxu0
        %v5597 = vadd.f32 0.0, %v5596
        %v5598 = vpop.f32.mrf.mxu0
        %v5599 = vadd.f32 0.0, %v5598
        %5600 = vmatmul.bf16.gmra.mxu0 %v5392
        %v5601 = vpop.f32.mrf.mxu0
        %v5602 = vadd.f32 0.0, %v5601
        %v5603 = vpop.f32.mrf.mxu0
        %v5604 = vadd.f32 0.0, %v5603
        %5605 = vmatmul.bf16.gmra.mxu0 %v5395
        %v5606 = vpop.f32.mrf.mxu0
        %v5607 = vadd.f32 0.0, %v5606
        %v5608 = vpop.f32.mrf.mxu0
        %v5609 = vadd.f32 0.0, %v5608
        %5610 = vmatmul.bf16.gmra.mxu0 %v5398
        %v5611 = vpop.f32.mrf.mxu0
        %v5612 = vadd.f32 0.0, %v5611
        %v5613 = vpop.f32.mrf.mxu0
        %v5614 = vadd.f32 0.0, %v5613
        %5615 = vmatmul.bf16.gmra.mxu0 %v5401
        %v5616 = vpop.f32.mrf.mxu0
        %v5617 = vadd.f32 0.0, %v5616
        %v5618 = vpop.f32.mrf.mxu0
        %v5619 = vadd.f32 0.0, %v5618
        %5620 = vmatmul.bf16.gmra.mxu0 %v5404
        %v5621 = vpop.f32.mrf.mxu0
        %v5622 = vadd.f32 0.0, %v5621
        %v5623 = vpop.f32.mrf.mxu0
        %v5624 = vadd.f32 0.0, %v5623
        %5625 = vmatmul.bf16.gmra.mxu0 %v5407
        %v5626 = vpop.f32.mrf.mxu0
        %v5627 = vadd.f32 0.0, %v5626
        %v5628 = vpop.f32.mrf.mxu0
        %v5629 = vadd.f32 0.0, %v5628
        %5630 = vmatmul.bf16.gmra.mxu0 %v5410
        %v5631 = vpop.f32.mrf.mxu0
        %v5632 = vadd.f32 0.0, %v5631
        %v5633 = vpop.f32.mrf.mxu0
        %v5634 = vadd.f32 0.0, %v5633
        %5635 = vmatmul.bf16.gmra.mxu0 %v5413
        %v5636 = vpop.f32.mrf.mxu0
        %v5637 = vadd.f32 0.0, %v5636
        %v5638 = vpop.f32.mrf.mxu0
        %v5639 = vadd.f32 0.0, %v5638
        %5640 = vdwg.mxu0
        %v5641 = vmax.f32 %v5473, %v5562
        %5642 = vmax.xlane.f32.xlu0 %v5641
        %v5643 = vpop.xlane.xlu0 %5642
        %v5644 = vmax.f32 %v5475, %v5564
        %5645 = vmax.xlane.f32.xlu0 %v5644
        %v5646 = vpop.xlane.xlu0 %5645
        %v5647 = vmax.f32 %v5478, %v5567
        %5648 = vmax.xlane.f32.xlu0 %v5647
        %v5649 = vpop.xlane.xlu0 %5648
        %v5650 = vmax.f32 %v5480, %v5569
        %5651 = vmax.xlane.f32.xlu0 %v5650
        %v5652 = vpop.xlane.xlu0 %5651
        %v5653 = vmax.f32 %v5483, %v5572
        %5654 = vmax.xlane.f32.xlu0 %v5653
        %v5655 = vpop.xlane.xlu0 %5654
        %v5656 = vmax.f32 %v5485, %v5574
        %5657 = vmax.xlane.f32.xlu0 %v5656
        %v5658 = vpop.xlane.xlu0 %5657
        %v5659 = vmax.f32 %v5488, %v5577
        %5660 = vmax.xlane.f32.xlu0 %v5659
        %v5661 = vpop.xlane.xlu0 %5660
        %v5662 = vmax.f32 %v5490, %v5579
        %5663 = vmax.xlane.f32.xlu0 %v5662
        %v5664 = vpop.xlane.xlu0 %5663
        %v5665 = vmax.f32 %v5493, %v5582
        %5666 = vmax.xlane.f32.xlu0 %v5665
        %v5667 = vpop.xlane.xlu0 %5666
        %v5668 = vmax.f32 %v5495, %v5584
        %5669 = vmax.xlane.f32.xlu0 %v5668
        %v5670 = vpop.xlane.xlu0 %5669
        %v5671 = vmax.f32 %v5498, %v5587
        %5672 = vmax.xlane.f32.xlu0 %v5671
        %v5673 = vpop.xlane.xlu0 %5672
        %v5674 = vmax.f32 %v5500, %v5589
        %5675 = vmax.xlane.f32.xlu0 %v5674
        %v5676 = vpop.xlane.xlu0 %5675
        %v5677 = vmax.f32 %v5503, %v5592
        %5678 = vmax.xlane.f32.xlu0 %v5677
        %v5679 = vpop.xlane.xlu0 %5678
        %v5680 = vmax.f32 %v5505, %v5594
        %5681 = vmax.xlane.f32.xlu0 %v5680
        %v5682 = vpop.xlane.xlu0 %5681
        %v5683 = vmax.f32 %v5508, %v5597
        %5684 = vmax.xlane.f32.xlu0 %v5683
        %v5685 = vpop.xlane.xlu0 %5684
        %v5686 = vmax.f32 %v5510, %v5599
        %5687 = vmax.xlane.f32.xlu0 %v5686
        %v5688 = vpop.xlane.xlu0 %5687
        %v5689 = vmax.f32 %v5513, %v5602
        %5690 = vmax.xlane.f32.xlu0 %v5689
        %v5691 = vpop.xlane.xlu0 %5690
        %v5692 = vmax.f32 %v5515, %v5604
        %5693 = vmax.xlane.f32.xlu0 %v5692
        %v5694 = vpop.xlane.xlu0 %5693
        %v5695 = vmax.f32 %v5518, %v5607
        %5696 = vmax.xlane.f32.xlu0 %v5695
        %v5697 = vpop.xlane.xlu0 %5696
        %v5698 = vmax.f32 %v5520, %v5609
        %5699 = vmax.xlane.f32.xlu0 %v5698
        %v5700 = vpop.xlane.xlu0 %5699
        %v5701 = vmax.f32 %v5523, %v5612
        %5702 = vmax.xlane.f32.xlu0 %v5701
        %v5703 = vpop.xlane.xlu0 %5702
        %v5704 = vmax.f32 %v5525, %v5614
        %5705 = vmax.xlane.f32.xlu0 %v5704
        %v5706 = vpop.xlane.xlu0 %5705
        %v5707 = vmax.f32 %v5528, %v5617
        %5708 = vmax.xlane.f32.xlu0 %v5707
        %v5709 = vpop.xlane.xlu0 %5708
        %v5710 = vmax.f32 %v5530, %v5619
        %5711 = vmax.xlane.f32.xlu0 %v5710
        %v5712 = vpop.xlane.xlu0 %5711
        %v5713 = vmax.f32 %v5533, %v5622
        %5714 = vmax.xlane.f32.xlu0 %v5713
        %v5715 = vpop.xlane.xlu0 %5714
        %v5716 = vmax.f32 %v5535, %v5624
        %5717 = vmax.xlane.f32.xlu0 %v5716
        %v5718 = vpop.xlane.xlu0 %5717
        %v5719 = vmax.f32 %v5538, %v5627
        %5720 = vmax.xlane.f32.xlu0 %v5719
        %v5721 = vpop.xlane.xlu0 %5720
        %v5722 = vmax.f32 %v5540, %v5629
        %5723 = vmax.xlane.f32.xlu0 %v5722
        %v5724 = vpop.xlane.xlu0 %5723
        %v5725 = vmax.f32 %v5543, %v5632
        %5726 = vmax.xlane.f32.xlu0 %v5725
        %v5727 = vpop.xlane.xlu0 %5726
        %v5728 = vmax.f32 %v5545, %v5634
        %5729 = vmax.xlane.f32.xlu0 %v5728
        %v5730 = vpop.xlane.xlu0 %5729
        %v5731 = vmax.f32 %v5548, %v5637
        %5732 = vmax.xlane.f32.xlu0 %v5731
        %v5733 = vpop.xlane.xlu0 %5732
        %v5734 = vmax.f32 %v5550, %v5639
        %5735 = vmax.xlane.f32.xlu0 %v5734
        %v5736 = vpop.xlane.xlu0 %5735
        %v5737 = vsub.f32 %v5473, %v5643
        %v5738 = vsub.f32 %v5562, %v5643
        %v5739 = vsub.f32 %v5475, %v5646
        %v5740 = vsub.f32 %v5564, %v5646
        %v5741 = vsub.f32 %v5478, %v5649
        %v5742 = vsub.f32 %v5567, %v5649
        %v5743 = vsub.f32 %v5480, %v5652
        %v5744 = vsub.f32 %v5569, %v5652
        %v5745 = vsub.f32 %v5483, %v5655
        %v5746 = vsub.f32 %v5572, %v5655
        %v5747 = vsub.f32 %v5485, %v5658
        %v5748 = vsub.f32 %v5574, %v5658
        %v5749 = vsub.f32 %v5488, %v5661
        %v5750 = vsub.f32 %v5577, %v5661
        %v5751 = vsub.f32 %v5490, %v5664
        %v5752 = vsub.f32 %v5579, %v5664
        %v5753 = vsub.f32 %v5493, %v5667
        %v5754 = vsub.f32 %v5582, %v5667
        %v5755 = vsub.f32 %v5495, %v5670
        %v5756 = vsub.f32 %v5584, %v5670
        %v5757 = vsub.f32 %v5498, %v5673
        %v5758 = vsub.f32 %v5587, %v5673
        %v5759 = vsub.f32 %v5500, %v5676
        %v5760 = vsub.f32 %v5589, %v5676
        %v5761 = vsub.f32 %v5503, %v5679
        %v5762 = vsub.f32 %v5592, %v5679
        %v5763 = vsub.f32 %v5505, %v5682
        %v5764 = vsub.f32 %v5594, %v5682
        %v5765 = vsub.f32 %v5508, %v5685
        %v5766 = vsub.f32 %v5597, %v5685
        %v5767 = vsub.f32 %v5510, %v5688
        %v5768 = vsub.f32 %v5599, %v5688
        %v5769 = vsub.f32 %v5513, %v5691
        %v5770 = vsub.f32 %v5602, %v5691
        %v5771 = vsub.f32 %v5515, %v5694
        %v5772 = vsub.f32 %v5604, %v5694
        %v5773 = vsub.f32 %v5518, %v5697
        %v5774 = vsub.f32 %v5607, %v5697
        %v5775 = vsub.f32 %v5520, %v5700
        %v5776 = vsub.f32 %v5609, %v5700
        %v5777 = vsub.f32 %v5523, %v5703
        %v5778 = vsub.f32 %v5612, %v5703
        %v5779 = vsub.f32 %v5525, %v5706
        %v5780 = vsub.f32 %v5614, %v5706
        %v5781 = vsub.f32 %v5528, %v5709
        %v5782 = vsub.f32 %v5617, %v5709
        %v5783 = vsub.f32 %v5530, %v5712
        %v5784 = vsub.f32 %v5619, %v5712
        %v5785 = vsub.f32 %v5533, %v5715
        %v5786 = vsub.f32 %v5622, %v5715
        %v5787 = vsub.f32 %v5535, %v5718
        %v5788 = vsub.f32 %v5624, %v5718
        %v5789 = vsub.f32 %v5538, %v5721
        %v5790 = vsub.f32 %v5627, %v5721
        %v5791 = vsub.f32 %v5540, %v5724
        %v5792 = vsub.f32 %v5629, %v5724
        %v5793 = vsub.f32 %v5543, %v5727
        %v5794 = vsub.f32 %v5632, %v5727
        %v5795 = vsub.f32 %v5545, %v5730
        %v5796 = vsub.f32 %v5634, %v5730
        %v5797 = vsub.f32 %v5548, %v5733
        %v5798 = vsub.f32 %v5637, %v5733
        %v5799 = vsub.f32 %v5550, %v5736
        %v5800 = vsub.f32 %v5639, %v5736
        %v5801 = vmul.f32 %v5737, 1.442695
        %v5802 = vpow.pop %v5801
        %v5803 = vmul.f32 %v5738, 1.442695
        %v5804 = vpow.pop %v5803
        %v5805 = vmul.f32 %v5739, 1.442695
        %v5806 = vpow.pop %v5805
        %v5807 = vmul.f32 %v5740, 1.442695
        %v5808 = vpow.pop %v5807
        %v5809 = vmul.f32 %v5741, 1.442695
        %v5810 = vpow.pop %v5809
        %v5811 = vmul.f32 %v5742, 1.442695
        %v5812 = vpow.pop %v5811
        %v5813 = vmul.f32 %v5743, 1.442695
        %v5814 = vpow.pop %v5813
        %v5815 = vmul.f32 %v5744, 1.442695
        %v5816 = vpow.pop %v5815
        %v5817 = vmul.f32 %v5745, 1.442695
        %v5818 = vpow.pop %v5817
        %v5819 = vmul.f32 %v5746, 1.442695
        %v5820 = vpow.pop %v5819
        %v5821 = vmul.f32 %v5747, 1.442695
        %v5822 = vpow.pop %v5821
        %v5823 = vmul.f32 %v5748, 1.442695
        %v5824 = vpow.pop %v5823
        %v5825 = vmul.f32 %v5749, 1.442695
        %v5826 = vpow.pop %v5825
        %v5827 = vmul.f32 %v5750, 1.442695
        %v5828 = vpow.pop %v5827
        %v5829 = vmul.f32 %v5751, 1.442695
        %v5830 = vpow.pop %v5829
        %v5831 = vmul.f32 %v5752, 1.442695
        %v5832 = vpow.pop %v5831
        %v5833 = vmul.f32 %v5753, 1.442695
        %v5834 = vpow.pop %v5833
        %v5835 = vmul.f32 %v5754, 1.442695
        %v5836 = vpow.pop %v5835
        %v5837 = vmul.f32 %v5755, 1.442695
        %v5838 = vpow.pop %v5837
        %v5839 = vmul.f32 %v5756, 1.442695
        %v5840 = vpow.pop %v5839
        %v5841 = vmul.f32 %v5757, 1.442695
        %v5842 = vpow.pop %v5841
        %v5843 = vmul.f32 %v5758, 1.442695
        %v5844 = vpow.pop %v5843
        %v5845 = vmul.f32 %v5759, 1.442695
        %v5846 = vpow.pop %v5845
        %v5847 = vmul.f32 %v5760, 1.442695
        %v5848 = vpow.pop %v5847
        %v5849 = vmul.f32 %v5761, 1.442695
        %v5850 = vpow.pop %v5849
        %v5851 = vmul.f32 %v5762, 1.442695
        %v5852 = vpow.pop %v5851
        %v5853 = vmul.f32 %v5763, 1.442695
        %v5854 = vpow.pop %v5853
        %v5855 = vmul.f32 %v5764, 1.442695
        %v5856 = vpow.pop %v5855
        %v5857 = vmul.f32 %v5765, 1.442695
        %v5858 = vpow.pop %v5857
        %v5859 = vmul.f32 %v5766, 1.442695
        %v5860 = vpow.pop %v5859
        %v5861 = vmul.f32 %v5767, 1.442695
        %v5862 = vpow.pop %v5861
        %v5863 = vmul.f32 %v5768, 1.442695
        %v5864 = vpow.pop %v5863
        %v5865 = vmul.f32 %v5769, 1.442695
        %v5866 = vpow.pop %v5865
        %v5867 = vmul.f32 %v5770, 1.442695
        %v5868 = vpow.pop %v5867
        %v5869 = vmul.f32 %v5771, 1.442695
        %v5870 = vpow.pop %v5869
        %v5871 = vmul.f32 %v5772, 1.442695
        %v5872 = vpow.pop %v5871
        %v5873 = vmul.f32 %v5773, 1.442695
        %v5874 = vpow.pop %v5873
        %v5875 = vmul.f32 %v5774, 1.442695
        %v5876 = vpow.pop %v5875
        %v5877 = vmul.f32 %v5775, 1.442695
        %v5878 = vpow.pop %v5877
        %v5879 = vmul.f32 %v5776, 1.442695
        %v5880 = vpow.pop %v5879
        %v5881 = vmul.f32 %v5777, 1.442695
        %v5882 = vpow.pop %v5881
        %v5883 = vmul.f32 %v5778, 1.442695
        %v5884 = vpow.pop %v5883
        %v5885 = vmul.f32 %v5779, 1.442695
        %v5886 = vpow.pop %v5885
        %v5887 = vmul.f32 %v5780, 1.442695
        %v5888 = vpow.pop %v5887
        %v5889 = vmul.f32 %v5781, 1.442695
        %v5890 = vpow.pop %v5889
        %v5891 = vmul.f32 %v5782, 1.442695
        %v5892 = vpow.pop %v5891
        %v5893 = vmul.f32 %v5783, 1.442695
        %v5894 = vpow.pop %v5893
        %v5895 = vmul.f32 %v5784, 1.442695
        %v5896 = vpow.pop %v5895
        %v5897 = vmul.f32 %v5785, 1.442695
        %v5898 = vpow.pop %v5897
        %v5899 = vmul.f32 %v5786, 1.442695
        %v5900 = vpow.pop %v5899
        %v5901 = vmul.f32 %v5787, 1.442695
        %v5902 = vpow.pop %v5901
        %v5903 = vmul.f32 %v5788, 1.442695
        %v5904 = vpow.pop %v5903
        %v5905 = vmul.f32 %v5789, 1.442695
        %v5906 = vpow.pop %v5905
        %v5907 = vmul.f32 %v5790, 1.442695
        %v5908 = vpow.pop %v5907
        %v5909 = vmul.f32 %v5791, 1.442695
        %v5910 = vpow.pop %v5909
        %v5911 = vmul.f32 %v5792, 1.442695
        %v5912 = vpow.pop %v5911
        %v5913 = vmul.f32 %v5793, 1.442695
        %v5914 = vpow.pop %v5913
        %v5915 = vmul.f32 %v5794, 1.442695
        %v5916 = vpow.pop %v5915
        %v5917 = vmul.f32 %v5795, 1.442695
        %v5918 = vpow.pop %v5917
        %v5919 = vmul.f32 %v5796, 1.442695
        %v5920 = vpow.pop %v5919
        %v5921 = vmul.f32 %v5797, 1.442695
        %v5922 = vpow.pop %v5921
        %v5923 = vmul.f32 %v5798, 1.442695
        %v5924 = vpow.pop %v5923
        %v5925 = vmul.f32 %v5799, 1.442695
        %v5926 = vpow.pop %v5925
        %v5927 = vmul.f32 %v5800, 1.442695
        %v5928 = vpow.pop %v5927
        %v5929 = vadd.f32 %v5802, %v5804
        %5930 = vadd.xlane.f32.xlu0 %v5929
        %v5931 = vpop.xlane.xlu0 %5930
        %v5932 = vadd.f32 %v5806, %v5808
        %5933 = vadd.xlane.f32.xlu0 %v5932
        %v5934 = vpop.xlane.xlu0 %5933
        %v5935 = vadd.f32 %v5810, %v5812
        %5936 = vadd.xlane.f32.xlu0 %v5935
        %v5937 = vpop.xlane.xlu0 %5936
        %v5938 = vadd.f32 %v5814, %v5816
        %5939 = vadd.xlane.f32.xlu0 %v5938
        %v5940 = vpop.xlane.xlu0 %5939
        %v5941 = vadd.f32 %v5818, %v5820
        %5942 = vadd.xlane.f32.xlu0 %v5941
        %v5943 = vpop.xlane.xlu0 %5942
        %v5944 = vadd.f32 %v5822, %v5824
        %5945 = vadd.xlane.f32.xlu0 %v5944
        %v5946 = vpop.xlane.xlu0 %5945
        %v5947 = vadd.f32 %v5826, %v5828
        %5948 = vadd.xlane.f32.xlu0 %v5947
        %v5949 = vpop.xlane.xlu0 %5948
        %v5950 = vadd.f32 %v5830, %v5832
        %5951 = vadd.xlane.f32.xlu0 %v5950
        %v5952 = vpop.xlane.xlu0 %5951
        %v5953 = vadd.f32 %v5834, %v5836
        %5954 = vadd.xlane.f32.xlu0 %v5953
        %v5955 = vpop.xlane.xlu0 %5954
        %v5956 = vadd.f32 %v5838, %v5840
        %5957 = vadd.xlane.f32.xlu0 %v5956
        %v5958 = vpop.xlane.xlu0 %5957
        %v5959 = vadd.f32 %v5842, %v5844
        %5960 = vadd.xlane.f32.xlu0 %v5959
        %v5961 = vpop.xlane.xlu0 %5960
        %v5962 = vadd.f32 %v5846, %v5848
        %5963 = vadd.xlane.f32.xlu0 %v5962
        %v5964 = vpop.xlane.xlu0 %5963
        %v5965 = vadd.f32 %v5850, %v5852
        %5966 = vadd.xlane.f32.xlu0 %v5965
        %v5967 = vpop.xlane.xlu0 %5966
        %v5968 = vadd.f32 %v5854, %v5856
        %5969 = vadd.xlane.f32.xlu0 %v5968
        %v5970 = vpop.xlane.xlu0 %5969
        %v5971 = vadd.f32 %v5858, %v5860
        %5972 = vadd.xlane.f32.xlu0 %v5971
        %v5973 = vpop.xlane.xlu0 %5972
        %v5974 = vadd.f32 %v5862, %v5864
        %5975 = vadd.xlane.f32.xlu0 %v5974
        %v5976 = vpop.xlane.xlu0 %5975
        %v5977 = vadd.f32 %v5866, %v5868
        %5978 = vadd.xlane.f32.xlu0 %v5977
        %v5979 = vpop.xlane.xlu0 %5978
        %v5980 = vadd.f32 %v5870, %v5872
        %5981 = vadd.xlane.f32.xlu0 %v5980
        %v5982 = vpop.xlane.xlu0 %5981
        %v5983 = vadd.f32 %v5874, %v5876
        %5984 = vadd.xlane.f32.xlu0 %v5983
        %v5985 = vpop.xlane.xlu0 %5984
        %v5986 = vadd.f32 %v5878, %v5880
        %5987 = vadd.xlane.f32.xlu0 %v5986
        %v5988 = vpop.xlane.xlu0 %5987
        %v5989 = vadd.f32 %v5882, %v5884
        %5990 = vadd.xlane.f32.xlu0 %v5989
        %v5991 = vpop.xlane.xlu0 %5990
        %v5992 = vadd.f32 %v5886, %v5888
        %5993 = vadd.xlane.f32.xlu0 %v5992
        %v5994 = vpop.xlane.xlu0 %5993
        %v5995 = vadd.f32 %v5890, %v5892
        %5996 = vadd.xlane.f32.xlu0 %v5995
        %v5997 = vpop.xlane.xlu0 %5996
        %v5998 = vadd.f32 %v5894, %v5896
        %5999 = vadd.xlane.f32.xlu0 %v5998
        %v6000 = vpop.xlane.xlu0 %5999
        %v6001 = vadd.f32 %v5898, %v5900
        %6002 = vadd.xlane.f32.xlu0 %v6001
        %v6003 = vpop.xlane.xlu0 %6002
        %v6004 = vadd.f32 %v5902, %v5904
        %6005 = vadd.xlane.f32.xlu0 %v6004
        %v6006 = vpop.xlane.xlu0 %6005
        %v6007 = vadd.f32 %v5906, %v5908
        %6008 = vadd.xlane.f32.xlu0 %v6007
        %v6009 = vpop.xlane.xlu0 %6008
        %v6010 = vadd.f32 %v5910, %v5912
        %6011 = vadd.xlane.f32.xlu0 %v6010
        %v6012 = vpop.xlane.xlu0 %6011
        %v6013 = vadd.f32 %v5914, %v5916
        %6014 = vadd.xlane.f32.xlu0 %v6013
        %v6015 = vpop.xlane.xlu0 %6014
        %v6016 = vadd.f32 %v5918, %v5920
        %6017 = vadd.xlane.f32.xlu0 %v6016
        %v6018 = vpop.xlane.xlu0 %6017
        %v6019 = vadd.f32 %v5922, %v5924
        %6020 = vadd.xlane.f32.xlu0 %v6019
        %v6021 = vpop.xlane.xlu0 %6020
        %v6022 = vadd.f32 %v5926, %v5928
        %6023 = vadd.xlane.f32.xlu0 %v6022
        %v6024 = vpop.xlane.xlu0 %6023
        %v6025 = vpack.c.bf16 %v5806, %v5802
        %v6026 = vpack.c.bf16 %v5808, %v5804
        %v6027 = vpack.c.bf16 %v5814, %v5810
        %v6028 = vpack.c.bf16 %v5816, %v5812
        %v6029 = vpack.c.bf16 %v5822, %v5818
        %v6030 = vpack.c.bf16 %v5824, %v5820
        %v6031 = vpack.c.bf16 %v5830, %v5826
        %v6032 = vpack.c.bf16 %v5832, %v5828
        %v6033 = vpack.c.bf16 %v5838, %v5834
        %v6034 = vpack.c.bf16 %v5840, %v5836
        %v6035 = vpack.c.bf16 %v5846, %v5842
        %v6036 = vpack.c.bf16 %v5848, %v5844
        %v6037 = vpack.c.bf16 %v5854, %v5850
        %v6038 = vpack.c.bf16 %v5856, %v5852
        %v6039 = vpack.c.bf16 %v5862, %v5858
        %v6040 = vpack.c.bf16 %v5864, %v5860
        %v6041 = vpack.c.bf16 %v5870, %v5866
        %v6042 = vpack.c.bf16 %v5872, %v5868
        %v6043 = vpack.c.bf16 %v5878, %v5874
        %v6044 = vpack.c.bf16 %v5880, %v5876
        %v6045 = vpack.c.bf16 %v5886, %v5882
        %v6046 = vpack.c.bf16 %v5888, %v5884
        %v6047 = vpack.c.bf16 %v5894, %v5890
        %v6048 = vpack.c.bf16 %v5896, %v5892
        %v6049 = vpack.c.bf16 %v5902, %v5898
        %v6050 = vpack.c.bf16 %v5904, %v5900
        %v6051 = vpack.c.bf16 %v5910, %v5906
        %v6052 = vpack.c.bf16 %v5912, %v5908
        %v6053 = vpack.c.bf16 %v5918, %v5914
        %v6054 = vpack.c.bf16 %v5920, %v5916
        %v6055 = vpack.c.bf16 %v5926, %v5922
        %v6056 = vpack.c.bf16 %v5928, %v5924
        %6073 = vmatpush.bf16.msra.mxu0 %v5350
        %6074 = vmatpush.bf16.msra.mxu0 %v5348
        %6075 = vmatpush.bf16.msra.mxu0 %v5346
        %6076 = vmatpush.bf16.msra.mxu0 %v5344
        %6077 = vmatpush.bf16.msra.mxu0 %v5342
        %6078 = vmatpush.bf16.msra.mxu0 %v5340
        %6079 = vmatpush.bf16.msra.mxu0 %v5338
        %6080 = vmatpush.bf16.msra.mxu0 %v5336
        %6081 = vmatmul.bf16.gmra.mxu0 %v6025
        %v6082 = vpop.f32.mrf.mxu0
        %v6083 = vadd.f32 0.0, %v6082
        %v6084 = vpop.f32.mrf.mxu0
        %v6085 = vadd.f32 0.0, %v6084
        %6086 = vmatmul.bf16.gmra.mxu0 %v6027
        %v6087 = vpop.f32.mrf.mxu0
        %v6088 = vadd.f32 0.0, %v6087
        %v6089 = vpop.f32.mrf.mxu0
        %v6090 = vadd.f32 0.0, %v6089
        %6091 = vmatmul.bf16.gmra.mxu0 %v6029
        %v6092 = vpop.f32.mrf.mxu0
        %v6093 = vadd.f32 0.0, %v6092
        %v6094 = vpop.f32.mrf.mxu0
        %v6095 = vadd.f32 0.0, %v6094
        %6096 = vmatmul.bf16.gmra.mxu0 %v6031
        %v6097 = vpop.f32.mrf.mxu0
        %v6098 = vadd.f32 0.0, %v6097
        %v6099 = vpop.f32.mrf.mxu0
        %v6100 = vadd.f32 0.0, %v6099
        %6101 = vmatmul.bf16.gmra.mxu0 %v6033
        %v6102 = vpop.f32.mrf.mxu0
        %v6103 = vadd.f32 0.0, %v6102
        %v6104 = vpop.f32.mrf.mxu0
        %v6105 = vadd.f32 0.0, %v6104
        %6106 = vmatmul.bf16.gmra.mxu0 %v6035
        %v6107 = vpop.f32.mrf.mxu0
        %v6108 = vadd.f32 0.0, %v6107
        %v6109 = vpop.f32.mrf.mxu0
        %v6110 = vadd.f32 0.0, %v6109
        %6111 = vmatmul.bf16.gmra.mxu0 %v6037
        %v6112 = vpop.f32.mrf.mxu0
        %v6113 = vadd.f32 0.0, %v6112
        %v6114 = vpop.f32.mrf.mxu0
        %v6115 = vadd.f32 0.0, %v6114
        %6116 = vmatmul.bf16.gmra.mxu0 %v6039
        %v6117 = vpop.f32.mrf.mxu0
        %v6118 = vadd.f32 0.0, %v6117
        %v6119 = vpop.f32.mrf.mxu0
        %v6120 = vadd.f32 0.0, %v6119
        %6121 = vmatmul.bf16.gmra.mxu0 %v6041
        %v6122 = vpop.f32.mrf.mxu0
        %v6123 = vadd.f32 0.0, %v6122
        %v6124 = vpop.f32.mrf.mxu0
        %v6125 = vadd.f32 0.0, %v6124
        %6126 = vmatmul.bf16.gmra.mxu0 %v6043
        %v6127 = vpop.f32.mrf.mxu0
        %v6128 = vadd.f32 0.0, %v6127
        %v6129 = vpop.f32.mrf.mxu0
        %v6130 = vadd.f32 0.0, %v6129
        %6131 = vmatmul.bf16.gmra.mxu0 %v6045
        %v6132 = vpop.f32.mrf.mxu0
        %v6133 = vadd.f32 0.0, %v6132
        %v6134 = vpop.f32.mrf.mxu0
        %v6135 = vadd.f32 0.0, %v6134
        %6136 = vmatmul.bf16.gmra.mxu0 %v6047
        %v6137 = vpop.f32.mrf.mxu0
        %v6138 = vadd.f32 0.0, %v6137
        %v6139 = vpop.f32.mrf.mxu0
        %v6140 = vadd.f32 0.0, %v6139
        %6141 = vmatmul.bf16.gmra.mxu0 %v6049
        %v6142 = vpop.f32.mrf.mxu0
        %v6143 = vadd.f32 0.0, %v6142
        %v6144 = vpop.f32.mrf.mxu0
        %v6145 = vadd.f32 0.0, %v6144
        %6146 = vmatmul.bf16.gmra.mxu0 %v6051
        %v6147 = vpop.f32.mrf.mxu0
        %v6148 = vadd.f32 0.0, %v6147
        %v6149 = vpop.f32.mrf.mxu0
        %v6150 = vadd.f32 0.0, %v6149
        %6151 = vmatmul.bf16.gmra.mxu0 %v6053
        %v6152 = vpop.f32.mrf.mxu0
        %v6153 = vadd.f32 0.0, %v6152
        %v6154 = vpop.f32.mrf.mxu0
        %v6155 = vadd.f32 0.0, %v6154
        %6156 = vmatmul.bf16.gmra.mxu0 %v6055
        %v6157 = vpop.f32.mrf.mxu0
        %v6158 = vadd.f32 0.0, %v6157
        %v6159 = vpop.f32.mrf.mxu0
        %v6160 = vadd.f32 0.0, %v6159
        %6161 = vdwg.mxu0
        %6162 = vmatpush.bf16.msra.mxu0 %v5366
        %6163 = vmatpush.bf16.msra.mxu0 %v5364
        %6164 = vmatpush.bf16.msra.mxu0 %v5362
        %6165 = vmatpush.bf16.msra.mxu0 %v5360
        %6166 = vmatpush.bf16.msra.mxu0 %v5358
        %6167 = vmatpush.bf16.msra.mxu0 %v5356
        %6168 = vmatpush.bf16.msra.mxu0 %v5354
        %6169 = vmatpush.bf16.msra.mxu0 %v5352
        %6170 = vmatmul.bf16.gmra.mxu0 %v6026
        %v6171 = vpop.f32.mrf.mxu0
        %v6172 = vadd.f32 %v6083, %v6171
        %v6173 = vpop.f32.mrf.mxu0
        %v6174 = vadd.f32 %v6085, %v6173
        %6175 = vmatmul.bf16.gmra.mxu0 %v6028
        %v6176 = vpop.f32.mrf.mxu0
        %v6177 = vadd.f32 %v6088, %v6176
        %v6178 = vpop.f32.mrf.mxu0
        %v6179 = vadd.f32 %v6090, %v6178
        %6180 = vmatmul.bf16.gmra.mxu0 %v6030
        %v6181 = vpop.f32.mrf.mxu0
        %v6182 = vadd.f32 %v6093, %v6181
        %v6183 = vpop.f32.mrf.mxu0
        %v6184 = vadd.f32 %v6095, %v6183
        %6185 = vmatmul.bf16.gmra.mxu0 %v6032
        %v6186 = vpop.f32.mrf.mxu0
        %v6187 = vadd.f32 %v6098, %v6186
        %v6188 = vpop.f32.mrf.mxu0
        %v6189 = vadd.f32 %v6100, %v6188
        %6190 = vmatmul.bf16.gmra.mxu0 %v6034
        %v6191 = vpop.f32.mrf.mxu0
        %v6192 = vadd.f32 %v6103, %v6191
        %v6193 = vpop.f32.mrf.mxu0
        %v6194 = vadd.f32 %v6105, %v6193
        %6195 = vmatmul.bf16.gmra.mxu0 %v6036
        %v6196 = vpop.f32.mrf.mxu0
        %v6197 = vadd.f32 %v6108, %v6196
        %v6198 = vpop.f32.mrf.mxu0
        %v6199 = vadd.f32 %v6110, %v6198
        %6200 = vmatmul.bf16.gmra.mxu0 %v6038
        %v6201 = vpop.f32.mrf.mxu0
        %v6202 = vadd.f32 %v6113, %v6201
        %v6203 = vpop.f32.mrf.mxu0
        %v6204 = vadd.f32 %v6115, %v6203
        %6205 = vmatmul.bf16.gmra.mxu0 %v6040
        %v6206 = vpop.f32.mrf.mxu0
        %v6207 = vadd.f32 %v6118, %v6206
        %v6208 = vpop.f32.mrf.mxu0
        %v6209 = vadd.f32 %v6120, %v6208
        %6210 = vmatmul.bf16.gmra.mxu0 %v6042
        %v6211 = vpop.f32.mrf.mxu0
        %v6212 = vadd.f32 %v6123, %v6211
        %v6213 = vpop.f32.mrf.mxu0
        %v6214 = vadd.f32 %v6125, %v6213
        %6215 = vmatmul.bf16.gmra.mxu0 %v6044
        %v6216 = vpop.f32.mrf.mxu0
        %v6217 = vadd.f32 %v6128, %v6216
        %v6218 = vpop.f32.mrf.mxu0
        %v6219 = vadd.f32 %v6130, %v6218
        %6220 = vmatmul.bf16.gmra.mxu0 %v6046
        %v6221 = vpop.f32.mrf.mxu0
        %v6222 = vadd.f32 %v6133, %v6221
        %v6223 = vpop.f32.mrf.mxu0
        %v6224 = vadd.f32 %v6135, %v6223
        %6225 = vmatmul.bf16.gmra.mxu0 %v6048
        %v6226 = vpop.f32.mrf.mxu0
        %v6227 = vadd.f32 %v6138, %v6226
        %v6228 = vpop.f32.mrf.mxu0
        %v6229 = vadd.f32 %v6140, %v6228
        %6230 = vmatmul.bf16.gmra.mxu0 %v6050
        %v6231 = vpop.f32.mrf.mxu0
        %v6232 = vadd.f32 %v6143, %v6231
        %v6233 = vpop.f32.mrf.mxu0
        %v6234 = vadd.f32 %v6145, %v6233
        %6235 = vmatmul.bf16.gmra.mxu0 %v6052
        %v6236 = vpop.f32.mrf.mxu0
        %v6237 = vadd.f32 %v6148, %v6236
        %v6238 = vpop.f32.mrf.mxu0
        %v6239 = vadd.f32 %v6150, %v6238
        %6240 = vmatmul.bf16.gmra.mxu0 %v6054
        %v6241 = vpop.f32.mrf.mxu0
        %v6242 = vadd.f32 %v6153, %v6241
        %v6243 = vpop.f32.mrf.mxu0
        %v6244 = vadd.f32 %v6155, %v6243
        %6245 = vmatmul.bf16.gmra.mxu0 %v6056
        %v6246 = vpop.f32.mrf.mxu0
        %v6247 = vadd.f32 %v6158, %v6246
        %v6248 = vpop.f32.mrf.mxu0
        %v6249 = vadd.f32 %v6160, %v6248
        %6250 = vdwg.mxu0
        %v6251 = vrcp.pop %v5931
        %v6252 = vrcp.pop %v5934
        %v6253 = vrcp.pop %v5937
        %v6254 = vrcp.pop %v5940
        %v6255 = vrcp.pop %v5943
        %v6256 = vrcp.pop %v5946
        %v6257 = vrcp.pop %v5949
        %v6258 = vrcp.pop %v5952
        %v6259 = vrcp.pop %v5955
        %v6260 = vrcp.pop %v5958
        %v6261 = vrcp.pop %v5961
        %v6262 = vrcp.pop %v5964
        %v6263 = vrcp.pop %v5967
        %v6264 = vrcp.pop %v5970
        %v6265 = vrcp.pop %v5973
        %v6266 = vrcp.pop %v5976
        %v6267 = vrcp.pop %v5979
        %v6268 = vrcp.pop %v5982
        %v6269 = vrcp.pop %v5985
        %v6270 = vrcp.pop %v5988
        %v6271 = vrcp.pop %v5991
        %v6272 = vrcp.pop %v5994
        %v6273 = vrcp.pop %v5997
        %v6274 = vrcp.pop %v6000
        %v6275 = vrcp.pop %v6003
        %v6276 = vrcp.pop %v6006
        %v6277 = vrcp.pop %v6009
        %v6278 = vrcp.pop %v6012
        %v6279 = vrcp.pop %v6015
        %v6280 = vrcp.pop %v6018
        %v6281 = vrcp.pop %v6021
        %v6282 = vrcp.pop %v6024
        %v6283 = vmul.f32 %v6172, %v6251
        %v6284 = vmul.f32 %v6174, %v6252
        %v6285 = vmul.f32 %v6177, %v6253
        %v6286 = vmul.f32 %v6179, %v6254
        %v6287 = vmul.f32 %v6182, %v6255
        %v6288 = vmul.f32 %v6184, %v6256
        %v6289 = vmul.f32 %v6187, %v6257
        %v6290 = vmul.f32 %v6189, %v6258
        %v6291 = vmul.f32 %v6192, %v6259
        %v6292 = vmul.f32 %v6194, %v6260
        %v6293 = vmul.f32 %v6197, %v6261
        %v6294 = vmul.f32 %v6199, %v6262
        %v6295 = vmul.f32 %v6202, %v6263
        %v6296 = vmul.f32 %v6204, %v6264
        %v6297 = vmul.f32 %v6207, %v6265
        %v6298 = vmul.f32 %v6209, %v6266
        %v6299 = vmul.f32 %v6212, %v6267
        %v6300 = vmul.f32 %v6214, %v6268
        %v6301 = vmul.f32 %v6217, %v6269
        %v6302 = vmul.f32 %v6219, %v6270
        %v6303 = vmul.f32 %v6222, %v6271
        %v6304 = vmul.f32 %v6224, %v6272
        %v6305 = vmul.f32 %v6227, %v6273
        %v6306 = vmul.f32 %v6229, %v6274
        %v6307 = vmul.f32 %v6232, %v6275
        %v6308 = vmul.f32 %v6234, %v6276
        %v6309 = vmul.f32 %v6237, %v6277
        %v6310 = vmul.f32 %v6239, %v6278
        %v6311 = vmul.f32 %v6242, %v6279
        %v6312 = vmul.f32 %v6244, %v6280
        %v6313 = vmul.f32 %v6247, %v6281
        %v6314 = vmul.f32 %v6249, %v6282
        %6347 = vrot.lane.b32.xlu0 %v6283, 64
        %v6348 = vpop.permute.xlu0 %6347
        %6349 = vrot.lane.b32.xlu0 %v6284, 64
        %v6350 = vpop.permute.xlu0 %6349
        %6351 = vrot.lane.b32.xlu0 %v6285, 64
        %v6352 = vpop.permute.xlu0 %6351
        %6353 = vrot.lane.b32.xlu0 %v6286, 64
        %v6354 = vpop.permute.xlu0 %6353
        %6355 = vrot.lane.b32.xlu0 %v6287, 64
        %v6356 = vpop.permute.xlu0 %6355
        %6357 = vrot.lane.b32.xlu0 %v6288, 64
        %v6358 = vpop.permute.xlu0 %6357
        %6359 = vrot.lane.b32.xlu0 %v6289, 64
        %v6360 = vpop.permute.xlu0 %6359
        %6361 = vrot.lane.b32.xlu0 %v6290, 64
        %v6362 = vpop.permute.xlu0 %6361
        %6363 = vrot.lane.b32.xlu0 %v6291, 64
        %v6364 = vpop.permute.xlu0 %6363
        %6365 = vrot.lane.b32.xlu0 %v6292, 64
        %v6366 = vpop.permute.xlu0 %6365
        %6367 = vrot.lane.b32.xlu0 %v6293, 64
        %v6368 = vpop.permute.xlu0 %6367
        %6369 = vrot.lane.b32.xlu0 %v6294, 64
        %v6370 = vpop.permute.xlu0 %6369
        %6371 = vrot.lane.b32.xlu0 %v6295, 64
        %v6372 = vpop.permute.xlu0 %6371
        %6373 = vrot.lane.b32.xlu0 %v6296, 64
        %v6374 = vpop.permute.xlu0 %6373
        %6375 = vrot.lane.b32.xlu0 %v6297, 64
        %v6376 = vpop.permute.xlu0 %6375
        %6377 = vrot.lane.b32.xlu0 %v6298, 64
        %v6378 = vpop.permute.xlu0 %6377
        %6379 = vrot.lane.b32.xlu0 %v6299, 64
        %v6380 = vpop.permute.xlu0 %6379
        %6381 = vrot.lane.b32.xlu0 %v6300, 64
        %v6382 = vpop.permute.xlu0 %6381
        %6383 = vrot.lane.b32.xlu0 %v6301, 64
        %v6384 = vpop.permute.xlu0 %6383
        %6385 = vrot.lane.b32.xlu0 %v6302, 64
        %v6386 = vpop.permute.xlu0 %6385
        %6387 = vrot.lane.b32.xlu0 %v6303, 64
        %v6388 = vpop.permute.xlu0 %6387
        %6389 = vrot.lane.b32.xlu0 %v6304, 64
        %v6390 = vpop.permute.xlu0 %6389
        %6391 = vrot.lane.b32.xlu0 %v6305, 64
        %v6392 = vpop.permute.xlu0 %6391
        %6393 = vrot.lane.b32.xlu0 %v6306, 64
        %v6394 = vpop.permute.xlu0 %6393
        %6395 = vrot.lane.b32.xlu0 %v6307, 64
        %v6396 = vpop.permute.xlu0 %6395
        %6397 = vrot.lane.b32.xlu0 %v6308, 64
        %v6398 = vpop.permute.xlu0 %6397
        %6399 = vrot.lane.b32.xlu0 %v6309, 64
        %v6400 = vpop.permute.xlu0 %6399
        %6401 = vrot.lane.b32.xlu0 %v6310, 64
        %v6402 = vpop.permute.xlu0 %6401
        %6403 = vrot.lane.b32.xlu0 %v6311, 64
        %v6404 = vpop.permute.xlu0 %6403
        %6405 = vrot.lane.b32.xlu0 %v6312, 64
        %v6406 = vpop.permute.xlu0 %6405
        %6407 = vrot.lane.b32.xlu0 %v6313, 64
        %v6408 = vpop.permute.xlu0 %6407
        %6409 = vrot.lane.b32.xlu0 %v6314, 64
        %v6410 = vpop.permute.xlu0 %6409
        %vm6443 = vcmask 654848
        %6444 = vst.msk [vmem:[#allocation2] sm:$0xff] %vm6443, %v6348
        %6445 = vst.msk [vmem:[#allocation2 + $0x8] sm:$0xff] %vm6443, %v6350
        %6446 = vst.msk [vmem:[#allocation2 + $0x10] sm:$0xff] %vm6443, %v6352
        %6447 = vst.msk [vmem:[#allocation2 + $0x18] sm:$0xff] %vm6443, %v6354
        %6448 = vst.msk [vmem:[#allocation2 + $0x20] sm:$0xff] %vm6443, %v6356
        %6449 = vst.msk [vmem:[#allocation2 + $0x28] sm:$0xff] %vm6443, %v6358
        %6450 = vst.msk [vmem:[#allocation2 + $0x30] sm:$0xff] %vm6443, %v6360
        %6451 = vst.msk [vmem:[#allocation2 + $0x38] sm:$0xff] %vm6443, %v6362
        %6452 = vst.msk [vmem:[#allocation2 + $0x40] sm:$0xff] %vm6443, %v6364
        %6453 = vst.msk [vmem:[#allocation2 + $0x48] sm:$0xff] %vm6443, %v6366
        %6454 = vst.msk [vmem:[#allocation2 + $0x50] sm:$0xff] %vm6443, %v6368
        %6455 = vst.msk [vmem:[#allocation2 + $0x58] sm:$0xff] %vm6443, %v6370
        %6456 = vst.msk [vmem:[#allocation2 + $0x60] sm:$0xff] %vm6443, %v6372
        %6457 = vst.msk [vmem:[#allocation2 + $0x68] sm:$0xff] %vm6443, %v6374
        %6458 = vst.msk [vmem:[#allocation2 + $0x70] sm:$0xff] %vm6443, %v6376
        %6459 = vst.msk [vmem:[#allocation2 + $0x78] sm:$0xff] %vm6443, %v6378
        %6460 = vst.msk [vmem:[#allocation2 + $0x80] sm:$0xff] %vm6443, %v6380
        %6461 = vst.msk [vmem:[#allocation2 + $0x88] sm:$0xff] %vm6443, %v6382
        %6462 = vst.msk [vmem:[#allocation2 + $0x90] sm:$0xff] %vm6443, %v6384
        %6463 = vst.msk [vmem:[#allocation2 + $0x98] sm:$0xff] %vm6443, %v6386
        %6464 = vst.msk [vmem:[#allocation2 + $0xa0] sm:$0xff] %vm6443, %v6388
        %6465 = vst.msk [vmem:[#allocation2 + $0xa8] sm:$0xff] %vm6443, %v6390
        %6466 = vst.msk [vmem:[#allocation2 + $0xb0] sm:$0xff] %vm6443, %v6392
        %6467 = vst.msk [vmem:[#allocation2 + $0xb8] sm:$0xff] %vm6443, %v6394
        %6468 = vst.msk [vmem:[#allocation2 + $0xc0] sm:$0xff] %vm6443, %v6396
        %6469 = vst.msk [vmem:[#allocation2 + $0xc8] sm:$0xff] %vm6443, %v6398
        %6470 = vst.msk [vmem:[#allocation2 + $0xd0] sm:$0xff] %vm6443, %v6400
        %6471 = vst.msk [vmem:[#allocation2 + $0xd8] sm:$0xff] %vm6443, %v6402
        %6472 = vst.msk [vmem:[#allocation2 + $0xe0] sm:$0xff] %vm6443, %v6404
        %6473 = vst.msk [vmem:[#allocation2 + $0xe8] sm:$0xff] %vm6443, %v6406
        %6474 = vst.msk [vmem:[#allocation2 + $0xf0] sm:$0xff] %vm6443, %v6408
        %6475 = vst.msk [vmem:[#allocation2 + $0xf8] sm:$0xff] %vm6443, %v6410
        %v6476 = vld [vmem:[%s185] sm:$0xff]
        %v6477 = vld [vmem:[%s185 + $0x8] sm:$0xff]
        %v6478 = vld [vmem:[%s185 + $0x10] sm:$0xff]
        %v6479 = vld [vmem:[%s185 + $0x18] sm:$0xff]
        %v6480 = vld [vmem:[%s185 + $0x20] sm:$0xff]
        %v6481 = vld [vmem:[%s185 + $0x28] sm:$0xff]
        %v6482 = vld [vmem:[%s185 + $0x30] sm:$0xff]
        %v6483 = vld [vmem:[%s185 + $0x38] sm:$0xff]
        %v6484 = vld [vmem:[%s185 + $0x40] sm:$0xff]
        %v6485 = vld [vmem:[%s185 + $0x48] sm:$0xff]
        %v6486 = vld [vmem:[%s185 + $0x50] sm:$0xff]
        %v6487 = vld [vmem:[%s185 + $0x58] sm:$0xff]
        %v6488 = vld [vmem:[%s185 + $0x60] sm:$0xff]
        %v6489 = vld [vmem:[%s185 + $0x68] sm:$0xff]
        %v6490 = vld [vmem:[%s185 + $0x70] sm:$0xff]
        %v6491 = vld [vmem:[%s185 + $0x78] sm:$0xff]
        %v6492 = vld [vmem:[%s185 + $0x80] sm:$0xff]
        %v6493 = vld [vmem:[%s185 + $0x88] sm:$0xff]
        %v6494 = vld [vmem:[%s185 + $0x90] sm:$0xff]
        %v6495 = vld [vmem:[%s185 + $0x98] sm:$0xff]
        %v6496 = vld [vmem:[%s185 + $0xa0] sm:$0xff]
        %v6497 = vld [vmem:[%s185 + $0xa8] sm:$0xff]
        %v6498 = vld [vmem:[%s185 + $0xb0] sm:$0xff]
        %v6499 = vld [vmem:[%s185 + $0xb8] sm:$0xff]
        %v6500 = vld [vmem:[%s185 + $0xc0] sm:$0xff]
        %v6501 = vld [vmem:[%s185 + $0xc8] sm:$0xff]
        %v6502 = vld [vmem:[%s185 + $0xd0] sm:$0xff]
        %v6503 = vld [vmem:[%s185 + $0xd8] sm:$0xff]
        %v6504 = vld [vmem:[%s185 + $0xe0] sm:$0xff]
        %v6505 = vld [vmem:[%s185 + $0xe8] sm:$0xff]
        %v6506 = vld [vmem:[%s185 + $0xf0] sm:$0xff]
        %v6507 = vld [vmem:[%s185 + $0xf8] sm:$0xff]
        %v6508 = vmul.f32 %v6476, 0.25
        %v6509 = vmul.f32 %v6477, 0.25
        %v6510 = vmul.f32 %v6478, 0.25
        %v6511 = vmul.f32 %v6479, 0.25
        %v6512 = vmul.f32 %v6480, 0.25
        %v6513 = vmul.f32 %v6481, 0.25
        %v6514 = vmul.f32 %v6482, 0.25
        %v6515 = vmul.f32 %v6483, 0.25
        %v6516 = vmul.f32 %v6484, 0.25
        %v6517 = vmul.f32 %v6485, 0.25
        %v6518 = vmul.f32 %v6486, 0.25
        %v6519 = vmul.f32 %v6487, 0.25
        %v6520 = vmul.f32 %v6488, 0.25
        %v6521 = vmul.f32 %v6489, 0.25
        %v6522 = vmul.f32 %v6490, 0.25
        %v6523 = vmul.f32 %v6491, 0.25
        %v6524 = vmul.f32 %v6492, 0.25
        %v6525 = vmul.f32 %v6493, 0.25
        %v6526 = vmul.f32 %v6494, 0.25
        %v6527 = vmul.f32 %v6495, 0.25
        %v6528 = vmul.f32 %v6496, 0.25
        %v6529 = vmul.f32 %v6497, 0.25
        %v6530 = vmul.f32 %v6498, 0.25
        %v6531 = vmul.f32 %v6499, 0.25
        %v6532 = vmul.f32 %v6500, 0.25
        %v6533 = vmul.f32 %v6501, 0.25
        %v6534 = vmul.f32 %v6502, 0.25
        %v6535 = vmul.f32 %v6503, 0.25
        %v6536 = vmul.f32 %v6504, 0.25
        %v6537 = vmul.f32 %v6505, 0.25
        %v6538 = vmul.f32 %v6506, 0.25
        %v6539 = vmul.f32 %v6507, 0.25
        %v6540 = vpack.c.bf16 %v6509, %v6508
        %v6541 = vpack.c.bf16 %v6511, %v6510
        %v6542 = vpack.c.bf16 %v6513, %v6512
        %v6543 = vpack.c.bf16 %v6515, %v6514
        %v6544 = vpack.c.bf16 %v6517, %v6516
        %v6545 = vpack.c.bf16 %v6519, %v6518
        %v6546 = vpack.c.bf16 %v6521, %v6520
        %v6547 = vpack.c.bf16 %v6523, %v6522
        %v6548 = vpack.c.bf16 %v6525, %v6524
        %v6549 = vpack.c.bf16 %v6527, %v6526
        %v6550 = vpack.c.bf16 %v6529, %v6528
        %v6551 = vpack.c.bf16 %v6531, %v6530
        %v6552 = vpack.c.bf16 %v6533, %v6532
        %v6553 = vpack.c.bf16 %v6535, %v6534
        %v6554 = vpack.c.bf16 %v6537, %v6536
        %v6555 = vpack.c.bf16 %v6539, %v6538
        %v6556 = vpack.c.bf16 %v6477, %v6476
        %v6557 = vpack.c.bf16 %v6479, %v6478
        %v6558 = vpack.c.bf16 %v6481, %v6480
        %v6559 = vpack.c.bf16 %v6483, %v6482
        %v6560 = vpack.c.bf16 %v6485, %v6484
        %v6561 = vpack.c.bf16 %v6487, %v6486
        %v6562 = vpack.c.bf16 %v6489, %v6488
        %v6563 = vpack.c.bf16 %v6491, %v6490
        %v6564 = vpack.c.bf16 %v6493, %v6492
        %v6565 = vpack.c.bf16 %v6495, %v6494
        %v6566 = vpack.c.bf16 %v6497, %v6496
        %v6567 = vpack.c.bf16 %v6499, %v6498
        %v6568 = vpack.c.bf16 %v6501, %v6500
        %v6569 = vpack.c.bf16 %v6503, %v6502
        %v6570 = vpack.c.bf16 %v6505, %v6504
        %v6571 = vpack.c.bf16 %v6507, %v6506
        %6588 = vrot.lane.b32.xlu0 %v6540, 48
        %v6589 = vpop.permute.xlu0 %6588
        %6590 = vrot.lane.b32.xlu0 %v6541, 48
        %v6591 = vpop.permute.xlu0 %6590
        %6592 = vrot.lane.b32.xlu0 %v6542, 48
        %v6593 = vpop.permute.xlu0 %6592
        %6594 = vrot.lane.b32.xlu0 %v6543, 48
        %v6595 = vpop.permute.xlu0 %6594
        %6596 = vrot.lane.b32.xlu0 %v6544, 48
        %v6597 = vpop.permute.xlu0 %6596
        %6598 = vrot.lane.b32.xlu0 %v6545, 48
        %v6599 = vpop.permute.xlu0 %6598
        %6600 = vrot.lane.b32.xlu0 %v6546, 48
        %v6601 = vpop.permute.xlu0 %6600
        %6602 = vrot.lane.b32.xlu0 %v6547, 48
        %v6603 = vpop.permute.xlu0 %6602
        %6604 = vrot.lane.b32.xlu0 %v6548, 48
        %v6605 = vpop.permute.xlu0 %6604
        %6606 = vrot.lane.b32.xlu0 %v6549, 48
        %v6607 = vpop.permute.xlu0 %6606
        %6608 = vrot.lane.b32.xlu0 %v6550, 48
        %v6609 = vpop.permute.xlu0 %6608
        %6610 = vrot.lane.b32.xlu0 %v6551, 48
        %v6611 = vpop.permute.xlu0 %6610
        %6612 = vrot.lane.b32.xlu0 %v6552, 48
        %v6613 = vpop.permute.xlu0 %6612
        %6614 = vrot.lane.b32.xlu0 %v6553, 48
        %v6615 = vpop.permute.xlu0 %6614
        %6616 = vrot.lane.b32.xlu0 %v6554, 48
        %v6617 = vpop.permute.xlu0 %6616
        %6618 = vrot.lane.b32.xlu0 %v6555, 48
        %v6619 = vpop.permute.xlu0 %6618
        %6636 = vrot.lane.b32.xlu0 %v6556, 48
        %v6637 = vpop.permute.xlu0 %6636
        %6638 = vrot.lane.b32.xlu0 %v6557, 48
        %v6639 = vpop.permute.xlu0 %6638
        %6640 = vrot.lane.b32.xlu0 %v6558, 48
        %v6641 = vpop.permute.xlu0 %6640
        %6642 = vrot.lane.b32.xlu0 %v6559, 48
        %v6643 = vpop.permute.xlu0 %6642
        %6644 = vrot.lane.b32.xlu0 %v6560, 48
        %v6645 = vpop.permute.xlu0 %6644
        %6646 = vrot.lane.b32.xlu0 %v6561, 48
        %v6647 = vpop.permute.xlu0 %6646
        %6648 = vrot.lane.b32.xlu0 %v6562, 48
        %v6649 = vpop.permute.xlu0 %6648
        %6650 = vrot.lane.b32.xlu0 %v6563, 48
        %v6651 = vpop.permute.xlu0 %6650
        %6652 = vrot.lane.b32.xlu0 %v6564, 48
        %v6653 = vpop.permute.xlu0 %6652
        %6654 = vrot.lane.b32.xlu0 %v6565, 48
        %v6655 = vpop.permute.xlu0 %6654
        %6656 = vrot.lane.b32.xlu0 %v6566, 48
        %v6657 = vpop.permute.xlu0 %6656
        %6658 = vrot.lane.b32.xlu0 %v6567, 48
        %v6659 = vpop.permute.xlu0 %6658
        %6660 = vrot.lane.b32.xlu0 %v6568, 48
        %v6661 = vpop.permute.xlu0 %6660
        %6662 = vrot.lane.b32.xlu0 %v6569, 48
        %v6663 = vpop.permute.xlu0 %6662
        %6664 = vrot.lane.b32.xlu0 %v6570, 48
        %v6665 = vpop.permute.xlu0 %6664
        %6666 = vrot.lane.b32.xlu0 %v6571, 48
        %v6667 = vpop.permute.xlu0 %6666
        %v6669 = vsel %vm307, %v6589, 0
        %v6672 = vsel %vm307, %v6591, 0
        %v6675 = vsel %vm307, %v6593, 0
        %v6678 = vsel %vm307, %v6595, 0
        %v6681 = vsel %vm307, %v6597, 0
        %v6684 = vsel %vm307, %v6599, 0
        %v6687 = vsel %vm307, %v6601, 0
        %v6690 = vsel %vm307, %v6603, 0
        %v6693 = vsel %vm307, %v6605, 0
        %v6696 = vsel %vm307, %v6607, 0
        %v6699 = vsel %vm307, %v6609, 0
        %v6702 = vsel %vm307, %v6611, 0
        %v6705 = vsel %vm307, %v6613, 0
        %v6708 = vsel %vm307, %v6615, 0
        %v6711 = vsel %vm307, %v6617, 0
        %v6714 = vsel %vm307, %v6619, 0
        %v6717 = vsel %vm307, %v6637, 0
        %v6720 = vsel %vm307, %v6639, 0
        %v6723 = vsel %vm307, %v6641, 0
        %v6726 = vsel %vm307, %v6643, 0
        %v6729 = vsel %vm307, %v6645, 0
        %v6732 = vsel %vm307, %v6647, 0
        %v6735 = vsel %vm307, %v6649, 0
        %v6738 = vsel %vm307, %v6651, 0
        %v6741 = vsel %vm307, %v6653, 0
        %v6744 = vsel %vm307, %v6655, 0
        %v6747 = vsel %vm307, %v6657, 0
        %v6750 = vsel %vm307, %v6659, 0
        %v6753 = vsel %vm307, %v6661, 0
        %v6756 = vsel %vm307, %v6663, 0
        %v6759 = vsel %vm307, %v6665, 0
        %v6762 = vsel %vm307, %v6667, 0
        %6764 = vmatpush.bf16.xpose.msra.mxu0 %v6738
        %6765 = vmatpush.bf16.xpose.msra.mxu0 %v6735
        %6766 = vmatpush.bf16.xpose.msra.mxu0 %v6732
        %6767 = vmatpush.bf16.xpose.msra.mxu0 %v6729
        %6768 = vmatpush.bf16.xpose.msra.mxu0 %v6726
        %6769 = vmatpush.bf16.xpose.msra.mxu0 %v6723
        %6770 = vmatpush.bf16.xpose.msra.mxu0 %v6720
        %6771 = vmatpush.bf16.xpose.msra.mxu0 %v6717
        %6772 = vmatmul.bf16.gmra.mxu0 %v6669
        %v6773 = vpop.f32.mrf.mxu0
        %v6774 = vadd.f32 0.0, %v6773
        %v6775 = vpop.f32.mrf.mxu0
        %v6776 = vadd.f32 0.0, %v6775
        %6777 = vmatmul.bf16.gmra.mxu0 %v6672
        %v6778 = vpop.f32.mrf.mxu0
        %v6779 = vadd.f32 0.0, %v6778
        %v6780 = vpop.f32.mrf.mxu0
        %v6781 = vadd.f32 0.0, %v6780
        %6782 = vmatmul.bf16.gmra.mxu0 %v6675
        %v6783 = vpop.f32.mrf.mxu0
        %v6784 = vadd.f32 0.0, %v6783
        %v6785 = vpop.f32.mrf.mxu0
        %v6786 = vadd.f32 0.0, %v6785
        %6787 = vmatmul.bf16.gmra.mxu0 %v6678
        %v6788 = vpop.f32.mrf.mxu0
        %v6789 = vadd.f32 0.0, %v6788
        %v6790 = vpop.f32.mrf.mxu0
        %v6791 = vadd.f32 0.0, %v6790
        %6792 = vmatmul.bf16.gmra.mxu0 %v6681
        %v6793 = vpop.f32.mrf.mxu0
        %v6794 = vadd.f32 0.0, %v6793
        %v6795 = vpop.f32.mrf.mxu0
        %v6796 = vadd.f32 0.0, %v6795
        %6797 = vmatmul.bf16.gmra.mxu0 %v6684
        %v6798 = vpop.f32.mrf.mxu0
        %v6799 = vadd.f32 0.0, %v6798
        %v6800 = vpop.f32.mrf.mxu0
        %v6801 = vadd.f32 0.0, %v6800
        %6802 = vmatmul.bf16.gmra.mxu0 %v6687
        %v6803 = vpop.f32.mrf.mxu0
        %v6804 = vadd.f32 0.0, %v6803
        %v6805 = vpop.f32.mrf.mxu0
        %v6806 = vadd.f32 0.0, %v6805
        %6807 = vmatmul.bf16.gmra.mxu0 %v6690
        %v6808 = vpop.f32.mrf.mxu0
        %v6809 = vadd.f32 0.0, %v6808
        %v6810 = vpop.f32.mrf.mxu0
        %v6811 = vadd.f32 0.0, %v6810
        %6812 = vmatmul.bf16.gmra.mxu0 %v6693
        %v6813 = vpop.f32.mrf.mxu0
        %v6814 = vadd.f32 0.0, %v6813
        %v6815 = vpop.f32.mrf.mxu0
        %v6816 = vadd.f32 0.0, %v6815
        %6817 = vmatmul.bf16.gmra.mxu0 %v6696
        %v6818 = vpop.f32.mrf.mxu0
        %v6819 = vadd.f32 0.0, %v6818
        %v6820 = vpop.f32.mrf.mxu0
        %v6821 = vadd.f32 0.0, %v6820
        %6822 = vmatmul.bf16.gmra.mxu0 %v6699
        %v6823 = vpop.f32.mrf.mxu0
        %v6824 = vadd.f32 0.0, %v6823
        %v6825 = vpop.f32.mrf.mxu0
        %v6826 = vadd.f32 0.0, %v6825
        %6827 = vmatmul.bf16.gmra.mxu0 %v6702
        %v6828 = vpop.f32.mrf.mxu0
        %v6829 = vadd.f32 0.0, %v6828
        %v6830 = vpop.f32.mrf.mxu0
        %v6831 = vadd.f32 0.0, %v6830
        %6832 = vmatmul.bf16.gmra.mxu0 %v6705
        %v6833 = vpop.f32.mrf.mxu0
        %v6834 = vadd.f32 0.0, %v6833
        %v6835 = vpop.f32.mrf.mxu0
        %v6836 = vadd.f32 0.0, %v6835
        %6837 = vmatmul.bf16.gmra.mxu0 %v6708
        %v6838 = vpop.f32.mrf.mxu0
        %v6839 = vadd.f32 0.0, %v6838
        %v6840 = vpop.f32.mrf.mxu0
        %v6841 = vadd.f32 0.0, %v6840
        %6842 = vmatmul.bf16.gmra.mxu0 %v6711
        %v6843 = vpop.f32.mrf.mxu0
        %v6844 = vadd.f32 0.0, %v6843
        %v6845 = vpop.f32.mrf.mxu0
        %v6846 = vadd.f32 0.0, %v6845
        %6847 = vmatmul.bf16.gmra.mxu0 %v6714
        %v6848 = vpop.f32.mrf.mxu0
        %v6849 = vadd.f32 0.0, %v6848
        %v6850 = vpop.f32.mrf.mxu0
        %v6851 = vadd.f32 0.0, %v6850
        %6852 = vdwg.mxu0
        %6853 = vmatpush.bf16.xpose.msra.mxu0 %v6762
        %6854 = vmatpush.bf16.xpose.msra.mxu0 %v6759
        %6855 = vmatpush.bf16.xpose.msra.mxu0 %v6756
        %6856 = vmatpush.bf16.xpose.msra.mxu0 %v6753
        %6857 = vmatpush.bf16.xpose.msra.mxu0 %v6750
        %6858 = vmatpush.bf16.xpose.msra.mxu0 %v6747
        %6859 = vmatpush.bf16.xpose.msra.mxu0 %v6744
        %6860 = vmatpush.bf16.xpose.msra.mxu0 %v6741
        %6861 = vmatmul.bf16.gmra.mxu0 %v6669
        %v6862 = vpop.f32.mrf.mxu0
        %v6863 = vadd.f32 0.0, %v6862
        %v6864 = vpop.f32.mrf.mxu0
        %v6865 = vadd.f32 0.0, %v6864
        %6866 = vmatmul.bf16.gmra.mxu0 %v6672
        %v6867 = vpop.f32.mrf.mxu0
        %v6868 = vadd.f32 0.0, %v6867
        %v6869 = vpop.f32.mrf.mxu0
        %v6870 = vadd.f32 0.0, %v6869
        %6871 = vmatmul.bf16.gmra.mxu0 %v6675
        %v6872 = vpop.f32.mrf.mxu0
        %v6873 = vadd.f32 0.0, %v6872
        %v6874 = vpop.f32.mrf.mxu0
        %v6875 = vadd.f32 0.0, %v6874
        %6876 = vmatmul.bf16.gmra.mxu0 %v6678
        %v6877 = vpop.f32.mrf.mxu0
        %v6878 = vadd.f32 0.0, %v6877
        %v6879 = vpop.f32.mrf.mxu0
        %v6880 = vadd.f32 0.0, %v6879
        %6881 = vmatmul.bf16.gmra.mxu0 %v6681
        %v6882 = vpop.f32.mrf.mxu0
        %v6883 = vadd.f32 0.0, %v6882
        %v6884 = vpop.f32.mrf.mxu0
        %v6885 = vadd.f32 0.0, %v6884
        %6886 = vmatmul.bf16.gmra.mxu0 %v6684
        %v6887 = vpop.f32.mrf.mxu0
        %v6888 = vadd.f32 0.0, %v6887
        %v6889 = vpop.f32.mrf.mxu0
        %v6890 = vadd.f32 0.0, %v6889
        %6891 = vmatmul.bf16.gmra.mxu0 %v6687
        %v6892 = vpop.f32.mrf.mxu0
        %v6893 = vadd.f32 0.0, %v6892
        %v6894 = vpop.f32.mrf.mxu0
        %v6895 = vadd.f32 0.0, %v6894
        %6896 = vmatmul.bf16.gmra.mxu0 %v6690
        %v6897 = vpop.f32.mrf.mxu0
        %v6898 = vadd.f32 0.0, %v6897
        %v6899 = vpop.f32.mrf.mxu0
        %v6900 = vadd.f32 0.0, %v6899
        %6901 = vmatmul.bf16.gmra.mxu0 %v6693
        %v6902 = vpop.f32.mrf.mxu0
        %v6903 = vadd.f32 0.0, %v6902
        %v6904 = vpop.f32.mrf.mxu0
        %v6905 = vadd.f32 0.0, %v6904
        %6906 = vmatmul.bf16.gmra.mxu0 %v6696
        %v6907 = vpop.f32.mrf.mxu0
        %v6908 = vadd.f32 0.0, %v6907
        %v6909 = vpop.f32.mrf.mxu0
        %v6910 = vadd.f32 0.0, %v6909
        %6911 = vmatmul.bf16.gmra.mxu0 %v6699
        %v6912 = vpop.f32.mrf.mxu0
        %v6913 = vadd.f32 0.0, %v6912
        %v6914 = vpop.f32.mrf.mxu0
        %v6915 = vadd.f32 0.0, %v6914
        %6916 = vmatmul.bf16.gmra.mxu0 %v6702
        %v6917 = vpop.f32.mrf.mxu0
        %v6918 = vadd.f32 0.0, %v6917
        %v6919 = vpop.f32.mrf.mxu0
        %v6920 = vadd.f32 0.0, %v6919
        %6921 = vmatmul.bf16.gmra.mxu0 %v6705
        %v6922 = vpop.f32.mrf.mxu0
        %v6923 = vadd.f32 0.0, %v6922
        %v6924 = vpop.f32.mrf.mxu0
        %v6925 = vadd.f32 0.0, %v6924
        %6926 = vmatmul.bf16.gmra.mxu0 %v6708
        %v6927 = vpop.f32.mrf.mxu0
        %v6928 = vadd.f32 0.0, %v6927
        %v6929 = vpop.f32.mrf.mxu0
        %v6930 = vadd.f32 0.0, %v6929
        %6931 = vmatmul.bf16.gmra.mxu0 %v6711
        %v6932 = vpop.f32.mrf.mxu0
        %v6933 = vadd.f32 0.0, %v6932
        %v6934 = vpop.f32.mrf.mxu0
        %v6935 = vadd.f32 0.0, %v6934
        %6936 = vmatmul.bf16.gmra.mxu0 %v6714
        %v6937 = vpop.f32.mrf.mxu0
        %v6938 = vadd.f32 0.0, %v6937
        %v6939 = vpop.f32.mrf.mxu0
        %v6940 = vadd.f32 0.0, %v6939
        %6941 = vdwg.mxu0
        %v6942 = vmax.f32 %v6774, %v6863
        %6943 = vmax.xlane.f32.xlu0 %v6942
        %v6944 = vpop.xlane.xlu0 %6943
        %v6945 = vmax.f32 %v6776, %v6865
        %6946 = vmax.xlane.f32.xlu0 %v6945
        %v6947 = vpop.xlane.xlu0 %6946
        %v6948 = vmax.f32 %v6779, %v6868
        %6949 = vmax.xlane.f32.xlu0 %v6948
        %v6950 = vpop.xlane.xlu0 %6949
        %v6951 = vmax.f32 %v6781, %v6870
        %6952 = vmax.xlane.f32.xlu0 %v6951
        %v6953 = vpop.xlane.xlu0 %6952
        %v6954 = vmax.f32 %v6784, %v6873
        %6955 = vmax.xlane.f32.xlu0 %v6954
        %v6956 = vpop.xlane.xlu0 %6955
        %v6957 = vmax.f32 %v6786, %v6875
        %6958 = vmax.xlane.f32.xlu0 %v6957
        %v6959 = vpop.xlane.xlu0 %6958
        %v6960 = vmax.f32 %v6789, %v6878
        %6961 = vmax.xlane.f32.xlu0 %v6960
        %v6962 = vpop.xlane.xlu0 %6961
        %v6963 = vmax.f32 %v6791, %v6880
        %6964 = vmax.xlane.f32.xlu0 %v6963
        %v6965 = vpop.xlane.xlu0 %6964
        %v6966 = vmax.f32 %v6794, %v6883
        %6967 = vmax.xlane.f32.xlu0 %v6966
        %v6968 = vpop.xlane.xlu0 %6967
        %v6969 = vmax.f32 %v6796, %v6885
        %6970 = vmax.xlane.f32.xlu0 %v6969
        %v6971 = vpop.xlane.xlu0 %6970
        %v6972 = vmax.f32 %v6799, %v6888
        %6973 = vmax.xlane.f32.xlu0 %v6972
        %v6974 = vpop.xlane.xlu0 %6973
        %v6975 = vmax.f32 %v6801, %v6890
        %6976 = vmax.xlane.f32.xlu0 %v6975
        %v6977 = vpop.xlane.xlu0 %6976
        %v6978 = vmax.f32 %v6804, %v6893
        %6979 = vmax.xlane.f32.xlu0 %v6978
        %v6980 = vpop.xlane.xlu0 %6979
        %v6981 = vmax.f32 %v6806, %v6895
        %6982 = vmax.xlane.f32.xlu0 %v6981
        %v6983 = vpop.xlane.xlu0 %6982
        %v6984 = vmax.f32 %v6809, %v6898
        %6985 = vmax.xlane.f32.xlu0 %v6984
        %v6986 = vpop.xlane.xlu0 %6985
        %v6987 = vmax.f32 %v6811, %v6900
        %6988 = vmax.xlane.f32.xlu0 %v6987
        %v6989 = vpop.xlane.xlu0 %6988
        %v6990 = vmax.f32 %v6814, %v6903
        %6991 = vmax.xlane.f32.xlu0 %v6990
        %v6992 = vpop.xlane.xlu0 %6991
        %v6993 = vmax.f32 %v6816, %v6905
        %6994 = vmax.xlane.f32.xlu0 %v6993
        %v6995 = vpop.xlane.xlu0 %6994
        %v6996 = vmax.f32 %v6819, %v6908
        %6997 = vmax.xlane.f32.xlu0 %v6996
        %v6998 = vpop.xlane.xlu0 %6997
        %v6999 = vmax.f32 %v6821, %v6910
        %7000 = vmax.xlane.f32.xlu0 %v6999
        %v7001 = vpop.xlane.xlu0 %7000
        %v7002 = vmax.f32 %v6824, %v6913
        %7003 = vmax.xlane.f32.xlu0 %v7002
        %v7004 = vpop.xlane.xlu0 %7003
        %v7005 = vmax.f32 %v6826, %v6915
        %7006 = vmax.xlane.f32.xlu0 %v7005
        %v7007 = vpop.xlane.xlu0 %7006
        %v7008 = vmax.f32 %v6829, %v6918
        %7009 = vmax.xlane.f32.xlu0 %v7008
        %v7010 = vpop.xlane.xlu0 %7009
        %v7011 = vmax.f32 %v6831, %v6920
        %7012 = vmax.xlane.f32.xlu0 %v7011
        %v7013 = vpop.xlane.xlu0 %7012
        %v7014 = vmax.f32 %v6834, %v6923
        %7015 = vmax.xlane.f32.xlu0 %v7014
        %v7016 = vpop.xlane.xlu0 %7015
        %v7017 = vmax.f32 %v6836, %v6925
        %7018 = vmax.xlane.f32.xlu0 %v7017
        %v7019 = vpop.xlane.xlu0 %7018
        %v7020 = vmax.f32 %v6839, %v6928
        %7021 = vmax.xlane.f32.xlu0 %v7020
        %v7022 = vpop.xlane.xlu0 %7021
        %v7023 = vmax.f32 %v6841, %v6930
        %7024 = vmax.xlane.f32.xlu0 %v7023
        %v7025 = vpop.xlane.xlu0 %7024
        %v7026 = vmax.f32 %v6844, %v6933
        %7027 = vmax.xlane.f32.xlu0 %v7026
        %v7028 = vpop.xlane.xlu0 %7027
        %v7029 = vmax.f32 %v6846, %v6935
        %7030 = vmax.xlane.f32.xlu0 %v7029
        %v7031 = vpop.xlane.xlu0 %7030
        %v7032 = vmax.f32 %v6849, %v6938
        %7033 = vmax.xlane.f32.xlu0 %v7032
        %v7034 = vpop.xlane.xlu0 %7033
        %v7035 = vmax.f32 %v6851, %v6940
        %7036 = vmax.xlane.f32.xlu0 %v7035
        %v7037 = vpop.xlane.xlu0 %7036
        %v7038 = vsub.f32 %v6774, %v6944
        %v7039 = vsub.f32 %v6863, %v6944
        %v7040 = vsub.f32 %v6776, %v6947
        %v7041 = vsub.f32 %v6865, %v6947
        %v7042 = vsub.f32 %v6779, %v6950
        %v7043 = vsub.f32 %v6868, %v6950
        %v7044 = vsub.f32 %v6781, %v6953
        %v7045 = vsub.f32 %v6870, %v6953
        %v7046 = vsub.f32 %v6784, %v6956
        %v7047 = vsub.f32 %v6873, %v6956
        %v7048 = vsub.f32 %v6786, %v6959
        %v7049 = vsub.f32 %v6875, %v6959
        %v7050 = vsub.f32 %v6789, %v6962
        %v7051 = vsub.f32 %v6878, %v6962
        %v7052 = vsub.f32 %v6791, %v6965
        %v7053 = vsub.f32 %v6880, %v6965
        %v7054 = vsub.f32 %v6794, %v6968
        %v7055 = vsub.f32 %v6883, %v6968
        %v7056 = vsub.f32 %v6796, %v6971
        %v7057 = vsub.f32 %v6885, %v6971
        %v7058 = vsub.f32 %v6799, %v6974
        %v7059 = vsub.f32 %v6888, %v6974
        %v7060 = vsub.f32 %v6801, %v6977
        %v7061 = vsub.f32 %v6890, %v6977
        %v7062 = vsub.f32 %v6804, %v6980
        %v7063 = vsub.f32 %v6893, %v6980
        %v7064 = vsub.f32 %v6806, %v6983
        %v7065 = vsub.f32 %v6895, %v6983
        %v7066 = vsub.f32 %v6809, %v6986
        %v7067 = vsub.f32 %v6898, %v6986
        %v7068 = vsub.f32 %v6811, %v6989
        %v7069 = vsub.f32 %v6900, %v6989
        %v7070 = vsub.f32 %v6814, %v6992
        %v7071 = vsub.f32 %v6903, %v6992
        %v7072 = vsub.f32 %v6816, %v6995
        %v7073 = vsub.f32 %v6905, %v6995
        %v7074 = vsub.f32 %v6819, %v6998
        %v7075 = vsub.f32 %v6908, %v6998
        %v7076 = vsub.f32 %v6821, %v7001
        %v7077 = vsub.f32 %v6910, %v7001
        %v7078 = vsub.f32 %v6824, %v7004
        %v7079 = vsub.f32 %v6913, %v7004
        %v7080 = vsub.f32 %v6826, %v7007
        %v7081 = vsub.f32 %v6915, %v7007
        %v7082 = vsub.f32 %v6829, %v7010
        %v7083 = vsub.f32 %v6918, %v7010
        %v7084 = vsub.f32 %v6831, %v7013
        %v7085 = vsub.f32 %v6920, %v7013
        %v7086 = vsub.f32 %v6834, %v7016
        %v7087 = vsub.f32 %v6923, %v7016
        %v7088 = vsub.f32 %v6836, %v7019
        %v7089 = vsub.f32 %v6925, %v7019
        %v7090 = vsub.f32 %v6839, %v7022
        %v7091 = vsub.f32 %v6928, %v7022
        %v7092 = vsub.f32 %v6841, %v7025
        %v7093 = vsub.f32 %v6930, %v7025
        %v7094 = vsub.f32 %v6844, %v7028
        %v7095 = vsub.f32 %v6933, %v7028
        %v7096 = vsub.f32 %v6846, %v7031
        %v7097 = vsub.f32 %v6935, %v7031
        %v7098 = vsub.f32 %v6849, %v7034
        %v7099 = vsub.f32 %v6938, %v7034
        %v7100 = vsub.f32 %v6851, %v7037
        %v7101 = vsub.f32 %v6940, %v7037
        %v7102 = vmul.f32 %v7038, 1.442695
        %v7103 = vpow.pop %v7102
        %v7104 = vmul.f32 %v7039, 1.442695
        %v7105 = vpow.pop %v7104
        %v7106 = vmul.f32 %v7040, 1.442695
        %v7107 = vpow.pop %v7106
        %v7108 = vmul.f32 %v7041, 1.442695
        %v7109 = vpow.pop %v7108
        %v7110 = vmul.f32 %v7042, 1.442695
        %v7111 = vpow.pop %v7110
        %v7112 = vmul.f32 %v7043, 1.442695
        %v7113 = vpow.pop %v7112
        %v7114 = vmul.f32 %v7044, 1.442695
        %v7115 = vpow.pop %v7114
        %v7116 = vmul.f32 %v7045, 1.442695
        %v7117 = vpow.pop %v7116
        %v7118 = vmul.f32 %v7046, 1.442695
        %v7119 = vpow.pop %v7118
        %v7120 = vmul.f32 %v7047, 1.442695
        %v7121 = vpow.pop %v7120
        %v7122 = vmul.f32 %v7048, 1.442695
        %v7123 = vpow.pop %v7122
        %v7124 = vmul.f32 %v7049, 1.442695
        %v7125 = vpow.pop %v7124
        %v7126 = vmul.f32 %v7050, 1.442695
        %v7127 = vpow.pop %v7126
        %v7128 = vmul.f32 %v7051, 1.442695
        %v7129 = vpow.pop %v7128
        %v7130 = vmul.f32 %v7052, 1.442695
        %v7131 = vpow.pop %v7130
        %v7132 = vmul.f32 %v7053, 1.442695
        %v7133 = vpow.pop %v7132
        %v7134 = vmul.f32 %v7054, 1.442695
        %v7135 = vpow.pop %v7134
        %v7136 = vmul.f32 %v7055, 1.442695
        %v7137 = vpow.pop %v7136
        %v7138 = vmul.f32 %v7056, 1.442695
        %v7139 = vpow.pop %v7138
        %v7140 = vmul.f32 %v7057, 1.442695
        %v7141 = vpow.pop %v7140
        %v7142 = vmul.f32 %v7058, 1.442695
        %v7143 = vpow.pop %v7142
        %v7144 = vmul.f32 %v7059, 1.442695
        %v7145 = vpow.pop %v7144
        %v7146 = vmul.f32 %v7060, 1.442695
        %v7147 = vpow.pop %v7146
        %v7148 = vmul.f32 %v7061, 1.442695
        %v7149 = vpow.pop %v7148
        %v7150 = vmul.f32 %v7062, 1.442695
        %v7151 = vpow.pop %v7150
        %v7152 = vmul.f32 %v7063, 1.442695
        %v7153 = vpow.pop %v7152
        %v7154 = vmul.f32 %v7064, 1.442695
        %v7155 = vpow.pop %v7154
        %v7156 = vmul.f32 %v7065, 1.442695
        %v7157 = vpow.pop %v7156
        %v7158 = vmul.f32 %v7066, 1.442695
        %v7159 = vpow.pop %v7158
        %v7160 = vmul.f32 %v7067, 1.442695
        %v7161 = vpow.pop %v7160
        %v7162 = vmul.f32 %v7068, 1.442695
        %v7163 = vpow.pop %v7162
        %v7164 = vmul.f32 %v7069, 1.442695
        %v7165 = vpow.pop %v7164
        %v7166 = vmul.f32 %v7070, 1.442695
        %v7167 = vpow.pop %v7166
        %v7168 = vmul.f32 %v7071, 1.442695
        %v7169 = vpow.pop %v7168
        %v7170 = vmul.f32 %v7072, 1.442695
        %v7171 = vpow.pop %v7170
        %v7172 = vmul.f32 %v7073, 1.442695
        %v7173 = vpow.pop %v7172
        %v7174 = vmul.f32 %v7074, 1.442695
        %v7175 = vpow.pop %v7174
        %v7176 = vmul.f32 %v7075, 1.442695
        %v7177 = vpow.pop %v7176
        %v7178 = vmul.f32 %v7076, 1.442695
        %v7179 = vpow.pop %v7178
        %v7180 = vmul.f32 %v7077, 1.442695
        %v7181 = vpow.pop %v7180
        %v7182 = vmul.f32 %v7078, 1.442695
        %v7183 = vpow.pop %v7182
        %v7184 = vmul.f32 %v7079, 1.442695
        %v7185 = vpow.pop %v7184
        %v7186 = vmul.f32 %v7080, 1.442695
        %v7187 = vpow.pop %v7186
        %v7188 = vmul.f32 %v7081, 1.442695
        %v7189 = vpow.pop %v7188
        %v7190 = vmul.f32 %v7082, 1.442695
        %v7191 = vpow.pop %v7190
        %v7192 = vmul.f32 %v7083, 1.442695
        %v7193 = vpow.pop %v7192
        %v7194 = vmul.f32 %v7084, 1.442695
        %v7195 = vpow.pop %v7194
        %v7196 = vmul.f32 %v7085, 1.442695
        %v7197 = vpow.pop %v7196
        %v7198 = vmul.f32 %v7086, 1.442695
        %v7199 = vpow.pop %v7198
        %v7200 = vmul.f32 %v7087, 1.442695
        %v7201 = vpow.pop %v7200
        %v7202 = vmul.f32 %v7088, 1.442695
        %v7203 = vpow.pop %v7202
        %v7204 = vmul.f32 %v7089, 1.442695
        %v7205 = vpow.pop %v7204
        %v7206 = vmul.f32 %v7090, 1.442695
        %v7207 = vpow.pop %v7206
        %v7208 = vmul.f32 %v7091, 1.442695
        %v7209 = vpow.pop %v7208
        %v7210 = vmul.f32 %v7092, 1.442695
        %v7211 = vpow.pop %v7210
        %v7212 = vmul.f32 %v7093, 1.442695
        %v7213 = vpow.pop %v7212
        %v7214 = vmul.f32 %v7094, 1.442695
        %v7215 = vpow.pop %v7214
        %v7216 = vmul.f32 %v7095, 1.442695
        %v7217 = vpow.pop %v7216
        %v7218 = vmul.f32 %v7096, 1.442695
        %v7219 = vpow.pop %v7218
        %v7220 = vmul.f32 %v7097, 1.442695
        %v7221 = vpow.pop %v7220
        %v7222 = vmul.f32 %v7098, 1.442695
        %v7223 = vpow.pop %v7222
        %v7224 = vmul.f32 %v7099, 1.442695
        %v7225 = vpow.pop %v7224
        %v7226 = vmul.f32 %v7100, 1.442695
        %v7227 = vpow.pop %v7226
        %v7228 = vmul.f32 %v7101, 1.442695
        %v7229 = vpow.pop %v7228
        %v7230 = vadd.f32 %v7103, %v7105
        %7231 = vadd.xlane.f32.xlu0 %v7230
        %v7232 = vpop.xlane.xlu0 %7231
        %v7233 = vadd.f32 %v7107, %v7109
        %7234 = vadd.xlane.f32.xlu0 %v7233
        %v7235 = vpop.xlane.xlu0 %7234
        %v7236 = vadd.f32 %v7111, %v7113
        %7237 = vadd.xlane.f32.xlu0 %v7236
        %v7238 = vpop.xlane.xlu0 %7237
        %v7239 = vadd.f32 %v7115, %v7117
        %7240 = vadd.xlane.f32.xlu0 %v7239
        %v7241 = vpop.xlane.xlu0 %7240
        %v7242 = vadd.f32 %v7119, %v7121
        %7243 = vadd.xlane.f32.xlu0 %v7242
        %v7244 = vpop.xlane.xlu0 %7243
        %v7245 = vadd.f32 %v7123, %v7125
        %7246 = vadd.xlane.f32.xlu0 %v7245
        %v7247 = vpop.xlane.xlu0 %7246
        %v7248 = vadd.f32 %v7127, %v7129
        %7249 = vadd.xlane.f32.xlu0 %v7248
        %v7250 = vpop.xlane.xlu0 %7249
        %v7251 = vadd.f32 %v7131, %v7133
        %7252 = vadd.xlane.f32.xlu0 %v7251
        %v7253 = vpop.xlane.xlu0 %7252
        %v7254 = vadd.f32 %v7135, %v7137
        %7255 = vadd.xlane.f32.xlu0 %v7254
        %v7256 = vpop.xlane.xlu0 %7255
        %v7257 = vadd.f32 %v7139, %v7141
        %7258 = vadd.xlane.f32.xlu0 %v7257
        %v7259 = vpop.xlane.xlu0 %7258
        %v7260 = vadd.f32 %v7143, %v7145
        %7261 = vadd.xlane.f32.xlu0 %v7260
        %v7262 = vpop.xlane.xlu0 %7261
        %v7263 = vadd.f32 %v7147, %v7149
        %7264 = vadd.xlane.f32.xlu0 %v7263
        %v7265 = vpop.xlane.xlu0 %7264
        %v7266 = vadd.f32 %v7151, %v7153
        %7267 = vadd.xlane.f32.xlu0 %v7266
        %v7268 = vpop.xlane.xlu0 %7267
        %v7269 = vadd.f32 %v7155, %v7157
        %7270 = vadd.xlane.f32.xlu0 %v7269
        %v7271 = vpop.xlane.xlu0 %7270
        %v7272 = vadd.f32 %v7159, %v7161
        %7273 = vadd.xlane.f32.xlu0 %v7272
        %v7274 = vpop.xlane.xlu0 %7273
        %v7275 = vadd.f32 %v7163, %v7165
        %7276 = vadd.xlane.f32.xlu0 %v7275
        %v7277 = vpop.xlane.xlu0 %7276
        %v7278 = vadd.f32 %v7167, %v7169
        %7279 = vadd.xlane.f32.xlu0 %v7278
        %v7280 = vpop.xlane.xlu0 %7279
        %v7281 = vadd.f32 %v7171, %v7173
        %7282 = vadd.xlane.f32.xlu0 %v7281
        %v7283 = vpop.xlane.xlu0 %7282
        %v7284 = vadd.f32 %v7175, %v7177
        %7285 = vadd.xlane.f32.xlu0 %v7284
        %v7286 = vpop.xlane.xlu0 %7285
        %v7287 = vadd.f32 %v7179, %v7181
        %7288 = vadd.xlane.f32.xlu0 %v7287
        %v7289 = vpop.xlane.xlu0 %7288
        %v7290 = vadd.f32 %v7183, %v7185
        %7291 = vadd.xlane.f32.xlu0 %v7290
        %v7292 = vpop.xlane.xlu0 %7291
        %v7293 = vadd.f32 %v7187, %v7189
        %7294 = vadd.xlane.f32.xlu0 %v7293
        %v7295 = vpop.xlane.xlu0 %7294
        %v7296 = vadd.f32 %v7191, %v7193
        %7297 = vadd.xlane.f32.xlu0 %v7296
        %v7298 = vpop.xlane.xlu0 %7297
        %v7299 = vadd.f32 %v7195, %v7197
        %7300 = vadd.xlane.f32.xlu0 %v7299
        %v7301 = vpop.xlane.xlu0 %7300
        %v7302 = vadd.f32 %v7199, %v7201
        %7303 = vadd.xlane.f32.xlu0 %v7302
        %v7304 = vpop.xlane.xlu0 %7303
        %v7305 = vadd.f32 %v7203, %v7205
        %7306 = vadd.xlane.f32.xlu0 %v7305
        %v7307 = vpop.xlane.xlu0 %7306
        %v7308 = vadd.f32 %v7207, %v7209
        %7309 = vadd.xlane.f32.xlu0 %v7308
        %v7310 = vpop.xlane.xlu0 %7309
        %v7311 = vadd.f32 %v7211, %v7213
        %7312 = vadd.xlane.f32.xlu0 %v7311
        %v7313 = vpop.xlane.xlu0 %7312
        %v7314 = vadd.f32 %v7215, %v7217
        %7315 = vadd.xlane.f32.xlu0 %v7314
        %v7316 = vpop.xlane.xlu0 %7315
        %v7317 = vadd.f32 %v7219, %v7221
        %7318 = vadd.xlane.f32.xlu0 %v7317
        %v7319 = vpop.xlane.xlu0 %7318
        %v7320 = vadd.f32 %v7223, %v7225
        %7321 = vadd.xlane.f32.xlu0 %v7320
        %v7322 = vpop.xlane.xlu0 %7321
        %v7323 = vadd.f32 %v7227, %v7229
        %7324 = vadd.xlane.f32.xlu0 %v7323
        %v7325 = vpop.xlane.xlu0 %7324
        %v7326 = vpack.c.bf16 %v7107, %v7103
        %v7327 = vpack.c.bf16 %v7109, %v7105
        %v7328 = vpack.c.bf16 %v7115, %v7111
        %v7329 = vpack.c.bf16 %v7117, %v7113
        %v7330 = vpack.c.bf16 %v7123, %v7119
        %v7331 = vpack.c.bf16 %v7125, %v7121
        %v7332 = vpack.c.bf16 %v7131, %v7127
        %v7333 = vpack.c.bf16 %v7133, %v7129
        %v7334 = vpack.c.bf16 %v7139, %v7135
        %v7335 = vpack.c.bf16 %v7141, %v7137
        %v7336 = vpack.c.bf16 %v7147, %v7143
        %v7337 = vpack.c.bf16 %v7149, %v7145
        %v7338 = vpack.c.bf16 %v7155, %v7151
        %v7339 = vpack.c.bf16 %v7157, %v7153
        %v7340 = vpack.c.bf16 %v7163, %v7159
        %v7341 = vpack.c.bf16 %v7165, %v7161
        %v7342 = vpack.c.bf16 %v7171, %v7167
        %v7343 = vpack.c.bf16 %v7173, %v7169
        %v7344 = vpack.c.bf16 %v7179, %v7175
        %v7345 = vpack.c.bf16 %v7181, %v7177
        %v7346 = vpack.c.bf16 %v7187, %v7183
        %v7347 = vpack.c.bf16 %v7189, %v7185
        %v7348 = vpack.c.bf16 %v7195, %v7191
        %v7349 = vpack.c.bf16 %v7197, %v7193
        %v7350 = vpack.c.bf16 %v7203, %v7199
        %v7351 = vpack.c.bf16 %v7205, %v7201
        %v7352 = vpack.c.bf16 %v7211, %v7207
        %v7353 = vpack.c.bf16 %v7213, %v7209
        %v7354 = vpack.c.bf16 %v7219, %v7215
        %v7355 = vpack.c.bf16 %v7221, %v7217
        %v7356 = vpack.c.bf16 %v7227, %v7223
        %v7357 = vpack.c.bf16 %v7229, %v7225
        %7374 = vmatpush.bf16.msra.mxu0 %v6651
        %7375 = vmatpush.bf16.msra.mxu0 %v6649
        %7376 = vmatpush.bf16.msra.mxu0 %v6647
        %7377 = vmatpush.bf16.msra.mxu0 %v6645
        %7378 = vmatpush.bf16.msra.mxu0 %v6643
        %7379 = vmatpush.bf16.msra.mxu0 %v6641
        %7380 = vmatpush.bf16.msra.mxu0 %v6639
        %7381 = vmatpush.bf16.msra.mxu0 %v6637
        %7382 = vmatmul.bf16.gmra.mxu0 %v7326
        %v7383 = vpop.f32.mrf.mxu0
        %v7384 = vadd.f32 0.0, %v7383
        %v7385 = vpop.f32.mrf.mxu0
        %v7386 = vadd.f32 0.0, %v7385
        %7387 = vmatmul.bf16.gmra.mxu0 %v7328
        %v7388 = vpop.f32.mrf.mxu0
        %v7389 = vadd.f32 0.0, %v7388
        %v7390 = vpop.f32.mrf.mxu0
        %v7391 = vadd.f32 0.0, %v7390
        %7392 = vmatmul.bf16.gmra.mxu0 %v7330
        %v7393 = vpop.f32.mrf.mxu0
        %v7394 = vadd.f32 0.0, %v7393
        %v7395 = vpop.f32.mrf.mxu0
        %v7396 = vadd.f32 0.0, %v7395
        %7397 = vmatmul.bf16.gmra.mxu0 %v7332
        %v7398 = vpop.f32.mrf.mxu0
        %v7399 = vadd.f32 0.0, %v7398
        %v7400 = vpop.f32.mrf.mxu0
        %v7401 = vadd.f32 0.0, %v7400
        %7402 = vmatmul.bf16.gmra.mxu0 %v7334
        %v7403 = vpop.f32.mrf.mxu0
        %v7404 = vadd.f32 0.0, %v7403
        %v7405 = vpop.f32.mrf.mxu0
        %v7406 = vadd.f32 0.0, %v7405
        %7407 = vmatmul.bf16.gmra.mxu0 %v7336
        %v7408 = vpop.f32.mrf.mxu0
        %v7409 = vadd.f32 0.0, %v7408
        %v7410 = vpop.f32.mrf.mxu0
        %v7411 = vadd.f32 0.0, %v7410
        %7412 = vmatmul.bf16.gmra.mxu0 %v7338
        %v7413 = vpop.f32.mrf.mxu0
        %v7414 = vadd.f32 0.0, %v7413
        %v7415 = vpop.f32.mrf.mxu0
        %v7416 = vadd.f32 0.0, %v7415
        %7417 = vmatmul.bf16.gmra.mxu0 %v7340
        %v7418 = vpop.f32.mrf.mxu0
        %v7419 = vadd.f32 0.0, %v7418
        %v7420 = vpop.f32.mrf.mxu0
        %v7421 = vadd.f32 0.0, %v7420
        %7422 = vmatmul.bf16.gmra.mxu0 %v7342
        %v7423 = vpop.f32.mrf.mxu0
        %v7424 = vadd.f32 0.0, %v7423
        %v7425 = vpop.f32.mrf.mxu0
        %v7426 = vadd.f32 0.0, %v7425
        %7427 = vmatmul.bf16.gmra.mxu0 %v7344
        %v7428 = vpop.f32.mrf.mxu0
        %v7429 = vadd.f32 0.0, %v7428
        %v7430 = vpop.f32.mrf.mxu0
        %v7431 = vadd.f32 0.0, %v7430
        %7432 = vmatmul.bf16.gmra.mxu0 %v7346
        %v7433 = vpop.f32.mrf.mxu0
        %v7434 = vadd.f32 0.0, %v7433
        %v7435 = vpop.f32.mrf.mxu0
        %v7436 = vadd.f32 0.0, %v7435
        %7437 = vmatmul.bf16.gmra.mxu0 %v7348
        %v7438 = vpop.f32.mrf.mxu0
        %v7439 = vadd.f32 0.0, %v7438
        %v7440 = vpop.f32.mrf.mxu0
        %v7441 = vadd.f32 0.0, %v7440
        %7442 = vmatmul.bf16.gmra.mxu0 %v7350
        %v7443 = vpop.f32.mrf.mxu0
        %v7444 = vadd.f32 0.0, %v7443
        %v7445 = vpop.f32.mrf.mxu0
        %v7446 = vadd.f32 0.0, %v7445
        %7447 = vmatmul.bf16.gmra.mxu0 %v7352
        %v7448 = vpop.f32.mrf.mxu0
        %v7449 = vadd.f32 0.0, %v7448
        %v7450 = vpop.f32.mrf.mxu0
        %v7451 = vadd.f32 0.0, %v7450
        %7452 = vmatmul.bf16.gmra.mxu0 %v7354
        %v7453 = vpop.f32.mrf.mxu0
        %v7454 = vadd.f32 0.0, %v7453
        %v7455 = vpop.f32.mrf.mxu0
        %v7456 = vadd.f32 0.0, %v7455
        %7457 = vmatmul.bf16.gmra.mxu0 %v7356
        %v7458 = vpop.f32.mrf.mxu0
        %v7459 = vadd.f32 0.0, %v7458
        %v7460 = vpop.f32.mrf.mxu0
        %v7461 = vadd.f32 0.0, %v7460
        %7462 = vdwg.mxu0
        %7463 = vmatpush.bf16.msra.mxu0 %v6667
        %7464 = vmatpush.bf16.msra.mxu0 %v6665
        %7465 = vmatpush.bf16.msra.mxu0 %v6663
        %7466 = vmatpush.bf16.msra.mxu0 %v6661
        %7467 = vmatpush.bf16.msra.mxu0 %v6659
        %7468 = vmatpush.bf16.msra.mxu0 %v6657
        %7469 = vmatpush.bf16.msra.mxu0 %v6655
        %7470 = vmatpush.bf16.msra.mxu0 %v6653
        %7471 = vmatmul.bf16.gmra.mxu0 %v7327
        %v7472 = vpop.f32.mrf.mxu0
        %v7473 = vadd.f32 %v7384, %v7472
        %v7474 = vpop.f32.mrf.mxu0
        %v7475 = vadd.f32 %v7386, %v7474
        %7476 = vmatmul.bf16.gmra.mxu0 %v7329
        %v7477 = vpop.f32.mrf.mxu0
        %v7478 = vadd.f32 %v7389, %v7477
        %v7479 = vpop.f32.mrf.mxu0
        %v7480 = vadd.f32 %v7391, %v7479
        %7481 = vmatmul.bf16.gmra.mxu0 %v7331
        %v7482 = vpop.f32.mrf.mxu0
        %v7483 = vadd.f32 %v7394, %v7482
        %v7484 = vpop.f32.mrf.mxu0
        %v7485 = vadd.f32 %v7396, %v7484
        %7486 = vmatmul.bf16.gmra.mxu0 %v7333
        %v7487 = vpop.f32.mrf.mxu0
        %v7488 = vadd.f32 %v7399, %v7487
        %v7489 = vpop.f32.mrf.mxu0
        %v7490 = vadd.f32 %v7401, %v7489
        %7491 = vmatmul.bf16.gmra.mxu0 %v7335
        %v7492 = vpop.f32.mrf.mxu0
        %v7493 = vadd.f32 %v7404, %v7492
        %v7494 = vpop.f32.mrf.mxu0
        %v7495 = vadd.f32 %v7406, %v7494
        %7496 = vmatmul.bf16.gmra.mxu0 %v7337
        %v7497 = vpop.f32.mrf.mxu0
        %v7498 = vadd.f32 %v7409, %v7497
        %v7499 = vpop.f32.mrf.mxu0
        %v7500 = vadd.f32 %v7411, %v7499
        %7501 = vmatmul.bf16.gmra.mxu0 %v7339
        %v7502 = vpop.f32.mrf.mxu0
        %v7503 = vadd.f32 %v7414, %v7502
        %v7504 = vpop.f32.mrf.mxu0
        %v7505 = vadd.f32 %v7416, %v7504
        %7506 = vmatmul.bf16.gmra.mxu0 %v7341
        %v7507 = vpop.f32.mrf.mxu0
        %v7508 = vadd.f32 %v7419, %v7507
        %v7509 = vpop.f32.mrf.mxu0
        %v7510 = vadd.f32 %v7421, %v7509
        %7511 = vmatmul.bf16.gmra.mxu0 %v7343
        %v7512 = vpop.f32.mrf.mxu0
        %v7513 = vadd.f32 %v7424, %v7512
        %v7514 = vpop.f32.mrf.mxu0
        %v7515 = vadd.f32 %v7426, %v7514
        %7516 = vmatmul.bf16.gmra.mxu0 %v7345
        %v7517 = vpop.f32.mrf.mxu0
        %v7518 = vadd.f32 %v7429, %v7517
        %v7519 = vpop.f32.mrf.mxu0
        %v7520 = vadd.f32 %v7431, %v7519
        %7521 = vmatmul.bf16.gmra.mxu0 %v7347
        %v7522 = vpop.f32.mrf.mxu0
        %v7523 = vadd.f32 %v7434, %v7522
        %v7524 = vpop.f32.mrf.mxu0
        %v7525 = vadd.f32 %v7436, %v7524
        %7526 = vmatmul.bf16.gmra.mxu0 %v7349
        %v7527 = vpop.f32.mrf.mxu0
        %v7528 = vadd.f32 %v7439, %v7527
        %v7529 = vpop.f32.mrf.mxu0
        %v7530 = vadd.f32 %v7441, %v7529
        %7531 = vmatmul.bf16.gmra.mxu0 %v7351
        %v7532 = vpop.f32.mrf.mxu0
        %v7533 = vadd.f32 %v7444, %v7532
        %v7534 = vpop.f32.mrf.mxu0
        %v7535 = vadd.f32 %v7446, %v7534
        %7536 = vmatmul.bf16.gmra.mxu0 %v7353
        %v7537 = vpop.f32.mrf.mxu0
        %v7538 = vadd.f32 %v7449, %v7537
        %v7539 = vpop.f32.mrf.mxu0
        %v7540 = vadd.f32 %v7451, %v7539
        %7541 = vmatmul.bf16.gmra.mxu0 %v7355
        %v7542 = vpop.f32.mrf.mxu0
        %v7543 = vadd.f32 %v7454, %v7542
        %v7544 = vpop.f32.mrf.mxu0
        %v7545 = vadd.f32 %v7456, %v7544
        %7546 = vmatmul.bf16.gmra.mxu0 %v7357
        %v7547 = vpop.f32.mrf.mxu0
        %v7548 = vadd.f32 %v7459, %v7547
        %v7549 = vpop.f32.mrf.mxu0
        %v7550 = vadd.f32 %v7461, %v7549
        %7551 = vdwg.mxu0
        %v7552 = vrcp.pop %v7232
        %v7553 = vrcp.pop %v7235
        %v7554 = vrcp.pop %v7238
        %v7555 = vrcp.pop %v7241
        %v7556 = vrcp.pop %v7244
        %v7557 = vrcp.pop %v7247
        %v7558 = vrcp.pop %v7250
        %v7559 = vrcp.pop %v7253
        %v7560 = vrcp.pop %v7256
        %v7561 = vrcp.pop %v7259
        %v7562 = vrcp.pop %v7262
        %v7563 = vrcp.pop %v7265
        %v7564 = vrcp.pop %v7268
        %v7565 = vrcp.pop %v7271
        %v7566 = vrcp.pop %v7274
        %v7567 = vrcp.pop %v7277
        %v7568 = vrcp.pop %v7280
        %v7569 = vrcp.pop %v7283
        %v7570 = vrcp.pop %v7286
        %v7571 = vrcp.pop %v7289
        %v7572 = vrcp.pop %v7292
        %v7573 = vrcp.pop %v7295
        %v7574 = vrcp.pop %v7298
        %v7575 = vrcp.pop %v7301
        %v7576 = vrcp.pop %v7304
        %v7577 = vrcp.pop %v7307
        %v7578 = vrcp.pop %v7310
        %v7579 = vrcp.pop %v7313
        %v7580 = vrcp.pop %v7316
        %v7581 = vrcp.pop %v7319
        %v7582 = vrcp.pop %v7322
        %v7583 = vrcp.pop %v7325
        %v7584 = vmul.f32 %v7473, %v7552
        %v7585 = vmul.f32 %v7475, %v7553
        %v7586 = vmul.f32 %v7478, %v7554
        %v7587 = vmul.f32 %v7480, %v7555
        %v7588 = vmul.f32 %v7483, %v7556
        %v7589 = vmul.f32 %v7485, %v7557
        %v7590 = vmul.f32 %v7488, %v7558
        %v7591 = vmul.f32 %v7490, %v7559
        %v7592 = vmul.f32 %v7493, %v7560
        %v7593 = vmul.f32 %v7495, %v7561
        %v7594 = vmul.f32 %v7498, %v7562
        %v7595 = vmul.f32 %v7500, %v7563
        %v7596 = vmul.f32 %v7503, %v7564
        %v7597 = vmul.f32 %v7505, %v7565
        %v7598 = vmul.f32 %v7508, %v7566
        %v7599 = vmul.f32 %v7510, %v7567
        %v7600 = vmul.f32 %v7513, %v7568
        %v7601 = vmul.f32 %v7515, %v7569
        %v7602 = vmul.f32 %v7518, %v7570
        %v7603 = vmul.f32 %v7520, %v7571
        %v7604 = vmul.f32 %v7523, %v7572
        %v7605 = vmul.f32 %v7525, %v7573
        %v7606 = vmul.f32 %v7528, %v7574
        %v7607 = vmul.f32 %v7530, %v7575
        %v7608 = vmul.f32 %v7533, %v7576
        %v7609 = vmul.f32 %v7535, %v7577
        %v7610 = vmul.f32 %v7538, %v7578
        %v7611 = vmul.f32 %v7540, %v7579
        %v7612 = vmul.f32 %v7543, %v7580
        %v7613 = vmul.f32 %v7545, %v7581
        %v7614 = vmul.f32 %v7548, %v7582
        %v7615 = vmul.f32 %v7550, %v7583
        %7648 = vrot.lane.b32.xlu0 %v7584, 80
        %v7649 = vpop.permute.xlu0 %7648
        %7650 = vrot.lane.b32.xlu0 %v7585, 80
        %v7651 = vpop.permute.xlu0 %7650
        %7652 = vrot.lane.b32.xlu0 %v7586, 80
        %v7653 = vpop.permute.xlu0 %7652
        %7654 = vrot.lane.b32.xlu0 %v7587, 80
        %v7655 = vpop.permute.xlu0 %7654
        %7656 = vrot.lane.b32.xlu0 %v7588, 80
        %v7657 = vpop.permute.xlu0 %7656
        %7658 = vrot.lane.b32.xlu0 %v7589, 80
        %v7659 = vpop.permute.xlu0 %7658
        %7660 = vrot.lane.b32.xlu0 %v7590, 80
        %v7661 = vpop.permute.xlu0 %7660
        %7662 = vrot.lane.b32.xlu0 %v7591, 80
        %v7663 = vpop.permute.xlu0 %7662
        %7664 = vrot.lane.b32.xlu0 %v7592, 80
        %v7665 = vpop.permute.xlu0 %7664
        %7666 = vrot.lane.b32.xlu0 %v7593, 80
        %v7667 = vpop.permute.xlu0 %7666
        %7668 = vrot.lane.b32.xlu0 %v7594, 80
        %v7669 = vpop.permute.xlu0 %7668
        %7670 = vrot.lane.b32.xlu0 %v7595, 80
        %v7671 = vpop.permute.xlu0 %7670
        %7672 = vrot.lane.b32.xlu0 %v7596, 80
        %v7673 = vpop.permute.xlu0 %7672
        %7674 = vrot.lane.b32.xlu0 %v7597, 80
        %v7675 = vpop.permute.xlu0 %7674
        %7676 = vrot.lane.b32.xlu0 %v7598, 80
        %v7677 = vpop.permute.xlu0 %7676
        %7678 = vrot.lane.b32.xlu0 %v7599, 80
        %v7679 = vpop.permute.xlu0 %7678
        %7680 = vrot.lane.b32.xlu0 %v7600, 80
        %v7681 = vpop.permute.xlu0 %7680
        %7682 = vrot.lane.b32.xlu0 %v7601, 80
        %v7683 = vpop.permute.xlu0 %7682
        %7684 = vrot.lane.b32.xlu0 %v7602, 80
        %v7685 = vpop.permute.xlu0 %7684
        %7686 = vrot.lane.b32.xlu0 %v7603, 80
        %v7687 = vpop.permute.xlu0 %7686
        %7688 = vrot.lane.b32.xlu0 %v7604, 80
        %v7689 = vpop.permute.xlu0 %7688
        %7690 = vrot.lane.b32.xlu0 %v7605, 80
        %v7691 = vpop.permute.xlu0 %7690
        %7692 = vrot.lane.b32.xlu0 %v7606, 80
        %v7693 = vpop.permute.xlu0 %7692
        %7694 = vrot.lane.b32.xlu0 %v7607, 80
        %v7695 = vpop.permute.xlu0 %7694
        %7696 = vrot.lane.b32.xlu0 %v7608, 80
        %v7697 = vpop.permute.xlu0 %7696
        %7698 = vrot.lane.b32.xlu0 %v7609, 80
        %v7699 = vpop.permute.xlu0 %7698
        %7700 = vrot.lane.b32.xlu0 %v7610, 80
        %v7701 = vpop.permute.xlu0 %7700
        %7702 = vrot.lane.b32.xlu0 %v7611, 80
        %v7703 = vpop.permute.xlu0 %7702
        %7704 = vrot.lane.b32.xlu0 %v7612, 80
        %v7705 = vpop.permute.xlu0 %7704
        %7706 = vrot.lane.b32.xlu0 %v7613, 80
        %v7707 = vpop.permute.xlu0 %7706
        %7708 = vrot.lane.b32.xlu0 %v7614, 80
        %v7709 = vpop.permute.xlu0 %7708
        %7710 = vrot.lane.b32.xlu0 %v7615, 80
        %v7711 = vpop.permute.xlu0 %7710
        %vm7744 = vcmask 786048
        %7745 = vst.msk [vmem:[#allocation2] sm:$0xff] %vm7744, %v7649
        %7746 = vst.msk [vmem:[#allocation2 + $0x8] sm:$0xff] %vm7744, %v7651
        %7747 = vst.msk [vmem:[#allocation2 + $0x10] sm:$0xff] %vm7744, %v7653
        %7748 = vst.msk [vmem:[#allocation2 + $0x18] sm:$0xff] %vm7744, %v7655
        %7749 = vst.msk [vmem:[#allocation2 + $0x20] sm:$0xff] %vm7744, %v7657
        %7750 = vst.msk [vmem:[#allocation2 + $0x28] sm:$0xff] %vm7744, %v7659
        %7751 = vst.msk [vmem:[#allocation2 + $0x30] sm:$0xff] %vm7744, %v7661
        %7752 = vst.msk [vmem:[#allocation2 + $0x38] sm:$0xff] %vm7744, %v7663
        %7753 = vst.msk [vmem:[#allocation2 + $0x40] sm:$0xff] %vm7744, %v7665
        %7754 = vst.msk [vmem:[#allocation2 + $0x48] sm:$0xff] %vm7744, %v7667
        %7755 = vst.msk [vmem:[#allocation2 + $0x50] sm:$0xff] %vm7744, %v7669
        %7756 = vst.msk [vmem:[#allocation2 + $0x58] sm:$0xff] %vm7744, %v7671
        %7757 = vst.msk [vmem:[#allocation2 + $0x60] sm:$0xff] %vm7744, %v7673
        %7758 = vst.msk [vmem:[#allocation2 + $0x68] sm:$0xff] %vm7744, %v7675
        %7759 = vst.msk [vmem:[#allocation2 + $0x70] sm:$0xff] %vm7744, %v7677
        %7760 = vst.msk [vmem:[#allocation2 + $0x78] sm:$0xff] %vm7744, %v7679
        %7761 = vst.msk [vmem:[#allocation2 + $0x80] sm:$0xff] %vm7744, %v7681
        %7762 = vst.msk [vmem:[#allocation2 + $0x88] sm:$0xff] %vm7744, %v7683
        %7763 = vst.msk [vmem:[#allocation2 + $0x90] sm:$0xff] %vm7744, %v7685
        %7764 = vst.msk [vmem:[#allocation2 + $0x98] sm:$0xff] %vm7744, %v7687
        %7765 = vst.msk [vmem:[#allocation2 + $0xa0] sm:$0xff] %vm7744, %v7689
        %7766 = vst.msk [vmem:[#allocation2 + $0xa8] sm:$0xff] %vm7744, %v7691
        %7767 = vst.msk [vmem:[#allocation2 + $0xb0] sm:$0xff] %vm7744, %v7693
        %7768 = vst.msk [vmem:[#allocation2 + $0xb8] sm:$0xff] %vm7744, %v7695
        %7769 = vst.msk [vmem:[#allocation2 + $0xc0] sm:$0xff] %vm7744, %v7697
        %7770 = vst.msk [vmem:[#allocation2 + $0xc8] sm:$0xff] %vm7744, %v7699
        %7771 = vst.msk [vmem:[#allocation2 + $0xd0] sm:$0xff] %vm7744, %v7701
        %7772 = vst.msk [vmem:[#allocation2 + $0xd8] sm:$0xff] %vm7744, %v7703
        %7773 = vst.msk [vmem:[#allocation2 + $0xe0] sm:$0xff] %vm7744, %v7705
        %7774 = vst.msk [vmem:[#allocation2 + $0xe8] sm:$0xff] %vm7744, %v7707
        %7775 = vst.msk [vmem:[#allocation2 + $0xf0] sm:$0xff] %vm7744, %v7709
        %7776 = vst.msk [vmem:[#allocation2 + $0xf8] sm:$0xff] %vm7744, %v7711
        %v7777 = vld [vmem:[%s185] sm:$0xff]
        %v7778 = vld [vmem:[%s185 + $0x8] sm:$0xff]
        %v7779 = vld [vmem:[%s185 + $0x10] sm:$0xff]
        %v7780 = vld [vmem:[%s185 + $0x18] sm:$0xff]
        %v7781 = vld [vmem:[%s185 + $0x20] sm:$0xff]
        %v7782 = vld [vmem:[%s185 + $0x28] sm:$0xff]
        %v7783 = vld [vmem:[%s185 + $0x30] sm:$0xff]
        %v7784 = vld [vmem:[%s185 + $0x38] sm:$0xff]
        %v7785 = vld [vmem:[%s185 + $0x40] sm:$0xff]
        %v7786 = vld [vmem:[%s185 + $0x48] sm:$0xff]
        %v7787 = vld [vmem:[%s185 + $0x50] sm:$0xff]
        %v7788 = vld [vmem:[%s185 + $0x58] sm:$0xff]
        %v7789 = vld [vmem:[%s185 + $0x60] sm:$0xff]
        %v7790 = vld [vmem:[%s185 + $0x68] sm:$0xff]
        %v7791 = vld [vmem:[%s185 + $0x70] sm:$0xff]
        %v7792 = vld [vmem:[%s185 + $0x78] sm:$0xff]
        %v7793 = vld [vmem:[%s185 + $0x80] sm:$0xff]
        %v7794 = vld [vmem:[%s185 + $0x88] sm:$0xff]
        %v7795 = vld [vmem:[%s185 + $0x90] sm:$0xff]
        %v7796 = vld [vmem:[%s185 + $0x98] sm:$0xff]
        %v7797 = vld [vmem:[%s185 + $0xa0] sm:$0xff]
        %v7798 = vld [vmem:[%s185 + $0xa8] sm:$0xff]
        %v7799 = vld [vmem:[%s185 + $0xb0] sm:$0xff]
        %v7800 = vld [vmem:[%s185 + $0xb8] sm:$0xff]
        %v7801 = vld [vmem:[%s185 + $0xc0] sm:$0xff]
        %v7802 = vld [vmem:[%s185 + $0xc8] sm:$0xff]
        %v7803 = vld [vmem:[%s185 + $0xd0] sm:$0xff]
        %v7804 = vld [vmem:[%s185 + $0xd8] sm:$0xff]
        %v7805 = vld [vmem:[%s185 + $0xe0] sm:$0xff]
        %v7806 = vld [vmem:[%s185 + $0xe8] sm:$0xff]
        %v7807 = vld [vmem:[%s185 + $0xf0] sm:$0xff]
        %v7808 = vld [vmem:[%s185 + $0xf8] sm:$0xff]
        %v7809 = vmul.f32 %v7777, 0.25
        %v7810 = vmul.f32 %v7778, 0.25
        %v7811 = vmul.f32 %v7779, 0.25
        %v7812 = vmul.f32 %v7780, 0.25
        %v7813 = vmul.f32 %v7781, 0.25
        %v7814 = vmul.f32 %v7782, 0.25
        %v7815 = vmul.f32 %v7783, 0.25
        %v7816 = vmul.f32 %v7784, 0.25
        %v7817 = vmul.f32 %v7785, 0.25
        %v7818 = vmul.f32 %v7786, 0.25
        %v7819 = vmul.f32 %v7787, 0.25
        %v7820 = vmul.f32 %v7788, 0.25
        %v7821 = vmul.f32 %v7789, 0.25
        %v7822 = vmul.f32 %v7790, 0.25
        %v7823 = vmul.f32 %v7791, 0.25
        %v7824 = vmul.f32 %v7792, 0.25
        %v7825 = vmul.f32 %v7793, 0.25
        %v7826 = vmul.f32 %v7794, 0.25
        %v7827 = vmul.f32 %v7795, 0.25
        %v7828 = vmul.f32 %v7796, 0.25
        %v7829 = vmul.f32 %v7797, 0.25
        %v7830 = vmul.f32 %v7798, 0.25
        %v7831 = vmul.f32 %v7799, 0.25
        %v7832 = vmul.f32 %v7800, 0.25
        %v7833 = vmul.f32 %v7801, 0.25
        %v7834 = vmul.f32 %v7802, 0.25
        %v7835 = vmul.f32 %v7803, 0.25
        %v7836 = vmul.f32 %v7804, 0.25
        %v7837 = vmul.f32 %v7805, 0.25
        %v7838 = vmul.f32 %v7806, 0.25
        %v7839 = vmul.f32 %v7807, 0.25
        %v7840 = vmul.f32 %v7808, 0.25
        %v7841 = vpack.c.bf16 %v7810, %v7809
        %v7842 = vpack.c.bf16 %v7812, %v7811
        %v7843 = vpack.c.bf16 %v7814, %v7813
        %v7844 = vpack.c.bf16 %v7816, %v7815
        %v7845 = vpack.c.bf16 %v7818, %v7817
        %v7846 = vpack.c.bf16 %v7820, %v7819
        %v7847 = vpack.c.bf16 %v7822, %v7821
        %v7848 = vpack.c.bf16 %v7824, %v7823
        %v7849 = vpack.c.bf16 %v7826, %v7825
        %v7850 = vpack.c.bf16 %v7828, %v7827
        %v7851 = vpack.c.bf16 %v7830, %v7829
        %v7852 = vpack.c.bf16 %v7832, %v7831
        %v7853 = vpack.c.bf16 %v7834, %v7833
        %v7854 = vpack.c.bf16 %v7836, %v7835
        %v7855 = vpack.c.bf16 %v7838, %v7837
        %v7856 = vpack.c.bf16 %v7840, %v7839
        %v7857 = vpack.c.bf16 %v7778, %v7777
        %v7858 = vpack.c.bf16 %v7780, %v7779
        %v7859 = vpack.c.bf16 %v7782, %v7781
        %v7860 = vpack.c.bf16 %v7784, %v7783
        %v7861 = vpack.c.bf16 %v7786, %v7785
        %v7862 = vpack.c.bf16 %v7788, %v7787
        %v7863 = vpack.c.bf16 %v7790, %v7789
        %v7864 = vpack.c.bf16 %v7792, %v7791
        %v7865 = vpack.c.bf16 %v7794, %v7793
        %v7866 = vpack.c.bf16 %v7796, %v7795
        %v7867 = vpack.c.bf16 %v7798, %v7797
        %v7868 = vpack.c.bf16 %v7800, %v7799
        %v7869 = vpack.c.bf16 %v7802, %v7801
        %v7870 = vpack.c.bf16 %v7804, %v7803
        %v7871 = vpack.c.bf16 %v7806, %v7805
        %v7872 = vpack.c.bf16 %v7808, %v7807
        %7889 = vrot.lane.b32.xlu0 %v7841, 32
        %v7890 = vpop.permute.xlu0 %7889
        %7891 = vrot.lane.b32.xlu0 %v7842, 32
        %v7892 = vpop.permute.xlu0 %7891
        %7893 = vrot.lane.b32.xlu0 %v7843, 32
        %v7894 = vpop.permute.xlu0 %7893
        %7895 = vrot.lane.b32.xlu0 %v7844, 32
        %v7896 = vpop.permute.xlu0 %7895
        %7897 = vrot.lane.b32.xlu0 %v7845, 32
        %v7898 = vpop.permute.xlu0 %7897
        %7899 = vrot.lane.b32.xlu0 %v7846, 32
        %v7900 = vpop.permute.xlu0 %7899
        %7901 = vrot.lane.b32.xlu0 %v7847, 32
        %v7902 = vpop.permute.xlu0 %7901
        %7903 = vrot.lane.b32.xlu0 %v7848, 32
        %v7904 = vpop.permute.xlu0 %7903
        %7905 = vrot.lane.b32.xlu0 %v7849, 32
        %v7906 = vpop.permute.xlu0 %7905
        %7907 = vrot.lane.b32.xlu0 %v7850, 32
        %v7908 = vpop.permute.xlu0 %7907
        %7909 = vrot.lane.b32.xlu0 %v7851, 32
        %v7910 = vpop.permute.xlu0 %7909
        %7911 = vrot.lane.b32.xlu0 %v7852, 32
        %v7912 = vpop.permute.xlu0 %7911
        %7913 = vrot.lane.b32.xlu0 %v7853, 32
        %v7914 = vpop.permute.xlu0 %7913
        %7915 = vrot.lane.b32.xlu0 %v7854, 32
        %v7916 = vpop.permute.xlu0 %7915
        %7917 = vrot.lane.b32.xlu0 %v7855, 32
        %v7918 = vpop.permute.xlu0 %7917
        %7919 = vrot.lane.b32.xlu0 %v7856, 32
        %v7920 = vpop.permute.xlu0 %7919
        %7937 = vrot.lane.b32.xlu0 %v7857, 32
        %v7938 = vpop.permute.xlu0 %7937
        %7939 = vrot.lane.b32.xlu0 %v7858, 32
        %v7940 = vpop.permute.xlu0 %7939
        %7941 = vrot.lane.b32.xlu0 %v7859, 32
        %v7942 = vpop.permute.xlu0 %7941
        %7943 = vrot.lane.b32.xlu0 %v7860, 32
        %v7944 = vpop.permute.xlu0 %7943
        %7945 = vrot.lane.b32.xlu0 %v7861, 32
        %v7946 = vpop.permute.xlu0 %7945
        %7947 = vrot.lane.b32.xlu0 %v7862, 32
        %v7948 = vpop.permute.xlu0 %7947
        %7949 = vrot.lane.b32.xlu0 %v7863, 32
        %v7950 = vpop.permute.xlu0 %7949
        %7951 = vrot.lane.b32.xlu0 %v7864, 32
        %v7952 = vpop.permute.xlu0 %7951
        %7953 = vrot.lane.b32.xlu0 %v7865, 32
        %v7954 = vpop.permute.xlu0 %7953
        %7955 = vrot.lane.b32.xlu0 %v7866, 32
        %v7956 = vpop.permute.xlu0 %7955
        %7957 = vrot.lane.b32.xlu0 %v7867, 32
        %v7958 = vpop.permute.xlu0 %7957
        %7959 = vrot.lane.b32.xlu0 %v7868, 32
        %v7960 = vpop.permute.xlu0 %7959
        %7961 = vrot.lane.b32.xlu0 %v7869, 32
        %v7962 = vpop.permute.xlu0 %7961
        %7963 = vrot.lane.b32.xlu0 %v7870, 32
        %v7964 = vpop.permute.xlu0 %7963
        %7965 = vrot.lane.b32.xlu0 %v7871, 32
        %v7966 = vpop.permute.xlu0 %7965
        %7967 = vrot.lane.b32.xlu0 %v7872, 32
        %v7968 = vpop.permute.xlu0 %7967
        %v7970 = vsel %vm307, %v7890, 0
        %v7973 = vsel %vm307, %v7892, 0
        %v7976 = vsel %vm307, %v7894, 0
        %v7979 = vsel %vm307, %v7896, 0
        %v7982 = vsel %vm307, %v7898, 0
        %v7985 = vsel %vm307, %v7900, 0
        %v7988 = vsel %vm307, %v7902, 0
        %v7991 = vsel %vm307, %v7904, 0
        %v7994 = vsel %vm307, %v7906, 0
        %v7997 = vsel %vm307, %v7908, 0
        %v8000 = vsel %vm307, %v7910, 0
        %v8003 = vsel %vm307, %v7912, 0
        %v8006 = vsel %vm307, %v7914, 0
        %v8009 = vsel %vm307, %v7916, 0
        %v8012 = vsel %vm307, %v7918, 0
        %v8015 = vsel %vm307, %v7920, 0
        %v8018 = vsel %vm307, %v7938, 0
        %v8021 = vsel %vm307, %v7940, 0
        %v8024 = vsel %vm307, %v7942, 0
        %v8027 = vsel %vm307, %v7944, 0
        %v8030 = vsel %vm307, %v7946, 0
        %v8033 = vsel %vm307, %v7948, 0
        %v8036 = vsel %vm307, %v7950, 0
        %v8039 = vsel %vm307, %v7952, 0
        %v8042 = vsel %vm307, %v7954, 0
        %v8045 = vsel %vm307, %v7956, 0
        %v8048 = vsel %vm307, %v7958, 0
        %v8051 = vsel %vm307, %v7960, 0
        %v8054 = vsel %vm307, %v7962, 0
        %v8057 = vsel %vm307, %v7964, 0
        %v8060 = vsel %vm307, %v7966, 0
        %v8063 = vsel %vm307, %v7968, 0
        %8065 = vmatpush.bf16.xpose.msra.mxu0 %v8039
        %8066 = vmatpush.bf16.xpose.msra.mxu0 %v8036
        %8067 = vmatpush.bf16.xpose.msra.mxu0 %v8033
        %8068 = vmatpush.bf16.xpose.msra.mxu0 %v8030
        %8069 = vmatpush.bf16.xpose.msra.mxu0 %v8027
        %8070 = vmatpush.bf16.xpose.msra.mxu0 %v8024
        %8071 = vmatpush.bf16.xpose.msra.mxu0 %v8021
        %8072 = vmatpush.bf16.xpose.msra.mxu0 %v8018
        %8073 = vmatmul.bf16.gmra.mxu0 %v7970
        %v8074 = vpop.f32.mrf.mxu0
        %v8075 = vadd.f32 0.0, %v8074
        %v8076 = vpop.f32.mrf.mxu0
        %v8077 = vadd.f32 0.0, %v8076
        %8078 = vmatmul.bf16.gmra.mxu0 %v7973
        %v8079 = vpop.f32.mrf.mxu0
        %v8080 = vadd.f32 0.0, %v8079
        %v8081 = vpop.f32.mrf.mxu0
        %v8082 = vadd.f32 0.0, %v8081
        %8083 = vmatmul.bf16.gmra.mxu0 %v7976
        %v8084 = vpop.f32.mrf.mxu0
        %v8085 = vadd.f32 0.0, %v8084
        %v8086 = vpop.f32.mrf.mxu0
        %v8087 = vadd.f32 0.0, %v8086
        %8088 = vmatmul.bf16.gmra.mxu0 %v7979
        %v8089 = vpop.f32.mrf.mxu0
        %v8090 = vadd.f32 0.0, %v8089
        %v8091 = vpop.f32.mrf.mxu0
        %v8092 = vadd.f32 0.0, %v8091
        %8093 = vmatmul.bf16.gmra.mxu0 %v7982
        %v8094 = vpop.f32.mrf.mxu0
        %v8095 = vadd.f32 0.0, %v8094
        %v8096 = vpop.f32.mrf.mxu0
        %v8097 = vadd.f32 0.0, %v8096
        %8098 = vmatmul.bf16.gmra.mxu0 %v7985
        %v8099 = vpop.f32.mrf.mxu0
        %v8100 = vadd.f32 0.0, %v8099
        %v8101 = vpop.f32.mrf.mxu0
        %v8102 = vadd.f32 0.0, %v8101
        %8103 = vmatmul.bf16.gmra.mxu0 %v7988
        %v8104 = vpop.f32.mrf.mxu0
        %v8105 = vadd.f32 0.0, %v8104
        %v8106 = vpop.f32.mrf.mxu0
        %v8107 = vadd.f32 0.0, %v8106
        %8108 = vmatmul.bf16.gmra.mxu0 %v7991
        %v8109 = vpop.f32.mrf.mxu0
        %v8110 = vadd.f32 0.0, %v8109
        %v8111 = vpop.f32.mrf.mxu0
        %v8112 = vadd.f32 0.0, %v8111
        %8113 = vmatmul.bf16.gmra.mxu0 %v7994
        %v8114 = vpop.f32.mrf.mxu0
        %v8115 = vadd.f32 0.0, %v8114
        %v8116 = vpop.f32.mrf.mxu0
        %v8117 = vadd.f32 0.0, %v8116
        %8118 = vmatmul.bf16.gmra.mxu0 %v7997
        %v8119 = vpop.f32.mrf.mxu0
        %v8120 = vadd.f32 0.0, %v8119
        %v8121 = vpop.f32.mrf.mxu0
        %v8122 = vadd.f32 0.0, %v8121
        %8123 = vmatmul.bf16.gmra.mxu0 %v8000
        %v8124 = vpop.f32.mrf.mxu0
        %v8125 = vadd.f32 0.0, %v8124
        %v8126 = vpop.f32.mrf.mxu0
        %v8127 = vadd.f32 0.0, %v8126
        %8128 = vmatmul.bf16.gmra.mxu0 %v8003
        %v8129 = vpop.f32.mrf.mxu0
        %v8130 = vadd.f32 0.0, %v8129
        %v8131 = vpop.f32.mrf.mxu0
        %v8132 = vadd.f32 0.0, %v8131
        %8133 = vmatmul.bf16.gmra.mxu0 %v8006
        %v8134 = vpop.f32.mrf.mxu0
        %v8135 = vadd.f32 0.0, %v8134
        %v8136 = vpop.f32.mrf.mxu0
        %v8137 = vadd.f32 0.0, %v8136
        %8138 = vmatmul.bf16.gmra.mxu0 %v8009
        %v8139 = vpop.f32.mrf.mxu0
        %v8140 = vadd.f32 0.0, %v8139
        %v8141 = vpop.f32.mrf.mxu0
        %v8142 = vadd.f32 0.0, %v8141
        %8143 = vmatmul.bf16.gmra.mxu0 %v8012
        %v8144 = vpop.f32.mrf.mxu0
        %v8145 = vadd.f32 0.0, %v8144
        %v8146 = vpop.f32.mrf.mxu0
        %v8147 = vadd.f32 0.0, %v8146
        %8148 = vmatmul.bf16.gmra.mxu0 %v8015
        %v8149 = vpop.f32.mrf.mxu0
        %v8150 = vadd.f32 0.0, %v8149
        %v8151 = vpop.f32.mrf.mxu0
        %v8152 = vadd.f32 0.0, %v8151
        %8153 = vdwg.mxu0
        %8154 = vmatpush.bf16.xpose.msra.mxu0 %v8063
        %8155 = vmatpush.bf16.xpose.msra.mxu0 %v8060
        %8156 = vmatpush.bf16.xpose.msra.mxu0 %v8057
        %8157 = vmatpush.bf16.xpose.msra.mxu0 %v8054
        %8158 = vmatpush.bf16.xpose.msra.mxu0 %v8051
        %8159 = vmatpush.bf16.xpose.msra.mxu0 %v8048
        %8160 = vmatpush.bf16.xpose.msra.mxu0 %v8045
        %8161 = vmatpush.bf16.xpose.msra.mxu0 %v8042
        %8162 = vmatmul.bf16.gmra.mxu0 %v7970
        %v8163 = vpop.f32.mrf.mxu0
        %v8164 = vadd.f32 0.0, %v8163
        %v8165 = vpop.f32.mrf.mxu0
        %v8166 = vadd.f32 0.0, %v8165
        %8167 = vmatmul.bf16.gmra.mxu0 %v7973
        %v8168 = vpop.f32.mrf.mxu0
        %v8169 = vadd.f32 0.0, %v8168
        %v8170 = vpop.f32.mrf.mxu0
        %v8171 = vadd.f32 0.0, %v8170
        %8172 = vmatmul.bf16.gmra.mxu0 %v7976
        %v8173 = vpop.f32.mrf.mxu0
        %v8174 = vadd.f32 0.0, %v8173
        %v8175 = vpop.f32.mrf.mxu0
        %v8176 = vadd.f32 0.0, %v8175
        %8177 = vmatmul.bf16.gmra.mxu0 %v7979
        %v8178 = vpop.f32.mrf.mxu0
        %v8179 = vadd.f32 0.0, %v8178
        %v8180 = vpop.f32.mrf.mxu0
        %v8181 = vadd.f32 0.0, %v8180
        %8182 = vmatmul.bf16.gmra.mxu0 %v7982
        %v8183 = vpop.f32.mrf.mxu0
        %v8184 = vadd.f32 0.0, %v8183
        %v8185 = vpop.f32.mrf.mxu0
        %v8186 = vadd.f32 0.0, %v8185
        %8187 = vmatmul.bf16.gmra.mxu0 %v7985
        %v8188 = vpop.f32.mrf.mxu0
        %v8189 = vadd.f32 0.0, %v8188
        %v8190 = vpop.f32.mrf.mxu0
        %v8191 = vadd.f32 0.0, %v8190
        %8192 = vmatmul.bf16.gmra.mxu0 %v7988
        %v8193 = vpop.f32.mrf.mxu0
        %v8194 = vadd.f32 0.0, %v8193
        %v8195 = vpop.f32.mrf.mxu0
        %v8196 = vadd.f32 0.0, %v8195
        %8197 = vmatmul.bf16.gmra.mxu0 %v7991
        %v8198 = vpop.f32.mrf.mxu0
        %v8199 = vadd.f32 0.0, %v8198
        %v8200 = vpop.f32.mrf.mxu0
        %v8201 = vadd.f32 0.0, %v8200
        %8202 = vmatmul.bf16.gmra.mxu0 %v7994
        %v8203 = vpop.f32.mrf.mxu0
        %v8204 = vadd.f32 0.0, %v8203
        %v8205 = vpop.f32.mrf.mxu0
        %v8206 = vadd.f32 0.0, %v8205
        %8207 = vmatmul.bf16.gmra.mxu0 %v7997
        %v8208 = vpop.f32.mrf.mxu0
        %v8209 = vadd.f32 0.0, %v8208
        %v8210 = vpop.f32.mrf.mxu0
        %v8211 = vadd.f32 0.0, %v8210
        %8212 = vmatmul.bf16.gmra.mxu0 %v8000
        %v8213 = vpop.f32.mrf.mxu0
        %v8214 = vadd.f32 0.0, %v8213
        %v8215 = vpop.f32.mrf.mxu0
        %v8216 = vadd.f32 0.0, %v8215
        %8217 = vmatmul.bf16.gmra.mxu0 %v8003
        %v8218 = vpop.f32.mrf.mxu0
        %v8219 = vadd.f32 0.0, %v8218
        %v8220 = vpop.f32.mrf.mxu0
        %v8221 = vadd.f32 0.0, %v8220
        %8222 = vmatmul.bf16.gmra.mxu0 %v8006
        %v8223 = vpop.f32.mrf.mxu0
        %v8224 = vadd.f32 0.0, %v8223
        %v8225 = vpop.f32.mrf.mxu0
        %v8226 = vadd.f32 0.0, %v8225
        %8227 = vmatmul.bf16.gmra.mxu0 %v8009
        %v8228 = vpop.f32.mrf.mxu0
        %v8229 = vadd.f32 0.0, %v8228
        %v8230 = vpop.f32.mrf.mxu0
        %v8231 = vadd.f32 0.0, %v8230
        %8232 = vmatmul.bf16.gmra.mxu0 %v8012
        %v8233 = vpop.f32.mrf.mxu0
        %v8234 = vadd.f32 0.0, %v8233
        %v8235 = vpop.f32.mrf.mxu0
        %v8236 = vadd.f32 0.0, %v8235
        %8237 = vmatmul.bf16.gmra.mxu0 %v8015
        %v8238 = vpop.f32.mrf.mxu0
        %v8239 = vadd.f32 0.0, %v8238
        %v8240 = vpop.f32.mrf.mxu0
        %v8241 = vadd.f32 0.0, %v8240
        %8242 = vdwg.mxu0
        %v8243 = vmax.f32 %v8075, %v8164
        %8244 = vmax.xlane.f32.xlu0 %v8243
        %v8245 = vpop.xlane.xlu0 %8244
        %v8246 = vmax.f32 %v8077, %v8166
        %8247 = vmax.xlane.f32.xlu0 %v8246
        %v8248 = vpop.xlane.xlu0 %8247
        %v8249 = vmax.f32 %v8080, %v8169
        %8250 = vmax.xlane.f32.xlu0 %v8249
        %v8251 = vpop.xlane.xlu0 %8250
        %v8252 = vmax.f32 %v8082, %v8171
        %8253 = vmax.xlane.f32.xlu0 %v8252
        %v8254 = vpop.xlane.xlu0 %8253
        %v8255 = vmax.f32 %v8085, %v8174
        %8256 = vmax.xlane.f32.xlu0 %v8255
        %v8257 = vpop.xlane.xlu0 %8256
        %v8258 = vmax.f32 %v8087, %v8176
        %8259 = vmax.xlane.f32.xlu0 %v8258
        %v8260 = vpop.xlane.xlu0 %8259
        %v8261 = vmax.f32 %v8090, %v8179
        %8262 = vmax.xlane.f32.xlu0 %v8261
        %v8263 = vpop.xlane.xlu0 %8262
        %v8264 = vmax.f32 %v8092, %v8181
        %8265 = vmax.xlane.f32.xlu0 %v8264
        %v8266 = vpop.xlane.xlu0 %8265
        %v8267 = vmax.f32 %v8095, %v8184
        %8268 = vmax.xlane.f32.xlu0 %v8267
        %v8269 = vpop.xlane.xlu0 %8268
        %v8270 = vmax.f32 %v8097, %v8186
        %8271 = vmax.xlane.f32.xlu0 %v8270
        %v8272 = vpop.xlane.xlu0 %8271
        %v8273 = vmax.f32 %v8100, %v8189
        %8274 = vmax.xlane.f32.xlu0 %v8273
        %v8275 = vpop.xlane.xlu0 %8274
        %v8276 = vmax.f32 %v8102, %v8191
        %8277 = vmax.xlane.f32.xlu0 %v8276
        %v8278 = vpop.xlane.xlu0 %8277
        %v8279 = vmax.f32 %v8105, %v8194
        %8280 = vmax.xlane.f32.xlu0 %v8279
        %v8281 = vpop.xlane.xlu0 %8280
        %v8282 = vmax.f32 %v8107, %v8196
        %8283 = vmax.xlane.f32.xlu0 %v8282
        %v8284 = vpop.xlane.xlu0 %8283
        %v8285 = vmax.f32 %v8110, %v8199
        %8286 = vmax.xlane.f32.xlu0 %v8285
        %v8287 = vpop.xlane.xlu0 %8286
        %v8288 = vmax.f32 %v8112, %v8201
        %8289 = vmax.xlane.f32.xlu0 %v8288
        %v8290 = vpop.xlane.xlu0 %8289
        %v8291 = vmax.f32 %v8115, %v8204
        %8292 = vmax.xlane.f32.xlu0 %v8291
        %v8293 = vpop.xlane.xlu0 %8292
        %v8294 = vmax.f32 %v8117, %v8206
        %8295 = vmax.xlane.f32.xlu0 %v8294
        %v8296 = vpop.xlane.xlu0 %8295
        %v8297 = vmax.f32 %v8120, %v8209
        %8298 = vmax.xlane.f32.xlu0 %v8297
        %v8299 = vpop.xlane.xlu0 %8298
        %v8300 = vmax.f32 %v8122, %v8211
        %8301 = vmax.xlane.f32.xlu0 %v8300
        %v8302 = vpop.xlane.xlu0 %8301
        %v8303 = vmax.f32 %v8125, %v8214
        %8304 = vmax.xlane.f32.xlu0 %v8303
        %v8305 = vpop.xlane.xlu0 %8304
        %v8306 = vmax.f32 %v8127, %v8216
        %8307 = vmax.xlane.f32.xlu0 %v8306
        %v8308 = vpop.xlane.xlu0 %8307
        %v8309 = vmax.f32 %v8130, %v8219
        %8310 = vmax.xlane.f32.xlu0 %v8309
        %v8311 = vpop.xlane.xlu0 %8310
        %v8312 = vmax.f32 %v8132, %v8221
        %8313 = vmax.xlane.f32.xlu0 %v8312
        %v8314 = vpop.xlane.xlu0 %8313
        %v8315 = vmax.f32 %v8135, %v8224
        %8316 = vmax.xlane.f32.xlu0 %v8315
        %v8317 = vpop.xlane.xlu0 %8316
        %v8318 = vmax.f32 %v8137, %v8226
        %8319 = vmax.xlane.f32.xlu0 %v8318
        %v8320 = vpop.xlane.xlu0 %8319
        %v8321 = vmax.f32 %v8140, %v8229
        %8322 = vmax.xlane.f32.xlu0 %v8321
        %v8323 = vpop.xlane.xlu0 %8322
        %v8324 = vmax.f32 %v8142, %v8231
        %8325 = vmax.xlane.f32.xlu0 %v8324
        %v8326 = vpop.xlane.xlu0 %8325
        %v8327 = vmax.f32 %v8145, %v8234
        %8328 = vmax.xlane.f32.xlu0 %v8327
        %v8329 = vpop.xlane.xlu0 %8328
        %v8330 = vmax.f32 %v8147, %v8236
        %8331 = vmax.xlane.f32.xlu0 %v8330
        %v8332 = vpop.xlane.xlu0 %8331
        %v8333 = vmax.f32 %v8150, %v8239
        %8334 = vmax.xlane.f32.xlu0 %v8333
        %v8335 = vpop.xlane.xlu0 %8334
        %v8336 = vmax.f32 %v8152, %v8241
        %8337 = vmax.xlane.f32.xlu0 %v8336
        %v8338 = vpop.xlane.xlu0 %8337
        %v8339 = vsub.f32 %v8075, %v8245
        %v8340 = vsub.f32 %v8164, %v8245
        %v8341 = vsub.f32 %v8077, %v8248
        %v8342 = vsub.f32 %v8166, %v8248
        %v8343 = vsub.f32 %v8080, %v8251
        %v8344 = vsub.f32 %v8169, %v8251
        %v8345 = vsub.f32 %v8082, %v8254
        %v8346 = vsub.f32 %v8171, %v8254
        %v8347 = vsub.f32 %v8085, %v8257
        %v8348 = vsub.f32 %v8174, %v8257
        %v8349 = vsub.f32 %v8087, %v8260
        %v8350 = vsub.f32 %v8176, %v8260
        %v8351 = vsub.f32 %v8090, %v8263
        %v8352 = vsub.f32 %v8179, %v8263
        %v8353 = vsub.f32 %v8092, %v8266
        %v8354 = vsub.f32 %v8181, %v8266
        %v8355 = vsub.f32 %v8095, %v8269
        %v8356 = vsub.f32 %v8184, %v8269
        %v8357 = vsub.f32 %v8097, %v8272
        %v8358 = vsub.f32 %v8186, %v8272
        %v8359 = vsub.f32 %v8100, %v8275
        %v8360 = vsub.f32 %v8189, %v8275
        %v8361 = vsub.f32 %v8102, %v8278
        %v8362 = vsub.f32 %v8191, %v8278
        %v8363 = vsub.f32 %v8105, %v8281
        %v8364 = vsub.f32 %v8194, %v8281
        %v8365 = vsub.f32 %v8107, %v8284
        %v8366 = vsub.f32 %v8196, %v8284
        %v8367 = vsub.f32 %v8110, %v8287
        %v8368 = vsub.f32 %v8199, %v8287
        %v8369 = vsub.f32 %v8112, %v8290
        %v8370 = vsub.f32 %v8201, %v8290
        %v8371 = vsub.f32 %v8115, %v8293
        %v8372 = vsub.f32 %v8204, %v8293
        %v8373 = vsub.f32 %v8117, %v8296
        %v8374 = vsub.f32 %v8206, %v8296
        %v8375 = vsub.f32 %v8120, %v8299
        %v8376 = vsub.f32 %v8209, %v8299
        %v8377 = vsub.f32 %v8122, %v8302
        %v8378 = vsub.f32 %v8211, %v8302
        %v8379 = vsub.f32 %v8125, %v8305
        %v8380 = vsub.f32 %v8214, %v8305
        %v8381 = vsub.f32 %v8127, %v8308
        %v8382 = vsub.f32 %v8216, %v8308
        %v8383 = vsub.f32 %v8130, %v8311
        %v8384 = vsub.f32 %v8219, %v8311
        %v8385 = vsub.f32 %v8132, %v8314
        %v8386 = vsub.f32 %v8221, %v8314
        %v8387 = vsub.f32 %v8135, %v8317
        %v8388 = vsub.f32 %v8224, %v8317
        %v8389 = vsub.f32 %v8137, %v8320
        %v8390 = vsub.f32 %v8226, %v8320
        %v8391 = vsub.f32 %v8140, %v8323
        %v8392 = vsub.f32 %v8229, %v8323
        %v8393 = vsub.f32 %v8142, %v8326
        %v8394 = vsub.f32 %v8231, %v8326
        %v8395 = vsub.f32 %v8145, %v8329
        %v8396 = vsub.f32 %v8234, %v8329
        %v8397 = vsub.f32 %v8147, %v8332
        %v8398 = vsub.f32 %v8236, %v8332
        %v8399 = vsub.f32 %v8150, %v8335
        %v8400 = vsub.f32 %v8239, %v8335
        %v8401 = vsub.f32 %v8152, %v8338
        %v8402 = vsub.f32 %v8241, %v8338
        %v8403 = vmul.f32 %v8339, 1.442695
        %v8404 = vpow.pop %v8403
        %v8405 = vmul.f32 %v8340, 1.442695
        %v8406 = vpow.pop %v8405
        %v8407 = vmul.f32 %v8341, 1.442695
        %v8408 = vpow.pop %v8407
        %v8409 = vmul.f32 %v8342, 1.442695
        %v8410 = vpow.pop %v8409
        %v8411 = vmul.f32 %v8343, 1.442695
        %v8412 = vpow.pop %v8411
        %v8413 = vmul.f32 %v8344, 1.442695
        %v8414 = vpow.pop %v8413
        %v8415 = vmul.f32 %v8345, 1.442695
        %v8416 = vpow.pop %v8415
        %v8417 = vmul.f32 %v8346, 1.442695
        %v8418 = vpow.pop %v8417
        %v8419 = vmul.f32 %v8347, 1.442695
        %v8420 = vpow.pop %v8419
        %v8421 = vmul.f32 %v8348, 1.442695
        %v8422 = vpow.pop %v8421
        %v8423 = vmul.f32 %v8349, 1.442695
        %v8424 = vpow.pop %v8423
        %v8425 = vmul.f32 %v8350, 1.442695
        %v8426 = vpow.pop %v8425
        %v8427 = vmul.f32 %v8351, 1.442695
        %v8428 = vpow.pop %v8427
        %v8429 = vmul.f32 %v8352, 1.442695
        %v8430 = vpow.pop %v8429
        %v8431 = vmul.f32 %v8353, 1.442695
        %v8432 = vpow.pop %v8431
        %v8433 = vmul.f32 %v8354, 1.442695
        %v8434 = vpow.pop %v8433
        %v8435 = vmul.f32 %v8355, 1.442695
        %v8436 = vpow.pop %v8435
        %v8437 = vmul.f32 %v8356, 1.442695
        %v8438 = vpow.pop %v8437
        %v8439 = vmul.f32 %v8357, 1.442695
        %v8440 = vpow.pop %v8439
        %v8441 = vmul.f32 %v8358, 1.442695
        %v8442 = vpow.pop %v8441
        %v8443 = vmul.f32 %v8359, 1.442695
        %v8444 = vpow.pop %v8443
        %v8445 = vmul.f32 %v8360, 1.442695
        %v8446 = vpow.pop %v8445
        %v8447 = vmul.f32 %v8361, 1.442695
        %v8448 = vpow.pop %v8447
        %v8449 = vmul.f32 %v8362, 1.442695
        %v8450 = vpow.pop %v8449
        %v8451 = vmul.f32 %v8363, 1.442695
        %v8452 = vpow.pop %v8451
        %v8453 = vmul.f32 %v8364, 1.442695
        %v8454 = vpow.pop %v8453
        %v8455 = vmul.f32 %v8365, 1.442695
        %v8456 = vpow.pop %v8455
        %v8457 = vmul.f32 %v8366, 1.442695
        %v8458 = vpow.pop %v8457
        %v8459 = vmul.f32 %v8367, 1.442695
        %v8460 = vpow.pop %v8459
        %v8461 = vmul.f32 %v8368, 1.442695
        %v8462 = vpow.pop %v8461
        %v8463 = vmul.f32 %v8369, 1.442695
        %v8464 = vpow.pop %v8463
        %v8465 = vmul.f32 %v8370, 1.442695
        %v8466 = vpow.pop %v8465
        %v8467 = vmul.f32 %v8371, 1.442695
        %v8468 = vpow.pop %v8467
        %v8469 = vmul.f32 %v8372, 1.442695
        %v8470 = vpow.pop %v8469
        %v8471 = vmul.f32 %v8373, 1.442695
        %v8472 = vpow.pop %v8471
        %v8473 = vmul.f32 %v8374, 1.442695
        %v8474 = vpow.pop %v8473
        %v8475 = vmul.f32 %v8375, 1.442695
        %v8476 = vpow.pop %v8475
        %v8477 = vmul.f32 %v8376, 1.442695
        %v8478 = vpow.pop %v8477
        %v8479 = vmul.f32 %v8377, 1.442695
        %v8480 = vpow.pop %v8479
        %v8481 = vmul.f32 %v8378, 1.442695
        %v8482 = vpow.pop %v8481
        %v8483 = vmul.f32 %v8379, 1.442695
        %v8484 = vpow.pop %v8483
        %v8485 = vmul.f32 %v8380, 1.442695
        %v8486 = vpow.pop %v8485
        %v8487 = vmul.f32 %v8381, 1.442695
        %v8488 = vpow.pop %v8487
        %v8489 = vmul.f32 %v8382, 1.442695
        %v8490 = vpow.pop %v8489
        %v8491 = vmul.f32 %v8383, 1.442695
        %v8492 = vpow.pop %v8491
        %v8493 = vmul.f32 %v8384, 1.442695
        %v8494 = vpow.pop %v8493
        %v8495 = vmul.f32 %v8385, 1.442695
        %v8496 = vpow.pop %v8495
        %v8497 = vmul.f32 %v8386, 1.442695
        %v8498 = vpow.pop %v8497
        %v8499 = vmul.f32 %v8387, 1.442695
        %v8500 = vpow.pop %v8499
        %v8501 = vmul.f32 %v8388, 1.442695
        %v8502 = vpow.pop %v8501
        %v8503 = vmul.f32 %v8389, 1.442695
        %v8504 = vpow.pop %v8503
        %v8505 = vmul.f32 %v8390, 1.442695
        %v8506 = vpow.pop %v8505
        %v8507 = vmul.f32 %v8391, 1.442695
        %v8508 = vpow.pop %v8507
        %v8509 = vmul.f32 %v8392, 1.442695
        %v8510 = vpow.pop %v8509
        %v8511 = vmul.f32 %v8393, 1.442695
        %v8512 = vpow.pop %v8511
        %v8513 = vmul.f32 %v8394, 1.442695
        %v8514 = vpow.pop %v8513
        %v8515 = vmul.f32 %v8395, 1.442695
        %v8516 = vpow.pop %v8515
        %v8517 = vmul.f32 %v8396, 1.442695
        %v8518 = vpow.pop %v8517
        %v8519 = vmul.f32 %v8397, 1.442695
        %v8520 = vpow.pop %v8519
        %v8521 = vmul.f32 %v8398, 1.442695
        %v8522 = vpow.pop %v8521
        %v8523 = vmul.f32 %v8399, 1.442695
        %v8524 = vpow.pop %v8523
        %v8525 = vmul.f32 %v8400, 1.442695
        %v8526 = vpow.pop %v8525
        %v8527 = vmul.f32 %v8401, 1.442695
        %v8528 = vpow.pop %v8527
        %v8529 = vmul.f32 %v8402, 1.442695
        %v8530 = vpow.pop %v8529
        %v8531 = vadd.f32 %v8404, %v8406
        %8532 = vadd.xlane.f32.xlu0 %v8531
        %v8533 = vpop.xlane.xlu0 %8532
        %v8534 = vadd.f32 %v8408, %v8410
        %8535 = vadd.xlane.f32.xlu0 %v8534
        %v8536 = vpop.xlane.xlu0 %8535
        %v8537 = vadd.f32 %v8412, %v8414
        %8538 = vadd.xlane.f32.xlu0 %v8537
        %v8539 = vpop.xlane.xlu0 %8538
        %v8540 = vadd.f32 %v8416, %v8418
        %8541 = vadd.xlane.f32.xlu0 %v8540
        %v8542 = vpop.xlane.xlu0 %8541
        %v8543 = vadd.f32 %v8420, %v8422
        %8544 = vadd.xlane.f32.xlu0 %v8543
        %v8545 = vpop.xlane.xlu0 %8544
        %v8546 = vadd.f32 %v8424, %v8426
        %8547 = vadd.xlane.f32.xlu0 %v8546
        %v8548 = vpop.xlane.xlu0 %8547
        %v8549 = vadd.f32 %v8428, %v8430
        %8550 = vadd.xlane.f32.xlu0 %v8549
        %v8551 = vpop.xlane.xlu0 %8550
        %v8552 = vadd.f32 %v8432, %v8434
        %8553 = vadd.xlane.f32.xlu0 %v8552
        %v8554 = vpop.xlane.xlu0 %8553
        %v8555 = vadd.f32 %v8436, %v8438
        %8556 = vadd.xlane.f32.xlu0 %v8555
        %v8557 = vpop.xlane.xlu0 %8556
        %v8558 = vadd.f32 %v8440, %v8442
        %8559 = vadd.xlane.f32.xlu0 %v8558
        %v8560 = vpop.xlane.xlu0 %8559
        %v8561 = vadd.f32 %v8444, %v8446
        %8562 = vadd.xlane.f32.xlu0 %v8561
        %v8563 = vpop.xlane.xlu0 %8562
        %v8564 = vadd.f32 %v8448, %v8450
        %8565 = vadd.xlane.f32.xlu0 %v8564
        %v8566 = vpop.xlane.xlu0 %8565
        %v8567 = vadd.f32 %v8452, %v8454
        %8568 = vadd.xlane.f32.xlu0 %v8567
        %v8569 = vpop.xlane.xlu0 %8568
        %v8570 = vadd.f32 %v8456, %v8458
        %8571 = vadd.xlane.f32.xlu0 %v8570
        %v8572 = vpop.xlane.xlu0 %8571
        %v8573 = vadd.f32 %v8460, %v8462
        %8574 = vadd.xlane.f32.xlu0 %v8573
        %v8575 = vpop.xlane.xlu0 %8574
        %v8576 = vadd.f32 %v8464, %v8466
        %8577 = vadd.xlane.f32.xlu0 %v8576
        %v8578 = vpop.xlane.xlu0 %8577
        %v8579 = vadd.f32 %v8468, %v8470
        %8580 = vadd.xlane.f32.xlu0 %v8579
        %v8581 = vpop.xlane.xlu0 %8580
        %v8582 = vadd.f32 %v8472, %v8474
        %8583 = vadd.xlane.f32.xlu0 %v8582
        %v8584 = vpop.xlane.xlu0 %8583
        %v8585 = vadd.f32 %v8476, %v8478
        %8586 = vadd.xlane.f32.xlu0 %v8585
        %v8587 = vpop.xlane.xlu0 %8586
        %v8588 = vadd.f32 %v8480, %v8482
        %8589 = vadd.xlane.f32.xlu0 %v8588
        %v8590 = vpop.xlane.xlu0 %8589
        %v8591 = vadd.f32 %v8484, %v8486
        %8592 = vadd.xlane.f32.xlu0 %v8591
        %v8593 = vpop.xlane.xlu0 %8592
        %v8594 = vadd.f32 %v8488, %v8490
        %8595 = vadd.xlane.f32.xlu0 %v8594
        %v8596 = vpop.xlane.xlu0 %8595
        %v8597 = vadd.f32 %v8492, %v8494
        %8598 = vadd.xlane.f32.xlu0 %v8597
        %v8599 = vpop.xlane.xlu0 %8598
        %v8600 = vadd.f32 %v8496, %v8498
        %8601 = vadd.xlane.f32.xlu0 %v8600
        %v8602 = vpop.xlane.xlu0 %8601
        %v8603 = vadd.f32 %v8500, %v8502
        %8604 = vadd.xlane.f32.xlu0 %v8603
        %v8605 = vpop.xlane.xlu0 %8604
        %v8606 = vadd.f32 %v8504, %v8506
        %8607 = vadd.xlane.f32.xlu0 %v8606
        %v8608 = vpop.xlane.xlu0 %8607
        %v8609 = vadd.f32 %v8508, %v8510
        %8610 = vadd.xlane.f32.xlu0 %v8609
        %v8611 = vpop.xlane.xlu0 %8610
        %v8612 = vadd.f32 %v8512, %v8514
        %8613 = vadd.xlane.f32.xlu0 %v8612
        %v8614 = vpop.xlane.xlu0 %8613
        %v8615 = vadd.f32 %v8516, %v8518
        %8616 = vadd.xlane.f32.xlu0 %v8615
        %v8617 = vpop.xlane.xlu0 %8616
        %v8618 = vadd.f32 %v8520, %v8522
        %8619 = vadd.xlane.f32.xlu0 %v8618
        %v8620 = vpop.xlane.xlu0 %8619
        %v8621 = vadd.f32 %v8524, %v8526
        %8622 = vadd.xlane.f32.xlu0 %v8621
        %v8623 = vpop.xlane.xlu0 %8622
        %v8624 = vadd.f32 %v8528, %v8530
        %8625 = vadd.xlane.f32.xlu0 %v8624
        %v8626 = vpop.xlane.xlu0 %8625
        %v8627 = vpack.c.bf16 %v8408, %v8404
        %v8628 = vpack.c.bf16 %v8410, %v8406
        %v8629 = vpack.c.bf16 %v8416, %v8412
        %v8630 = vpack.c.bf16 %v8418, %v8414
        %v8631 = vpack.c.bf16 %v8424, %v8420
        %v8632 = vpack.c.bf16 %v8426, %v8422
        %v8633 = vpack.c.bf16 %v8432, %v8428
        %v8634 = vpack.c.bf16 %v8434, %v8430
        %v8635 = vpack.c.bf16 %v8440, %v8436
        %v8636 = vpack.c.bf16 %v8442, %v8438
        %v8637 = vpack.c.bf16 %v8448, %v8444
        %v8638 = vpack.c.bf16 %v8450, %v8446
        %v8639 = vpack.c.bf16 %v8456, %v8452
        %v8640 = vpack.c.bf16 %v8458, %v8454
        %v8641 = vpack.c.bf16 %v8464, %v8460
        %v8642 = vpack.c.bf16 %v8466, %v8462
        %v8643 = vpack.c.bf16 %v8472, %v8468
        %v8644 = vpack.c.bf16 %v8474, %v8470
        %v8645 = vpack.c.bf16 %v8480, %v8476
        %v8646 = vpack.c.bf16 %v8482, %v8478
        %v8647 = vpack.c.bf16 %v8488, %v8484
        %v8648 = vpack.c.bf16 %v8490, %v8486
        %v8649 = vpack.c.bf16 %v8496, %v8492
        %v8650 = vpack.c.bf16 %v8498, %v8494
        %v8651 = vpack.c.bf16 %v8504, %v8500
        %v8652 = vpack.c.bf16 %v8506, %v8502
        %v8653 = vpack.c.bf16 %v8512, %v8508
        %v8654 = vpack.c.bf16 %v8514, %v8510
        %v8655 = vpack.c.bf16 %v8520, %v8516
        %v8656 = vpack.c.bf16 %v8522, %v8518
        %v8657 = vpack.c.bf16 %v8528, %v8524
        %v8658 = vpack.c.bf16 %v8530, %v8526
        %8675 = vmatpush.bf16.msra.mxu0 %v7952
        %8676 = vmatpush.bf16.msra.mxu0 %v7950
        %8677 = vmatpush.bf16.msra.mxu0 %v7948
        %8678 = vmatpush.bf16.msra.mxu0 %v7946
        %8679 = vmatpush.bf16.msra.mxu0 %v7944
        %8680 = vmatpush.bf16.msra.mxu0 %v7942
        %8681 = vmatpush.bf16.msra.mxu0 %v7940
        %8682 = vmatpush.bf16.msra.mxu0 %v7938
        %8683 = vmatmul.bf16.gmra.mxu0 %v8627
        %v8684 = vpop.f32.mrf.mxu0
        %v8685 = vadd.f32 0.0, %v8684
        %v8686 = vpop.f32.mrf.mxu0
        %v8687 = vadd.f32 0.0, %v8686
        %8688 = vmatmul.bf16.gmra.mxu0 %v8629
        %v8689 = vpop.f32.mrf.mxu0
        %v8690 = vadd.f32 0.0, %v8689
        %v8691 = vpop.f32.mrf.mxu0
        %v8692 = vadd.f32 0.0, %v8691
        %8693 = vmatmul.bf16.gmra.mxu0 %v8631
        %v8694 = vpop.f32.mrf.mxu0
        %v8695 = vadd.f32 0.0, %v8694
        %v8696 = vpop.f32.mrf.mxu0
        %v8697 = vadd.f32 0.0, %v8696
        %8698 = vmatmul.bf16.gmra.mxu0 %v8633
        %v8699 = vpop.f32.mrf.mxu0
        %v8700 = vadd.f32 0.0, %v8699
        %v8701 = vpop.f32.mrf.mxu0
        %v8702 = vadd.f32 0.0, %v8701
        %8703 = vmatmul.bf16.gmra.mxu0 %v8635
        %v8704 = vpop.f32.mrf.mxu0
        %v8705 = vadd.f32 0.0, %v8704
        %v8706 = vpop.f32.mrf.mxu0
        %v8707 = vadd.f32 0.0, %v8706
        %8708 = vmatmul.bf16.gmra.mxu0 %v8637
        %v8709 = vpop.f32.mrf.mxu0
        %v8710 = vadd.f32 0.0, %v8709
        %v8711 = vpop.f32.mrf.mxu0
        %v8712 = vadd.f32 0.0, %v8711
        %8713 = vmatmul.bf16.gmra.mxu0 %v8639
        %v8714 = vpop.f32.mrf.mxu0
        %v8715 = vadd.f32 0.0, %v8714
        %v8716 = vpop.f32.mrf.mxu0
        %v8717 = vadd.f32 0.0, %v8716
        %8718 = vmatmul.bf16.gmra.mxu0 %v8641
        %v8719 = vpop.f32.mrf.mxu0
        %v8720 = vadd.f32 0.0, %v8719
        %v8721 = vpop.f32.mrf.mxu0
        %v8722 = vadd.f32 0.0, %v8721
        %8723 = vmatmul.bf16.gmra.mxu0 %v8643
        %v8724 = vpop.f32.mrf.mxu0
        %v8725 = vadd.f32 0.0, %v8724
        %v8726 = vpop.f32.mrf.mxu0
        %v8727 = vadd.f32 0.0, %v8726
        %8728 = vmatmul.bf16.gmra.mxu0 %v8645
        %v8729 = vpop.f32.mrf.mxu0
        %v8730 = vadd.f32 0.0, %v8729
        %v8731 = vpop.f32.mrf.mxu0
        %v8732 = vadd.f32 0.0, %v8731
        %8733 = vmatmul.bf16.gmra.mxu0 %v8647
        %v8734 = vpop.f32.mrf.mxu0
        %v8735 = vadd.f32 0.0, %v8734
        %v8736 = vpop.f32.mrf.mxu0
        %v8737 = vadd.f32 0.0, %v8736
        %8738 = vmatmul.bf16.gmra.mxu0 %v8649
        %v8739 = vpop.f32.mrf.mxu0
        %v8740 = vadd.f32 0.0, %v8739
        %v8741 = vpop.f32.mrf.mxu0
        %v8742 = vadd.f32 0.0, %v8741
        %8743 = vmatmul.bf16.gmra.mxu0 %v8651
        %v8744 = vpop.f32.mrf.mxu0
        %v8745 = vadd.f32 0.0, %v8744
        %v8746 = vpop.f32.mrf.mxu0
        %v8747 = vadd.f32 0.0, %v8746
        %8748 = vmatmul.bf16.gmra.mxu0 %v8653
        %v8749 = vpop.f32.mrf.mxu0
        %v8750 = vadd.f32 0.0, %v8749
        %v8751 = vpop.f32.mrf.mxu0
        %v8752 = vadd.f32 0.0, %v8751
        %8753 = vmatmul.bf16.gmra.mxu0 %v8655
        %v8754 = vpop.f32.mrf.mxu0
        %v8755 = vadd.f32 0.0, %v8754
        %v8756 = vpop.f32.mrf.mxu0
        %v8757 = vadd.f32 0.0, %v8756
        %8758 = vmatmul.bf16.gmra.mxu0 %v8657
        %v8759 = vpop.f32.mrf.mxu0
        %v8760 = vadd.f32 0.0, %v8759
        %v8761 = vpop.f32.mrf.mxu0
        %v8762 = vadd.f32 0.0, %v8761
        %8763 = vdwg.mxu0
        %8764 = vmatpush.bf16.msra.mxu0 %v7968
        %8765 = vmatpush.bf16.msra.mxu0 %v7966
        %8766 = vmatpush.bf16.msra.mxu0 %v7964
        %8767 = vmatpush.bf16.msra.mxu0 %v7962
        %8768 = vmatpush.bf16.msra.mxu0 %v7960
        %8769 = vmatpush.bf16.msra.mxu0 %v7958
        %8770 = vmatpush.bf16.msra.mxu0 %v7956
        %8771 = vmatpush.bf16.msra.mxu0 %v7954
        %8772 = vmatmul.bf16.gmra.mxu0 %v8628
        %v8773 = vpop.f32.mrf.mxu0
        %v8774 = vadd.f32 %v8685, %v8773
        %v8775 = vpop.f32.mrf.mxu0
        %v8776 = vadd.f32 %v8687, %v8775
        %8777 = vmatmul.bf16.gmra.mxu0 %v8630
        %v8778 = vpop.f32.mrf.mxu0
        %v8779 = vadd.f32 %v8690, %v8778
        %v8780 = vpop.f32.mrf.mxu0
        %v8781 = vadd.f32 %v8692, %v8780
        %8782 = vmatmul.bf16.gmra.mxu0 %v8632
        %v8783 = vpop.f32.mrf.mxu0
        %v8784 = vadd.f32 %v8695, %v8783
        %v8785 = vpop.f32.mrf.mxu0
        %v8786 = vadd.f32 %v8697, %v8785
        %8787 = vmatmul.bf16.gmra.mxu0 %v8634
        %v8788 = vpop.f32.mrf.mxu0
        %v8789 = vadd.f32 %v8700, %v8788
        %v8790 = vpop.f32.mrf.mxu0
        %v8791 = vadd.f32 %v8702, %v8790
        %8792 = vmatmul.bf16.gmra.mxu0 %v8636
        %v8793 = vpop.f32.mrf.mxu0
        %v8794 = vadd.f32 %v8705, %v8793
        %v8795 = vpop.f32.mrf.mxu0
        %v8796 = vadd.f32 %v8707, %v8795
        %8797 = vmatmul.bf16.gmra.mxu0 %v8638
        %v8798 = vpop.f32.mrf.mxu0
        %v8799 = vadd.f32 %v8710, %v8798
        %v8800 = vpop.f32.mrf.mxu0
        %v8801 = vadd.f32 %v8712, %v8800
        %8802 = vmatmul.bf16.gmra.mxu0 %v8640
        %v8803 = vpop.f32.mrf.mxu0
        %v8804 = vadd.f32 %v8715, %v8803
        %v8805 = vpop.f32.mrf.mxu0
        %v8806 = vadd.f32 %v8717, %v8805
        %8807 = vmatmul.bf16.gmra.mxu0 %v8642
        %v8808 = vpop.f32.mrf.mxu0
        %v8809 = vadd.f32 %v8720, %v8808
        %v8810 = vpop.f32.mrf.mxu0
        %v8811 = vadd.f32 %v8722, %v8810
        %8812 = vmatmul.bf16.gmra.mxu0 %v8644
        %v8813 = vpop.f32.mrf.mxu0
        %v8814 = vadd.f32 %v8725, %v8813
        %v8815 = vpop.f32.mrf.mxu0
        %v8816 = vadd.f32 %v8727, %v8815
        %8817 = vmatmul.bf16.gmra.mxu0 %v8646
        %v8818 = vpop.f32.mrf.mxu0
        %v8819 = vadd.f32 %v8730, %v8818
        %v8820 = vpop.f32.mrf.mxu0
        %v8821 = vadd.f32 %v8732, %v8820
        %8822 = vmatmul.bf16.gmra.mxu0 %v8648
        %v8823 = vpop.f32.mrf.mxu0
        %v8824 = vadd.f32 %v8735, %v8823
        %v8825 = vpop.f32.mrf.mxu0
        %v8826 = vadd.f32 %v8737, %v8825
        %8827 = vmatmul.bf16.gmra.mxu0 %v8650
        %v8828 = vpop.f32.mrf.mxu0
        %v8829 = vadd.f32 %v8740, %v8828
        %v8830 = vpop.f32.mrf.mxu0
        %v8831 = vadd.f32 %v8742, %v8830
        %8832 = vmatmul.bf16.gmra.mxu0 %v8652
        %v8833 = vpop.f32.mrf.mxu0
        %v8834 = vadd.f32 %v8745, %v8833
        %v8835 = vpop.f32.mrf.mxu0
        %v8836 = vadd.f32 %v8747, %v8835
        %8837 = vmatmul.bf16.gmra.mxu0 %v8654
        %v8838 = vpop.f32.mrf.mxu0
        %v8839 = vadd.f32 %v8750, %v8838
        %v8840 = vpop.f32.mrf.mxu0
        %v8841 = vadd.f32 %v8752, %v8840
        %8842 = vmatmul.bf16.gmra.mxu0 %v8656
        %v8843 = vpop.f32.mrf.mxu0
        %v8844 = vadd.f32 %v8755, %v8843
        %v8845 = vpop.f32.mrf.mxu0
        %v8846 = vadd.f32 %v8757, %v8845
        %8847 = vmatmul.bf16.gmra.mxu0 %v8658
        %v8848 = vpop.f32.mrf.mxu0
        %v8849 = vadd.f32 %v8760, %v8848
        %v8850 = vpop.f32.mrf.mxu0
        %v8851 = vadd.f32 %v8762, %v8850
        %8852 = vdwg.mxu0
        %v8853 = vrcp.pop %v8533
        %v8854 = vrcp.pop %v8536
        %v8855 = vrcp.pop %v8539
        %v8856 = vrcp.pop %v8542
        %v8857 = vrcp.pop %v8545
        %v8858 = vrcp.pop %v8548
        %v8859 = vrcp.pop %v8551
        %v8860 = vrcp.pop %v8554
        %v8861 = vrcp.pop %v8557
        %v8862 = vrcp.pop %v8560
        %v8863 = vrcp.pop %v8563
        %v8864 = vrcp.pop %v8566
        %v8865 = vrcp.pop %v8569
        %v8866 = vrcp.pop %v8572
        %v8867 = vrcp.pop %v8575
        %v8868 = vrcp.pop %v8578
        %v8869 = vrcp.pop %v8581
        %v8870 = vrcp.pop %v8584
        %v8871 = vrcp.pop %v8587
        %v8872 = vrcp.pop %v8590
        %v8873 = vrcp.pop %v8593
        %v8874 = vrcp.pop %v8596
        %v8875 = vrcp.pop %v8599
        %v8876 = vrcp.pop %v8602
        %v8877 = vrcp.pop %v8605
        %v8878 = vrcp.pop %v8608
        %v8879 = vrcp.pop %v8611
        %v8880 = vrcp.pop %v8614
        %v8881 = vrcp.pop %v8617
        %v8882 = vrcp.pop %v8620
        %v8883 = vrcp.pop %v8623
        %v8884 = vrcp.pop %v8626
        %v8885 = vmul.f32 %v8774, %v8853
        %v8886 = vmul.f32 %v8776, %v8854
        %v8887 = vmul.f32 %v8779, %v8855
        %v8888 = vmul.f32 %v8781, %v8856
        %v8889 = vmul.f32 %v8784, %v8857
        %v8890 = vmul.f32 %v8786, %v8858
        %v8891 = vmul.f32 %v8789, %v8859
        %v8892 = vmul.f32 %v8791, %v8860
        %v8893 = vmul.f32 %v8794, %v8861
        %v8894 = vmul.f32 %v8796, %v8862
        %v8895 = vmul.f32 %v8799, %v8863
        %v8896 = vmul.f32 %v8801, %v8864
        %v8897 = vmul.f32 %v8804, %v8865
        %v8898 = vmul.f32 %v8806, %v8866
        %v8899 = vmul.f32 %v8809, %v8867
        %v8900 = vmul.f32 %v8811, %v8868
        %v8901 = vmul.f32 %v8814, %v8869
        %v8902 = vmul.f32 %v8816, %v8870
        %v8903 = vmul.f32 %v8819, %v8871
        %v8904 = vmul.f32 %v8821, %v8872
        %v8905 = vmul.f32 %v8824, %v8873
        %v8906 = vmul.f32 %v8826, %v8874
        %v8907 = vmul.f32 %v8829, %v8875
        %v8908 = vmul.f32 %v8831, %v8876
        %v8909 = vmul.f32 %v8834, %v8877
        %v8910 = vmul.f32 %v8836, %v8878
        %v8911 = vmul.f32 %v8839, %v8879
        %v8912 = vmul.f32 %v8841, %v8880
        %v8913 = vmul.f32 %v8844, %v8881
        %v8914 = vmul.f32 %v8846, %v8882
        %v8915 = vmul.f32 %v8849, %v8883
        %v8916 = vmul.f32 %v8851, %v8884
        %8949 = vrot.lane.b32.xlu0 %v8885, 96
        %v8950 = vpop.permute.xlu0 %8949
        %8951 = vrot.lane.b32.xlu0 %v8886, 96
        %v8952 = vpop.permute.xlu0 %8951
        %8953 = vrot.lane.b32.xlu0 %v8887, 96
        %v8954 = vpop.permute.xlu0 %8953
        %8955 = vrot.lane.b32.xlu0 %v8888, 96
        %v8956 = vpop.permute.xlu0 %8955
        %8957 = vrot.lane.b32.xlu0 %v8889, 96
        %v8958 = vpop.permute.xlu0 %8957
        %8959 = vrot.lane.b32.xlu0 %v8890, 96
        %v8960 = vpop.permute.xlu0 %8959
        %8961 = vrot.lane.b32.xlu0 %v8891, 96
        %v8962 = vpop.permute.xlu0 %8961
        %8963 = vrot.lane.b32.xlu0 %v8892, 96
        %v8964 = vpop.permute.xlu0 %8963
        %8965 = vrot.lane.b32.xlu0 %v8893, 96
        %v8966 = vpop.permute.xlu0 %8965
        %8967 = vrot.lane.b32.xlu0 %v8894, 96
        %v8968 = vpop.permute.xlu0 %8967
        %8969 = vrot.lane.b32.xlu0 %v8895, 96
        %v8970 = vpop.permute.xlu0 %8969
        %8971 = vrot.lane.b32.xlu0 %v8896, 96
        %v8972 = vpop.permute.xlu0 %8971
        %8973 = vrot.lane.b32.xlu0 %v8897, 96
        %v8974 = vpop.permute.xlu0 %8973
        %8975 = vrot.lane.b32.xlu0 %v8898, 96
        %v8976 = vpop.permute.xlu0 %8975
        %8977 = vrot.lane.b32.xlu0 %v8899, 96
        %v8978 = vpop.permute.xlu0 %8977
        %8979 = vrot.lane.b32.xlu0 %v8900, 96
        %v8980 = vpop.permute.xlu0 %8979
        %8981 = vrot.lane.b32.xlu0 %v8901, 96
        %v8982 = vpop.permute.xlu0 %8981
        %8983 = vrot.lane.b32.xlu0 %v8902, 96
        %v8984 = vpop.permute.xlu0 %8983
        %8985 = vrot.lane.b32.xlu0 %v8903, 96
        %v8986 = vpop.permute.xlu0 %8985
        %8987 = vrot.lane.b32.xlu0 %v8904, 96
        %v8988 = vpop.permute.xlu0 %8987
        %8989 = vrot.lane.b32.xlu0 %v8905, 96
        %v8990 = vpop.permute.xlu0 %8989
        %8991 = vrot.lane.b32.xlu0 %v8906, 96
        %v8992 = vpop.permute.xlu0 %8991
        %8993 = vrot.lane.b32.xlu0 %v8907, 96
        %v8994 = vpop.permute.xlu0 %8993
        %8995 = vrot.lane.b32.xlu0 %v8908, 96
        %v8996 = vpop.permute.xlu0 %8995
        %8997 = vrot.lane.b32.xlu0 %v8909, 96
        %v8998 = vpop.permute.xlu0 %8997
        %8999 = vrot.lane.b32.xlu0 %v8910, 96
        %v9000 = vpop.permute.xlu0 %8999
        %9001 = vrot.lane.b32.xlu0 %v8911, 96
        %v9002 = vpop.permute.xlu0 %9001
        %9003 = vrot.lane.b32.xlu0 %v8912, 96
        %v9004 = vpop.permute.xlu0 %9003
        %9005 = vrot.lane.b32.xlu0 %v8913, 96
        %v9006 = vpop.permute.xlu0 %9005
        %9007 = vrot.lane.b32.xlu0 %v8914, 96
        %v9008 = vpop.permute.xlu0 %9007
        %9009 = vrot.lane.b32.xlu0 %v8915, 96
        %v9010 = vpop.permute.xlu0 %9009
        %9011 = vrot.lane.b32.xlu0 %v8916, 96
        %v9012 = vpop.permute.xlu0 %9011
        %vm9045 = vcmask 917248
        %9046 = vst.msk [vmem:[#allocation2] sm:$0xff] %vm9045, %v8950
        %9047 = vst.msk [vmem:[#allocation2 + $0x8] sm:$0xff] %vm9045, %v8952
        %9048 = vst.msk [vmem:[#allocation2 + $0x10] sm:$0xff] %vm9045, %v8954
        %9049 = vst.msk [vmem:[#allocation2 + $0x18] sm:$0xff] %vm9045, %v8956
        %9050 = vst.msk [vmem:[#allocation2 + $0x20] sm:$0xff] %vm9045, %v8958
        %9051 = vst.msk [vmem:[#allocation2 + $0x28] sm:$0xff] %vm9045, %v8960
        %9052 = vst.msk [vmem:[#allocation2 + $0x30] sm:$0xff] %vm9045, %v8962
        %9053 = vst.msk [vmem:[#allocation2 + $0x38] sm:$0xff] %vm9045, %v8964
        %9054 = vst.msk [vmem:[#allocation2 + $0x40] sm:$0xff] %vm9045, %v8966
        %9055 = vst.msk [vmem:[#allocation2 + $0x48] sm:$0xff] %vm9045, %v8968
        %9056 = vst.msk [vmem:[#allocation2 + $0x50] sm:$0xff] %vm9045, %v8970
        %9057 = vst.msk [vmem:[#allocation2 + $0x58] sm:$0xff] %vm9045, %v8972
        %9058 = vst.msk [vmem:[#allocation2 + $0x60] sm:$0xff] %vm9045, %v8974
        %9059 = vst.msk [vmem:[#allocation2 + $0x68] sm:$0xff] %vm9045, %v8976
        %9060 = vst.msk [vmem:[#allocation2 + $0x70] sm:$0xff] %vm9045, %v8978
        %9061 = vst.msk [vmem:[#allocation2 + $0x78] sm:$0xff] %vm9045, %v8980
        %9062 = vst.msk [vmem:[#allocation2 + $0x80] sm:$0xff] %vm9045, %v8982
        %9063 = vst.msk [vmem:[#allocation2 + $0x88] sm:$0xff] %vm9045, %v8984
        %9064 = vst.msk [vmem:[#allocation2 + $0x90] sm:$0xff] %vm9045, %v8986
        %9065 = vst.msk [vmem:[#allocation2 + $0x98] sm:$0xff] %vm9045, %v8988
        %9066 = vst.msk [vmem:[#allocation2 + $0xa0] sm:$0xff] %vm9045, %v8990
        %9067 = vst.msk [vmem:[#allocation2 + $0xa8] sm:$0xff] %vm9045, %v8992
        %9068 = vst.msk [vmem:[#allocation2 + $0xb0] sm:$0xff] %vm9045, %v8994
        %9069 = vst.msk [vmem:[#allocation2 + $0xb8] sm:$0xff] %vm9045, %v8996
        %9070 = vst.msk [vmem:[#allocation2 + $0xc0] sm:$0xff] %vm9045, %v8998
        %9071 = vst.msk [vmem:[#allocation2 + $0xc8] sm:$0xff] %vm9045, %v9000
        %9072 = vst.msk [vmem:[#allocation2 + $0xd0] sm:$0xff] %vm9045, %v9002
        %9073 = vst.msk [vmem:[#allocation2 + $0xd8] sm:$0xff] %vm9045, %v9004
        %9074 = vst.msk [vmem:[#allocation2 + $0xe0] sm:$0xff] %vm9045, %v9006
        %9075 = vst.msk [vmem:[#allocation2 + $0xe8] sm:$0xff] %vm9045, %v9008
        %9076 = vst.msk [vmem:[#allocation2 + $0xf0] sm:$0xff] %vm9045, %v9010
        %9077 = vst.msk [vmem:[#allocation2 + $0xf8] sm:$0xff] %vm9045, %v9012
        %v9078 = vld [vmem:[%s185] sm:$0xff]
        %v9079 = vld [vmem:[%s185 + $0x8] sm:$0xff]
        %v9080 = vld [vmem:[%s185 + $0x10] sm:$0xff]
        %v9081 = vld [vmem:[%s185 + $0x18] sm:$0xff]
        %v9082 = vld [vmem:[%s185 + $0x20] sm:$0xff]
        %v9083 = vld [vmem:[%s185 + $0x28] sm:$0xff]
        %v9084 = vld [vmem:[%s185 + $0x30] sm:$0xff]
        %v9085 = vld [vmem:[%s185 + $0x38] sm:$0xff]
        %v9086 = vld [vmem:[%s185 + $0x40] sm:$0xff]
        %v9087 = vld [vmem:[%s185 + $0x48] sm:$0xff]
        %v9088 = vld [vmem:[%s185 + $0x50] sm:$0xff]
        %v9089 = vld [vmem:[%s185 + $0x58] sm:$0xff]
        %v9090 = vld [vmem:[%s185 + $0x60] sm:$0xff]
        %v9091 = vld [vmem:[%s185 + $0x68] sm:$0xff]
        %v9092 = vld [vmem:[%s185 + $0x70] sm:$0xff]
        %v9093 = vld [vmem:[%s185 + $0x78] sm:$0xff]
        %v9094 = vld [vmem:[%s185 + $0x80] sm:$0xff]
        %v9095 = vld [vmem:[%s185 + $0x88] sm:$0xff]
        %v9096 = vld [vmem:[%s185 + $0x90] sm:$0xff]
        %v9097 = vld [vmem:[%s185 + $0x98] sm:$0xff]
        %v9098 = vld [vmem:[%s185 + $0xa0] sm:$0xff]
        %v9099 = vld [vmem:[%s185 + $0xa8] sm:$0xff]
        %v9100 = vld [vmem:[%s185 + $0xb0] sm:$0xff]
        %v9101 = vld [vmem:[%s185 + $0xb8] sm:$0xff]
        %v9102 = vld [vmem:[%s185 + $0xc0] sm:$0xff]
        %v9103 = vld [vmem:[%s185 + $0xc8] sm:$0xff]
        %v9104 = vld [vmem:[%s185 + $0xd0] sm:$0xff]
        %v9105 = vld [vmem:[%s185 + $0xd8] sm:$0xff]
        %v9106 = vld [vmem:[%s185 + $0xe0] sm:$0xff]
        %v9107 = vld [vmem:[%s185 + $0xe8] sm:$0xff]
        %v9108 = vld [vmem:[%s185 + $0xf0] sm:$0xff]
        %v9109 = vld [vmem:[%s185 + $0xf8] sm:$0xff]
        %v9110 = vmul.f32 %v9078, 0.25
        %v9111 = vmul.f32 %v9079, 0.25
        %v9112 = vmul.f32 %v9080, 0.25
        %v9113 = vmul.f32 %v9081, 0.25
        %v9114 = vmul.f32 %v9082, 0.25
        %v9115 = vmul.f32 %v9083, 0.25
        %v9116 = vmul.f32 %v9084, 0.25
        %v9117 = vmul.f32 %v9085, 0.25
        %v9118 = vmul.f32 %v9086, 0.25
        %v9119 = vmul.f32 %v9087, 0.25
        %v9120 = vmul.f32 %v9088, 0.25
        %v9121 = vmul.f32 %v9089, 0.25
        %v9122 = vmul.f32 %v9090, 0.25
        %v9123 = vmul.f32 %v9091, 0.25
        %v9124 = vmul.f32 %v9092, 0.25
        %v9125 = vmul.f32 %v9093, 0.25
        %v9126 = vmul.f32 %v9094, 0.25
        %v9127 = vmul.f32 %v9095, 0.25
        %v9128 = vmul.f32 %v9096, 0.25
        %v9129 = vmul.f32 %v9097, 0.25
        %v9130 = vmul.f32 %v9098, 0.25
        %v9131 = vmul.f32 %v9099, 0.25
        %v9132 = vmul.f32 %v9100, 0.25
        %v9133 = vmul.f32 %v9101, 0.25
        %v9134 = vmul.f32 %v9102, 0.25
        %v9135 = vmul.f32 %v9103, 0.25
        %v9136 = vmul.f32 %v9104, 0.25
        %v9137 = vmul.f32 %v9105, 0.25
        %v9138 = vmul.f32 %v9106, 0.25
        %v9139 = vmul.f32 %v9107, 0.25
        %v9140 = vmul.f32 %v9108, 0.25
        %v9141 = vmul.f32 %v9109, 0.25
        %v9142 = vpack.c.bf16 %v9111, %v9110
        %v9143 = vpack.c.bf16 %v9113, %v9112
        %v9144 = vpack.c.bf16 %v9115, %v9114
        %v9145 = vpack.c.bf16 %v9117, %v9116
        %v9146 = vpack.c.bf16 %v9119, %v9118
        %v9147 = vpack.c.bf16 %v9121, %v9120
        %v9148 = vpack.c.bf16 %v9123, %v9122
        %v9149 = vpack.c.bf16 %v9125, %v9124
        %v9150 = vpack.c.bf16 %v9127, %v9126
        %v9151 = vpack.c.bf16 %v9129, %v9128
        %v9152 = vpack.c.bf16 %v9131, %v9130
        %v9153 = vpack.c.bf16 %v9133, %v9132
        %v9154 = vpack.c.bf16 %v9135, %v9134
        %v9155 = vpack.c.bf16 %v9137, %v9136
        %v9156 = vpack.c.bf16 %v9139, %v9138
        %v9157 = vpack.c.bf16 %v9141, %v9140
        %v9158 = vpack.c.bf16 %v9079, %v9078
        %v9159 = vpack.c.bf16 %v9081, %v9080
        %v9160 = vpack.c.bf16 %v9083, %v9082
        %v9161 = vpack.c.bf16 %v9085, %v9084
        %v9162 = vpack.c.bf16 %v9087, %v9086
        %v9163 = vpack.c.bf16 %v9089, %v9088
        %v9164 = vpack.c.bf16 %v9091, %v9090
        %v9165 = vpack.c.bf16 %v9093, %v9092
        %v9166 = vpack.c.bf16 %v9095, %v9094
        %v9167 = vpack.c.bf16 %v9097, %v9096
        %v9168 = vpack.c.bf16 %v9099, %v9098
        %v9169 = vpack.c.bf16 %v9101, %v9100
        %v9170 = vpack.c.bf16 %v9103, %v9102
        %v9171 = vpack.c.bf16 %v9105, %v9104
        %v9172 = vpack.c.bf16 %v9107, %v9106
        %v9173 = vpack.c.bf16 %v9109, %v9108
        %9190 = vrot.lane.b32.xlu0 %v9142, 16
        %v9191 = vpop.permute.xlu0 %9190
        %9192 = vrot.lane.b32.xlu0 %v9143, 16
        %v9193 = vpop.permute.xlu0 %9192
        %9194 = vrot.lane.b32.xlu0 %v9144, 16
        %v9195 = vpop.permute.xlu0 %9194
        %9196 = vrot.lane.b32.xlu0 %v9145, 16
        %v9197 = vpop.permute.xlu0 %9196
        %9198 = vrot.lane.b32.xlu0 %v9146, 16
        %v9199 = vpop.permute.xlu0 %9198
        %9200 = vrot.lane.b32.xlu0 %v9147, 16
        %v9201 = vpop.permute.xlu0 %9200
        %9202 = vrot.lane.b32.xlu0 %v9148, 16
        %v9203 = vpop.permute.xlu0 %9202
        %9204 = vrot.lane.b32.xlu0 %v9149, 16
        %v9205 = vpop.permute.xlu0 %9204
        %9206 = vrot.lane.b32.xlu0 %v9150, 16
        %v9207 = vpop.permute.xlu0 %9206
        %9208 = vrot.lane.b32.xlu0 %v9151, 16
        %v9209 = vpop.permute.xlu0 %9208
        %9210 = vrot.lane.b32.xlu0 %v9152, 16
        %v9211 = vpop.permute.xlu0 %9210
        %9212 = vrot.lane.b32.xlu0 %v9153, 16
        %v9213 = vpop.permute.xlu0 %9212
        %9214 = vrot.lane.b32.xlu0 %v9154, 16
        %v9215 = vpop.permute.xlu0 %9214
        %9216 = vrot.lane.b32.xlu0 %v9155, 16
        %v9217 = vpop.permute.xlu0 %9216
        %9218 = vrot.lane.b32.xlu0 %v9156, 16
        %v9219 = vpop.permute.xlu0 %9218
        %9220 = vrot.lane.b32.xlu0 %v9157, 16
        %v9221 = vpop.permute.xlu0 %9220
        %9238 = vrot.lane.b32.xlu0 %v9158, 16
        %v9239 = vpop.permute.xlu0 %9238
        %9240 = vrot.lane.b32.xlu0 %v9159, 16
        %v9241 = vpop.permute.xlu0 %9240
        %9242 = vrot.lane.b32.xlu0 %v9160, 16
        %v9243 = vpop.permute.xlu0 %9242
        %9244 = vrot.lane.b32.xlu0 %v9161, 16
        %v9245 = vpop.permute.xlu0 %9244
        %9246 = vrot.lane.b32.xlu0 %v9162, 16
        %v9247 = vpop.permute.xlu0 %9246
        %9248 = vrot.lane.b32.xlu0 %v9163, 16
        %v9249 = vpop.permute.xlu0 %9248
        %9250 = vrot.lane.b32.xlu0 %v9164, 16
        %v9251 = vpop.permute.xlu0 %9250
        %9252 = vrot.lane.b32.xlu0 %v9165, 16
        %v9253 = vpop.permute.xlu0 %9252
        %9254 = vrot.lane.b32.xlu0 %v9166, 16
        %v9255 = vpop.permute.xlu0 %9254
        %9256 = vrot.lane.b32.xlu0 %v9167, 16
        %v9257 = vpop.permute.xlu0 %9256
        %9258 = vrot.lane.b32.xlu0 %v9168, 16
        %v9259 = vpop.permute.xlu0 %9258
        %9260 = vrot.lane.b32.xlu0 %v9169, 16
        %v9261 = vpop.permute.xlu0 %9260
        %9262 = vrot.lane.b32.xlu0 %v9170, 16
        %v9263 = vpop.permute.xlu0 %9262
        %9264 = vrot.lane.b32.xlu0 %v9171, 16
        %v9265 = vpop.permute.xlu0 %9264
        %9266 = vrot.lane.b32.xlu0 %v9172, 16
        %v9267 = vpop.permute.xlu0 %9266
        %9268 = vrot.lane.b32.xlu0 %v9173, 16
        %v9269 = vpop.permute.xlu0 %9268
        %v9271 = vsel %vm307, %v9191, 0
        %v9274 = vsel %vm307, %v9193, 0
        %v9277 = vsel %vm307, %v9195, 0
        %v9280 = vsel %vm307, %v9197, 0
        %v9283 = vsel %vm307, %v9199, 0
        %v9286 = vsel %vm307, %v9201, 0
        %v9289 = vsel %vm307, %v9203, 0
        %v9292 = vsel %vm307, %v9205, 0
        %v9295 = vsel %vm307, %v9207, 0
        %v9298 = vsel %vm307, %v9209, 0
        %v9301 = vsel %vm307, %v9211, 0
        %v9304 = vsel %vm307, %v9213, 0
        %v9307 = vsel %vm307, %v9215, 0
        %v9310 = vsel %vm307, %v9217, 0
        %v9313 = vsel %vm307, %v9219, 0
        %v9316 = vsel %vm307, %v9221, 0
        %v9319 = vsel %vm307, %v9239, 0
        %v9322 = vsel %vm307, %v9241, 0
        %v9325 = vsel %vm307, %v9243, 0
        %v9328 = vsel %vm307, %v9245, 0
        %v9331 = vsel %vm307, %v9247, 0
        %v9334 = vsel %vm307, %v9249, 0
        %v9337 = vsel %vm307, %v9251, 0
        %v9340 = vsel %vm307, %v9253, 0
        %v9343 = vsel %vm307, %v9255, 0
        %v9346 = vsel %vm307, %v9257, 0
        %v9349 = vsel %vm307, %v9259, 0
        %v9352 = vsel %vm307, %v9261, 0
        %v9355 = vsel %vm307, %v9263, 0
        %v9358 = vsel %vm307, %v9265, 0
        %v9361 = vsel %vm307, %v9267, 0
        %v9364 = vsel %vm307, %v9269, 0
        %9366 = vmatpush.bf16.xpose.msra.mxu0 %v9340
        %9367 = vmatpush.bf16.xpose.msra.mxu0 %v9337
        %9368 = vmatpush.bf16.xpose.msra.mxu0 %v9334
        %9369 = vmatpush.bf16.xpose.msra.mxu0 %v9331
        %9370 = vmatpush.bf16.xpose.msra.mxu0 %v9328
        %9371 = vmatpush.bf16.xpose.msra.mxu0 %v9325
        %9372 = vmatpush.bf16.xpose.msra.mxu0 %v9322
        %9373 = vmatpush.bf16.xpose.msra.mxu0 %v9319
        %9374 = vmatmul.bf16.gmra.mxu0 %v9271
        %v9375 = vpop.f32.mrf.mxu0
        %v9376 = vadd.f32 0.0, %v9375
        %v9377 = vpop.f32.mrf.mxu0
        %v9378 = vadd.f32 0.0, %v9377
        %9379 = vmatmul.bf16.gmra.mxu0 %v9274
        %v9380 = vpop.f32.mrf.mxu0
        %v9381 = vadd.f32 0.0, %v9380
        %v9382 = vpop.f32.mrf.mxu0
        %v9383 = vadd.f32 0.0, %v9382
        %9384 = vmatmul.bf16.gmra.mxu0 %v9277
        %v9385 = vpop.f32.mrf.mxu0
        %v9386 = vadd.f32 0.0, %v9385
        %v9387 = vpop.f32.mrf.mxu0
        %v9388 = vadd.f32 0.0, %v9387
        %9389 = vmatmul.bf16.gmra.mxu0 %v9280
        %v9390 = vpop.f32.mrf.mxu0
        %v9391 = vadd.f32 0.0, %v9390
        %v9392 = vpop.f32.mrf.mxu0
        %v9393 = vadd.f32 0.0, %v9392
        %9394 = vmatmul.bf16.gmra.mxu0 %v9283
        %v9395 = vpop.f32.mrf.mxu0
        %v9396 = vadd.f32 0.0, %v9395
        %v9397 = vpop.f32.mrf.mxu0
        %v9398 = vadd.f32 0.0, %v9397
        %9399 = vmatmul.bf16.gmra.mxu0 %v9286
        %v9400 = vpop.f32.mrf.mxu0
        %v9401 = vadd.f32 0.0, %v9400
        %v9402 = vpop.f32.mrf.mxu0
        %v9403 = vadd.f32 0.0, %v9402
        %9404 = vmatmul.bf16.gmra.mxu0 %v9289
        %v9405 = vpop.f32.mrf.mxu0
        %v9406 = vadd.f32 0.0, %v9405
        %v9407 = vpop.f32.mrf.mxu0
        %v9408 = vadd.f32 0.0, %v9407
        %9409 = vmatmul.bf16.gmra.mxu0 %v9292
        %v9410 = vpop.f32.mrf.mxu0
        %v9411 = vadd.f32 0.0, %v9410
        %v9412 = vpop.f32.mrf.mxu0
        %v9413 = vadd.f32 0.0, %v9412
        %9414 = vmatmul.bf16.gmra.mxu0 %v9295
        %v9415 = vpop.f32.mrf.mxu0
        %v9416 = vadd.f32 0.0, %v9415
        %v9417 = vpop.f32.mrf.mxu0
        %v9418 = vadd.f32 0.0, %v9417
        %9419 = vmatmul.bf16.gmra.mxu0 %v9298
        %v9420 = vpop.f32.mrf.mxu0
        %v9421 = vadd.f32 0.0, %v9420
        %v9422 = vpop.f32.mrf.mxu0
        %v9423 = vadd.f32 0.0, %v9422
        %9424 = vmatmul.bf16.gmra.mxu0 %v9301
        %v9425 = vpop.f32.mrf.mxu0
        %v9426 = vadd.f32 0.0, %v9425
        %v9427 = vpop.f32.mrf.mxu0
        %v9428 = vadd.f32 0.0, %v9427
        %9429 = vmatmul.bf16.gmra.mxu0 %v9304
        %v9430 = vpop.f32.mrf.mxu0
        %v9431 = vadd.f32 0.0, %v9430
        %v9432 = vpop.f32.mrf.mxu0
        %v9433 = vadd.f32 0.0, %v9432
        %9434 = vmatmul.bf16.gmra.mxu0 %v9307
        %v9435 = vpop.f32.mrf.mxu0
        %v9436 = vadd.f32 0.0, %v9435
        %v9437 = vpop.f32.mrf.mxu0
        %v9438 = vadd.f32 0.0, %v9437
        %9439 = vmatmul.bf16.gmra.mxu0 %v9310
        %v9440 = vpop.f32.mrf.mxu0
        %v9441 = vadd.f32 0.0, %v9440
        %v9442 = vpop.f32.mrf.mxu0
        %v9443 = vadd.f32 0.0, %v9442
        %9444 = vmatmul.bf16.gmra.mxu0 %v9313
        %v9445 = vpop.f32.mrf.mxu0
        %v9446 = vadd.f32 0.0, %v9445
        %v9447 = vpop.f32.mrf.mxu0
        %v9448 = vadd.f32 0.0, %v9447
        %9449 = vmatmul.bf16.gmra.mxu0 %v9316
        %v9450 = vpop.f32.mrf.mxu0
        %v9451 = vadd.f32 0.0, %v9450
        %v9452 = vpop.f32.mrf.mxu0
        %v9453 = vadd.f32 0.0, %v9452
        %9454 = vdwg.mxu0
        %9455 = vmatpush.bf16.xpose.msra.mxu0 %v9364
        %9456 = vmatpush.bf16.xpose.msra.mxu0 %v9361
        %9457 = vmatpush.bf16.xpose.msra.mxu0 %v9358
        %9458 = vmatpush.bf16.xpose.msra.mxu0 %v9355
        %9459 = vmatpush.bf16.xpose.msra.mxu0 %v9352
        %9460 = vmatpush.bf16.xpose.msra.mxu0 %v9349
        %9461 = vmatpush.bf16.xpose.msra.mxu0 %v9346
        %9462 = vmatpush.bf16.xpose.msra.mxu0 %v9343
        %9463 = vmatmul.bf16.gmra.mxu0 %v9271
        %v9464 = vpop.f32.mrf.mxu0
        %v9465 = vadd.f32 0.0, %v9464
        %v9466 = vpop.f32.mrf.mxu0
        %v9467 = vadd.f32 0.0, %v9466
        %9468 = vmatmul.bf16.gmra.mxu0 %v9274
        %v9469 = vpop.f32.mrf.mxu0
        %v9470 = vadd.f32 0.0, %v9469
        %v9471 = vpop.f32.mrf.mxu0
        %v9472 = vadd.f32 0.0, %v9471
        %9473 = vmatmul.bf16.gmra.mxu0 %v9277
        %v9474 = vpop.f32.mrf.mxu0
        %v9475 = vadd.f32 0.0, %v9474
        %v9476 = vpop.f32.mrf.mxu0
        %v9477 = vadd.f32 0.0, %v9476
        %9478 = vmatmul.bf16.gmra.mxu0 %v9280
        %v9479 = vpop.f32.mrf.mxu0
        %v9480 = vadd.f32 0.0, %v9479
        %v9481 = vpop.f32.mrf.mxu0
        %v9482 = vadd.f32 0.0, %v9481
        %9483 = vmatmul.bf16.gmra.mxu0 %v9283
        %v9484 = vpop.f32.mrf.mxu0
        %v9485 = vadd.f32 0.0, %v9484
        %v9486 = vpop.f32.mrf.mxu0
        %v9487 = vadd.f32 0.0, %v9486
        %9488 = vmatmul.bf16.gmra.mxu0 %v9286
        %v9489 = vpop.f32.mrf.mxu0
        %v9490 = vadd.f32 0.0, %v9489
        %v9491 = vpop.f32.mrf.mxu0
        %v9492 = vadd.f32 0.0, %v9491
        %9493 = vmatmul.bf16.gmra.mxu0 %v9289
        %v9494 = vpop.f32.mrf.mxu0
        %v9495 = vadd.f32 0.0, %v9494
        %v9496 = vpop.f32.mrf.mxu0
        %v9497 = vadd.f32 0.0, %v9496
        %9498 = vmatmul.bf16.gmra.mxu0 %v9292
        %v9499 = vpop.f32.mrf.mxu0
        %v9500 = vadd.f32 0.0, %v9499
        %v9501 = vpop.f32.mrf.mxu0
        %v9502 = vadd.f32 0.0, %v9501
        %9503 = vmatmul.bf16.gmra.mxu0 %v9295
        %v9504 = vpop.f32.mrf.mxu0
        %v9505 = vadd.f32 0.0, %v9504
        %v9506 = vpop.f32.mrf.mxu0
        %v9507 = vadd.f32 0.0, %v9506
        %9508 = vmatmul.bf16.gmra.mxu0 %v9298
        %v9509 = vpop.f32.mrf.mxu0
        %v9510 = vadd.f32 0.0, %v9509
        %v9511 = vpop.f32.mrf.mxu0
        %v9512 = vadd.f32 0.0, %v9511
        %9513 = vmatmul.bf16.gmra.mxu0 %v9301
        %v9514 = vpop.f32.mrf.mxu0
        %v9515 = vadd.f32 0.0, %v9514
        %v9516 = vpop.f32.mrf.mxu0
        %v9517 = vadd.f32 0.0, %v9516
        %9518 = vmatmul.bf16.gmra.mxu0 %v9304
        %v9519 = vpop.f32.mrf.mxu0
        %v9520 = vadd.f32 0.0, %v9519
        %v9521 = vpop.f32.mrf.mxu0
        %v9522 = vadd.f32 0.0, %v9521
        %9523 = vmatmul.bf16.gmra.mxu0 %v9307
        %v9524 = vpop.f32.mrf.mxu0
        %v9525 = vadd.f32 0.0, %v9524
        %v9526 = vpop.f32.mrf.mxu0
        %v9527 = vadd.f32 0.0, %v9526
        %9528 = vmatmul.bf16.gmra.mxu0 %v9310
        %v9529 = vpop.f32.mrf.mxu0
        %v9530 = vadd.f32 0.0, %v9529
        %v9531 = vpop.f32.mrf.mxu0
        %v9532 = vadd.f32 0.0, %v9531
        %9533 = vmatmul.bf16.gmra.mxu0 %v9313
        %v9534 = vpop.f32.mrf.mxu0
        %v9535 = vadd.f32 0.0, %v9534
        %v9536 = vpop.f32.mrf.mxu0
        %v9537 = vadd.f32 0.0, %v9536
        %9538 = vmatmul.bf16.gmra.mxu0 %v9316
        %v9539 = vpop.f32.mrf.mxu0
        %v9540 = vadd.f32 0.0, %v9539
        %v9541 = vpop.f32.mrf.mxu0
        %v9542 = vadd.f32 0.0, %v9541
        %9543 = vdwg.mxu0
        %v9544 = vmax.f32 %v9376, %v9465
        %9545 = vmax.xlane.f32.xlu0 %v9544
        %v9546 = vpop.xlane.xlu0 %9545
        %v9547 = vmax.f32 %v9378, %v9467
        %9548 = vmax.xlane.f32.xlu0 %v9547
        %v9549 = vpop.xlane.xlu0 %9548
        %v9550 = vmax.f32 %v9381, %v9470
        %9551 = vmax.xlane.f32.xlu0 %v9550
        %v9552 = vpop.xlane.xlu0 %9551
        %v9553 = vmax.f32 %v9383, %v9472
        %9554 = vmax.xlane.f32.xlu0 %v9553
        %v9555 = vpop.xlane.xlu0 %9554
        %v9556 = vmax.f32 %v9386, %v9475
        %9557 = vmax.xlane.f32.xlu0 %v9556
        %v9558 = vpop.xlane.xlu0 %9557
        %v9559 = vmax.f32 %v9388, %v9477
        %9560 = vmax.xlane.f32.xlu0 %v9559
        %v9561 = vpop.xlane.xlu0 %9560
        %v9562 = vmax.f32 %v9391, %v9480
        %9563 = vmax.xlane.f32.xlu0 %v9562
        %v9564 = vpop.xlane.xlu0 %9563
        %v9565 = vmax.f32 %v9393, %v9482
        %9566 = vmax.xlane.f32.xlu0 %v9565
        %v9567 = vpop.xlane.xlu0 %9566
        %v9568 = vmax.f32 %v9396, %v9485
        %9569 = vmax.xlane.f32.xlu0 %v9568
        %v9570 = vpop.xlane.xlu0 %9569
        %v9571 = vmax.f32 %v9398, %v9487
        %9572 = vmax.xlane.f32.xlu0 %v9571
        %v9573 = vpop.xlane.xlu0 %9572
        %v9574 = vmax.f32 %v9401, %v9490
        %9575 = vmax.xlane.f32.xlu0 %v9574
        %v9576 = vpop.xlane.xlu0 %9575
        %v9577 = vmax.f32 %v9403, %v9492
        %9578 = vmax.xlane.f32.xlu0 %v9577
        %v9579 = vpop.xlane.xlu0 %9578
        %v9580 = vmax.f32 %v9406, %v9495
        %9581 = vmax.xlane.f32.xlu0 %v9580
        %v9582 = vpop.xlane.xlu0 %9581
        %v9583 = vmax.f32 %v9408, %v9497
        %9584 = vmax.xlane.f32.xlu0 %v9583
        %v9585 = vpop.xlane.xlu0 %9584
        %v9586 = vmax.f32 %v9411, %v9500
        %9587 = vmax.xlane.f32.xlu0 %v9586
        %v9588 = vpop.xlane.xlu0 %9587
        %v9589 = vmax.f32 %v9413, %v9502
        %9590 = vmax.xlane.f32.xlu0 %v9589
        %v9591 = vpop.xlane.xlu0 %9590
        %v9592 = vmax.f32 %v9416, %v9505
        %9593 = vmax.xlane.f32.xlu0 %v9592
        %v9594 = vpop.xlane.xlu0 %9593
        %v9595 = vmax.f32 %v9418, %v9507
        %9596 = vmax.xlane.f32.xlu0 %v9595
        %v9597 = vpop.xlane.xlu0 %9596
        %v9598 = vmax.f32 %v9421, %v9510
        %9599 = vmax.xlane.f32.xlu0 %v9598
        %v9600 = vpop.xlane.xlu0 %9599
        %v9601 = vmax.f32 %v9423, %v9512
        %9602 = vmax.xlane.f32.xlu0 %v9601
        %v9603 = vpop.xlane.xlu0 %9602
        %v9604 = vmax.f32 %v9426, %v9515
        %9605 = vmax.xlane.f32.xlu0 %v9604
        %v9606 = vpop.xlane.xlu0 %9605
        %v9607 = vmax.f32 %v9428, %v9517
        %9608 = vmax.xlane.f32.xlu0 %v9607
        %v9609 = vpop.xlane.xlu0 %9608
        %v9610 = vmax.f32 %v9431, %v9520
        %9611 = vmax.xlane.f32.xlu0 %v9610
        %v9612 = vpop.xlane.xlu0 %9611
        %v9613 = vmax.f32 %v9433, %v9522
        %9614 = vmax.xlane.f32.xlu0 %v9613
        %v9615 = vpop.xlane.xlu0 %9614
        %v9616 = vmax.f32 %v9436, %v9525
        %9617 = vmax.xlane.f32.xlu0 %v9616
        %v9618 = vpop.xlane.xlu0 %9617
        %v9619 = vmax.f32 %v9438, %v9527
        %9620 = vmax.xlane.f32.xlu0 %v9619
        %v9621 = vpop.xlane.xlu0 %9620
        %v9622 = vmax.f32 %v9441, %v9530
        %9623 = vmax.xlane.f32.xlu0 %v9622
        %v9624 = vpop.xlane.xlu0 %9623
        %v9625 = vmax.f32 %v9443, %v9532
        %9626 = vmax.xlane.f32.xlu0 %v9625
        %v9627 = vpop.xlane.xlu0 %9626
        %v9628 = vmax.f32 %v9446, %v9535
        %9629 = vmax.xlane.f32.xlu0 %v9628
        %v9630 = vpop.xlane.xlu0 %9629
        %v9631 = vmax.f32 %v9448, %v9537
        %9632 = vmax.xlane.f32.xlu0 %v9631
        %v9633 = vpop.xlane.xlu0 %9632
        %v9634 = vmax.f32 %v9451, %v9540
        %9635 = vmax.xlane.f32.xlu0 %v9634
        %v9636 = vpop.xlane.xlu0 %9635
        %v9637 = vmax.f32 %v9453, %v9542
        %9638 = vmax.xlane.f32.xlu0 %v9637
        %v9639 = vpop.xlane.xlu0 %9638
        %v9640 = vsub.f32 %v9376, %v9546
        %v9641 = vsub.f32 %v9465, %v9546
        %v9642 = vsub.f32 %v9378, %v9549
        %v9643 = vsub.f32 %v9467, %v9549
        %v9644 = vsub.f32 %v9381, %v9552
        %v9645 = vsub.f32 %v9470, %v9552
        %v9646 = vsub.f32 %v9383, %v9555
        %v9647 = vsub.f32 %v9472, %v9555
        %v9648 = vsub.f32 %v9386, %v9558
        %v9649 = vsub.f32 %v9475, %v9558
        %v9650 = vsub.f32 %v9388, %v9561
        %v9651 = vsub.f32 %v9477, %v9561
        %v9652 = vsub.f32 %v9391, %v9564
        %v9653 = vsub.f32 %v9480, %v9564
        %v9654 = vsub.f32 %v9393, %v9567
        %v9655 = vsub.f32 %v9482, %v9567
        %v9656 = vsub.f32 %v9396, %v9570
        %v9657 = vsub.f32 %v9485, %v9570
        %v9658 = vsub.f32 %v9398, %v9573
        %v9659 = vsub.f32 %v9487, %v9573
        %v9660 = vsub.f32 %v9401, %v9576
        %v9661 = vsub.f32 %v9490, %v9576
        %v9662 = vsub.f32 %v9403, %v9579
        %v9663 = vsub.f32 %v9492, %v9579
        %v9664 = vsub.f32 %v9406, %v9582
        %v9665 = vsub.f32 %v9495, %v9582
        %v9666 = vsub.f32 %v9408, %v9585
        %v9667 = vsub.f32 %v9497, %v9585
        %v9668 = vsub.f32 %v9411, %v9588
        %v9669 = vsub.f32 %v9500, %v9588
        %v9670 = vsub.f32 %v9413, %v9591
        %v9671 = vsub.f32 %v9502, %v9591
        %v9672 = vsub.f32 %v9416, %v9594
        %v9673 = vsub.f32 %v9505, %v9594
        %v9674 = vsub.f32 %v9418, %v9597
        %v9675 = vsub.f32 %v9507, %v9597
        %v9676 = vsub.f32 %v9421, %v9600
        %v9677 = vsub.f32 %v9510, %v9600
        %v9678 = vsub.f32 %v9423, %v9603
        %v9679 = vsub.f32 %v9512, %v9603
        %v9680 = vsub.f32 %v9426, %v9606
        %v9681 = vsub.f32 %v9515, %v9606
        %v9682 = vsub.f32 %v9428, %v9609
        %v9683 = vsub.f32 %v9517, %v9609
        %v9684 = vsub.f32 %v9431, %v9612
        %v9685 = vsub.f32 %v9520, %v9612
        %v9686 = vsub.f32 %v9433, %v9615
        %v9687 = vsub.f32 %v9522, %v9615
        %v9688 = vsub.f32 %v9436, %v9618
        %v9689 = vsub.f32 %v9525, %v9618
        %v9690 = vsub.f32 %v9438, %v9621
        %v9691 = vsub.f32 %v9527, %v9621
        %v9692 = vsub.f32 %v9441, %v9624
        %v9693 = vsub.f32 %v9530, %v9624
        %v9694 = vsub.f32 %v9443, %v9627
        %v9695 = vsub.f32 %v9532, %v9627
        %v9696 = vsub.f32 %v9446, %v9630
        %v9697 = vsub.f32 %v9535, %v9630
        %v9698 = vsub.f32 %v9448, %v9633
        %v9699 = vsub.f32 %v9537, %v9633
        %v9700 = vsub.f32 %v9451, %v9636
        %v9701 = vsub.f32 %v9540, %v9636
        %v9702 = vsub.f32 %v9453, %v9639
        %v9703 = vsub.f32 %v9542, %v9639
        %v9704 = vmul.f32 %v9640, 1.442695
        %v9705 = vpow.pop %v9704
        %v9706 = vmul.f32 %v9641, 1.442695
        %v9707 = vpow.pop %v9706
        %v9708 = vmul.f32 %v9642, 1.442695
        %v9709 = vpow.pop %v9708
        %v9710 = vmul.f32 %v9643, 1.442695
        %v9711 = vpow.pop %v9710
        %v9712 = vmul.f32 %v9644, 1.442695
        %v9713 = vpow.pop %v9712
        %v9714 = vmul.f32 %v9645, 1.442695
        %v9715 = vpow.pop %v9714
        %v9716 = vmul.f32 %v9646, 1.442695
        %v9717 = vpow.pop %v9716
        %v9718 = vmul.f32 %v9647, 1.442695
        %v9719 = vpow.pop %v9718
        %v9720 = vmul.f32 %v9648, 1.442695
        %v9721 = vpow.pop %v9720
        %v9722 = vmul.f32 %v9649, 1.442695
        %v9723 = vpow.pop %v9722
        %v9724 = vmul.f32 %v9650, 1.442695
        %v9725 = vpow.pop %v9724
        %v9726 = vmul.f32 %v9651, 1.442695
        %v9727 = vpow.pop %v9726
        %v9728 = vmul.f32 %v9652, 1.442695
        %v9729 = vpow.pop %v9728
        %v9730 = vmul.f32 %v9653, 1.442695
        %v9731 = vpow.pop %v9730
        %v9732 = vmul.f32 %v9654, 1.442695
        %v9733 = vpow.pop %v9732
        %v9734 = vmul.f32 %v9655, 1.442695
        %v9735 = vpow.pop %v9734
        %v9736 = vmul.f32 %v9656, 1.442695
        %v9737 = vpow.pop %v9736
        %v9738 = vmul.f32 %v9657, 1.442695
        %v9739 = vpow.pop %v9738
        %v9740 = vmul.f32 %v9658, 1.442695
        %v9741 = vpow.pop %v9740
        %v9742 = vmul.f32 %v9659, 1.442695
        %v9743 = vpow.pop %v9742
        %v9744 = vmul.f32 %v9660, 1.442695
        %v9745 = vpow.pop %v9744
        %v9746 = vmul.f32 %v9661, 1.442695
        %v9747 = vpow.pop %v9746
        %v9748 = vmul.f32 %v9662, 1.442695
        %v9749 = vpow.pop %v9748
        %v9750 = vmul.f32 %v9663, 1.442695
        %v9751 = vpow.pop %v9750
        %v9752 = vmul.f32 %v9664, 1.442695
        %v9753 = vpow.pop %v9752
        %v9754 = vmul.f32 %v9665, 1.442695
        %v9755 = vpow.pop %v9754
        %v9756 = vmul.f32 %v9666, 1.442695
        %v9757 = vpow.pop %v9756
        %v9758 = vmul.f32 %v9667, 1.442695
        %v9759 = vpow.pop %v9758
        %v9760 = vmul.f32 %v9668, 1.442695
        %v9761 = vpow.pop %v9760
        %v9762 = vmul.f32 %v9669, 1.442695
        %v9763 = vpow.pop %v9762
        %v9764 = vmul.f32 %v9670, 1.442695
        %v9765 = vpow.pop %v9764
        %v9766 = vmul.f32 %v9671, 1.442695
        %v9767 = vpow.pop %v9766
        %v9768 = vmul.f32 %v9672, 1.442695
        %v9769 = vpow.pop %v9768
        %v9770 = vmul.f32 %v9673, 1.442695
        %v9771 = vpow.pop %v9770
        %v9772 = vmul.f32 %v9674, 1.442695
        %v9773 = vpow.pop %v9772
        %v9774 = vmul.f32 %v9675, 1.442695
        %v9775 = vpow.pop %v9774
        %v9776 = vmul.f32 %v9676, 1.442695
        %v9777 = vpow.pop %v9776
        %v9778 = vmul.f32 %v9677, 1.442695
        %v9779 = vpow.pop %v9778
        %v9780 = vmul.f32 %v9678, 1.442695
        %v9781 = vpow.pop %v9780
        %v9782 = vmul.f32 %v9679, 1.442695
        %v9783 = vpow.pop %v9782
        %v9784 = vmul.f32 %v9680, 1.442695
        %v9785 = vpow.pop %v9784
        %v9786 = vmul.f32 %v9681, 1.442695
        %v9787 = vpow.pop %v9786
        %v9788 = vmul.f32 %v9682, 1.442695
        %v9789 = vpow.pop %v9788
        %v9790 = vmul.f32 %v9683, 1.442695
        %v9791 = vpow.pop %v9790
        %v9792 = vmul.f32 %v9684, 1.442695
        %v9793 = vpow.pop %v9792
        %v9794 = vmul.f32 %v9685, 1.442695
        %v9795 = vpow.pop %v9794
        %v9796 = vmul.f32 %v9686, 1.442695
        %v9797 = vpow.pop %v9796
        %v9798 = vmul.f32 %v9687, 1.442695
        %v9799 = vpow.pop %v9798
        %v9800 = vmul.f32 %v9688, 1.442695
        %v9801 = vpow.pop %v9800
        %v9802 = vmul.f32 %v9689, 1.442695
        %v9803 = vpow.pop %v9802
        %v9804 = vmul.f32 %v9690, 1.442695
        %v9805 = vpow.pop %v9804
        %v9806 = vmul.f32 %v9691, 1.442695
        %v9807 = vpow.pop %v9806
        %v9808 = vmul.f32 %v9692, 1.442695
        %v9809 = vpow.pop %v9808
        %v9810 = vmul.f32 %v9693, 1.442695
        %v9811 = vpow.pop %v9810
        %v9812 = vmul.f32 %v9694, 1.442695
        %v9813 = vpow.pop %v9812
        %v9814 = vmul.f32 %v9695, 1.442695
        %v9815 = vpow.pop %v9814
        %v9816 = vmul.f32 %v9696, 1.442695
        %v9817 = vpow.pop %v9816
        %v9818 = vmul.f32 %v9697, 1.442695
        %v9819 = vpow.pop %v9818
        %v9820 = vmul.f32 %v9698, 1.442695
        %v9821 = vpow.pop %v9820
        %v9822 = vmul.f32 %v9699, 1.442695
        %v9823 = vpow.pop %v9822
        %v9824 = vmul.f32 %v9700, 1.442695
        %v9825 = vpow.pop %v9824
        %v9826 = vmul.f32 %v9701, 1.442695
        %v9827 = vpow.pop %v9826
        %v9828 = vmul.f32 %v9702, 1.442695
        %v9829 = vpow.pop %v9828
        %v9830 = vmul.f32 %v9703, 1.442695
        %v9831 = vpow.pop %v9830
        %v9832 = vadd.f32 %v9705, %v9707
        %9833 = vadd.xlane.f32.xlu0 %v9832
        %v9834 = vpop.xlane.xlu0 %9833
        %v9835 = vadd.f32 %v9709, %v9711
        %9836 = vadd.xlane.f32.xlu0 %v9835
        %v9837 = vpop.xlane.xlu0 %9836
        %v9838 = vadd.f32 %v9713, %v9715
        %9839 = vadd.xlane.f32.xlu0 %v9838
        %v9840 = vpop.xlane.xlu0 %9839
        %v9841 = vadd.f32 %v9717, %v9719
        %9842 = vadd.xlane.f32.xlu0 %v9841
        %v9843 = vpop.xlane.xlu0 %9842
        %v9844 = vadd.f32 %v9721, %v9723
        %9845 = vadd.xlane.f32.xlu0 %v9844
        %v9846 = vpop.xlane.xlu0 %9845
        %v9847 = vadd.f32 %v9725, %v9727
        %9848 = vadd.xlane.f32.xlu0 %v9847
        %v9849 = vpop.xlane.xlu0 %9848
        %v9850 = vadd.f32 %v9729, %v9731
        %9851 = vadd.xlane.f32.xlu0 %v9850
        %v9852 = vpop.xlane.xlu0 %9851
        %v9853 = vadd.f32 %v9733, %v9735
        %9854 = vadd.xlane.f32.xlu0 %v9853
        %v9855 = vpop.xlane.xlu0 %9854
        %v9856 = vadd.f32 %v9737, %v9739
        %9857 = vadd.xlane.f32.xlu0 %v9856
        %v9858 = vpop.xlane.xlu0 %9857
        %v9859 = vadd.f32 %v9741, %v9743
        %9860 = vadd.xlane.f32.xlu0 %v9859
        %v9861 = vpop.xlane.xlu0 %9860
        %v9862 = vadd.f32 %v9745, %v9747
        %9863 = vadd.xlane.f32.xlu0 %v9862
        %v9864 = vpop.xlane.xlu0 %9863
        %v9865 = vadd.f32 %v9749, %v9751
        %9866 = vadd.xlane.f32.xlu0 %v9865
        %v9867 = vpop.xlane.xlu0 %9866
        %v9868 = vadd.f32 %v9753, %v9755
        %9869 = vadd.xlane.f32.xlu0 %v9868
        %v9870 = vpop.xlane.xlu0 %9869
        %v9871 = vadd.f32 %v9757, %v9759
        %9872 = vadd.xlane.f32.xlu0 %v9871
        %v9873 = vpop.xlane.xlu0 %9872
        %v9874 = vadd.f32 %v9761, %v9763
        %9875 = vadd.xlane.f32.xlu0 %v9874
        %v9876 = vpop.xlane.xlu0 %9875
        %v9877 = vadd.f32 %v9765, %v9767
        %9878 = vadd.xlane.f32.xlu0 %v9877
        %v9879 = vpop.xlane.xlu0 %9878
        %v9880 = vadd.f32 %v9769, %v9771
        %9881 = vadd.xlane.f32.xlu0 %v9880
        %v9882 = vpop.xlane.xlu0 %9881
        %v9883 = vadd.f32 %v9773, %v9775
        %9884 = vadd.xlane.f32.xlu0 %v9883
        %v9885 = vpop.xlane.xlu0 %9884
        %v9886 = vadd.f32 %v9777, %v9779
        %9887 = vadd.xlane.f32.xlu0 %v9886
        %v9888 = vpop.xlane.xlu0 %9887
        %v9889 = vadd.f32 %v9781, %v9783
        %9890 = vadd.xlane.f32.xlu0 %v9889
        %v9891 = vpop.xlane.xlu0 %9890
        %v9892 = vadd.f32 %v9785, %v9787
        %9893 = vadd.xlane.f32.xlu0 %v9892
        %v9894 = vpop.xlane.xlu0 %9893
        %v9895 = vadd.f32 %v9789, %v9791
        %9896 = vadd.xlane.f32.xlu0 %v9895
        %v9897 = vpop.xlane.xlu0 %9896
        %v9898 = vadd.f32 %v9793, %v9795
        %9899 = vadd.xlane.f32.xlu0 %v9898
        %v9900 = vpop.xlane.xlu0 %9899
        %v9901 = vadd.f32 %v9797, %v9799
        %9902 = vadd.xlane.f32.xlu0 %v9901
        %v9903 = vpop.xlane.xlu0 %9902
        %v9904 = vadd.f32 %v9801, %v9803
        %9905 = vadd.xlane.f32.xlu0 %v9904
        %v9906 = vpop.xlane.xlu0 %9905
        %v9907 = vadd.f32 %v9805, %v9807
        %9908 = vadd.xlane.f32.xlu0 %v9907
        %v9909 = vpop.xlane.xlu0 %9908
        %v9910 = vadd.f32 %v9809, %v9811
        %9911 = vadd.xlane.f32.xlu0 %v9910
        %v9912 = vpop.xlane.xlu0 %9911
        %v9913 = vadd.f32 %v9813, %v9815
        %9914 = vadd.xlane.f32.xlu0 %v9913
        %v9915 = vpop.xlane.xlu0 %9914
        %v9916 = vadd.f32 %v9817, %v9819
        %9917 = vadd.xlane.f32.xlu0 %v9916
        %v9918 = vpop.xlane.xlu0 %9917
        %v9919 = vadd.f32 %v9821, %v9823
        %9920 = vadd.xlane.f32.xlu0 %v9919
        %v9921 = vpop.xlane.xlu0 %9920
        %v9922 = vadd.f32 %v9825, %v9827
        %9923 = vadd.xlane.f32.xlu0 %v9922
        %v9924 = vpop.xlane.xlu0 %9923
        %v9925 = vadd.f32 %v9829, %v9831
        %9926 = vadd.xlane.f32.xlu0 %v9925
        %v9927 = vpop.xlane.xlu0 %9926
        %v9928 = vpack.c.bf16 %v9709, %v9705
        %v9929 = vpack.c.bf16 %v9711, %v9707
        %v9930 = vpack.c.bf16 %v9717, %v9713
        %v9931 = vpack.c.bf16 %v9719, %v9715
        %v9932 = vpack.c.bf16 %v9725, %v9721
        %v9933 = vpack.c.bf16 %v9727, %v9723
        %v9934 = vpack.c.bf16 %v9733, %v9729
        %v9935 = vpack.c.bf16 %v9735, %v9731
        %v9936 = vpack.c.bf16 %v9741, %v9737
        %v9937 = vpack.c.bf16 %v9743, %v9739
        %v9938 = vpack.c.bf16 %v9749, %v9745
        %v9939 = vpack.c.bf16 %v9751, %v9747
        %v9940 = vpack.c.bf16 %v9757, %v9753
        %v9941 = vpack.c.bf16 %v9759, %v9755
        %v9942 = vpack.c.bf16 %v9765, %v9761
        %v9943 = vpack.c.bf16 %v9767, %v9763
        %v9944 = vpack.c.bf16 %v9773, %v9769
        %v9945 = vpack.c.bf16 %v9775, %v9771
        %v9946 = vpack.c.bf16 %v9781, %v9777
        %v9947 = vpack.c.bf16 %v9783, %v9779
        %v9948 = vpack.c.bf16 %v9789, %v9785
        %v9949 = vpack.c.bf16 %v9791, %v9787
        %v9950 = vpack.c.bf16 %v9797, %v9793
        %v9951 = vpack.c.bf16 %v9799, %v9795
        %v9952 = vpack.c.bf16 %v9805, %v9801
        %v9953 = vpack.c.bf16 %v9807, %v9803
        %v9954 = vpack.c.bf16 %v9813, %v9809
        %v9955 = vpack.c.bf16 %v9815, %v9811
        %v9956 = vpack.c.bf16 %v9821, %v9817
        %v9957 = vpack.c.bf16 %v9823, %v9819
        %v9958 = vpack.c.bf16 %v9829, %v9825
        %v9959 = vpack.c.bf16 %v9831, %v9827
        %9976 = vmatpush.bf16.msra.mxu0 %v9253
        %9977 = vmatpush.bf16.msra.mxu0 %v9251
        %9978 = vmatpush.bf16.msra.mxu0 %v9249
        %9979 = vmatpush.bf16.msra.mxu0 %v9247
        %9980 = vmatpush.bf16.msra.mxu0 %v9245
        %9981 = vmatpush.bf16.msra.mxu0 %v9243
        %9982 = vmatpush.bf16.msra.mxu0 %v9241
        %9983 = vmatpush.bf16.msra.mxu0 %v9239
        %9984 = vmatmul.bf16.gmra.mxu0 %v9928
        %v9985 = vpop.f32.mrf.mxu0
        %v9986 = vadd.f32 0.0, %v9985
        %v9987 = vpop.f32.mrf.mxu0
        %v9988 = vadd.f32 0.0, %v9987
        %9989 = vmatmul.bf16.gmra.mxu0 %v9930
        %v9990 = vpop.f32.mrf.mxu0
        %v9991 = vadd.f32 0.0, %v9990
        %v9992 = vpop.f32.mrf.mxu0
        %v9993 = vadd.f32 0.0, %v9992
        %9994 = vmatmul.bf16.gmra.mxu0 %v9932
        %v9995 = vpop.f32.mrf.mxu0
        %v9996 = vadd.f32 0.0, %v9995
        %v9997 = vpop.f32.mrf.mxu0
        %v9998 = vadd.f32 0.0, %v9997
        %9999 = vmatmul.bf16.gmra.mxu0 %v9934
        %v10000 = vpop.f32.mrf.mxu0
        %v10001 = vadd.f32 0.0, %v10000
        %v10002 = vpop.f32.mrf.mxu0
        %v10003 = vadd.f32 0.0, %v10002
        %10004 = vmatmul.bf16.gmra.mxu0 %v9936
        %v10005 = vpop.f32.mrf.mxu0
        %v10006 = vadd.f32 0.0, %v10005
        %v10007 = vpop.f32.mrf.mxu0
        %v10008 = vadd.f32 0.0, %v10007
        %10009 = vmatmul.bf16.gmra.mxu0 %v9938
        %v10010 = vpop.f32.mrf.mxu0
        %v10011 = vadd.f32 0.0, %v10010
        %v10012 = vpop.f32.mrf.mxu0
        %v10013 = vadd.f32 0.0, %v10012
        %10014 = vmatmul.bf16.gmra.mxu0 %v9940
        %v10015 = vpop.f32.mrf.mxu0
        %v10016 = vadd.f32 0.0, %v10015
        %v10017 = vpop.f32.mrf.mxu0
        %v10018 = vadd.f32 0.0, %v10017
        %10019 = vmatmul.bf16.gmra.mxu0 %v9942
        %v10020 = vpop.f32.mrf.mxu0
        %v10021 = vadd.f32 0.0, %v10020
        %v10022 = vpop.f32.mrf.mxu0
        %v10023 = vadd.f32 0.0, %v10022
        %10024 = vmatmul.bf16.gmra.mxu0 %v9944
        %v10025 = vpop.f32.mrf.mxu0
        %v10026 = vadd.f32 0.0, %v10025
        %v10027 = vpop.f32.mrf.mxu0
        %v10028 = vadd.f32 0.0, %v10027
        %10029 = vmatmul.bf16.gmra.mxu0 %v9946
        %v10030 = vpop.f32.mrf.mxu0
        %v10031 = vadd.f32 0.0, %v10030
        %v10032 = vpop.f32.mrf.mxu0
        %v10033 = vadd.f32 0.0, %v10032
        %10034 = vmatmul.bf16.gmra.mxu0 %v9948
        %v10035 = vpop.f32.mrf.mxu0
        %v10036 = vadd.f32 0.0, %v10035
        %v10037 = vpop.f32.mrf.mxu0
        %v10038 = vadd.f32 0.0, %v10037
        %10039 = vmatmul.bf16.gmra.mxu0 %v9950
        %v10040 = vpop.f32.mrf.mxu0
        %v10041 = vadd.f32 0.0, %v10040
        %v10042 = vpop.f32.mrf.mxu0
        %v10043 = vadd.f32 0.0, %v10042
        %10044 = vmatmul.bf16.gmra.mxu0 %v9952
        %v10045 = vpop.f32.mrf.mxu0
        %v10046 = vadd.f32 0.0, %v10045
        %v10047 = vpop.f32.mrf.mxu0
        %v10048 = vadd.f32 0.0, %v10047
        %10049 = vmatmul.bf16.gmra.mxu0 %v9954
        %v10050 = vpop.f32.mrf.mxu0
        %v10051 = vadd.f32 0.0, %v10050
        %v10052 = vpop.f32.mrf.mxu0
        %v10053 = vadd.f32 0.0, %v10052
        %10054 = vmatmul.bf16.gmra.mxu0 %v9956
        %v10055 = vpop.f32.mrf.mxu0
        %v10056 = vadd.f32 0.0, %v10055
        %v10057 = vpop.f32.mrf.mxu0
        %v10058 = vadd.f32 0.0, %v10057
        %10059 = vmatmul.bf16.gmra.mxu0 %v9958
        %v10060 = vpop.f32.mrf.mxu0
        %v10061 = vadd.f32 0.0, %v10060
        %v10062 = vpop.f32.mrf.mxu0
        %v10063 = vadd.f32 0.0, %v10062
        %10064 = vdwg.mxu0
        %10065 = vmatpush.bf16.msra.mxu0 %v9269
        %10066 = vmatpush.bf16.msra.mxu0 %v9267
        %10067 = vmatpush.bf16.msra.mxu0 %v9265
        %10068 = vmatpush.bf16.msra.mxu0 %v9263
        %10069 = vmatpush.bf16.msra.mxu0 %v9261
        %10070 = vmatpush.bf16.msra.mxu0 %v9259
        %10071 = vmatpush.bf16.msra.mxu0 %v9257
        %10072 = vmatpush.bf16.msra.mxu0 %v9255
        %10073 = vmatmul.bf16.gmra.mxu0 %v9929
        %v10074 = vpop.f32.mrf.mxu0
        %v10075 = vadd.f32 %v9986, %v10074
        %v10076 = vpop.f32.mrf.mxu0
        %v10077 = vadd.f32 %v9988, %v10076
        %10078 = vmatmul.bf16.gmra.mxu0 %v9931
        %v10079 = vpop.f32.mrf.mxu0
        %v10080 = vadd.f32 %v9991, %v10079
        %v10081 = vpop.f32.mrf.mxu0
        %v10082 = vadd.f32 %v9993, %v10081
        %10083 = vmatmul.bf16.gmra.mxu0 %v9933
        %v10084 = vpop.f32.mrf.mxu0
        %v10085 = vadd.f32 %v9996, %v10084
        %v10086 = vpop.f32.mrf.mxu0
        %v10087 = vadd.f32 %v9998, %v10086
        %10088 = vmatmul.bf16.gmra.mxu0 %v9935
        %v10089 = vpop.f32.mrf.mxu0
        %v10090 = vadd.f32 %v10001, %v10089
        %v10091 = vpop.f32.mrf.mxu0
        %v10092 = vadd.f32 %v10003, %v10091
        %10093 = vmatmul.bf16.gmra.mxu0 %v9937
        %v10094 = vpop.f32.mrf.mxu0
        %v10095 = vadd.f32 %v10006, %v10094
        %v10096 = vpop.f32.mrf.mxu0
        %v10097 = vadd.f32 %v10008, %v10096
        %10098 = vmatmul.bf16.gmra.mxu0 %v9939
        %v10099 = vpop.f32.mrf.mxu0
        %v10100 = vadd.f32 %v10011, %v10099
        %v10101 = vpop.f32.mrf.mxu0
        %v10102 = vadd.f32 %v10013, %v10101
        %10103 = vmatmul.bf16.gmra.mxu0 %v9941
        %v10104 = vpop.f32.mrf.mxu0
        %v10105 = vadd.f32 %v10016, %v10104
        %v10106 = vpop.f32.mrf.mxu0
        %v10107 = vadd.f32 %v10018, %v10106
        %10108 = vmatmul.bf16.gmra.mxu0 %v9943
        %v10109 = vpop.f32.mrf.mxu0
        %v10110 = vadd.f32 %v10021, %v10109
        %v10111 = vpop.f32.mrf.mxu0
        %v10112 = vadd.f32 %v10023, %v10111
        %10113 = vmatmul.bf16.gmra.mxu0 %v9945
        %v10114 = vpop.f32.mrf.mxu0
        %v10115 = vadd.f32 %v10026, %v10114
        %v10116 = vpop.f32.mrf.mxu0
        %v10117 = vadd.f32 %v10028, %v10116
        %10118 = vmatmul.bf16.gmra.mxu0 %v9947
        %v10119 = vpop.f32.mrf.mxu0
        %v10120 = vadd.f32 %v10031, %v10119
        %v10121 = vpop.f32.mrf.mxu0
        %v10122 = vadd.f32 %v10033, %v10121
        %10123 = vmatmul.bf16.gmra.mxu0 %v9949
        %v10124 = vpop.f32.mrf.mxu0
        %v10125 = vadd.f32 %v10036, %v10124
        %v10126 = vpop.f32.mrf.mxu0
        %v10127 = vadd.f32 %v10038, %v10126
        %10128 = vmatmul.bf16.gmra.mxu0 %v9951
        %v10129 = vpop.f32.mrf.mxu0
        %v10130 = vadd.f32 %v10041, %v10129
        %v10131 = vpop.f32.mrf.mxu0
        %v10132 = vadd.f32 %v10043, %v10131
        %10133 = vmatmul.bf16.gmra.mxu0 %v9953
        %v10134 = vpop.f32.mrf.mxu0
        %v10135 = vadd.f32 %v10046, %v10134
        %v10136 = vpop.f32.mrf.mxu0
        %v10137 = vadd.f32 %v10048, %v10136
        %10138 = vmatmul.bf16.gmra.mxu0 %v9955
        %v10139 = vpop.f32.mrf.mxu0
        %v10140 = vadd.f32 %v10051, %v10139
        %v10141 = vpop.f32.mrf.mxu0
        %v10142 = vadd.f32 %v10053, %v10141
        %10143 = vmatmul.bf16.gmra.mxu0 %v9957
        %v10144 = vpop.f32.mrf.mxu0
        %v10145 = vadd.f32 %v10056, %v10144
        %v10146 = vpop.f32.mrf.mxu0
        %v10147 = vadd.f32 %v10058, %v10146
        %10148 = vmatmul.bf16.gmra.mxu0 %v9959
        %v10149 = vpop.f32.mrf.mxu0
        %v10150 = vadd.f32 %v10061, %v10149
        %v10151 = vpop.f32.mrf.mxu0
        %v10152 = vadd.f32 %v10063, %v10151
        %10153 = vdwg.mxu0
        %v10154 = vrcp.pop %v9834
        %v10155 = vrcp.pop %v9837
        %v10156 = vrcp.pop %v9840
        %v10157 = vrcp.pop %v9843
        %v10158 = vrcp.pop %v9846
        %v10159 = vrcp.pop %v9849
        %v10160 = vrcp.pop %v9852
        %v10161 = vrcp.pop %v9855
        %v10162 = vrcp.pop %v9858
        %v10163 = vrcp.pop %v9861
        %v10164 = vrcp.pop %v9864
        %v10165 = vrcp.pop %v9867
        %v10166 = vrcp.pop %v9870
        %v10167 = vrcp.pop %v9873
        %v10168 = vrcp.pop %v9876
        %v10169 = vrcp.pop %v9879
        %v10170 = vrcp.pop %v9882
        %v10171 = vrcp.pop %v9885
        %v10172 = vrcp.pop %v9888
        %v10173 = vrcp.pop %v9891
        %v10174 = vrcp.pop %v9894
        %v10175 = vrcp.pop %v9897
        %v10176 = vrcp.pop %v9900
        %v10177 = vrcp.pop %v9903
        %v10178 = vrcp.pop %v9906
        %v10179 = vrcp.pop %v9909
        %v10180 = vrcp.pop %v9912
        %v10181 = vrcp.pop %v9915
        %v10182 = vrcp.pop %v9918
        %v10183 = vrcp.pop %v9921
        %v10184 = vrcp.pop %v9924
        %v10185 = vrcp.pop %v9927
        %v10186 = vmul.f32 %v10075, %v10154
        %v10187 = vmul.f32 %v10077, %v10155
        %v10188 = vmul.f32 %v10080, %v10156
        %v10189 = vmul.f32 %v10082, %v10157
        %v10190 = vmul.f32 %v10085, %v10158
        %v10191 = vmul.f32 %v10087, %v10159
        %v10192 = vmul.f32 %v10090, %v10160
        %v10193 = vmul.f32 %v10092, %v10161
        %v10194 = vmul.f32 %v10095, %v10162
        %v10195 = vmul.f32 %v10097, %v10163
        %v10196 = vmul.f32 %v10100, %v10164
        %v10197 = vmul.f32 %v10102, %v10165
        %v10198 = vmul.f32 %v10105, %v10166
        %v10199 = vmul.f32 %v10107, %v10167
        %v10200 = vmul.f32 %v10110, %v10168
        %v10201 = vmul.f32 %v10112, %v10169
        %v10202 = vmul.f32 %v10115, %v10170
        %v10203 = vmul.f32 %v10117, %v10171
        %v10204 = vmul.f32 %v10120, %v10172
        %v10205 = vmul.f32 %v10122, %v10173
        %v10206 = vmul.f32 %v10125, %v10174
        %v10207 = vmul.f32 %v10127, %v10175
        %v10208 = vmul.f32 %v10130, %v10176
        %v10209 = vmul.f32 %v10132, %v10177
        %v10210 = vmul.f32 %v10135, %v10178
        %v10211 = vmul.f32 %v10137, %v10179
        %v10212 = vmul.f32 %v10140, %v10180
        %v10213 = vmul.f32 %v10142, %v10181
        %v10214 = vmul.f32 %v10145, %v10182
        %v10215 = vmul.f32 %v10147, %v10183
        %v10216 = vmul.f32 %v10150, %v10184
        %v10217 = vmul.f32 %v10152, %v10185
        %10250 = vrot.lane.b32.xlu0 %v10186, 112
        %v10251 = vpop.permute.xlu0 %10250
        %10252 = vrot.lane.b32.xlu0 %v10187, 112
        %v10253 = vpop.permute.xlu0 %10252
        %10254 = vrot.lane.b32.xlu0 %v10188, 112
        %v10255 = vpop.permute.xlu0 %10254
        %10256 = vrot.lane.b32.xlu0 %v10189, 112
        %v10257 = vpop.permute.xlu0 %10256
        %10258 = vrot.lane.b32.xlu0 %v10190, 112
        %v10259 = vpop.permute.xlu0 %10258
        %10260 = vrot.lane.b32.xlu0 %v10191, 112
        %v10261 = vpop.permute.xlu0 %10260
        %10262 = vrot.lane.b32.xlu0 %v10192, 112
        %v10263 = vpop.permute.xlu0 %10262
        %10264 = vrot.lane.b32.xlu0 %v10193, 112
        %v10265 = vpop.permute.xlu0 %10264
        %10266 = vrot.lane.b32.xlu0 %v10194, 112
        %v10267 = vpop.permute.xlu0 %10266
        %10268 = vrot.lane.b32.xlu0 %v10195, 112
        %v10269 = vpop.permute.xlu0 %10268
        %10270 = vrot.lane.b32.xlu0 %v10196, 112
        %v10271 = vpop.permute.xlu0 %10270
        %10272 = vrot.lane.b32.xlu0 %v10197, 112
        %v10273 = vpop.permute.xlu0 %10272
        %10274 = vrot.lane.b32.xlu0 %v10198, 112
        %v10275 = vpop.permute.xlu0 %10274
        %10276 = vrot.lane.b32.xlu0 %v10199, 112
        %v10277 = vpop.permute.xlu0 %10276
        %10278 = vrot.lane.b32.xlu0 %v10200, 112
        %v10279 = vpop.permute.xlu0 %10278
        %10280 = vrot.lane.b32.xlu0 %v10201, 112
        %v10281 = vpop.permute.xlu0 %10280
        %10282 = vrot.lane.b32.xlu0 %v10202, 112
        %v10283 = vpop.permute.xlu0 %10282
        %10284 = vrot.lane.b32.xlu0 %v10203, 112
        %v10285 = vpop.permute.xlu0 %10284
        %10286 = vrot.lane.b32.xlu0 %v10204, 112
        %v10287 = vpop.permute.xlu0 %10286
        %10288 = vrot.lane.b32.xlu0 %v10205, 112
        %v10289 = vpop.permute.xlu0 %10288
        %10290 = vrot.lane.b32.xlu0 %v10206, 112
        %v10291 = vpop.permute.xlu0 %10290
        %10292 = vrot.lane.b32.xlu0 %v10207, 112
        %v10293 = vpop.permute.xlu0 %10292
        %10294 = vrot.lane.b32.xlu0 %v10208, 112
        %v10295 = vpop.permute.xlu0 %10294
        %10296 = vrot.lane.b32.xlu0 %v10209, 112
        %v10297 = vpop.permute.xlu0 %10296
        %10298 = vrot.lane.b32.xlu0 %v10210, 112
        %v10299 = vpop.permute.xlu0 %10298
        %10300 = vrot.lane.b32.xlu0 %v10211, 112
        %v10301 = vpop.permute.xlu0 %10300
        %10302 = vrot.lane.b32.xlu0 %v10212, 112
        %v10303 = vpop.permute.xlu0 %10302
        %10304 = vrot.lane.b32.xlu0 %v10213, 112
        %v10305 = vpop.permute.xlu0 %10304
        %10306 = vrot.lane.b32.xlu0 %v10214, 112
        %v10307 = vpop.permute.xlu0 %10306
        %10308 = vrot.lane.b32.xlu0 %v10215, 112
        %v10309 = vpop.permute.xlu0 %10308
        %10310 = vrot.lane.b32.xlu0 %v10216, 112
        %v10311 = vpop.permute.xlu0 %10310
        %10312 = vrot.lane.b32.xlu0 %v10217, 112
        %v10313 = vpop.permute.xlu0 %10312
        %vm10346 = vcmask 1048448
        %10347 = vst.msk [vmem:[#allocation2] sm:$0xff] %vm10346, %v10251
        %10348 = vst.msk [vmem:[#allocation2 + $0x8] sm:$0xff] %vm10346, %v10253
        %10349 = vst.msk [vmem:[#allocation2 + $0x10] sm:$0xff] %vm10346, %v10255
        %10350 = vst.msk [vmem:[#allocation2 + $0x18] sm:$0xff] %vm10346, %v10257
        %10351 = vst.msk [vmem:[#allocation2 + $0x20] sm:$0xff] %vm10346, %v10259
        %10352 = vst.msk [vmem:[#allocation2 + $0x28] sm:$0xff] %vm10346, %v10261
        %10353 = vst.msk [vmem:[#allocation2 + $0x30] sm:$0xff] %vm10346, %v10263
        %10354 = vst.msk [vmem:[#allocation2 + $0x38] sm:$0xff] %vm10346, %v10265
        %10355 = vst.msk [vmem:[#allocation2 + $0x40] sm:$0xff] %vm10346, %v10267
        %10356 = vst.msk [vmem:[#allocation2 + $0x48] sm:$0xff] %vm10346, %v10269
        %10357 = vst.msk [vmem:[#allocation2 + $0x50] sm:$0xff] %vm10346, %v10271
        %10358 = vst.msk [vmem:[#allocation2 + $0x58] sm:$0xff] %vm10346, %v10273
        %10359 = vst.msk [vmem:[#allocation2 + $0x60] sm:$0xff] %vm10346, %v10275
        %10360 = vst.msk [vmem:[#allocation2 + $0x68] sm:$0xff] %vm10346, %v10277
        %10361 = vst.msk [vmem:[#allocation2 + $0x70] sm:$0xff] %vm10346, %v10279
        %10362 = vst.msk [vmem:[#allocation2 + $0x78] sm:$0xff] %vm10346, %v10281
        %10363 = vst.msk [vmem:[#allocation2 + $0x80] sm:$0xff] %vm10346, %v10283
        %10364 = vst.msk [vmem:[#allocation2 + $0x88] sm:$0xff] %vm10346, %v10285
        %10365 = vst.msk [vmem:[#allocation2 + $0x90] sm:$0xff] %vm10346, %v10287
        %10366 = vst.msk [vmem:[#allocation2 + $0x98] sm:$0xff] %vm10346, %v10289
        %10367 = vst.msk [vmem:[#allocation2 + $0xa0] sm:$0xff] %vm10346, %v10291
        %10368 = vst.msk [vmem:[#allocation2 + $0xa8] sm:$0xff] %vm10346, %v10293
        %10369 = vst.msk [vmem:[#allocation2 + $0xb0] sm:$0xff] %vm10346, %v10295
        %10370 = vst.msk [vmem:[#allocation2 + $0xb8] sm:$0xff] %vm10346, %v10297
        %10371 = vst.msk [vmem:[#allocation2 + $0xc0] sm:$0xff] %vm10346, %v10299
        %10372 = vst.msk [vmem:[#allocation2 + $0xc8] sm:$0xff] %vm10346, %v10301
        %10373 = vst.msk [vmem:[#allocation2 + $0xd0] sm:$0xff] %vm10346, %v10303
        %10374 = vst.msk [vmem:[#allocation2 + $0xd8] sm:$0xff] %vm10346, %v10305
        %10375 = vst.msk [vmem:[#allocation2 + $0xe0] sm:$0xff] %vm10346, %v10307
        %10376 = vst.msk [vmem:[#allocation2 + $0xe8] sm:$0xff] %vm10346, %v10309
        %10377 = vst.msk [vmem:[#allocation2 + $0xf0] sm:$0xff] %vm10346, %v10311
        %10378 = vst.msk [vmem:[#allocation2 + $0xf8] sm:$0xff] %vm10346, %v10313
        %v10379 = vld [vmem:[#allocation2] sm:$0xff]
        %v10380 = vld [vmem:[#allocation2 + $0x8] sm:$0xff]
        %v10381 = vld [vmem:[#allocation2 + $0x10] sm:$0xff]
        %v10382 = vld [vmem:[#allocation2 + $0x18] sm:$0xff]
        %v10383 = vld [vmem:[#allocation2 + $0x20] sm:$0xff]
        %v10384 = vld [vmem:[#allocation2 + $0x28] sm:$0xff]
        %v10385 = vld [vmem:[#allocation2 + $0x30] sm:$0xff]
        %v10386 = vld [vmem:[#allocation2 + $0x38] sm:$0xff]
        %v10387 = vld [vmem:[#allocation2 + $0x40] sm:$0xff]
        %v10388 = vld [vmem:[#allocation2 + $0x48] sm:$0xff]
        %v10389 = vld [vmem:[#allocation2 + $0x50] sm:$0xff]
        %v10390 = vld [vmem:[#allocation2 + $0x58] sm:$0xff]
        %v10391 = vld [vmem:[#allocation2 + $0x60] sm:$0xff]
        %v10392 = vld [vmem:[#allocation2 + $0x68] sm:$0xff]
        %v10393 = vld [vmem:[#allocation2 + $0x70] sm:$0xff]
        %v10394 = vld [vmem:[#allocation2 + $0x78] sm:$0xff]
        %v10395 = vld [vmem:[#allocation2 + $0x80] sm:$0xff]
        %v10396 = vld [vmem:[#allocation2 + $0x88] sm:$0xff]
        %v10397 = vld [vmem:[#allocation2 + $0x90] sm:$0xff]
        %v10398 = vld [vmem:[#allocation2 + $0x98] sm:$0xff]
        %v10399 = vld [vmem:[#allocation2 + $0xa0] sm:$0xff]
        %v10400 = vld [vmem:[#allocation2 + $0xa8] sm:$0xff]
        %v10401 = vld [vmem:[#allocation2 + $0xb0] sm:$0xff]
        %v10402 = vld [vmem:[#allocation2 + $0xb8] sm:$0xff]
        %v10403 = vld [vmem:[#allocation2 + $0xc0] sm:$0xff]
        %v10404 = vld [vmem:[#allocation2 + $0xc8] sm:$0xff]
        %v10405 = vld [vmem:[#allocation2 + $0xd0] sm:$0xff]
        %v10406 = vld [vmem:[#allocation2 + $0xd8] sm:$0xff]
        %v10407 = vld [vmem:[#allocation2 + $0xe0] sm:$0xff]
        %v10408 = vld [vmem:[#allocation2 + $0xe8] sm:$0xff]
        %v10409 = vld [vmem:[#allocation2 + $0xf0] sm:$0xff]
        %v10410 = vld [vmem:[#allocation2 + $0xf8] sm:$0xff]
        %v10411 = vld [vmem:[%s1] sm:$0xff]
        %v10412 = vld [vmem:[%s1 + $0x8] sm:$0xff]
        %v10413 = vld [vmem:[%s1 + $0x10] sm:$0xff]
        %v10414 = vld [vmem:[%s1 + $0x18] sm:$0xff]
        %v10415 = vld [vmem:[%s1 + $0x20] sm:$0xff]
        %v10416 = vld [vmem:[%s1 + $0x28] sm:$0xff]
        %v10417 = vld [vmem:[%s1 + $0x30] sm:$0xff]
        %v10418 = vld [vmem:[%s1 + $0x38] sm:$0xff]
        %v10419 = vld [vmem:[%s1 + $0x40] sm:$0xff]
        %v10420 = vld [vmem:[%s1 + $0x48] sm:$0xff]
        %v10421 = vld [vmem:[%s1 + $0x50] sm:$0xff]
        %v10422 = vld [vmem:[%s1 + $0x58] sm:$0xff]
        %v10423 = vld [vmem:[%s1 + $0x60] sm:$0xff]
        %v10424 = vld [vmem:[%s1 + $0x68] sm:$0xff]
        %v10425 = vld [vmem:[%s1 + $0x70] sm:$0xff]
        %v10426 = vld [vmem:[%s1 + $0x78] sm:$0xff]
        %v10427 = vld [vmem:[%s2] sm:$0x1]
        %v10429 = vperm.slane %v10427, 0
        %10431 = vmatpush.msra.mxu0 %v10426
        %10432 = vmatpush.msra.mxu0 %v10425
        %10433 = vmatpush.msra.mxu0 %v10424
        %10434 = vmatpush.msra.mxu0 %v10423
        %10435 = vmatpush.msra.mxu0 %v10422
        %10436 = vmatpush.msra.mxu0 %v10421
        %10437 = vmatpush.msra.mxu0 %v10420
        %10438 = vmatpush.msra.mxu0 %v10419
        %10439 = vmatpush.msra.mxu0 %v10418
        %10440 = vmatpush.msra.mxu0 %v10417
        %10441 = vmatpush.msra.mxu0 %v10416
        %10442 = vmatpush.msra.mxu0 %v10415
        %10443 = vmatpush.msra.mxu0 %v10414
        %10444 = vmatpush.msra.mxu0 %v10413
        %10445 = vmatpush.msra.mxu0 %v10412
        %10446 = vmatpush.msra.mxu0 %v10411
        %10447 = vmatmul.f32.gmra.mxu0 %v10379
        %v10448 = vpop.f32.mrf.mxu0
        %v10449 = vadd.f32 %v10429, %v10448
        %10450 = vmatmul.f32.gmra.mxu0 %v10380
        %v10451 = vpop.f32.mrf.mxu0
        %v10452 = vadd.f32 %v10429, %v10451
        %10453 = vmatmul.f32.gmra.mxu0 %v10381
        %v10454 = vpop.f32.mrf.mxu0
        %v10455 = vadd.f32 %v10429, %v10454
        %10456 = vmatmul.f32.gmra.mxu0 %v10382
        %v10457 = vpop.f32.mrf.mxu0
        %v10458 = vadd.f32 %v10429, %v10457
        %10459 = vmatmul.f32.gmra.mxu0 %v10383
        %v10460 = vpop.f32.mrf.mxu0
        %v10461 = vadd.f32 %v10429, %v10460
        %10462 = vmatmul.f32.gmra.mxu0 %v10384
        %v10463 = vpop.f32.mrf.mxu0
        %v10464 = vadd.f32 %v10429, %v10463
        %10465 = vmatmul.f32.gmra.mxu0 %v10385
        %v10466 = vpop.f32.mrf.mxu0
        %v10467 = vadd.f32 %v10429, %v10466
        %10468 = vmatmul.f32.gmra.mxu0 %v10386
        %v10469 = vpop.f32.mrf.mxu0
        %v10470 = vadd.f32 %v10429, %v10469
        %10471 = vmatmul.f32.gmra.mxu0 %v10387
        %v10472 = vpop.f32.mrf.mxu0
        %v10473 = vadd.f32 %v10429, %v10472
        %10474 = vmatmul.f32.gmra.mxu0 %v10388
        %v10475 = vpop.f32.mrf.mxu0
        %v10476 = vadd.f32 %v10429, %v10475
        %10477 = vmatmul.f32.gmra.mxu0 %v10389
        %v10478 = vpop.f32.mrf.mxu0
        %v10479 = vadd.f32 %v10429, %v10478
        %10480 = vmatmul.f32.gmra.mxu0 %v10390
        %v10481 = vpop.f32.mrf.mxu0
        %v10482 = vadd.f32 %v10429, %v10481
        %10483 = vmatmul.f32.gmra.mxu0 %v10391
        %v10484 = vpop.f32.mrf.mxu0
        %v10485 = vadd.f32 %v10429, %v10484
        %10486 = vmatmul.f32.gmra.mxu0 %v10392
        %v10487 = vpop.f32.mrf.mxu0
        %v10488 = vadd.f32 %v10429, %v10487
        %10489 = vmatmul.f32.gmra.mxu0 %v10393
        %v10490 = vpop.f32.mrf.mxu0
        %v10491 = vadd.f32 %v10429, %v10490
        %10492 = vmatmul.f32.gmra.mxu0 %v10394
        %v10493 = vpop.f32.mrf.mxu0
        %v10494 = vadd.f32 %v10429, %v10493
        %10495 = vmatmul.f32.gmra.mxu0 %v10395
        %v10496 = vpop.f32.mrf.mxu0
        %v10497 = vadd.f32 %v10429, %v10496
        %10498 = vmatmul.f32.gmra.mxu0 %v10396
        %v10499 = vpop.f32.mrf.mxu0
        %v10500 = vadd.f32 %v10429, %v10499
        %10501 = vmatmul.f32.gmra.mxu0 %v10397
        %v10502 = vpop.f32.mrf.mxu0
        %v10503 = vadd.f32 %v10429, %v10502
        %10504 = vmatmul.f32.gmra.mxu0 %v10398
        %v10505 = vpop.f32.mrf.mxu0
        %v10506 = vadd.f32 %v10429, %v10505
        %10507 = vmatmul.f32.gmra.mxu0 %v10399
        %v10508 = vpop.f32.mrf.mxu0
        %v10509 = vadd.f32 %v10429, %v10508
        %10510 = vmatmul.f32.gmra.mxu0 %v10400
        %v10511 = vpop.f32.mrf.mxu0
        %v10512 = vadd.f32 %v10429, %v10511
        %10513 = vmatmul.f32.gmra.mxu0 %v10401
        %v10514 = vpop.f32.mrf.mxu0
        %v10515 = vadd.f32 %v10429, %v10514
        %10516 = vmatmul.f32.gmra.mxu0 %v10402
        %v10517 = vpop.f32.mrf.mxu0
        %v10518 = vadd.f32 %v10429, %v10517
        %10519 = vmatmul.f32.gmra.mxu0 %v10403
        %v10520 = vpop.f32.mrf.mxu0
        %v10521 = vadd.f32 %v10429, %v10520
        %10522 = vmatmul.f32.gmra.mxu0 %v10404
        %v10523 = vpop.f32.mrf.mxu0
        %v10524 = vadd.f32 %v10429, %v10523
        %10525 = vmatmul.f32.gmra.mxu0 %v10405
        %v10526 = vpop.f32.mrf.mxu0
        %v10527 = vadd.f32 %v10429, %v10526
        %10528 = vmatmul.f32.gmra.mxu0 %v10406
        %v10529 = vpop.f32.mrf.mxu0
        %v10530 = vadd.f32 %v10429, %v10529
        %10531 = vmatmul.f32.gmra.mxu0 %v10407
        %v10532 = vpop.f32.mrf.mxu0
        %v10533 = vadd.f32 %v10429, %v10532
        %10534 = vmatmul.f32.gmra.mxu0 %v10408
        %v10535 = vpop.f32.mrf.mxu0
        %v10536 = vadd.f32 %v10429, %v10535
        %10537 = vmatmul.f32.gmra.mxu0 %v10409
        %v10538 = vpop.f32.mrf.mxu0
        %v10539 = vadd.f32 %v10429, %v10538
        %10540 = vmatmul.f32.gmra.mxu0 %v10410
        %v10541 = vpop.f32.mrf.mxu0
        %v10542 = vadd.f32 %v10429, %v10541
        %10543 = vdwg.mxu0
        %10544 = vst [vmem:[%s208] sm:$0xff] %v10449
        %10545 = vst [vmem:[%s208 + $0x8] sm:$0xff] %v10452
        %10546 = vst [vmem:[%s208 + $0x10] sm:$0xff] %v10455
        %10547 = vst [vmem:[%s208 + $0x18] sm:$0xff] %v10458
        %10548 = vst [vmem:[%s208 + $0x20] sm:$0xff] %v10461
        %10549 = vst [vmem:[%s208 + $0x28] sm:$0xff] %v10464
        %10550 = vst [vmem:[%s208 + $0x30] sm:$0xff] %v10467
        %10551 = vst [vmem:[%s208 + $0x38] sm:$0xff] %v10470
        %10552 = vst [vmem:[%s208 + $0x40] sm:$0xff] %v10473
        %10553 = vst [vmem:[%s208 + $0x48] sm:$0xff] %v10476
        %10554 = vst [vmem:[%s208 + $0x50] sm:$0xff] %v10479
        %10555 = vst [vmem:[%s208 + $0x58] sm:$0xff] %v10482
        %10556 = vst [vmem:[%s208 + $0x60] sm:$0xff] %v10485
        %10557 = vst [vmem:[%s208 + $0x68] sm:$0xff] %v10488
        %10558 = vst [vmem:[%s208 + $0x70] sm:$0xff] %v10491
        %10559 = vst [vmem:[%s208 + $0x78] sm:$0xff] %v10494
        %10560 = vst [vmem:[%s208 + $0x80] sm:$0xff] %v10497
        %10561 = vst [vmem:[%s208 + $0x88] sm:$0xff] %v10500
        %10562 = vst [vmem:[%s208 + $0x90] sm:$0xff] %v10503
        %10563 = vst [vmem:[%s208 + $0x98] sm:$0xff] %v10506
        %10564 = vst [vmem:[%s208 + $0xa0] sm:$0xff] %v10509
        %10565 = vst [vmem:[%s208 + $0xa8] sm:$0xff] %v10512
        %10566 = vst [vmem:[%s208 + $0xb0] sm:$0xff] %v10515
        %10567 = vst [vmem:[%s208 + $0xb8] sm:$0xff] %v10518
        %10568 = vst [vmem:[%s208 + $0xc0] sm:$0xff] %v10521
        %10569 = vst [vmem:[%s208 + $0xc8] sm:$0xff] %v10524
        %10570 = vst [vmem:[%s208 + $0xd0] sm:$0xff] %v10527
        %10571 = vst [vmem:[%s208 + $0xd8] sm:$0xff] %v10530
        %10572 = vst [vmem:[%s208 + $0xe0] sm:$0xff] %v10533
        %10573 = vst [vmem:[%s208 + $0xe8] sm:$0xff] %v10536
        %10574 = vst [vmem:[%s208 + $0xf0] sm:$0xff] %v10539
        %10575 = vst [vmem:[%s208 + $0xf8] sm:$0xff] %v10542
        %s10576 = sand.u32 %s112, 1
        %s10577 = scalar_lea.sflag [#allocation5], %s10576
        %s10578 = sand.u32 %s112, 1
        %s10579 = smul.addr %s10578, 256
        %s10580 = scalar_lea.vmem [#allocation6], %s10579
        // Predicated region
        $region37: #{attention_forward.1} parent=31 // pred_check
          %p10581 = pneg %p122
        $region38: #{attention_forward.1} parent=31 // pred_check_branch
          %10583 = sbr.rel (%p10581) target = $region40
        $region39: #{attention_forward.1} parent=31 // pred_region
          %s10584 = smul.u32 32, %s25
          %10586 = vsyncadd %s10577, 0
          %s10587 = smul.addr %s24, 32
          %s10588 = sadd.s32 %s10584, %s10587
          %s10589 = smul.addr %s10588, 8
          %s10590 = scalar_lea.hbm %s3, %s10589
          %s10591 = sshll.u32 %s10580, 4
          %s10592 = int_to_ptr.vmem [resolvable:$true] %s10591
          %s10593 = sshll.u32 %s10590, 4
          %s10594 = int_to_ptr.hbm [resolvable:$true] %s10593
          %10599 = dma.vmem_to_hbm [thread:$0]  %s10592, 4096, %s10594, %s10577, 128, 128, 8
        $region40: #{attention_forward.1} parent=31 // pred_fallthru
          _
      $region32: #{attention_forward.1} parent=5 // pred_fallthru
        _
      %p10600 = scmp.le.s32.totalorder 2, %s15
      // Predicated region
      $region41: #{attention_forward.1} parent=5 // pred_check
        %p10601 = pneg %p10600
      $region42: #{attention_forward.1} parent=5 // pred_check_branch
        %10603 = sbr.rel (%p10601) target = $region44
      $region43: #{attention_forward.1} parent=5 // pred_region
        %s10604 = ssub.s32 %s15, 2
        // Predicated region
        $region45: #{attention_forward.1} parent=43 // pred_check
          %p10605 = pneg %p128
        $region46: #{attention_forward.1} parent=43 // pred_check_branch
          %10607 = sbr.rel (%p10605) target = $region48
        $region47: #{attention_forward.1} parent=43 // pred_region
          %s10608 = sand.u32 %s113, 1
          %s10609 = scalar_lea.sflag [#allocation5], %s10608
          %s10610 = sand.u32 %s113, 1
          %s10611 = smul.addr %s10610, 256
          %s10612 = scalar_lea.vmem [#allocation6], %s10611
          %10614 = dma.done %s10609, 4096
        $region48: #{attention_forward.1} parent=43 // pred_fallthru
          _
      $region44: #{attention_forward.1} parent=5 // pred_fallthru
        _
    $region6: #{attention_forward.1} parent=1 // loop_footer
      %s19 = sadd.s32 1, %s15
    $region7: #{attention_forward.1} parent=1 // loop_footer_branch
      %14 = sbr.rel target = $region3
    $region8: #{attention_forward.1} parent=1 // loop_exit
      _
    %10615 = vsyncpa [#allocation4], 1
    %s10616 = scalar_lea.sflag [#allocation4], 1
    %10617 = vsyncpa %s10616, 1
    %10618 = vsyncpa [#allocation5], 1
    %s10619 = scalar_lea.sflag [#allocation5], 1
    %10620 = vsyncpa %s10619, 1

</llo_original>
